<compile_context>
chip_gen: v6e
topology: v6e:2x2x1
jax: 0.10.0
libtpu: 0.0.40
codegen_flags: <defaults>
</compile_context>

<pallas_src>
import functools

import jax
import jax.numpy as jnp
import numpy as np
from jax.experimental import pallas as pl
from jax.experimental.pallas import tpu as pltpu

# Left spatial pad of conv1's stored output: the data starts at a 16-aligned
# column so its store is sublane-aligned (unmasked) even for bf16 (16,128) tiles.
LPAD = 16


@functools.lru_cache(maxsize=1)
def _vmem_limit_bytes():
    cap = 128 * 1024 * 1024
    try:
        info = pltpu.get_tpu_info()
        cap = int(getattr(info, "vmem_capacity_bytes", cap) or cap)
    except Exception:
        pass
    # 3/4 of physical VMEM, capped at 96 MiB, floored at 32 MiB:
    #   v5e/v6e (128 MiB) -> 96 MiB, v7x (64 MiB) -> 48 MiB.
    return int(max(32 * 1024 * 1024, min(cap * 3 // 4, 96 * 1024 * 1024)))


# ----------------------------------------------------------------------------
# Pallas kernel: in-kernel KxK conv (per-ky tap groups) + folded-BN bias
# [+ residual] [+ relu] [+ fused spatial pad of the output]
# ----------------------------------------------------------------------------
def _conv_bn_kernel(x_ref, w_ref, b_ref, *rest,
                    ksize, stride, out_h, out_w, h0, w0,
                    has_res, res_interior, do_relu, out_padded):
    if has_res:
        res_ref, o_ref = rest
    else:
        (o_ref,) = rest

    cin = x_ref.shape[-1]
    tc = o_ref.shape[-1]
    p = out_h * out_w

    def window(ky, kx):
        r0 = h0 + ky
        c0 = w0 + kx
        if stride == 1:
            return x_ref[0, r0:r0 + out_h, c0:c0 + out_w, :]
        # TODO(synk): stride>1 uses strided in-kernel ref loads; verify the
        # pl.ds(stride=) lowering on older Mosaic (v5e) or move striding to
        # the wrapper.
        return x_ref[0, pl.ds(r0, out_h, stride), pl.ds(c0, out_w, stride), :]

    acc = None
    for ky in range(ksize):
        if ksize > 1:
            # One (P, ksize*Cin) operand per ky: the kx-shifted windows
            # concatenated along channels (3 dots total instead of 9).
            opnd = jnp.concatenate([window(ky, kx) for kx in range(ksize)],
                                   axis=-1).reshape(p, ksize * cin)
        else:
            opnd = window(ky, 0).reshape(p, cin)
        d = jnp.dot(opnd, w_ref[ky], preferred_element_type=jnp.float32)
        acc = d if acc is None else acc + d

    acc = acc + b_ref[...]                           # folded BN bias (1, TC) f32
    if has_res:
        if res_interior:
            # Identity shortcut: residual is the spatially (1,1)-padded bf16
            # input image; select the interior here (no extra f32 copy in HBM).
            res = res_ref[0, 1:1 + out_h, 1:1 + out_w, :].reshape(p, tc)
        else:
            res = res_ref[0]                         # (P, TC) bf16
        acc = acc + res.astype(jnp.float32)
    if do_relu:
        acc = jnp.maximum(acc, 0.0)

    if out_padded:
        # Emit the output already spatially padded for the next 3x3 conv.
        # Interior store is sublane-aligned (column offset LPAD = 16).
        o_ref[0, 1:1 + out_h, LPAD:LPAD + out_w, :] = (
            acc.reshape(out_h, out_w, tc).astype(o_ref.dtype))
        # Zero only the halo cells the next conv actually reads
        # (rows 0 / out_h+1, columns LPAD-1 / LPAD+out_w).
        zcol = jnp.zeros((out_h + 2, 1, tc), o_ref.dtype)
        o_ref[0, :, LPAD - 1:LPAD, :] = zcol
        o_ref[0, :, LPAD + out_w:LPAD + out_w + 1, :] = zcol
        zrow = jnp.zeros((1, out_w + 2, tc), o_ref.dtype)
        o_ref[0, 0:1, LPAD - 1:LPAD + out_w + 1, :] = zrow
        o_ref[0, out_h + 1:out_h + 2, LPAD - 1:LPAD + out_w + 1, :] = zrow
    else:
        o_ref[0] = acc.astype(o_ref.dtype)


def fused_conv_bn(x_img, w_taps, bias, *, ksize, stride, out_h, out_w, h0, w0,
                  residual=None, res_kind="flat", relu=False,
                  out_padded=False, out_dtype=jnp.float32):
    """x_img:  (N, Hin, Win, Cin_pad) bf16 (spatially padded as required)
       w_taps: (ksize, ksize*Cin_pad, Cout_pad) bf16, BN scale already folded
       bias:   (Cout_pad,) f32
       residual: None | (N, P, Cout_pad) bf16 ("flat")
                      | (N, H+2, W+2, Cout_pad) bf16 ("image", interior used)
    """
    N, hin, win_, cin = x_img.shape
    T, kcin, cpad = w_taps.shape
    tc = 256 if cpad % 256 == 0 else 128         # lane-dense output tiles
    nct = cpad // tc
    p = out_h * out_w

    # Grid-axis order: keep the heavier stream resident across the fast axis
    # (a block whose index depends only on the slow axis is not re-DMA'd).
    x_block_bytes = hin * win_ * cin * x_img.dtype.itemsize
    w_block_bytes = T * kcin * tc * w_taps.dtype.itemsize
    c_fastest = w_block_bytes <= x_block_bytes
    if c_fastest:
        grid = (N, nct)
        def nc(i, j): return i, j                # (n, c)
    else:
        grid = (nct, N)
        def nc(i, j): return j, i                # (n, c)

    def x_map(i, j):
        n, _ = nc(i, j); return (n, 0, 0, 0)

    def w_map(i, j):
        _, c = nc(i, j); return (0, 0, c)

    def b_map(i, j):
        _, c = nc(i, j); return (0, c)

    in_specs = [
        pl.BlockSpec((1, hin, win_, cin), x_map),
        pl.BlockSpec((T, kcin, tc), w_map),
        pl.BlockSpec((1, tc), b_map),
    ]
    args = [x_img, w_taps, bias.reshape(1, cpad).astype(jnp.float32)]

    if residual is not None:
        if res_kind == "image":
            rh, rw = residual.shape[1], residual.shape[2]

            def r_map(i, j):
                n, c = nc(i, j); return (n, 0, 0, c)
            in_specs.append(pl.BlockSpec((1, rh, rw, tc), r_map))
        else:
            def r_map(i, j):
                n, c = nc(i, j); return (n, 0, c)
            in_specs.append(pl.BlockSpec((1, p, tc), r_map))
        args.append(residual)

    if out_padded:
        oh_p, ow_p = out_h + 2, LPAD + out_w + 1
        out_dt = jnp.bfloat16
        out_shape = jax.ShapeDtypeStruct((N, oh_p, ow_p, cpad), out_dt)

        def o_map(i, j):
            n, c = nc(i, j); return (n, 0, 0, c)
        out_spec = pl.BlockSpec((1, oh_p, ow_p, tc), o_map)
    else:
        out_dt = out_dtype
        out_shape = jax.ShapeDtypeStruct((N, p, cpad), out_dt)

        def o_map(i, j):
            n, c = nc(i, j); return (n, 0, c)
        out_spec = pl.BlockSpec((1, p, tc), o_map)

    kernel = functools.partial(
        _conv_bn_kernel, ksize=ksize, stride=stride, out_h=out_h, out_w=out_w,
        h0=h0, w0=w0, has_res=residual is not None,
        res_interior=(res_kind == "image"), do_relu=relu, out_padded=out_padded)

    flops = int(2 * N * p * (ksize * ksize * cin) * cpad)
    bytes_accessed = sum(int(a.size) * a.dtype.itemsize for a in args)
    bytes_accessed += int(np.prod(out_shape.shape)) * jnp.dtype(out_dt).itemsize

    # TODO(synk): for v7x (2 TensorCores, 64 MiB VMEM) add a spatial output-row
    # grid axis with halo'd input blocks; omitted here to keep blocks full-image.
    return pl.pallas_call(
        kernel,
        out_shape=out_shape,
        grid=grid,
        in_specs=in_specs,
        out_specs=out_spec,
        compiler_params=pltpu.CompilerParams(
            dimension_semantics=("parallel", "parallel"),
            vmem_limit_bytes=_vmem_limit_bytes()),
        cost_estimate=pl.CostEstimate(flops=flops, transcendentals=0,
                                      bytes_accessed=int(bytes_accessed)),
    )(*args)


# ----------------------------------------------------------------------------
# Glue (plain JAX, weight-sized / one-time transforms)
# ----------------------------------------------------------------------------
def _round_up(x, m):
    return (x + m - 1) // m * m


def _pad_vec(v, n):
    return jnp.pad(v, (0, n - v.shape[0]))


def fold_bn(bn, eps=1e-5):
    """BatchNorm2d (eval mode) -> per-channel scale, bias."""
    scale = bn["gamma"] / jnp.sqrt(bn["var"] + eps)
    bias = bn["beta"] - bn["mean"] * scale
    return scale, bias


def conv_weight_taps(w_oihw, scale, cin_pad, cout_pad):
    """(Cout, Cin, KH, KW) -> (KH, KW*Cin_pad, Cout_pad) bf16, BN scale folded.

    The kx taps are stacked along the contraction axis so each ky is a single
    MXU dot with K = KW*Cin_pad.
    """
    co, ci, kh, kw = w_oihw.shape
    w = jnp.transpose(w_oihw, (2, 3, 1, 0))                 # (kh, kw, ci, co)
    w = w * scale[None, None, None, :]                      # fold BN scale (f32)
    w = jnp.pad(w, ((0, 0), (0, 0), (0, cin_pad - ci), (0, cout_pad - co)))
    w = w.reshape(kh, kw * cin_pad, cout_pad)
    return w.astype(jnp.bfloat16)


# ----------------------------------------------------------------------------
# BasicBlock forward (NHWC internally)
# ----------------------------------------------------------------------------
def basic_block_forward(x_nchw, params, stride):
    x = jnp.transpose(x_nchw, (0, 2, 3, 1)).astype(jnp.float32)   # NCHW -> NHWC
    N, H, W, in_planes = x.shape
    planes = params["w1"].shape[0]
    cin_pad = _round_up(in_planes, 128)
    cpad = _round_up(planes, 128)
    Ho = (H + 2 - 3) // stride + 1
    Wo = (W + 2 - 3) // stride + 1

    # Spatial (1,1) + channel pad once, cast to bf16 (MXU operand format).
    x_p = jnp.pad(x, ((0, 0), (1, 1), (1, 1), (0, cin_pad - in_planes))
                  ).astype(jnp.bfloat16)

    # conv1 + bn1 + relu -> spatially padded bf16 output (pad fused into store,
    # data at sublane-aligned column LPAD, only read-halo cells zeroed).
    s1, b1 = fold_bn(params["bn1"])
    w1 = conv_weight_taps(params["w1"], s1, cin_pad, cpad)
    o1_pad = fused_conv_bn(x_p, w1, _pad_vec(b1, cpad),
                           ksize=3, stride=stride, out_h=Ho, out_w=Wo,
                           h0=0, w0=0, relu=True, out_padded=True)

    # shortcut branch (residual carried in bf16)
    if stride != 1 or in_planes != planes:
        ssc, bsc = fold_bn(params["bn_sc"])
        wsc = conv_weight_taps(params["w_sc"], ssc, cin_pad, cpad)
        # 1x1 conv reads the interior of the already-padded bf16 x_p directly.
        residual = fused_conv_bn(x_p, wsc, _pad_vec(bsc, cpad),
                                 ksize=1, stride=stride, out_h=Ho, out_w=Wo,
                                 h0=1, w0=1, out_dtype=jnp.bfloat16)
        res_kind = "flat"
    else:
        residual = x_p                      # identity: reuse padded bf16 input
        res_kind = "image"

    # conv2 + bn2 + residual add + relu (one fused kernel), f32 output.
    s2, b2 = fold_bn(params["bn2"])
    w2 = conv_weight_taps(params["w2"], s2, cpad, cpad)
    out = fused_conv_bn(o1_pad, w2, _pad_vec(b2, cpad),
                        ksize=3, stride=1, out_h=Ho, out_w=Wo,
                        h0=0, w0=LPAD - 1,
                        residual=residual, res_kind=res_kind, relu=True)

    out = out.reshape(N, Ho, Wo, cpad)[:, :, :, :planes]
    return jnp.transpose(out, (0, 3, 1, 2))                       # back to NCHW


# ----------------------------------------------------------------------------
# Reference (pure JAX, emulating the kernel's bf16 rounding points so the
# comparison only differs by f32 accumulation order)
# ----------------------------------------------------------------------------
def _bf16_round(v):
    return v.astype(jnp.bfloat16).astype(jnp.float32)


def basic_block_reference(x_nchw, params, stride):
    x = jnp.transpose(x_nchw, (0, 2, 3, 1)).astype(jnp.float32)
    in_planes = x.shape[-1]
    planes = params["w1"].shape[0]

    def conv(inp, w_oihw, scale, s, pad):
        w = jnp.transpose(w_oihw, (2, 3, 1, 0)) * scale            # HWIO, folded
        return jax.lax.conv_general_dilated(
            _bf16_round(inp), _bf16_round(w), (s, s), [(pad, pad), (pad, pad)],
            dimension_numbers=("NHWC", "HWIO", "NHWC"),
            precision=jax.lax.Precision.HIGHEST)

    s1, b1 = fold_bn(params["bn1"])
    o1 = jnp.maximum(conv(x, params["w1"], s1, stride, 1) + b1, 0.0)
    o1 = _bf16_round(o1)                       # kernel stores conv1 out in bf16

    if stride != 1 or in_planes != planes:
        ssc, bsc = fold_bn(params["bn_sc"])
        sc = _bf16_round(conv(x, params["w_sc"], ssc, stride, 0) + bsc)
    else:
        sc = _bf16_round(x)                    # identity residual carried bf16

    s2, b2 = fold_bn(params["bn2"])
    out = jnp.maximum(conv(o1, params["w2"], s2, 1, 1) + b2 + sc, 0.0)
    return jnp.transpose(out, (0, 3, 1, 2))


# ----------------------------------------------------------------------------
# Deterministic parameter init
# ----------------------------------------------------------------------------
def make_bn(key, c):
    k1, k2, k3, k4 = jax.random.split(key, 4)
    return {
        "gamma": 1.0 + 0.1 * jax.random.normal(k1, (c,), jnp.float32),
        "beta": 0.1 * jax.random.normal(k2, (c,), jnp.float32),
        "mean": 0.1 * jax.random.normal(k3, (c,), jnp.float32),
        "var": 0.5 + jax.random.uniform(k4, (c,), jnp.float32),
    }


def make_params(key, in_planes, planes, stride):
    keys = jax.random.split(key, 6)
    params = {
        "w1": 0.2 * jax.random.normal(keys[0], (planes, in_planes, 3, 3), jnp.float32),
        "bn1": make_bn(keys[1], planes),
        "w2": 0.2 * jax.random.normal(keys[2], (planes, planes, 3, 3), jnp.float32),
        "bn2": make_bn(keys[3], planes),
    }
    if stride != 1 or in_planes != planes:
        params["w_sc"] = 0.3 * jax.random.normal(keys[4], (planes, in_planes, 1, 1),
                                                 jnp.float32)
        params["bn_sc"] = make_bn(keys[5], planes)
    return params


if __name__ == "__main__":
    fwd = jax.jit(basic_block_forward, static_argnums=(2,))
    ref = jax.jit(basic_block_reference, static_argnums=(2,))

    root = jax.random.PRNGKey(0)
    # Config 1: projection shortcut (in_planes != planes, 1x1 conv + BN).
    # Config 2: identity shortcut (in_planes == planes).
    for (n, cin_, cout_, hw, s) in [(2, 4, 8, 16, 1), (2, 8, 8, 16, 1)]:
        kx, kp, root = jax.random.split(root, 3)
        x = jax.random.normal(kx, (n, cin_, hw, hw), jnp.float32)   # NCHW input
        params = make_params(kp, cin_, cout_, s)

        out = jax.block_until_ready(fwd(x, params, s))
        expect = jax.block_until_ready(ref(x, params, s))
        # bf16 matmul operands (f32 accumulation) and bf16-carried
        # intermediates; tolerance covers accumulation-order differences only.
        np.testing.assert_allclose(np.asarray(out), np.asarray(expect),
                                   atol=2e-2, rtol=2e-2)

    print("KERNEL_OK")
</pallas_src>

<mosaic_0001>
module attributes {stable_mosaic.version = 11 : i64} {
  func.func @_conv_bn_kernel(%arg0: i32, %arg1: i32, %arg2: memref<1x18x18x128xbf16, #tpu.memory_space<vmem>>, %arg3: memref<3x384x128xbf16, #tpu.memory_space<vmem>>, %arg4: memref<1x128xf32, #tpu.memory_space<vmem>>, %arg5: memref<1x18x33x128xbf16, #tpu.memory_space<vmem>>) attributes {dimension_semantics = [#tpu.dimension_semantics<parallel>, #tpu.dimension_semantics<parallel>], iteration_bounds = array<i64: 1, 2>, scalar_prefetch = 0 : i64, scratch_operands = 0 : i64, tpu.core_type = #tpu.core_type<tc>, window_params = [{transform_indices = @transform_0, window_bounds = array<i64: 1, 18, 18, 128>}, {transform_indices = @transform_1, window_bounds = array<i64: 3, 384, 128>}, {transform_indices = @transform_2, window_bounds = array<i64: 1, 128>}, {transform_indices = @transform_3, window_bounds = array<i64: 1, 18, 33, 128>}]} {
    %c0 = arith.constant 0 : index
    %c0_0 = arith.constant 0 : index
    %c0_1 = arith.constant 0 : index
    %c0_2 = arith.constant 0 : index
    %0 = vector.load %arg2[%c0, %c0_0, %c0_1, %c0_2] : memref<1x18x18x128xbf16, #tpu.memory_space<vmem>>, vector<1x16x16x128xbf16>
    %1 = vector.shape_cast %0 : vector<1x16x16x128xbf16> to vector<16x16x128xbf16>
    %c0_3 = arith.constant 0 : index
    %c0_4 = arith.constant 0 : index
    %c1 = arith.constant 1 : index
    %c0_5 = arith.constant 0 : index
    %2 = vector.load %arg2[%c0_3, %c0_4, %c1, %c0_5] : memref<1x18x18x128xbf16, #tpu.memory_space<vmem>>, vector<1x16x16x128xbf16>
    %3 = vector.shape_cast %2 : vector<1x16x16x128xbf16> to vector<16x16x128xbf16>
    %c0_6 = arith.constant 0 : index
    %c0_7 = arith.constant 0 : index
    %c2 = arith.constant 2 : index
    %c0_8 = arith.constant 0 : index
    %4 = vector.load %arg2[%c0_6, %c0_7, %c2, %c0_8] : memref<1x18x18x128xbf16, #tpu.memory_space<vmem>>, vector<1x16x16x128xbf16>
    %5 = vector.shape_cast %4 : vector<1x16x16x128xbf16> to vector<16x16x128xbf16>
    %6 = tpu.concatenate %1, %3, %5 in 2 : vector<16x16x128xbf16>, vector<16x16x128xbf16>, vector<16x16x128xbf16> -> vector<16x16x384xbf16>
    %7 = vector.shape_cast %6 : vector<16x16x384xbf16> to vector<256x384xbf16>
    %c0_9 = arith.constant 0 : index
    %c0_10 = arith.constant 0 : index
    %c0_11 = arith.constant 0 : index
    %8 = vector.load %arg3[%c0_9, %c0_10, %c0_11] : memref<3x384x128xbf16, #tpu.memory_space<vmem>>, vector<1x384x128xbf16>
    %9 = vector.shape_cast %8 : vector<1x384x128xbf16> to vector<384x128xbf16>
    %cst = arith.constant dense<0.000000e+00> : vector<256x128xf32>
    %10 = tpu.matmul %7, %9, %cst {dimension_numbers = #tpu.dot_dimension_numbers<[1], [0], [0], [1], [0, 0, 1, 1], [], []>} : vector<256x384xbf16>, vector<384x128xbf16>, vector<256x128xf32> -> vector<256x128xf32>
    %c0_12 = arith.constant 0 : index
    %c1_13 = arith.constant 1 : index
    %c0_14 = arith.constant 0 : index
    %c0_15 = arith.constant 0 : index
    %11 = vector.load %arg2[%c0_12, %c1_13, %c0_14, %c0_15] : memref<1x18x18x128xbf16, #tpu.memory_space<vmem>>, vector<1x16x16x128xbf16>
    %12 = vector.shape_cast %11 : vector<1x16x16x128xbf16> to vector<16x16x128xbf16>
    %c0_16 = arith.constant 0 : index
    %c1_17 = arith.constant 1 : index
    %c1_18 = arith.constant 1 : index
    %c0_19 = arith.constant 0 : index
    %13 = vector.load %arg2[%c0_16, %c1_17, %c1_18, %c0_19] : memref<1x18x18x128xbf16, #tpu.memory_space<vmem>>, vector<1x16x16x128xbf16>
    %14 = vector.shape_cast %13 : vector<1x16x16x128xbf16> to vector<16x16x128xbf16>
    %c0_20 = arith.constant 0 : index
    %c1_21 = arith.constant 1 : index
    %c2_22 = arith.constant 2 : index
    %c0_23 = arith.constant 0 : index
    %15 = vector.load %arg2[%c0_20, %c1_21, %c2_22, %c0_23] : memref<1x18x18x128xbf16, #tpu.memory_space<vmem>>, vector<1x16x16x128xbf16>
    %16 = vector.shape_cast %15 : vector<1x16x16x128xbf16> to vector<16x16x128xbf16>
    %17 = tpu.concatenate %12, %14, %16 in 2 : vector<16x16x128xbf16>, vector<16x16x128xbf16>, vector<16x16x128xbf16> -> vector<16x16x384xbf16>
    %18 = vector.shape_cast %17 : vector<16x16x384xbf16> to vector<256x384xbf16>
    %c1_24 = arith.constant 1 : index
    %c0_25 = arith.constant 0 : index
    %c0_26 = arith.constant 0 : index
    %19 = vector.load %arg3[%c1_24, %c0_25, %c0_26] : memref<3x384x128xbf16, #tpu.memory_space<vmem>>, vector<1x384x128xbf16>
    %20 = vector.shape_cast %19 : vector<1x384x128xbf16> to vector<384x128xbf16>
    %cst_27 = arith.constant dense<0.000000e+00> : vector<256x128xf32>
    %21 = tpu.matmul %18, %20, %cst_27 {dimension_numbers = #tpu.dot_dimension_numbers<[1], [0], [0], [1], [0, 0, 1, 1], [], []>} : vector<256x384xbf16>, vector<384x128xbf16>, vector<256x128xf32> -> vector<256x128xf32>
    %22 = arith.addf %10, %21 : vector<256x128xf32>
    %c0_28 = arith.constant 0 : index
    %c2_29 = arith.constant 2 : index
    %c0_30 = arith.constant 0 : index
    %c0_31 = arith.constant 0 : index
    %23 = vector.load %arg2[%c0_28, %c2_29, %c0_30, %c0_31] : memref<1x18x18x128xbf16, #tpu.memory_space<vmem>>, vector<1x16x16x128xbf16>
    %24 = vector.shape_cast %23 : vector<1x16x16x128xbf16> to vector<16x16x128xbf16>
    %c0_32 = arith.constant 0 : index
    %c2_33 = arith.constant 2 : index
    %c1_34 = arith.constant 1 : index
    %c0_35 = arith.constant 0 : index
    %25 = vector.load %arg2[%c0_32, %c2_33, %c1_34, %c0_35] : memref<1x18x18x128xbf16, #tpu.memory_space<vmem>>, vector<1x16x16x128xbf16>
    %26 = vector.shape_cast %25 : vector<1x16x16x128xbf16> to vector<16x16x128xbf16>
    %c0_36 = arith.constant 0 : index
    %c2_37 = arith.constant 2 : index
    %c2_38 = arith.constant 2 : index
    %c0_39 = arith.constant 0 : index
    %27 = vector.load %arg2[%c0_36, %c2_37, %c2_38, %c0_39] : memref<1x18x18x128xbf16, #tpu.memory_space<vmem>>, vector<1x16x16x128xbf16>
    %28 = vector.shape_cast %27 : vector<1x16x16x128xbf16> to vector<16x16x128xbf16>
    %29 = tpu.concatenate %24, %26, %28 in 2 : vector<16x16x128xbf16>, vector<16x16x128xbf16>, vector<16x16x128xbf16> -> vector<16x16x384xbf16>
    %30 = vector.shape_cast %29 : vector<16x16x384xbf16> to vector<256x384xbf16>
    %c2_40 = arith.constant 2 : index
    %c0_41 = arith.constant 0 : index
    %c0_42 = arith.constant 0 : index
    %31 = vector.load %arg3[%c2_40, %c0_41, %c0_42] : memref<3x384x128xbf16, #tpu.memory_space<vmem>>, vector<1x384x128xbf16>
    %32 = vector.shape_cast %31 : vector<1x384x128xbf16> to vector<384x128xbf16>
    %cst_43 = arith.constant dense<0.000000e+00> : vector<256x128xf32>
    %33 = tpu.matmul %30, %32, %cst_43 {dimension_numbers = #tpu.dot_dimension_numbers<[1], [0], [0], [1], [0, 0, 1, 1], [], []>} : vector<256x384xbf16>, vector<384x128xbf16>, vector<256x128xf32> -> vector<256x128xf32>
    %34 = arith.addf %22, %33 : vector<256x128xf32>
    %c0_44 = arith.constant 0 : index
    %c0_45 = arith.constant 0 : index
    %35 = vector.load %arg4[%c0_44, %c0_45] : memref<1x128xf32, #tpu.memory_space<vmem>>, vector<1x128xf32>
    %36 = vector.broadcast %35 : vector<1x128xf32> to vector<256x128xf32>
    %37 = arith.addf %34, %36 : vector<256x128xf32>
    %cst_46 = arith.constant 0.000000e+00 : f32
    %38 = vector.broadcast %cst_46 : f32 to vector<256x128xf32>
    %39 = arith.maximumf %37, %38 : vector<256x128xf32>
    %40 = vector.shape_cast %39 : vector<256x128xf32> to vector<16x16x128xf32>
    %41 = arith.truncf %40 : vector<16x16x128xf32> to vector<16x16x128xbf16>
    %c0_47 = arith.constant 0 : index
    %c1_48 = arith.constant 1 : index
    %c16 = arith.constant 16 : index
    %c0_49 = arith.constant 0 : index
    %42 = vector.load %arg5[%c0_47, %c1_48, %c16, %c0_49] : memref<1x18x33x128xbf16, #tpu.memory_space<vmem>>, vector<1x16x16x128xbf16>
    %43 = vector.shape_cast %42 : vector<1x16x16x128xbf16> to vector<16x16x128xbf16>
    %44 = vector.shape_cast %41 : vector<16x16x128xbf16> to vector<1x16x16x128xbf16>
    tpu.vector_store %arg5[%c0_47, %c1_48, %c16, %c0_49], %44 {strides = array<i32>} : memref<1x18x33x128xbf16, #tpu.memory_space<vmem>>, vector<1x16x16x128xbf16>,
    %cst_50 = arith.constant 0.000000e+00 : bf16
    %45 = vector.broadcast %cst_50 : bf16 to vector<18x1x128xbf16>
    %c0_51 = arith.constant 0 : index
    %c0_52 = arith.constant 0 : index
    %c15 = arith.constant 15 : index
    %c0_53 = arith.constant 0 : index
    %46 = vector.load %arg5[%c0_51, %c0_52, %c15, %c0_53] : memref<1x18x33x128xbf16, #tpu.memory_space<vmem>>, vector<1x18x1x128xbf16>
    %47 = vector.shape_cast %46 : vector<1x18x1x128xbf16> to vector<18x1x128xbf16>
    %48 = vector.shape_cast %45 : vector<18x1x128xbf16> to vector<1x18x1x128xbf16>
    tpu.vector_store %arg5[%c0_51, %c0_52, %c15, %c0_53], %48 {strides = array<i32>} : memref<1x18x33x128xbf16, #tpu.memory_space<vmem>>, vector<1x18x1x128xbf16>,
    %c0_54 = arith.constant 0 : index
    %c0_55 = arith.constant 0 : index
    %c32 = arith.constant 32 : index
    %c0_56 = arith.constant 0 : index
    %49 = vector.load %arg5[%c0_54, %c0_55, %c32, %c0_56] : memref<1x18x33x128xbf16, #tpu.memory_space<vmem>>, vector<1x18x1x128xbf16>
    %50 = vector.shape_cast %49 : vector<1x18x1x128xbf16> to vector<18x1x128xbf16>
    %51 = vector.shape_cast %45 : vector<18x1x128xbf16> to vector<1x18x1x128xbf16>
    tpu.vector_store %arg5[%c0_54, %c0_55, %c32, %c0_56], %51 {strides = array<i32>} : memref<1x18x33x128xbf16, #tpu.memory_space<vmem>>, vector<1x18x1x128xbf16>,
    %cst_57 = arith.constant 0.000000e+00 : bf16
    %52 = vector.broadcast %cst_57 : bf16 to vector<1x18x128xbf16>
    %c0_58 = arith.constant 0 : index
    %c0_59 = arith.constant 0 : index
    %c15_60 = arith.constant 15 : index
    %c0_61 = arith.constant 0 : index
    %53 = vector.load %arg5[%c0_58, %c0_59, %c15_60, %c0_61] : memref<1x18x33x128xbf16, #tpu.memory_space<vmem>>, vector<1x1x18x128xbf16>
    %54 = vector.shape_cast %53 : vector<1x1x18x128xbf16> to vector<1x18x128xbf16>
    %55 = vector.shape_cast %52 : vector<1x18x128xbf16> to vector<1x1x18x128xbf16>
    tpu.vector_store %arg5[%c0_58, %c0_59, %c15_60, %c0_61], %55 {strides = array<i32>} : memref<1x18x33x128xbf16, #tpu.memory_space<vmem>>, vector<1x1x18x128xbf16>,
    %c0_62 = arith.constant 0 : index
    %c17 = arith.constant 17 : index
    %c15_63 = arith.constant 15 : index
    %c0_64 = arith.constant 0 : index
    %56 = vector.load %arg5[%c0_62, %c17, %c15_63, %c0_64] : memref<1x18x33x128xbf16, #tpu.memory_space<vmem>>, vector<1x1x18x128xbf16>
    %57 = vector.shape_cast %56 : vector<1x1x18x128xbf16> to vector<1x18x128xbf16>
    %58 = vector.shape_cast %52 : vector<1x18x128xbf16> to vector<1x1x18x128xbf16>
    tpu.vector_store %arg5[%c0_62, %c17, %c15_63, %c0_64], %58 {strides = array<i32>} : memref<1x18x33x128xbf16, #tpu.memory_space<vmem>>, vector<1x1x18x128xbf16>,
    return
  }
  func.func @transform_0(%arg0: i32, %arg1: i32) -> (i32, i32, i32, i32) {
    %c0_i32 = arith.constant 0 : i32
    %c0_i32_0 = arith.constant 0 : i32
    %c0_i32_1 = arith.constant 0 : i32
    %c0_i32_2 = arith.constant 0 : i32
    return %arg1, %c0_i32, %c0_i32_0, %c0_i32_1 : i32, i32, i32, i32
  }
  func.func @transform_1(%arg0: i32, %arg1: i32) -> (i32, i32, i32) {
    %c0_i32 = arith.constant 0 : i32
    %c0_i32_0 = arith.constant 0 : i32
    %c0_i32_1 = arith.constant 0 : i32
    return %c0_i32, %c0_i32_0, %arg0 : i32, i32, i32
  }
  func.func @transform_2(%arg0: i32, %arg1: i32) -> (i32, i32) {
    %c0_i32 = arith.constant 0 : i32
    %c0_i32_0 = arith.constant 0 : i32
    return %c0_i32, %arg0 : i32, i32
  }
  func.func @transform_3(%arg0: i32, %arg1: i32) -> (i32, i32, i32, i32) {
    %c0_i32 = arith.constant 0 : i32
    %c0_i32_0 = arith.constant 0 : i32
    %c0_i32_1 = arith.constant 0 : i32
    return %arg1, %c0_i32, %c0_i32_0, %arg0 : i32, i32, i32, i32
  }
}

module attributes {stable_mosaic.version = 11 : i64} {
  func.func @_conv_bn_kernel(%arg0: i32, %arg1: i32, %arg2: memref<1x18x18x128xbf16, #tpu.memory_space<vmem>>, %arg3: memref<1x128x128xbf16, #tpu.memory_space<vmem>>, %arg4: memref<1x128xf32, #tpu.memory_space<vmem>>, %arg5: memref<1x256x128xbf16, #tpu.memory_space<vmem>>) attributes {dimension_semantics = [#tpu.dimension_semantics<parallel>, #tpu.dimension_semantics<parallel>], iteration_bounds = array<i64: 2, 1>, scalar_prefetch = 0 : i64, scratch_operands = 0 : i64, tpu.core_type = #tpu.core_type<tc>, window_params = [{transform_indices = @transform_0, window_bounds = array<i64: 1, 18, 18, 128>}, {transform_indices = @transform_1, window_bounds = array<i64: 1, 128, 128>}, {transform_indices = @transform_2, window_bounds = array<i64: 1, 128>}, {transform_indices = @transform_3, window_bounds = array<i64: 1, 256, 128>}]} {
    %c0 = arith.constant 0 : index
    %c1 = arith.constant 1 : index
    %c1_0 = arith.constant 1 : index
    %c0_1 = arith.constant 0 : index
    %0 = vector.load %arg2[%c0, %c1, %c1_0, %c0_1] : memref<1x18x18x128xbf16, #tpu.memory_space<vmem>>, vector<1x16x16x128xbf16>
    %1 = vector.shape_cast %0 : vector<1x16x16x128xbf16> to vector<16x16x128xbf16>
    %2 = vector.shape_cast %1 : vector<16x16x128xbf16> to vector<256x128xbf16>
    %c0_2 = arith.constant 0 : index
    %c0_3 = arith.constant 0 : index
    %c0_4 = arith.constant 0 : index
    %3 = vector.load %arg3[%c0_2, %c0_3, %c0_4] : memref<1x128x128xbf16, #tpu.memory_space<vmem>>, vector<1x128x128xbf16>
    %4 = vector.shape_cast %3 : vector<1x128x128xbf16> to vector<128x128xbf16>
    %cst = arith.constant dense<0.000000e+00> : vector<256x128xf32>
    %5 = tpu.matmul %2, %4, %cst {dimension_numbers = #tpu.dot_dimension_numbers<[1], [0], [0], [1], [0, 0, 1, 1], [], []>} : vector<256x128xbf16>, vector<128x128xbf16>, vector<256x128xf32> -> vector<256x128xf32>
    %c0_5 = arith.constant 0 : index
    %c0_6 = arith.constant 0 : index
    %6 = vector.load %arg4[%c0_5, %c0_6] : memref<1x128xf32, #tpu.memory_space<vmem>>, vector<1x128xf32>
    %7 = vector.broadcast %6 : vector<1x128xf32> to vector<256x128xf32>
    %8 = arith.addf %5, %7 : vector<256x128xf32>
    %9 = arith.truncf %8 : vector<256x128xf32> to vector<256x128xbf16>
    %c0_7 = arith.constant 0 : index
    %c0_8 = arith.constant 0 : index
    %c0_9 = arith.constant 0 : index
    %10 = vector.load %arg5[%c0_7, %c0_8, %c0_9] : memref<1x256x128xbf16, #tpu.memory_space<vmem>>, vector<1x256x128xbf16>
    %11 = vector.shape_cast %10 : vector<1x256x128xbf16> to vector<256x128xbf16>
    %12 = vector.shape_cast %9 : vector<256x128xbf16> to vector<1x256x128xbf16>
    tpu.vector_store %arg5[%c0_7, %c0_8, %c0_9], %12 {strides = array<i32>} : memref<1x256x128xbf16, #tpu.memory_space<vmem>>, vector<1x256x128xbf16>,
    return
  }
  func.func @transform_0(%arg0: i32, %arg1: i32) -> (i32, i32, i32, i32) {
    %c0_i32 = arith.constant 0 : i32
    %c0_i32_0 = arith.constant 0 : i32
    %c0_i32_1 = arith.constant 0 : i32
    %c0_i32_2 = arith.constant 0 : i32
    return %arg0, %c0_i32, %c0_i32_0, %c0_i32_1 : i32, i32, i32, i32
  }
  func.func @transform_1(%arg0: i32, %arg1: i32) -> (i32, i32, i32) {
    %c0_i32 = arith.constant 0 : i32
    %c0_i32_0 = arith.constant 0 : i32
    %c0_i32_1 = arith.constant 0 : i32
    return %c0_i32, %c0_i32_0, %arg1 : i32, i32, i32
  }
  func.func @transform_2(%arg0: i32, %arg1: i32) -> (i32, i32) {
    %c0_i32 = arith.constant 0 : i32
    %c0_i32_0 = arith.constant 0 : i32
    return %c0_i32, %arg1 : i32, i32
  }
  func.func @transform_3(%arg0: i32, %arg1: i32) -> (i32, i32, i32) {
    %c0_i32 = arith.constant 0 : i32
    %c0_i32_0 = arith.constant 0 : i32
    return %arg0, %c0_i32, %arg1 : i32, i32, i32
  }
}

module attributes {stable_mosaic.version = 11 : i64} {
  func.func @_conv_bn_kernel(%arg0: i32, %arg1: i32, %arg2: memref<1x18x33x128xbf16, #tpu.memory_space<vmem>>, %arg3: memref<3x384x128xbf16, #tpu.memory_space<vmem>>, %arg4: memref<1x128xf32, #tpu.memory_space<vmem>>, %arg5: memref<1x256x128xbf16, #tpu.memory_space<vmem>>, %arg6: memref<1x256x128xf32, #tpu.memory_space<vmem>>) attributes {dimension_semantics = [#tpu.dimension_semantics<parallel>, #tpu.dimension_semantics<parallel>], iteration_bounds = array<i64: 1, 2>, scalar_prefetch = 0 : i64, scratch_operands = 0 : i64, tpu.core_type = #tpu.core_type<tc>, window_params = [{transform_indices = @transform_0, window_bounds = array<i64: 1, 18, 33, 128>}, {transform_indices = @transform_1, window_bounds = array<i64: 3, 384, 128>}, {transform_indices = @transform_2, window_bounds = array<i64: 1, 128>}, {transform_indices = @transform_3, window_bounds = array<i64: 1, 256, 128>}, {transform_indices = @transform_4, window_bounds = array<i64: 1, 256, 128>}]} {
    %c0 = arith.constant 0 : index
    %c0_0 = arith.constant 0 : index
    %c15 = arith.constant 15 : index
    %c0_1 = arith.constant 0 : index
    %0 = vector.load %arg2[%c0, %c0_0, %c15, %c0_1] : memref<1x18x33x128xbf16, #tpu.memory_space<vmem>>, vector<1x16x16x128xbf16>
    %1 = vector.shape_cast %0 : vector<1x16x16x128xbf16> to vector<16x16x128xbf16>
    %c0_2 = arith.constant 0 : index
    %c0_3 = arith.constant 0 : index
    %c16 = arith.constant 16 : index
    %c0_4 = arith.constant 0 : index
    %2 = vector.load %arg2[%c0_2, %c0_3, %c16, %c0_4] : memref<1x18x33x128xbf16, #tpu.memory_space<vmem>>, vector<1x16x16x128xbf16>
    %3 = vector.shape_cast %2 : vector<1x16x16x128xbf16> to vector<16x16x128xbf16>
    %c0_5 = arith.constant 0 : index
    %c0_6 = arith.constant 0 : index
    %c17 = arith.constant 17 : index
    %c0_7 = arith.constant 0 : index
    %4 = vector.load %arg2[%c0_5, %c0_6, %c17, %c0_7] : memref<1x18x33x128xbf16, #tpu.memory_space<vmem>>, vector<1x16x16x128xbf16>
    %5 = vector.shape_cast %4 : vector<1x16x16x128xbf16> to vector<16x16x128xbf16>
    %6 = tpu.concatenate %1, %3, %5 in 2 : vector<16x16x128xbf16>, vector<16x16x128xbf16>, vector<16x16x128xbf16> -> vector<16x16x384xbf16>
    %7 = vector.shape_cast %6 : vector<16x16x384xbf16> to vector<256x384xbf16>
    %c0_8 = arith.constant 0 : index
    %c0_9 = arith.constant 0 : index
    %c0_10 = arith.constant 0 : index
    %8 = vector.load %arg3[%c0_8, %c0_9, %c0_10] : memref<3x384x128xbf16, #tpu.memory_space<vmem>>, vector<1x384x128xbf16>
    %9 = vector.shape_cast %8 : vector<1x384x128xbf16> to vector<384x128xbf16>
    %cst = arith.constant dense<0.000000e+00> : vector<256x128xf32>
    %10 = tpu.matmul %7, %9, %cst {dimension_numbers = #tpu.dot_dimension_numbers<[1], [0], [0], [1], [0, 0, 1, 1], [], []>} : vector<256x384xbf16>, vector<384x128xbf16>, vector<256x128xf32> -> vector<256x128xf32>
    %c0_11 = arith.constant 0 : index
    %c1 = arith.constant 1 : index
    %c15_12 = arith.constant 15 : index
    %c0_13 = arith.constant 0 : index
    %11 = vector.load %arg2[%c0_11, %c1, %c15_12, %c0_13] : memref<1x18x33x128xbf16, #tpu.memory_space<vmem>>, vector<1x16x16x128xbf16>
    %12 = vector.shape_cast %11 : vector<1x16x16x128xbf16> to vector<16x16x128xbf16>
    %c0_14 = arith.constant 0 : index
    %c1_15 = arith.constant 1 : index
    %c16_16 = arith.constant 16 : index
    %c0_17 = arith.constant 0 : index
    %13 = vector.load %arg2[%c0_14, %c1_15, %c16_16, %c0_17] : memref<1x18x33x128xbf16, #tpu.memory_space<vmem>>, vector<1x16x16x128xbf16>
    %14 = vector.shape_cast %13 : vector<1x16x16x128xbf16> to vector<16x16x128xbf16>
    %c0_18 = arith.constant 0 : index
    %c1_19 = arith.constant 1 : index
    %c17_20 = arith.constant 17 : index
    %c0_21 = arith.constant 0 : index
    %15 = vector.load %arg2[%c0_18, %c1_19, %c17_20, %c0_21] : memref<1x18x33x128xbf16, #tpu.memory_space<vmem>>, vector<1x16x16x128xbf16>
    %16 = vector.shape_cast %15 : vector<1x16x16x128xbf16> to vector<16x16x128xbf16>
    %17 = tpu.concatenate %12, %14, %16 in 2 : vector<16x16x128xbf16>, vector<16x16x128xbf16>, vector<16x16x128xbf16> -> vector<16x16x384xbf16>
    %18 = vector.shape_cast %17 : vector<16x16x384xbf16> to vector<256x384xbf16>
    %c1_22 = arith.constant 1 : index
    %c0_23 = arith.constant 0 : index
    %c0_24 = arith.constant 0 : index
    %19 = vector.load %arg3[%c1_22, %c0_23, %c0_24] : memref<3x384x128xbf16, #tpu.memory_space<vmem>>, vector<1x384x128xbf16>
    %20 = vector.shape_cast %19 : vector<1x384x128xbf16> to vector<384x128xbf16>
    %cst_25 = arith.constant dense<0.000000e+00> : vector<256x128xf32>
    %21 = tpu.matmul %18, %20, %cst_25 {dimension_numbers = #tpu.dot_dimension_numbers<[1], [0], [0], [1], [0, 0, 1, 1], [], []>} : vector<256x384xbf16>, vector<384x128xbf16>, vector<256x128xf32> -> vector<256x128xf32>
    %22 = arith.addf %10, %21 : vector<256x128xf32>
    %c0_26 = arith.constant 0 : index
    %c2 = arith.constant 2 : index
    %c15_27 = arith.constant 15 : index
    %c0_28 = arith.constant 0 : index
    %23 = vector.load %arg2[%c0_26, %c2, %c15_27, %c0_28] : memref<1x18x33x128xbf16, #tpu.memory_space<vmem>>, vector<1x16x16x128xbf16>
    %24 = vector.shape_cast %23 : vector<1x16x16x128xbf16> to vector<16x16x128xbf16>
    %c0_29 = arith.constant 0 : index
    %c2_30 = arith.constant 2 : index
    %c16_31 = arith.constant 16 : index
    %c0_32 = arith.constant 0 : index
    %25 = vector.load %arg2[%c0_29, %c2_30, %c16_31, %c0_32] : memref<1x18x33x128xbf16, #tpu.memory_space<vmem>>, vector<1x16x16x128xbf16>
    %26 = vector.shape_cast %25 : vector<1x16x16x128xbf16> to vector<16x16x128xbf16>
    %c0_33 = arith.constant 0 : index
    %c2_34 = arith.constant 2 : index
    %c17_35 = arith.constant 17 : index
    %c0_36 = arith.constant 0 : index
    %27 = vector.load %arg2[%c0_33, %c2_34, %c17_35, %c0_36] : memref<1x18x33x128xbf16, #tpu.memory_space<vmem>>, vector<1x16x16x128xbf16>
    %28 = vector.shape_cast %27 : vector<1x16x16x128xbf16> to vector<16x16x128xbf16>
    %29 = tpu.concatenate %24, %26, %28 in 2 : vector<16x16x128xbf16>, vector<16x16x128xbf16>, vector<16x16x128xbf16> -> vector<16x16x384xbf16>
    %30 = vector.shape_cast %29 : vector<16x16x384xbf16> to vector<256x384xbf16>
    %c2_37 = arith.constant 2 : index
    %c0_38 = arith.constant 0 : index
    %c0_39 = arith.constant 0 : index
    %31 = vector.load %arg3[%c2_37, %c0_38, %c0_39] : memref<3x384x128xbf16, #tpu.memory_space<vmem>>, vector<1x384x128xbf16>
    %32 = vector.shape_cast %31 : vector<1x384x128xbf16> to vector<384x128xbf16>
    %cst_40 = arith.constant dense<0.000000e+00> : vector<256x128xf32>
    %33 = tpu.matmul %30, %32, %cst_40 {dimension_numbers = #tpu.dot_dimension_numbers<[1], [0], [0], [1], [0, 0, 1, 1], [], []>} : vector<256x384xbf16>, vector<384x128xbf16>, vector<256x128xf32> -> vector<256x128xf32>
    %34 = arith.addf %22, %33 : vector<256x128xf32>
    %c0_41 = arith.constant 0 : index
    %c0_42 = arith.constant 0 : index
    %35 = vector.load %arg4[%c0_41, %c0_42] : memref<1x128xf32, #tpu.memory_space<vmem>>, vector<1x128xf32>
    %36 = vector.broadcast %35 : vector<1x128xf32> to vector<256x128xf32>
    %37 = arith.addf %34, %36 : vector<256x128xf32>
    %c0_43 = arith.constant 0 : index
    %c0_44 = arith.constant 0 : index
    %c0_45 = arith.constant 0 : index
    %38 = vector.load %arg5[%c0_43, %c0_44, %c0_45] : memref<1x256x128xbf16, #tpu.memory_space<vmem>>, vector<1x256x128xbf16>
    %39 = vector.shape_cast %38 : vector<1x256x128xbf16> to vector<256x128xbf16>
    %40 = arith.extf %39 : vector<256x128xbf16> to vector<256x128xf32>
    %41 = arith.addf %37, %40 : vector<256x128xf32>
    %cst_46 = arith.constant 0.000000e+00 : f32
    %42 = vector.broadcast %cst_46 : f32 to vector<256x128xf32>
    %43 = arith.maximumf %41, %42 : vector<256x128xf32>
    %c0_47 = arith.constant 0 : index
    %c0_48 = arith.constant 0 : index
    %c0_49 = arith.constant 0 : index
    %44 = vector.load %arg6[%c0_47, %c0_48, %c0_49] : memref<1x256x128xf32, #tpu.memory_space<vmem>>, vector<1x256x128xf32>
    %45 = vector.shape_cast %44 : vector<1x256x128xf32> to vector<256x128xf32>
    %46 = vector.shape_cast %43 : vector<256x128xf32> to vector<1x256x128xf32>
    tpu.vector_store %arg6[%c0_47, %c0_48, %c0_49], %46 {strides = array<i32>} : memref<1x256x128xf32, #tpu.memory_space<vmem>>, vector<1x256x128xf32>,
    return
  }
  func.func @transform_0(%arg0: i32, %arg1: i32) -> (i32, i32, i32, i32) {
    %c0_i32 = arith.constant 0 : i32
    %c0_i32_0 = arith.constant 0 : i32
    %c0_i32_1 = arith.constant 0 : i32
    %c0_i32_2 = arith.constant 0 : i32
    return %arg1, %c0_i32, %c0_i32_0, %c0_i32_1 : i32, i32, i32, i32
  }
  func.func @transform_1(%arg0: i32, %arg1: i32) -> (i32, i32, i32) {
    %c0_i32 = arith.constant 0 : i32
    %c0_i32_0 = arith.constant 0 : i32
    %c0_i32_1 = arith.constant 0 : i32
    return %c0_i32, %c0_i32_0, %arg0 : i32, i32, i32
  }
  func.func @transform_2(%arg0: i32, %arg1: i32) -> (i32, i32) {
    %c0_i32 = arith.constant 0 : i32
    %c0_i32_0 = arith.constant 0 : i32
    return %c0_i32, %arg0 : i32, i32
  }
  func.func @transform_3(%arg0: i32, %arg1: i32) -> (i32, i32, i32) {
    %c0_i32 = arith.constant 0 : i32
    %c0_i32_0 = arith.constant 0 : i32
    return %arg1, %c0_i32, %arg0 : i32, i32, i32
  }
  func.func @transform_4(%arg0: i32, %arg1: i32) -> (i32, i32, i32) {
    %c0_i32 = arith.constant 0 : i32
    %c0_i32_0 = arith.constant 0 : i32
    return %arg1, %c0_i32, %arg0 : i32, i32, i32
  }
}

</mosaic_0001>

<llo_original>
// kernel: basic_block_forward.4
$region0: #{basic_block_forward.4}
  #allocation0 [shape = 'u32[]', space=smem, size = 0x4, offset = 0x4, fixed_abs, tag = 'smem constant byte address 0x4 - core index']
  #allocation1 [shape = 'u32[144,128]{1,0:T(1,128)}', space=vmem, size = 0x12000, scoped, tag = 'internal scratch']
  %s0 = inlined_call_operand.vmem [shape: bf16[2,18,18,128], index: 0, kind: input, shape index: {}]
  %s1 = inlined_call_operand.vmem [shape: bf16[1,128,128], index: 1, kind: input, shape index: {}]
  %s2 = inlined_call_operand.vmem [shape: f32[1,128], index: 2, kind: input, shape index: {}]
  %s3 = inlined_call_operand.vmem [shape: bf16[2,256,128], index: 3, kind: output, shape index: {}]
  %s4 = sld [smem:[#allocation0]]
  $region45: #{basic_block_forward.4} parent=0
    _
  %s6 = ssub.s32 1, %s4
  %s7 = scalar_select 0, %s6, %s4
  loop: start=0, step=1, limit=4
  $region2: #{basic_block_forward.4} parent=0 // loop_pre_header
    _
  $region3: #{basic_block_forward.4} parent=0 // loop_header
    %s9 = sphi 0, %s13
    %p10 = scmp.ge.s32.totalorder %s9, 4
    %s16 = sphi 0, %s28
    %s17 = sphi 0, %s24
    %s18 = sphi 0, %s16
    %s19 = sphi 0, %s17
    %s20 = sphi 0, %s18
    %s21 = sphi 0, %s19
    %s31 = sphi 0, %s33
    %s34 = sphi 0, %s31
    %s35 = sphi 0, %s34
    %s51 = sphi 0, %s35
    %s57 = sphi 0, %s59
    %s60 = sphi 0, %s57
    %s61 = sphi 0, %s60
    %s77 = sphi 0, %s61
    %s83 = sphi 0, %s85
    %s86 = sphi 0, %s83
    %s87 = sphi 0, %s86
    %s103 = sphi 0, %s87
    %s111 = sphi 0, %s113
    %s114 = sphi 0, %s111
    %s115 = sphi 0, %s114
    %s131 = sphi 0, %s115
  $region4: #{basic_block_forward.4} parent=0 // loop_header_branch
    %12 = sbr.rel (%p10) target = $region8
  $region5: #{basic_block_forward.4} parent=0 // loop_body
    %s14 = ssub.s32 %s9, 1
    %s15 = ssub.s32 %s9, 2
    %s22 = sadd.s32 1, %s17
    %p23 = scmp.ge.s32.totalorder %s22, 1
    %s24 = scalar_select %p23, 0, %s22
    %s25 = sadd.s32 1, %s16
    %s26 = scalar_select %p23, %s25, %s16
    %p27 = scmp.ge.s32.totalorder %s26, 2
    %s28 = scalar_select %p27, 0, %s26
    %s29 = ssub.s32 %s16, %s28
    %p30 = scmp.eq.s32.totalorder %s29, 0
    %s32 = sadd.s32 %s31, 1
    %s33 = scalar_select %p30, %s31, %s32
    %p36 = pneg %p30
    %p37 = scmp.eq.s32.totalorder %s9, 1
    %p38 = por %p36, %p37
    %p39 = scmp.ne.s32.totalorder %s31, %s34
    %p40 = scmp.eq.s32.totalorder %s9, 0
    %p41 = por %p39, %p40
    %p42 = scmp.ne.s32.totalorder %s31, %s34
    %p43 = scmp.eq.s32.totalorder %s14, 1
    %p44 = por %p42, %p43
    %p45 = scmp.ne.s32.totalorder %s34, %s35
    %p46 = scmp.eq.s32.totalorder %s14, 0
    %p47 = por %p45, %p46
    %p48 = scmp.ne.s32.totalorder %s34, %s35
    %p49 = scmp.eq.s32.totalorder %s15, 1
    %p50 = por %p48, %p49
    %p52 = scmp.ne.s32.totalorder %s35, %s51
    %p53 = scmp.eq.s32.totalorder %s15, 0
    %p54 = por %p52, %p53
    %s55 = ssub.s32 %s17, %s24
    %p56 = scmp.eq.s32.totalorder %s55, 0
    %s58 = sadd.s32 %s57, 1
    %s59 = scalar_select %p56, %s57, %s58
    %p62 = pneg %p56
    %p63 = scmp.eq.s32.totalorder %s9, 1
    %p64 = por %p62, %p63
    %p65 = scmp.ne.s32.totalorder %s57, %s60
    %p66 = scmp.eq.s32.totalorder %s9, 0
    %p67 = por %p65, %p66
    %p68 = scmp.ne.s32.totalorder %s57, %s60
    %p69 = scmp.eq.s32.totalorder %s14, 1
    %p70 = por %p68, %p69
    %p71 = scmp.ne.s32.totalorder %s60, %s61
    %p72 = scmp.eq.s32.totalorder %s14, 0
    %p73 = por %p71, %p72
    %p74 = scmp.ne.s32.totalorder %s60, %s61
    %p75 = scmp.eq.s32.totalorder %s15, 1
    %p76 = por %p74, %p75
    %p78 = scmp.ne.s32.totalorder %s61, %s77
    %p79 = scmp.eq.s32.totalorder %s15, 0
    %p80 = por %p78, %p79
    %s81 = ssub.s32 %s17, %s24
    %p82 = scmp.eq.s32.totalorder %s81, 0
    %s84 = sadd.s32 %s83, 1
    %s85 = scalar_select %p82, %s83, %s84
    %p88 = pneg %p82
    %p89 = scmp.eq.s32.totalorder %s9, 1
    %p90 = por %p88, %p89
    %p91 = scmp.ne.s32.totalorder %s83, %s86
    %p92 = scmp.eq.s32.totalorder %s9, 0
    %p93 = por %p91, %p92
    %p94 = scmp.ne.s32.totalorder %s83, %s86
    %p95 = scmp.eq.s32.totalorder %s14, 1
    %p96 = por %p94, %p95
    %p97 = scmp.ne.s32.totalorder %s86, %s87
    %p98 = scmp.eq.s32.totalorder %s14, 0
    %p99 = por %p97, %p98
    %p100 = scmp.ne.s32.totalorder %s86, %s87
    %p101 = scmp.eq.s32.totalorder %s15, 1
    %p102 = por %p100, %p101
    %p104 = scmp.ne.s32.totalorder %s87, %s103
    %p105 = scmp.eq.s32.totalorder %s15, 0
    %p106 = por %p104, %p105
    %s107 = ssub.s32 %s16, %s28
    %s108 = ssub.s32 %s17, %s24
    %s109 = sor.u32 %s107, %s108
    %p110 = scmp.eq.s32.totalorder %s109, 0
    %s112 = sadd.s32 %s111, 1
    %s113 = scalar_select %p110, %s111, %s112
    %p116 = pneg %p110
    %p117 = scmp.eq.s32.totalorder %s9, 1
    %p118 = por %p116, %p117
    %p119 = scmp.ne.s32.totalorder %s111, %s114
    %p120 = scmp.eq.s32.totalorder %s9, 0
    %p121 = por %p119, %p120
    %p122 = scmp.ne.s32.totalorder %s111, %s114
    %p123 = scmp.eq.s32.totalorder %s14, 1
    %p124 = por %p122, %p123
    %p125 = scmp.ne.s32.totalorder %s114, %s115
    %p126 = scmp.eq.s32.totalorder %s14, 0
    %p127 = por %p125, %p126
    %p128 = scmp.ne.s32.totalorder %s114, %s115
    %p129 = scmp.eq.s32.totalorder %s15, 1
    %p130 = por %p128, %p129
    %p132 = scmp.ne.s32.totalorder %s115, %s131
    %p133 = scmp.eq.s32.totalorder %s15, 0
    %p134 = por %p132, %p133
    %p135 = scmp.le.s32.totalorder 1, %s9
    %p136 = scmp.lt.s32.totalorder %s9, 3
    %p137 = pnand %p135, %p136
    %p138 = pneg %p137
    // Predicated region
    $region9: #{basic_block_forward.4} parent=5 // pred_check
      _
    $region10: #{basic_block_forward.4} parent=5 // pred_check_branch
      %140 = sbr.rel (%p137) target = $region12
    $region11: #{basic_block_forward.4} parent=5 // pred_region
      %s141 = ssub.s32 %s9, 1
      // Predicated region
      $region13: #{basic_block_forward.4} parent=11 // pred_check
        %p142 = pneg %p73
      $region14: #{basic_block_forward.4} parent=11 // pred_check_branch
        %144 = sbr.rel (%p142) target = $region16
      $region15: #{basic_block_forward.4} parent=11 // pred_region
        %p145 = scmp.lt.s32.totalorder %s19, 0
        %s146 = scalar_select %p145, %s19, 0
        %s147 = smul.addr %s146, 4
        %s148 = scalar_lea.vmem %s1, %s147
      $region16: #{basic_block_forward.4} parent=11 // pred_fallthru
        _
      // Predicated region
      $region17: #{basic_block_forward.4} parent=11 // pred_check
        %p149 = pneg %p99
      $region18: #{basic_block_forward.4} parent=11 // pred_check_branch
        %151 = sbr.rel (%p149) target = $region20
      $region19: #{basic_block_forward.4} parent=11 // pred_region
        %p152 = scmp.lt.s32.totalorder %s19, 0
        %s153 = scalar_select %p152, %s19, 0
        %s154 = scalar_lea.vmem %s2, %s153
      $region20: #{basic_block_forward.4} parent=11 // pred_fallthru
        _
    $region12: #{basic_block_forward.4} parent=5 // pred_fallthru
      _
    %p155 = scmp.lt.s32.totalorder %s9, 2
    // Predicated region
    $region21: #{basic_block_forward.4} parent=5 // pred_check
      %p156 = pneg %p155
    $region22: #{basic_block_forward.4} parent=5 // pred_check_branch
      %158 = sbr.rel (%p156) target = $region24
    $region23: #{basic_block_forward.4} parent=5 // pred_region
      // Predicated region
      $region25: #{basic_block_forward.4} parent=23 // pred_check
        %p159 = pneg %p41
      $region26: #{basic_block_forward.4} parent=23 // pred_check_branch
        %161 = sbr.rel (%p159) target = $region28
      $region27: #{basic_block_forward.4} parent=23 // pred_region
        %p162 = scmp.lt.s32.totalorder %s16, 1
        %s163 = scalar_select %p162, %s16, 1
        %s164 = smul.addr %s163, 54
        %s165 = smul.addr %s164, 4
        %s166 = scalar_lea.vmem %s0, %s165
      $region28: #{basic_block_forward.4} parent=23 // pred_fallthru
        _
    $region24: #{basic_block_forward.4} parent=5 // pred_fallthru
      _
    %p167 = scmp.le.s32.totalorder 1, %s9
    %p168 = scmp.lt.s32.totalorder %s9, 3
    %p169 = pnand %p167, %p168
    %p170 = pneg %p169
    // Predicated region
    $region29: #{basic_block_forward.4} parent=5 // pred_check
      _
    $region30: #{basic_block_forward.4} parent=5 // pred_check_branch
      %172 = sbr.rel (%p169) target = $region32
    $region31: #{basic_block_forward.4} parent=5 // pred_region
      %s173 = ssub.s32 %s9, 1
      %p174 = scmp.lt.s32.totalorder %s18, 1
      %s175 = scalar_select %p174, %s18, 1
      %s176 = smul.addr %s175, 54
      %s177 = smul.addr %s176, 4
      %s178 = scalar_lea.vmem %s0, %s177
      %p179 = pneg %p47
      %p180 = pneg %p44
      %p181 = scmp.lt.s32.totalorder %s19, 0
      %s182 = scalar_select %p181, %s19, 0
      %s183 = smul.addr %s182, 4
      %s184 = scalar_lea.vmem %s1, %s183
      %p185 = pneg %p73
      %p186 = pneg %p70
      %p187 = scmp.lt.s32.totalorder %s19, 0
      %s188 = scalar_select %p187, %s19, 0
      %s189 = scalar_lea.vmem %s2, %s188
      %p190 = pneg %p99
      %p191 = pneg %p96
      %p192 = pneg %p127
      %p193 = pneg %p124
      %p194 = scmp.lt.s32.totalorder %s18, 1
      %s195 = scalar_select %p194, %s18, 1
      %p196 = scmp.lt.s32.totalorder %s19, 0
      %s197 = scalar_select %p196, %s19, 0
      %s198 = smul.addr %s195, 32
      %s199 = sadd.s32 %s197, %s198
      %s200 = smul.addr %s199, 4
      %s201 = scalar_lea.vmem %s3, %s200
      %p202 = scmp.lt.s32.totalorder %s18, 1
      %s203 = scalar_select %p202, %s18, 1
      %s204 = smul.addr %s203, 54
      %s205 = smul.addr %s204, 4
      %s206 = scalar_lea.vmem %s0, %s205
      %p207 = scmp.lt.s32.totalorder %s19, 0
      %s208 = scalar_select %p207, %s19, 0
      %s209 = smul.addr %s208, 4
      %s210 = scalar_lea.vmem %s1, %s209
      %p211 = scmp.lt.s32.totalorder %s19, 0
      %s212 = scalar_select %p211, %s19, 0
      %s213 = scalar_lea.vmem %s2, %s212
      %p214 = scmp.lt.s32.totalorder %s18, 1
      %s215 = scalar_select %p214, %s18, 1
      %p216 = scmp.lt.s32.totalorder %s19, 0
      %s217 = scalar_select %p216, %s19, 0
      %s218 = smul.addr %s215, 32
      %s219 = sadd.s32 %s217, %s218
      %s220 = smul.addr %s219, 4
      %s221 = scalar_lea.vmem %s3, %s220
      %s223 = scalar_lea.vmem %s206, 12
      %v224 = vld [vmem:[%s223] sm:$0xf]
      %v225 = vld [vmem:[%s223 + $0x4] sm:$0xf]
      %v226 = vld [vmem:[%s223 + $0x8] sm:$0x1]
      %v227 = vld [vmem:[%s223 + $0xc] sm:$0xf]
      %v228 = vld [vmem:[%s223 + $0x10] sm:$0xf]
      %v229 = vld [vmem:[%s223 + $0x14] sm:$0x1]
      %v230 = vld [vmem:[%s223 + $0x18] sm:$0xf]
      %v231 = vld [vmem:[%s223 + $0x1c] sm:$0xf]
      %v232 = vld [vmem:[%s223 + $0x20] sm:$0x1]
      %v233 = vld [vmem:[%s223 + $0x24] sm:$0xf]
      %v234 = vld [vmem:[%s223 + $0x28] sm:$0xf]
      %v235 = vld [vmem:[%s223 + $0x2c] sm:$0x1]
      %v236 = vld [vmem:[%s223 + $0x30] sm:$0xf]
      %v237 = vld [vmem:[%s223 + $0x34] sm:$0xf]
      %v238 = vld [vmem:[%s223 + $0x38] sm:$0x1]
      %v239 = vld [vmem:[%s223 + $0x3c] sm:$0xf]
      %v240 = vld [vmem:[%s223 + $0x40] sm:$0xf]
      %v241 = vld [vmem:[%s223 + $0x44] sm:$0x1]
      %v242 = vld [vmem:[%s223 + $0x48] sm:$0xf]
      %v243 = vld [vmem:[%s223 + $0x4c] sm:$0xf]
      %v244 = vld [vmem:[%s223 + $0x50] sm:$0x1]
      %v245 = vld [vmem:[%s223 + $0x54] sm:$0xf]
      %v246 = vld [vmem:[%s223 + $0x58] sm:$0xf]
      %v247 = vld [vmem:[%s223 + $0x5c] sm:$0x1]
      %v248 = vld [vmem:[%s223 + $0x60] sm:$0xf]
      %v249 = vld [vmem:[%s223 + $0x64] sm:$0xf]
      %v250 = vld [vmem:[%s223 + $0x68] sm:$0x1]
      %v251 = vld [vmem:[%s223 + $0x6c] sm:$0xf]
      %v252 = vld [vmem:[%s223 + $0x70] sm:$0xf]
      %v253 = vld [vmem:[%s223 + $0x74] sm:$0x1]
      %v254 = vld [vmem:[%s223 + $0x78] sm:$0xf]
      %v255 = vld [vmem:[%s223 + $0x7c] sm:$0xf]
      %v256 = vld [vmem:[%s223 + $0x80] sm:$0x1]
      %v257 = vld [vmem:[%s223 + $0x84] sm:$0xf]
      %v258 = vld [vmem:[%s223 + $0x88] sm:$0xf]
      %v259 = vld [vmem:[%s223 + $0x8c] sm:$0x1]
      %v260 = vld [vmem:[%s223 + $0x90] sm:$0xf]
      %v261 = vld [vmem:[%s223 + $0x94] sm:$0xf]
      %v262 = vld [vmem:[%s223 + $0x98] sm:$0x1]
      %v263 = vld [vmem:[%s223 + $0x9c] sm:$0xf]
      %v264 = vld [vmem:[%s223 + $0xa0] sm:$0xf]
      %v265 = vld [vmem:[%s223 + $0xa4] sm:$0x1]
      %v266 = vld [vmem:[%s223 + $0xa8] sm:$0xf]
      %v267 = vld [vmem:[%s223 + $0xac] sm:$0xf]
      %v268 = vld [vmem:[%s223 + $0xb0] sm:$0x1]
      %v269 = vld [vmem:[%s223 + $0xb4] sm:$0xf]
      %v270 = vld [vmem:[%s223 + $0xb8] sm:$0xf]
      %v271 = vld [vmem:[%s223 + $0xbc] sm:$0x1]
      %vm272 = vsmask.f32 3328
      %vm273 = vsmask.f32 7440
      %vm274 = vmor %vm272, %vm273
      %v276 = vshrl.u32 %v224, 16
      %v278 = vrot.slane %v276, 4
      %v279 = vshll.u32 %v224, 16
      %v281 = vrot.slane %v279, 5
      %v282 = vor.u32 %v278, %v281
      %v283 = vrot.slane %v282, 4
      %v285 = vshll.u32 %v225, 16
      %v287 = vrot.slane %v285, 5
      %v288 = vsel %vm274, %v283, %v287
      %v289 = vshrl.u32 %v225, 16
      %v291 = vrot.slane %v289, 4
      %v292 = vor.u32 %v291, %v287
      %v293 = vrot.slane %v292, 4
      %v295 = vshll.u32 %v226, 16
      %v297 = vrot.slane %v295, 5
      %v298 = vsel %vm274, %v293, %v297
      %v300 = vshrl.u32 %v227, 16
      %v302 = vrot.slane %v300, 4
      %v303 = vshll.u32 %v227, 16
      %v305 = vrot.slane %v303, 5
      %v306 = vor.u32 %v302, %v305
      %v307 = vrot.slane %v306, 4
      %v309 = vshll.u32 %v228, 16
      %v311 = vrot.slane %v309, 5
      %v312 = vsel %vm274, %v307, %v311
      %v313 = vshrl.u32 %v228, 16
      %v315 = vrot.slane %v313, 4
      %v316 = vor.u32 %v315, %v311
      %v317 = vrot.slane %v316, 4
      %v319 = vshll.u32 %v229, 16
      %v321 = vrot.slane %v319, 5
      %v322 = vsel %vm274, %v317, %v321
      %v324 = vshrl.u32 %v230, 16
      %v326 = vrot.slane %v324, 4
      %v327 = vshll.u32 %v230, 16
      %v329 = vrot.slane %v327, 5
      %v330 = vor.u32 %v326, %v329
      %v331 = vrot.slane %v330, 4
      %v333 = vshll.u32 %v231, 16
      %v335 = vrot.slane %v333, 5
      %v336 = vsel %vm274, %v331, %v335
      %v337 = vshrl.u32 %v231, 16
      %v339 = vrot.slane %v337, 4
      %v340 = vor.u32 %v339, %v335
      %v341 = vrot.slane %v340, 4
      %v343 = vshll.u32 %v232, 16
      %v345 = vrot.slane %v343, 5
      %v346 = vsel %vm274, %v341, %v345
      %v348 = vshrl.u32 %v233, 16
      %v350 = vrot.slane %v348, 4
      %v351 = vshll.u32 %v233, 16
      %v353 = vrot.slane %v351, 5
      %v354 = vor.u32 %v350, %v353
      %v355 = vrot.slane %v354, 4
      %v357 = vshll.u32 %v234, 16
      %v359 = vrot.slane %v357, 5
      %v360 = vsel %vm274, %v355, %v359
      %v361 = vshrl.u32 %v234, 16
      %v363 = vrot.slane %v361, 4
      %v364 = vor.u32 %v363, %v359
      %v365 = vrot.slane %v364, 4
      %v367 = vshll.u32 %v235, 16
      %v369 = vrot.slane %v367, 5
      %v370 = vsel %vm274, %v365, %v369
      %v372 = vshrl.u32 %v236, 16
      %v374 = vrot.slane %v372, 4
      %v375 = vshll.u32 %v236, 16
      %v377 = vrot.slane %v375, 5
      %v378 = vor.u32 %v374, %v377
      %v379 = vrot.slane %v378, 4
      %v381 = vshll.u32 %v237, 16
      %v383 = vrot.slane %v381, 5
      %v384 = vsel %vm274, %v379, %v383
      %v385 = vshrl.u32 %v237, 16
      %v387 = vrot.slane %v385, 4
      %v388 = vor.u32 %v387, %v383
      %v389 = vrot.slane %v388, 4
      %v391 = vshll.u32 %v238, 16
      %v393 = vrot.slane %v391, 5
      %v394 = vsel %vm274, %v389, %v393
      %v396 = vshrl.u32 %v239, 16
      %v398 = vrot.slane %v396, 4
      %v399 = vshll.u32 %v239, 16
      %v401 = vrot.slane %v399, 5
      %v402 = vor.u32 %v398, %v401
      %v403 = vrot.slane %v402, 4
      %v405 = vshll.u32 %v240, 16
      %v407 = vrot.slane %v405, 5
      %v408 = vsel %vm274, %v403, %v407
      %v409 = vshrl.u32 %v240, 16
      %v411 = vrot.slane %v409, 4
      %v412 = vor.u32 %v411, %v407
      %v413 = vrot.slane %v412, 4
      %v415 = vshll.u32 %v241, 16
      %v417 = vrot.slane %v415, 5
      %v418 = vsel %vm274, %v413, %v417
      %v420 = vshrl.u32 %v242, 16
      %v422 = vrot.slane %v420, 4
      %v423 = vshll.u32 %v242, 16
      %v425 = vrot.slane %v423, 5
      %v426 = vor.u32 %v422, %v425
      %v427 = vrot.slane %v426, 4
      %v429 = vshll.u32 %v243, 16
      %v431 = vrot.slane %v429, 5
      %v432 = vsel %vm274, %v427, %v431
      %v433 = vshrl.u32 %v243, 16
      %v435 = vrot.slane %v433, 4
      %v436 = vor.u32 %v435, %v431
      %v437 = vrot.slane %v436, 4
      %v439 = vshll.u32 %v244, 16
      %v441 = vrot.slane %v439, 5
      %v442 = vsel %vm274, %v437, %v441
      %v444 = vshrl.u32 %v245, 16
      %v446 = vrot.slane %v444, 4
      %v447 = vshll.u32 %v245, 16
      %v449 = vrot.slane %v447, 5
      %v450 = vor.u32 %v446, %v449
      %v451 = vrot.slane %v450, 4
      %v453 = vshll.u32 %v246, 16
      %v455 = vrot.slane %v453, 5
      %v456 = vsel %vm274, %v451, %v455
      %v457 = vshrl.u32 %v246, 16
      %v459 = vrot.slane %v457, 4
      %v460 = vor.u32 %v459, %v455
      %v461 = vrot.slane %v460, 4
      %v463 = vshll.u32 %v247, 16
      %v465 = vrot.slane %v463, 5
      %v466 = vsel %vm274, %v461, %v465
      %v468 = vshrl.u32 %v248, 16
      %v470 = vrot.slane %v468, 4
      %v471 = vshll.u32 %v248, 16
      %v473 = vrot.slane %v471, 5
      %v474 = vor.u32 %v470, %v473
      %v475 = vrot.slane %v474, 4
      %v477 = vshll.u32 %v249, 16
      %v479 = vrot.slane %v477, 5
      %v480 = vsel %vm274, %v475, %v479
      %v481 = vshrl.u32 %v249, 16
      %v483 = vrot.slane %v481, 4
      %v484 = vor.u32 %v483, %v479
      %v485 = vrot.slane %v484, 4
      %v487 = vshll.u32 %v250, 16
      %v489 = vrot.slane %v487, 5
      %v490 = vsel %vm274, %v485, %v489
      %v492 = vshrl.u32 %v251, 16
      %v494 = vrot.slane %v492, 4
      %v495 = vshll.u32 %v251, 16
      %v497 = vrot.slane %v495, 5
      %v498 = vor.u32 %v494, %v497
      %v499 = vrot.slane %v498, 4
      %v501 = vshll.u32 %v252, 16
      %v503 = vrot.slane %v501, 5
      %v504 = vsel %vm274, %v499, %v503
      %v505 = vshrl.u32 %v252, 16
      %v507 = vrot.slane %v505, 4
      %v508 = vor.u32 %v507, %v503
      %v509 = vrot.slane %v508, 4
      %v511 = vshll.u32 %v253, 16
      %v513 = vrot.slane %v511, 5
      %v514 = vsel %vm274, %v509, %v513
      %v516 = vshrl.u32 %v254, 16
      %v518 = vrot.slane %v516, 4
      %v519 = vshll.u32 %v254, 16
      %v521 = vrot.slane %v519, 5
      %v522 = vor.u32 %v518, %v521
      %v523 = vrot.slane %v522, 4
      %v525 = vshll.u32 %v255, 16
      %v527 = vrot.slane %v525, 5
      %v528 = vsel %vm274, %v523, %v527
      %v529 = vshrl.u32 %v255, 16
      %v531 = vrot.slane %v529, 4
      %v532 = vor.u32 %v531, %v527
      %v533 = vrot.slane %v532, 4
      %v535 = vshll.u32 %v256, 16
      %v537 = vrot.slane %v535, 5
      %v538 = vsel %vm274, %v533, %v537
      %v540 = vshrl.u32 %v257, 16
      %v542 = vrot.slane %v540, 4
      %v543 = vshll.u32 %v257, 16
      %v545 = vrot.slane %v543, 5
      %v546 = vor.u32 %v542, %v545
      %v547 = vrot.slane %v546, 4
      %v549 = vshll.u32 %v258, 16
      %v551 = vrot.slane %v549, 5
      %v552 = vsel %vm274, %v547, %v551
      %v553 = vshrl.u32 %v258, 16
      %v555 = vrot.slane %v553, 4
      %v556 = vor.u32 %v555, %v551
      %v557 = vrot.slane %v556, 4
      %v559 = vshll.u32 %v259, 16
      %v561 = vrot.slane %v559, 5
      %v562 = vsel %vm274, %v557, %v561
      %v564 = vshrl.u32 %v260, 16
      %v566 = vrot.slane %v564, 4
      %v567 = vshll.u32 %v260, 16
      %v569 = vrot.slane %v567, 5
      %v570 = vor.u32 %v566, %v569
      %v571 = vrot.slane %v570, 4
      %v573 = vshll.u32 %v261, 16
      %v575 = vrot.slane %v573, 5
      %v576 = vsel %vm274, %v571, %v575
      %v577 = vshrl.u32 %v261, 16
      %v579 = vrot.slane %v577, 4
      %v580 = vor.u32 %v579, %v575
      %v581 = vrot.slane %v580, 4
      %v583 = vshll.u32 %v262, 16
      %v585 = vrot.slane %v583, 5
      %v586 = vsel %vm274, %v581, %v585
      %v588 = vshrl.u32 %v263, 16
      %v590 = vrot.slane %v588, 4
      %v591 = vshll.u32 %v263, 16
      %v593 = vrot.slane %v591, 5
      %v594 = vor.u32 %v590, %v593
      %v595 = vrot.slane %v594, 4
      %v597 = vshll.u32 %v264, 16
      %v599 = vrot.slane %v597, 5
      %v600 = vsel %vm274, %v595, %v599
      %v601 = vshrl.u32 %v264, 16
      %v603 = vrot.slane %v601, 4
      %v604 = vor.u32 %v603, %v599
      %v605 = vrot.slane %v604, 4
      %v607 = vshll.u32 %v265, 16
      %v609 = vrot.slane %v607, 5
      %v610 = vsel %vm274, %v605, %v609
      %v612 = vshrl.u32 %v266, 16
      %v614 = vrot.slane %v612, 4
      %v615 = vshll.u32 %v266, 16
      %v617 = vrot.slane %v615, 5
      %v618 = vor.u32 %v614, %v617
      %v619 = vrot.slane %v618, 4
      %v621 = vshll.u32 %v267, 16
      %v623 = vrot.slane %v621, 5
      %v624 = vsel %vm274, %v619, %v623
      %v625 = vshrl.u32 %v267, 16
      %v627 = vrot.slane %v625, 4
      %v628 = vor.u32 %v627, %v623
      %v629 = vrot.slane %v628, 4
      %v631 = vshll.u32 %v268, 16
      %v633 = vrot.slane %v631, 5
      %v634 = vsel %vm274, %v629, %v633
      %v636 = vshrl.u32 %v269, 16
      %v638 = vrot.slane %v636, 4
      %v639 = vshll.u32 %v269, 16
      %v641 = vrot.slane %v639, 5
      %v642 = vor.u32 %v638, %v641
      %v643 = vrot.slane %v642, 4
      %v645 = vshll.u32 %v270, 16
      %v647 = vrot.slane %v645, 5
      %v648 = vsel %vm274, %v643, %v647
      %v649 = vshrl.u32 %v270, 16
      %v651 = vrot.slane %v649, 4
      %v652 = vor.u32 %v651, %v647
      %v653 = vrot.slane %v652, 4
      %v655 = vshll.u32 %v271, 16
      %v657 = vrot.slane %v655, 5
      %v658 = vsel %vm274, %v653, %v657
      %v659 = vld [vmem:[%s210] sm:$0xf]
      %v660 = vld [vmem:[%s210 + $0x4] sm:$0xf]
      %v661 = vld [vmem:[%s210 + $0x8] sm:$0xf]
      %v662 = vld [vmem:[%s210 + $0xc] sm:$0xf]
      %v663 = vld [vmem:[%s210 + $0x10] sm:$0xf]
      %v664 = vld [vmem:[%s210 + $0x14] sm:$0xf]
      %v665 = vld [vmem:[%s210 + $0x18] sm:$0xf]
      %v666 = vld [vmem:[%s210 + $0x1c] sm:$0xf]
      %v667 = vld [vmem:[%s210 + $0x20] sm:$0xf]
      %v668 = vld [vmem:[%s210 + $0x24] sm:$0xf]
      %v669 = vld [vmem:[%s210 + $0x28] sm:$0xf]
      %v670 = vld [vmem:[%s210 + $0x2c] sm:$0xf]
      %v671 = vld [vmem:[%s210 + $0x30] sm:$0xf]
      %v672 = vld [vmem:[%s210 + $0x34] sm:$0xf]
      %v673 = vld [vmem:[%s210 + $0x38] sm:$0xf]
      %v674 = vld [vmem:[%s210 + $0x3c] sm:$0xf]
      %v675 = vld [vmem:[%s213] sm:$0x1]
      %v677 = vlaneseq
      %v678 = vshrl.u32 %v677, 7
      %v679 = vsub.s32 0, %v678
      %v680 = vrot.slane %v675, %v679
      %v682 = vunpack.c.l.b16 %v288
      %v683 = vunpack.c.l.b16 %v298
      %v684 = vunpack.c.l.b16 %v312
      %v685 = vunpack.c.l.b16 %v322
      %v686 = vunpack.c.l.b16 %v336
      %v687 = vunpack.c.l.b16 %v346
      %v688 = vunpack.c.l.b16 %v360
      %v689 = vunpack.c.l.b16 %v370
      %v690 = vunpack.c.l.b16 %v384
      %v691 = vunpack.c.l.b16 %v394
      %v692 = vunpack.c.l.b16 %v408
      %v693 = vunpack.c.l.b16 %v418
      %v694 = vunpack.c.l.b16 %v432
      %v695 = vunpack.c.l.b16 %v442
      %v696 = vunpack.c.l.b16 %v456
      %v697 = vunpack.c.l.b16 %v466
      %v698 = vunpack.c.l.b16 %v480
      %v699 = vunpack.c.l.b16 %v490
      %v700 = vunpack.c.l.b16 %v504
      %v701 = vunpack.c.l.b16 %v514
      %v702 = vunpack.c.l.b16 %v528
      %v703 = vunpack.c.l.b16 %v538
      %v704 = vunpack.c.l.b16 %v552
      %v705 = vunpack.c.l.b16 %v562
      %v706 = vunpack.c.l.b16 %v576
      %v707 = vunpack.c.l.b16 %v586
      %v708 = vunpack.c.l.b16 %v600
      %v709 = vunpack.c.l.b16 %v610
      %v710 = vunpack.c.l.b16 %v624
      %v711 = vunpack.c.l.b16 %v634
      %v712 = vunpack.c.l.b16 %v648
      %v713 = vunpack.c.l.b16 %v658
      %v714 = vpack.c.b16 %v683, %v682
      %v715 = vpack.c.b16 %v685, %v684
      %v716 = vpack.c.b16 %v687, %v686
      %v717 = vpack.c.b16 %v689, %v688
      %v718 = vpack.c.b16 %v691, %v690
      %v719 = vpack.c.b16 %v693, %v692
      %v720 = vpack.c.b16 %v695, %v694
      %v721 = vpack.c.b16 %v697, %v696
      %v722 = vpack.c.b16 %v699, %v698
      %v723 = vpack.c.b16 %v701, %v700
      %v724 = vpack.c.b16 %v703, %v702
      %v725 = vpack.c.b16 %v705, %v704
      %v726 = vpack.c.b16 %v707, %v706
      %v727 = vpack.c.b16 %v709, %v708
      %v728 = vpack.c.b16 %v711, %v710
      %v729 = vpack.c.b16 %v713, %v712
      %v762 = vunpack.c.l.b16 %v659
      %v763 = vunpack.c.l.b16 %v660
      %v764 = vunpack.c.l.b16 %v661
      %v765 = vunpack.c.l.b16 %v662
      %v766 = vunpack.c.l.b16 %v663
      %v767 = vunpack.c.l.b16 %v664
      %v768 = vunpack.c.l.b16 %v665
      %v769 = vunpack.c.l.b16 %v666
      %v770 = vunpack.c.l.b16 %v667
      %v771 = vunpack.c.l.b16 %v668
      %v772 = vunpack.c.l.b16 %v669
      %v773 = vunpack.c.l.b16 %v670
      %v774 = vunpack.c.l.b16 %v671
      %v775 = vunpack.c.l.b16 %v672
      %v776 = vunpack.c.l.b16 %v673
      %v777 = vunpack.c.l.b16 %v674
      %v778 = vpack.c.b16 %v763, %v762
      %v779 = vpack.c.b16 %v765, %v764
      %v780 = vpack.c.b16 %v767, %v766
      %v781 = vpack.c.b16 %v769, %v768
      %v782 = vpack.c.b16 %v771, %v770
      %v783 = vpack.c.b16 %v773, %v772
      %v784 = vpack.c.b16 %v775, %v774
      %v785 = vpack.c.b16 %v777, %v776
      %794 = vmatprep.subr.bf16.mxu0 0
      %795 = vmatpush1.bf16.msra.mxu0 %v785
      %796 = vmatprep.subr.bf16.mxu0 0
      %797 = vmatpush1.bf16.msra.mxu0 %v784
      %798 = vmatprep.subr.bf16.mxu0 0
      %799 = vmatpush1.bf16.msra.mxu0 %v783
      %800 = vmatprep.subr.bf16.mxu0 0
      %801 = vmatpush1.bf16.msra.mxu0 %v782
      %802 = vmatprep.subr.bf16.mxu0 0
      %803 = vmatpush1.bf16.msra.mxu0 %v781
      %804 = vmatprep.subr.bf16.mxu0 0
      %805 = vmatpush1.bf16.msra.mxu0 %v780
      %806 = vmatprep.subr.bf16.mxu0 0
      %807 = vmatpush1.bf16.msra.mxu0 %v779
      %808 = vmatprep.subr.bf16.mxu0 0
      %809 = vmatpush1.bf16.msra.mxu0 %v778
      %810 = vmatprep.subr.bf16.mxu0 0
      %811 = vmatpush2.bf16.msra.mxu0 0
      %812 = vmatprep.subr.bf16.mxu0 0
      %813 = vmatpush2.bf16.msra.mxu0 0
      %814 = vmatprep.subr.bf16.mxu0 0
      %815 = vmatpush2.bf16.msra.mxu0 0
      %816 = vmatprep.subr.bf16.mxu0 0
      %817 = vmatpush2.bf16.msra.mxu0 0
      %818 = vmatprep.subr.bf16.mxu0 0
      %819 = vmatpush2.bf16.msra.mxu0 0
      %820 = vmatprep.subr.bf16.mxu0 0
      %821 = vmatpush2.bf16.msra.mxu0 0
      %822 = vmatprep.subr.bf16.mxu0 0
      %823 = vmatpush2.bf16.msra.mxu0 0
      %824 = vmatprep.subr.bf16.mxu0 0
      %825 = vmatpush2.bf16.msra.mxu0 0
      %826 = vmatprep.mubr.bf16.mxu0 0
      %827 = vmatmul.mubr.bf16.gmra.mxu0 %v714
      %v828 = vpop.f32.mrf.mxu0
      %v829 = vadd.f32 %v680, %v828
      %v830 = vpop.f32.mrf.mxu0
      %v831 = vpop.f32.mrf.mxu0
      %v832 = vadd.f32 %v680, %v831
      %v833 = vpop.f32.mrf.mxu0
      %834 = vmatprep.mubr.bf16.mxu0 0
      %835 = vmatmul.mubr.bf16.gmra.mxu0 %v715
      %v836 = vpop.f32.mrf.mxu0
      %v837 = vadd.f32 %v680, %v836
      %v838 = vpop.f32.mrf.mxu0
      %v839 = vpop.f32.mrf.mxu0
      %v840 = vadd.f32 %v680, %v839
      %v841 = vpop.f32.mrf.mxu0
      %842 = vmatprep.mubr.bf16.mxu0 0
      %843 = vmatmul.mubr.bf16.gmra.mxu0 %v716
      %v844 = vpop.f32.mrf.mxu0
      %v845 = vadd.f32 %v680, %v844
      %v846 = vpop.f32.mrf.mxu0
      %v847 = vpop.f32.mrf.mxu0
      %v848 = vadd.f32 %v680, %v847
      %v849 = vpop.f32.mrf.mxu0
      %850 = vmatprep.mubr.bf16.mxu0 0
      %851 = vmatmul.mubr.bf16.gmra.mxu0 %v717
      %v852 = vpop.f32.mrf.mxu0
      %v853 = vadd.f32 %v680, %v852
      %v854 = vpop.f32.mrf.mxu0
      %v855 = vpop.f32.mrf.mxu0
      %v856 = vadd.f32 %v680, %v855
      %v857 = vpop.f32.mrf.mxu0
      %858 = vmatprep.mubr.bf16.mxu0 0
      %859 = vmatmul.mubr.bf16.gmra.mxu0 %v718
      %v860 = vpop.f32.mrf.mxu0
      %v861 = vadd.f32 %v680, %v860
      %v862 = vpop.f32.mrf.mxu0
      %v863 = vpop.f32.mrf.mxu0
      %v864 = vadd.f32 %v680, %v863
      %v865 = vpop.f32.mrf.mxu0
      %866 = vmatprep.mubr.bf16.mxu0 0
      %867 = vmatmul.mubr.bf16.gmra.mxu0 %v719
      %v868 = vpop.f32.mrf.mxu0
      %v869 = vadd.f32 %v680, %v868
      %v870 = vpop.f32.mrf.mxu0
      %v871 = vpop.f32.mrf.mxu0
      %v872 = vadd.f32 %v680, %v871
      %v873 = vpop.f32.mrf.mxu0
      %874 = vmatprep.mubr.bf16.mxu0 0
      %875 = vmatmul.mubr.bf16.gmra.mxu0 %v720
      %v876 = vpop.f32.mrf.mxu0
      %v877 = vadd.f32 %v680, %v876
      %v878 = vpop.f32.mrf.mxu0
      %v879 = vpop.f32.mrf.mxu0
      %v880 = vadd.f32 %v680, %v879
      %v881 = vpop.f32.mrf.mxu0
      %882 = vmatprep.mubr.bf16.mxu0 0
      %883 = vmatmul.mubr.bf16.gmra.mxu0 %v721
      %v884 = vpop.f32.mrf.mxu0
      %v885 = vadd.f32 %v680, %v884
      %v886 = vpop.f32.mrf.mxu0
      %v887 = vpop.f32.mrf.mxu0
      %v888 = vadd.f32 %v680, %v887
      %v889 = vpop.f32.mrf.mxu0
      %890 = vmatprep.mubr.bf16.mxu0 0
      %891 = vmatmul.mubr.bf16.gmra.mxu0 %v722
      %v892 = vpop.f32.mrf.mxu0
      %v893 = vadd.f32 %v680, %v892
      %v894 = vpop.f32.mrf.mxu0
      %v895 = vpop.f32.mrf.mxu0
      %v896 = vadd.f32 %v680, %v895
      %v897 = vpop.f32.mrf.mxu0
      %898 = vmatprep.mubr.bf16.mxu0 0
      %899 = vmatmul.mubr.bf16.gmra.mxu0 %v723
      %v900 = vpop.f32.mrf.mxu0
      %v901 = vadd.f32 %v680, %v900
      %v902 = vpop.f32.mrf.mxu0
      %v903 = vpop.f32.mrf.mxu0
      %v904 = vadd.f32 %v680, %v903
      %v905 = vpop.f32.mrf.mxu0
      %906 = vmatprep.mubr.bf16.mxu0 0
      %907 = vmatmul.mubr.bf16.gmra.mxu0 %v724
      %v908 = vpop.f32.mrf.mxu0
      %v909 = vadd.f32 %v680, %v908
      %v910 = vpop.f32.mrf.mxu0
      %v911 = vpop.f32.mrf.mxu0
      %v912 = vadd.f32 %v680, %v911
      %v913 = vpop.f32.mrf.mxu0
      %914 = vmatprep.mubr.bf16.mxu0 0
      %915 = vmatmul.mubr.bf16.gmra.mxu0 %v725
      %v916 = vpop.f32.mrf.mxu0
      %v917 = vadd.f32 %v680, %v916
      %v918 = vpop.f32.mrf.mxu0
      %v919 = vpop.f32.mrf.mxu0
      %v920 = vadd.f32 %v680, %v919
      %v921 = vpop.f32.mrf.mxu0
      %922 = vmatprep.mubr.bf16.mxu0 0
      %923 = vmatmul.mubr.bf16.gmra.mxu0 %v726
      %v924 = vpop.f32.mrf.mxu0
      %v925 = vadd.f32 %v680, %v924
      %v926 = vpop.f32.mrf.mxu0
      %v927 = vpop.f32.mrf.mxu0
      %v928 = vadd.f32 %v680, %v927
      %v929 = vpop.f32.mrf.mxu0
      %930 = vmatprep.mubr.bf16.mxu0 0
      %931 = vmatmul.mubr.bf16.gmra.mxu0 %v727
      %v932 = vpop.f32.mrf.mxu0
      %v933 = vadd.f32 %v680, %v932
      %v934 = vpop.f32.mrf.mxu0
      %v935 = vpop.f32.mrf.mxu0
      %v936 = vadd.f32 %v680, %v935
      %v937 = vpop.f32.mrf.mxu0
      %938 = vmatprep.mubr.bf16.mxu0 0
      %939 = vmatmul.mubr.bf16.gmra.mxu0 %v728
      %v940 = vpop.f32.mrf.mxu0
      %v941 = vadd.f32 %v680, %v940
      %v942 = vpop.f32.mrf.mxu0
      %v943 = vpop.f32.mrf.mxu0
      %v944 = vadd.f32 %v680, %v943
      %v945 = vpop.f32.mrf.mxu0
      %946 = vmatprep.mubr.bf16.mxu0 0
      %947 = vmatmul.mubr.bf16.gmra.mxu0 %v729
      %v948 = vpop.f32.mrf.mxu0
      %v949 = vadd.f32 %v680, %v948
      %v950 = vpop.f32.mrf.mxu0
      %v951 = vpop.f32.mrf.mxu0
      %v952 = vadd.f32 %v680, %v951
      %v953 = vpop.f32.mrf.mxu0
      %954 = vdwg.mxu0
      %v955 = vpack.c.bf16 %v832, %v829
      %v956 = vpack.c.bf16 %v840, %v837
      %v957 = vpack.c.bf16 %v848, %v845
      %v958 = vpack.c.bf16 %v856, %v853
      %v959 = vpack.c.bf16 %v864, %v861
      %v960 = vpack.c.bf16 %v872, %v869
      %v961 = vpack.c.bf16 %v880, %v877
      %v962 = vpack.c.bf16 %v888, %v885
      %v963 = vpack.c.bf16 %v896, %v893
      %v964 = vpack.c.bf16 %v904, %v901
      %v965 = vpack.c.bf16 %v912, %v909
      %v966 = vpack.c.bf16 %v920, %v917
      %v967 = vpack.c.bf16 %v928, %v925
      %v968 = vpack.c.bf16 %v936, %v933
      %v969 = vpack.c.bf16 %v944, %v941
      %v970 = vpack.c.bf16 %v952, %v949
      %v987 = vunpack.c.l.b16 %v955
      %v988 = vunpack.c.h.b16 %v955
      %v989 = vunpack.c.l.b16 %v956
      %v990 = vunpack.c.h.b16 %v956
      %v991 = vunpack.c.l.b16 %v957
      %v992 = vunpack.c.h.b16 %v957
      %v993 = vunpack.c.l.b16 %v958
      %v994 = vunpack.c.h.b16 %v958
      %v995 = vunpack.c.l.b16 %v959
      %v996 = vunpack.c.h.b16 %v959
      %v997 = vunpack.c.l.b16 %v960
      %v998 = vunpack.c.h.b16 %v960
      %v999 = vunpack.c.l.b16 %v961
      %v1000 = vunpack.c.h.b16 %v961
      %v1001 = vunpack.c.l.b16 %v962
      %v1002 = vunpack.c.h.b16 %v962
      %v1003 = vunpack.c.l.b16 %v963
      %v1004 = vunpack.c.h.b16 %v963
      %v1005 = vunpack.c.l.b16 %v964
      %v1006 = vunpack.c.h.b16 %v964
      %v1007 = vunpack.c.l.b16 %v965
      %v1008 = vunpack.c.h.b16 %v965
      %v1009 = vunpack.c.l.b16 %v966
      %v1010 = vunpack.c.h.b16 %v966
      %v1011 = vunpack.c.l.b16 %v967
      %v1012 = vunpack.c.h.b16 %v967
      %v1013 = vunpack.c.l.b16 %v968
      %v1014 = vunpack.c.h.b16 %v968
      %v1015 = vunpack.c.l.b16 %v969
      %v1016 = vunpack.c.h.b16 %v969
      %v1017 = vunpack.c.l.b16 %v970
      %v1018 = vunpack.c.h.b16 %v970
      %v1019 = vpack.c.b16 %v987, %v987
      %v1020 = vpack.c.b16 %v988, %v988
      %v1021 = vpack.c.b16 %v989, %v989
      %v1022 = vpack.c.b16 %v990, %v990
      %v1023 = vpack.c.b16 %v991, %v991
      %v1024 = vpack.c.b16 %v992, %v992
      %v1025 = vpack.c.b16 %v993, %v993
      %v1026 = vpack.c.b16 %v994, %v994
      %v1027 = vpack.c.b16 %v995, %v995
      %v1028 = vpack.c.b16 %v996, %v996
      %v1029 = vpack.c.b16 %v997, %v997
      %v1030 = vpack.c.b16 %v998, %v998
      %v1031 = vpack.c.b16 %v999, %v999
      %v1032 = vpack.c.b16 %v1000, %v1000
      %v1033 = vpack.c.b16 %v1001, %v1001
      %v1034 = vpack.c.b16 %v1002, %v1002
      %v1035 = vpack.c.b16 %v1003, %v1003
      %v1036 = vpack.c.b16 %v1004, %v1004
      %v1037 = vpack.c.b16 %v1005, %v1005
      %v1038 = vpack.c.b16 %v1006, %v1006
      %v1039 = vpack.c.b16 %v1007, %v1007
      %v1040 = vpack.c.b16 %v1008, %v1008
      %v1041 = vpack.c.b16 %v1009, %v1009
      %v1042 = vpack.c.b16 %v1010, %v1010
      %v1043 = vpack.c.b16 %v1011, %v1011
      %v1044 = vpack.c.b16 %v1012, %v1012
      %v1045 = vpack.c.b16 %v1013, %v1013
      %v1046 = vpack.c.b16 %v1014, %v1014
      %v1047 = vpack.c.b16 %v1015, %v1015
      %v1048 = vpack.c.b16 %v1016, %v1016
      %v1049 = vpack.c.b16 %v1017, %v1017
      %v1050 = vpack.c.b16 %v1018, %v1018
      %1083 = vst [vmem:[%s221] sm:$0xf] %v1019
      %1084 = vst [vmem:[%s221 + $0x4] sm:$0xf] %v1020
      %1085 = vst [vmem:[%s221 + $0x8] sm:$0xf] %v1021
      %1086 = vst [vmem:[%s221 + $0xc] sm:$0xf] %v1022
      %1087 = vst [vmem:[%s221 + $0x10] sm:$0xf] %v1023
      %1088 = vst [vmem:[%s221 + $0x14] sm:$0xf] %v1024
      %1089 = vst [vmem:[%s221 + $0x18] sm:$0xf] %v1025
      %1090 = vst [vmem:[%s221 + $0x1c] sm:$0xf] %v1026
      %1091 = vst [vmem:[%s221 + $0x20] sm:$0xf] %v1027
      %1092 = vst [vmem:[%s221 + $0x24] sm:$0xf] %v1028
      %1093 = vst [vmem:[%s221 + $0x28] sm:$0xf] %v1029
      %1094 = vst [vmem:[%s221 + $0x2c] sm:$0xf] %v1030
      %1095 = vst [vmem:[%s221 + $0x30] sm:$0xf] %v1031
      %1096 = vst [vmem:[%s221 + $0x34] sm:$0xf] %v1032
      %1097 = vst [vmem:[%s221 + $0x38] sm:$0xf] %v1033
      %1098 = vst [vmem:[%s221 + $0x3c] sm:$0xf] %v1034
      %1099 = vst [vmem:[%s221 + $0x40] sm:$0xf] %v1035
      %1100 = vst [vmem:[%s221 + $0x44] sm:$0xf] %v1036
      %1101 = vst [vmem:[%s221 + $0x48] sm:$0xf] %v1037
      %1102 = vst [vmem:[%s221 + $0x4c] sm:$0xf] %v1038
      %1103 = vst [vmem:[%s221 + $0x50] sm:$0xf] %v1039
      %1104 = vst [vmem:[%s221 + $0x54] sm:$0xf] %v1040
      %1105 = vst [vmem:[%s221 + $0x58] sm:$0xf] %v1041
      %1106 = vst [vmem:[%s221 + $0x5c] sm:$0xf] %v1042
      %1107 = vst [vmem:[%s221 + $0x60] sm:$0xf] %v1043
      %1108 = vst [vmem:[%s221 + $0x64] sm:$0xf] %v1044
      %1109 = vst [vmem:[%s221 + $0x68] sm:$0xf] %v1045
      %1110 = vst [vmem:[%s221 + $0x6c] sm:$0xf] %v1046
      %1111 = vst [vmem:[%s221 + $0x70] sm:$0xf] %v1047
      %1112 = vst [vmem:[%s221 + $0x74] sm:$0xf] %v1048
      %1113 = vst [vmem:[%s221 + $0x78] sm:$0xf] %v1049
      %1114 = vst [vmem:[%s221 + $0x7c] sm:$0xf] %v1050
      %p1115 = scmp.lt.s32.totalorder %s18, 1
      %s1116 = scalar_select %p1115, %s18, 1
      %p1117 = scmp.lt.s32.totalorder %s19, 0
      %s1118 = scalar_select %p1117, %s19, 0
      %s1119 = smul.addr %s1116, 32
      %s1120 = sadd.s32 %s1118, %s1119
      %s1121 = smul.addr %s1120, 4
      %s1122 = scalar_lea.vmem %s3, %s1121
      // Predicated region
      $region33: #{basic_block_forward.4} parent=31 // pred_check
        %p1123 = pneg %p124
      $region34: #{basic_block_forward.4} parent=31 // pred_check_branch
        %1125 = sbr.rel (%p1123) target = $region36
      $region35: #{basic_block_forward.4} parent=31 // pred_region
        _
      $region36: #{basic_block_forward.4} parent=31 // pred_fallthru
        _
    $region32: #{basic_block_forward.4} parent=5 // pred_fallthru
      _
    %p1126 = scmp.le.s32.totalorder 2, %s9
    // Predicated region
    $region37: #{basic_block_forward.4} parent=5 // pred_check
      %p1127 = pneg %p1126
    $region38: #{basic_block_forward.4} parent=5 // pred_check_branch
      %1129 = sbr.rel (%p1127) target = $region40
    $region39: #{basic_block_forward.4} parent=5 // pred_region
      %s1130 = ssub.s32 %s9, 2
      // Predicated region
      $region41: #{basic_block_forward.4} parent=39 // pred_check
        %p1131 = pneg %p130
      $region42: #{basic_block_forward.4} parent=39 // pred_check_branch
        %1133 = sbr.rel (%p1131) target = $region44
      $region43: #{basic_block_forward.4} parent=39 // pred_region
        %p1134 = scmp.lt.s32.totalorder %s20, 1
        %s1135 = scalar_select %p1134, %s20, 1
        %p1136 = scmp.lt.s32.totalorder %s21, 0
        %s1137 = scalar_select %p1136, %s21, 0
        %s1138 = smul.addr %s1135, 32
        %s1139 = sadd.s32 %s1137, %s1138
        %s1140 = smul.addr %s1139, 4
        %s1141 = scalar_lea.vmem %s3, %s1140
      $region44: #{basic_block_forward.4} parent=39 // pred_fallthru
        _
    $region40: #{basic_block_forward.4} parent=5 // pred_fallthru
      _
  $region6: #{basic_block_forward.4} parent=0 // loop_footer
    %s13 = sadd.s32 1, %s9
  $region7: #{basic_block_forward.4} parent=0 // loop_footer_branch
    %8 = sbr.rel target = $region3
  $region8: #{basic_block_forward.4} parent=0 // loop_exit
    _

// kernel: basic_block_forward.3
$region0: #{basic_block_forward.3}
  #allocation0 [shape = 'u32[]', space=smem, size = 0x4, offset = 0x4, fixed_abs, tag = 'smem constant byte address 0x4 - core index']
  #allocation1 [shape = 'u32[144,128]{1,0:T(1,128)}', space=vmem, size = 0x12000, scoped, tag = 'internal scratch']
  %s0 = inlined_call_operand.vmem [shape: bf16[2,18,18,128], index: 0, kind: input, shape index: {}]
  %s1 = inlined_call_operand.vmem [shape: bf16[3,384,128], index: 1, kind: input, shape index: {}]
  %s2 = inlined_call_operand.vmem [shape: f32[1,128], index: 2, kind: input, shape index: {}]
  %s3 = inlined_call_operand.vmem [shape: bf16[2,18,33,128], index: 3, kind: output, shape index: {}]
  %s4 = sld [smem:[#allocation0]]
  $region45: #{basic_block_forward.3} parent=0
    _
  %s6 = ssub.s32 1, %s4
  %s7 = scalar_select 0, %s6, %s4
  loop: start=0, step=1, limit=4
  $region2: #{basic_block_forward.3} parent=0 // loop_pre_header
    _
  $region3: #{basic_block_forward.3} parent=0 // loop_header
    %s9 = sphi 0, %s13
    %p10 = scmp.ge.s32.totalorder %s9, 4
    %s16 = sphi 0, %s28
    %s17 = sphi 0, %s24
    %s18 = sphi 0, %s16
    %s19 = sphi 0, %s17
    %s20 = sphi 0, %s18
    %s21 = sphi 0, %s19
    %s31 = sphi 0, %s33
    %s34 = sphi 0, %s31
    %s35 = sphi 0, %s34
    %s51 = sphi 0, %s35
    %s57 = sphi 0, %s59
    %s60 = sphi 0, %s57
    %s61 = sphi 0, %s60
    %s77 = sphi 0, %s61
    %s83 = sphi 0, %s85
    %s86 = sphi 0, %s83
    %s87 = sphi 0, %s86
    %s103 = sphi 0, %s87
    %s111 = sphi 0, %s113
    %s114 = sphi 0, %s111
    %s115 = sphi 0, %s114
    %s131 = sphi 0, %s115
  $region4: #{basic_block_forward.3} parent=0 // loop_header_branch
    %12 = sbr.rel (%p10) target = $region8
  $region5: #{basic_block_forward.3} parent=0 // loop_body
    %s14 = ssub.s32 %s9, 1
    %s15 = ssub.s32 %s9, 2
    %s22 = sadd.s32 1, %s17
    %p23 = scmp.ge.s32.totalorder %s22, 2
    %s24 = scalar_select %p23, 0, %s22
    %s25 = sadd.s32 1, %s16
    %s26 = scalar_select %p23, %s25, %s16
    %p27 = scmp.ge.s32.totalorder %s26, 1
    %s28 = scalar_select %p27, 0, %s26
    %s29 = ssub.s32 %s17, %s24
    %p30 = scmp.eq.s32.totalorder %s29, 0
    %s32 = sadd.s32 %s31, 1
    %s33 = scalar_select %p30, %s31, %s32
    %p36 = pneg %p30
    %p37 = scmp.eq.s32.totalorder %s9, 1
    %p38 = por %p36, %p37
    %p39 = scmp.ne.s32.totalorder %s31, %s34
    %p40 = scmp.eq.s32.totalorder %s9, 0
    %p41 = por %p39, %p40
    %p42 = scmp.ne.s32.totalorder %s31, %s34
    %p43 = scmp.eq.s32.totalorder %s14, 1
    %p44 = por %p42, %p43
    %p45 = scmp.ne.s32.totalorder %s34, %s35
    %p46 = scmp.eq.s32.totalorder %s14, 0
    %p47 = por %p45, %p46
    %p48 = scmp.ne.s32.totalorder %s34, %s35
    %p49 = scmp.eq.s32.totalorder %s15, 1
    %p50 = por %p48, %p49
    %p52 = scmp.ne.s32.totalorder %s35, %s51
    %p53 = scmp.eq.s32.totalorder %s15, 0
    %p54 = por %p52, %p53
    %s55 = ssub.s32 %s16, %s28
    %p56 = scmp.eq.s32.totalorder %s55, 0
    %s58 = sadd.s32 %s57, 1
    %s59 = scalar_select %p56, %s57, %s58
    %p62 = pneg %p56
    %p63 = scmp.eq.s32.totalorder %s9, 1
    %p64 = por %p62, %p63
    %p65 = scmp.ne.s32.totalorder %s57, %s60
    %p66 = scmp.eq.s32.totalorder %s9, 0
    %p67 = por %p65, %p66
    %p68 = scmp.ne.s32.totalorder %s57, %s60
    %p69 = scmp.eq.s32.totalorder %s14, 1
    %p70 = por %p68, %p69
    %p71 = scmp.ne.s32.totalorder %s60, %s61
    %p72 = scmp.eq.s32.totalorder %s14, 0
    %p73 = por %p71, %p72
    %p74 = scmp.ne.s32.totalorder %s60, %s61
    %p75 = scmp.eq.s32.totalorder %s15, 1
    %p76 = por %p74, %p75
    %p78 = scmp.ne.s32.totalorder %s61, %s77
    %p79 = scmp.eq.s32.totalorder %s15, 0
    %p80 = por %p78, %p79
    %s81 = ssub.s32 %s16, %s28
    %p82 = scmp.eq.s32.totalorder %s81, 0
    %s84 = sadd.s32 %s83, 1
    %s85 = scalar_select %p82, %s83, %s84
    %p88 = pneg %p82
    %p89 = scmp.eq.s32.totalorder %s9, 1
    %p90 = por %p88, %p89
    %p91 = scmp.ne.s32.totalorder %s83, %s86
    %p92 = scmp.eq.s32.totalorder %s9, 0
    %p93 = por %p91, %p92
    %p94 = scmp.ne.s32.totalorder %s83, %s86
    %p95 = scmp.eq.s32.totalorder %s14, 1
    %p96 = por %p94, %p95
    %p97 = scmp.ne.s32.totalorder %s86, %s87
    %p98 = scmp.eq.s32.totalorder %s14, 0
    %p99 = por %p97, %p98
    %p100 = scmp.ne.s32.totalorder %s86, %s87
    %p101 = scmp.eq.s32.totalorder %s15, 1
    %p102 = por %p100, %p101
    %p104 = scmp.ne.s32.totalorder %s87, %s103
    %p105 = scmp.eq.s32.totalorder %s15, 0
    %p106 = por %p104, %p105
    %s107 = ssub.s32 %s17, %s24
    %s108 = ssub.s32 %s16, %s28
    %s109 = sor.u32 %s107, %s108
    %p110 = scmp.eq.s32.totalorder %s109, 0
    %s112 = sadd.s32 %s111, 1
    %s113 = scalar_select %p110, %s111, %s112
    %p116 = pneg %p110
    %p117 = scmp.eq.s32.totalorder %s9, 1
    %p118 = por %p116, %p117
    %p119 = scmp.ne.s32.totalorder %s111, %s114
    %p120 = scmp.eq.s32.totalorder %s9, 0
    %p121 = por %p119, %p120
    %p122 = scmp.ne.s32.totalorder %s111, %s114
    %p123 = scmp.eq.s32.totalorder %s14, 1
    %p124 = por %p122, %p123
    %p125 = scmp.ne.s32.totalorder %s114, %s115
    %p126 = scmp.eq.s32.totalorder %s14, 0
    %p127 = por %p125, %p126
    %p128 = scmp.ne.s32.totalorder %s114, %s115
    %p129 = scmp.eq.s32.totalorder %s15, 1
    %p130 = por %p128, %p129
    %p132 = scmp.ne.s32.totalorder %s115, %s131
    %p133 = scmp.eq.s32.totalorder %s15, 0
    %p134 = por %p132, %p133
    %p135 = scmp.le.s32.totalorder 1, %s9
    %p136 = scmp.lt.s32.totalorder %s9, 3
    %p137 = pnand %p135, %p136
    %p138 = pneg %p137
    // Predicated region
    $region9: #{basic_block_forward.3} parent=5 // pred_check
      _
    $region10: #{basic_block_forward.3} parent=5 // pred_check_branch
      %140 = sbr.rel (%p137) target = $region12
    $region11: #{basic_block_forward.3} parent=5 // pred_region
      %s141 = ssub.s32 %s9, 1
      // Predicated region
      $region13: #{basic_block_forward.3} parent=11 // pred_check
        %p142 = pneg %p73
      $region14: #{basic_block_forward.3} parent=11 // pred_check_branch
        %144 = sbr.rel (%p142) target = $region16
      $region15: #{basic_block_forward.3} parent=11 // pred_region
        %p145 = scmp.lt.s32.totalorder %s18, 0
        %s146 = scalar_select %p145, %s18, 0
        %s147 = smul.addr %s146, 4
        %s148 = scalar_lea.vmem %s1, %s147
      $region16: #{basic_block_forward.3} parent=11 // pred_fallthru
        _
      // Predicated region
      $region17: #{basic_block_forward.3} parent=11 // pred_check
        %p149 = pneg %p99
      $region18: #{basic_block_forward.3} parent=11 // pred_check_branch
        %151 = sbr.rel (%p149) target = $region20
      $region19: #{basic_block_forward.3} parent=11 // pred_region
        %p152 = scmp.lt.s32.totalorder %s18, 0
        %s153 = scalar_select %p152, %s18, 0
        %s154 = scalar_lea.vmem %s2, %s153
      $region20: #{basic_block_forward.3} parent=11 // pred_fallthru
        _
    $region12: #{basic_block_forward.3} parent=5 // pred_fallthru
      _
    %p155 = scmp.lt.s32.totalorder %s9, 2
    // Predicated region
    $region21: #{basic_block_forward.3} parent=5 // pred_check
      %p156 = pneg %p155
    $region22: #{basic_block_forward.3} parent=5 // pred_check_branch
      %158 = sbr.rel (%p156) target = $region24
    $region23: #{basic_block_forward.3} parent=5 // pred_region
      // Predicated region
      $region25: #{basic_block_forward.3} parent=23 // pred_check
        %p159 = pneg %p41
      $region26: #{basic_block_forward.3} parent=23 // pred_check_branch
        %161 = sbr.rel (%p159) target = $region28
      $region27: #{basic_block_forward.3} parent=23 // pred_region
        %p162 = scmp.lt.s32.totalorder %s17, 1
        %s163 = scalar_select %p162, %s17, 1
        %s164 = smul.addr %s163, 54
        %s165 = smul.addr %s164, 4
        %s166 = scalar_lea.vmem %s0, %s165
      $region28: #{basic_block_forward.3} parent=23 // pred_fallthru
        _
    $region24: #{basic_block_forward.3} parent=5 // pred_fallthru
      _
    %p167 = scmp.le.s32.totalorder 1, %s9
    %p168 = scmp.lt.s32.totalorder %s9, 3
    %p169 = pnand %p167, %p168
    %p170 = pneg %p169
    // Predicated region
    $region29: #{basic_block_forward.3} parent=5 // pred_check
      _
    $region30: #{basic_block_forward.3} parent=5 // pred_check_branch
      %172 = sbr.rel (%p169) target = $region32
    $region31: #{basic_block_forward.3} parent=5 // pred_region
      %s173 = ssub.s32 %s9, 1
      %p174 = scmp.lt.s32.totalorder %s19, 1
      %s175 = scalar_select %p174, %s19, 1
      %s176 = smul.addr %s175, 54
      %s177 = smul.addr %s176, 4
      %s178 = scalar_lea.vmem %s0, %s177
      %p179 = pneg %p47
      %p180 = pneg %p44
      %p181 = scmp.lt.s32.totalorder %s18, 0
      %s182 = scalar_select %p181, %s18, 0
      %s183 = smul.addr %s182, 4
      %s184 = scalar_lea.vmem %s1, %s183
      %p185 = pneg %p73
      %p186 = pneg %p70
      %p187 = scmp.lt.s32.totalorder %s18, 0
      %s188 = scalar_select %p187, %s18, 0
      %s189 = scalar_lea.vmem %s2, %s188
      %p190 = pneg %p99
      %p191 = pneg %p96
      %p192 = pneg %p127
      %p193 = pneg %p124
      %p194 = scmp.lt.s32.totalorder %s19, 1
      %s195 = scalar_select %p194, %s19, 1
      %p196 = scmp.lt.s32.totalorder %s18, 0
      %s197 = scalar_select %p196, %s18, 0
      %s198 = smul.addr %s195, 90
      %s199 = sadd.s32 %s197, %s198
      %s200 = smul.addr %s199, 4
      %s201 = scalar_lea.vmem %s3, %s200
      %p202 = scmp.lt.s32.totalorder %s19, 1
      %s203 = scalar_select %p202, %s19, 1
      %s204 = smul.addr %s203, 54
      %s205 = smul.addr %s204, 4
      %s206 = scalar_lea.vmem %s0, %s205
      %p207 = scmp.lt.s32.totalorder %s18, 0
      %s208 = scalar_select %p207, %s18, 0
      %s209 = smul.addr %s208, 4
      %s210 = scalar_lea.vmem %s1, %s209
      %p211 = scmp.lt.s32.totalorder %s18, 0
      %s212 = scalar_select %p211, %s18, 0
      %s213 = scalar_lea.vmem %s2, %s212
      %p214 = scmp.lt.s32.totalorder %s19, 1
      %s215 = scalar_select %p214, %s19, 1
      %p216 = scmp.lt.s32.totalorder %s18, 0
      %s217 = scalar_select %p216, %s18, 0
      %s218 = smul.addr %s215, 90
      %s219 = sadd.s32 %s217, %s218
      %s220 = smul.addr %s219, 4
      %s221 = scalar_lea.vmem %s3, %s220
      %v223 = vld [vmem:[%s206] sm:$0xf]
      %v224 = vld [vmem:[%s206 + $0x4] sm:$0xf]
      %v225 = vld [vmem:[%s206 + $0xc] sm:$0xf]
      %v226 = vld [vmem:[%s206 + $0x10] sm:$0xf]
      %v227 = vld [vmem:[%s206 + $0x18] sm:$0xf]
      %v228 = vld [vmem:[%s206 + $0x1c] sm:$0xf]
      %v229 = vld [vmem:[%s206 + $0x24] sm:$0xf]
      %v230 = vld [vmem:[%s206 + $0x28] sm:$0xf]
      %v231 = vld [vmem:[%s206 + $0x30] sm:$0xf]
      %v232 = vld [vmem:[%s206 + $0x34] sm:$0xf]
      %v233 = vld [vmem:[%s206 + $0x3c] sm:$0xf]
      %v234 = vld [vmem:[%s206 + $0x40] sm:$0xf]
      %v235 = vld [vmem:[%s206 + $0x48] sm:$0xf]
      %v236 = vld [vmem:[%s206 + $0x4c] sm:$0xf]
      %v237 = vld [vmem:[%s206 + $0x54] sm:$0xf]
      %v238 = vld [vmem:[%s206 + $0x58] sm:$0xf]
      %v239 = vld [vmem:[%s206 + $0x60] sm:$0xf]
      %v240 = vld [vmem:[%s206 + $0x64] sm:$0xf]
      %v241 = vld [vmem:[%s206 + $0x6c] sm:$0xf]
      %v242 = vld [vmem:[%s206 + $0x70] sm:$0xf]
      %v243 = vld [vmem:[%s206 + $0x78] sm:$0xf]
      %v244 = vld [vmem:[%s206 + $0x7c] sm:$0xf]
      %v245 = vld [vmem:[%s206 + $0x84] sm:$0xf]
      %v246 = vld [vmem:[%s206 + $0x88] sm:$0xf]
      %v247 = vld [vmem:[%s206 + $0x90] sm:$0xf]
      %v248 = vld [vmem:[%s206 + $0x94] sm:$0xf]
      %v249 = vld [vmem:[%s206 + $0x9c] sm:$0xf]
      %v250 = vld [vmem:[%s206 + $0xa0] sm:$0xf]
      %v251 = vld [vmem:[%s206 + $0xa8] sm:$0xf]
      %v252 = vld [vmem:[%s206 + $0xac] sm:$0xf]
      %v253 = vld [vmem:[%s206 + $0xb4] sm:$0xf]
      %v254 = vld [vmem:[%s206 + $0xb8] sm:$0xf]
      %v255 = vld [vmem:[%s206 + $0x8] sm:$0x1]
      %v256 = vld [vmem:[%s206 + $0x14] sm:$0x1]
      %v257 = vld [vmem:[%s206 + $0x20] sm:$0x1]
      %v258 = vld [vmem:[%s206 + $0x2c] sm:$0x1]
      %v259 = vld [vmem:[%s206 + $0x38] sm:$0x1]
      %v260 = vld [vmem:[%s206 + $0x44] sm:$0x1]
      %v261 = vld [vmem:[%s206 + $0x50] sm:$0x1]
      %v262 = vld [vmem:[%s206 + $0x5c] sm:$0x1]
      %v263 = vld [vmem:[%s206 + $0x68] sm:$0x1]
      %v264 = vld [vmem:[%s206 + $0x74] sm:$0x1]
      %v265 = vld [vmem:[%s206 + $0x80] sm:$0x1]
      %v266 = vld [vmem:[%s206 + $0x8c] sm:$0x1]
      %v267 = vld [vmem:[%s206 + $0x98] sm:$0x1]
      %v268 = vld [vmem:[%s206 + $0xa4] sm:$0x1]
      %v269 = vld [vmem:[%s206 + $0xb0] sm:$0x1]
      %v270 = vld [vmem:[%s206 + $0xbc] sm:$0x1]
      %v271 = vld [vmem:[%s206] sm:$0xe]
      %v272 = vld [vmem:[%s206 + $0xc] sm:$0xe]
      %v273 = vld [vmem:[%s206 + $0x18] sm:$0xe]
      %v274 = vld [vmem:[%s206 + $0x24] sm:$0xe]
      %v275 = vld [vmem:[%s206 + $0x30] sm:$0xe]
      %v276 = vld [vmem:[%s206 + $0x3c] sm:$0xe]
      %v277 = vld [vmem:[%s206 + $0x48] sm:$0xe]
      %v278 = vld [vmem:[%s206 + $0x54] sm:$0xe]
      %v279 = vld [vmem:[%s206 + $0x60] sm:$0xe]
      %v280 = vld [vmem:[%s206 + $0x6c] sm:$0xe]
      %v281 = vld [vmem:[%s206 + $0x78] sm:$0xe]
      %v282 = vld [vmem:[%s206 + $0x84] sm:$0xe]
      %v283 = vld [vmem:[%s206 + $0x90] sm:$0xe]
      %v284 = vld [vmem:[%s206 + $0x9c] sm:$0xe]
      %v285 = vld [vmem:[%s206 + $0xa8] sm:$0xe]
      %v286 = vld [vmem:[%s206 + $0xb4] sm:$0xe]
      %v319 = vunpack.c.l.b16 %v223
      %v320 = vunpack.c.l.b16 %v224
      %v321 = vunpack.c.l.b16 %v225
      %v322 = vunpack.c.l.b16 %v226
      %v323 = vunpack.c.l.b16 %v227
      %v324 = vunpack.c.l.b16 %v228
      %v325 = vunpack.c.l.b16 %v229
      %v326 = vunpack.c.l.b16 %v230
      %v327 = vunpack.c.l.b16 %v231
      %v328 = vunpack.c.l.b16 %v232
      %v329 = vunpack.c.l.b16 %v233
      %v330 = vunpack.c.l.b16 %v234
      %v331 = vunpack.c.l.b16 %v235
      %v332 = vunpack.c.l.b16 %v236
      %v333 = vunpack.c.l.b16 %v237
      %v334 = vunpack.c.l.b16 %v238
      %v335 = vunpack.c.l.b16 %v239
      %v336 = vunpack.c.l.b16 %v240
      %v337 = vunpack.c.l.b16 %v241
      %v338 = vunpack.c.l.b16 %v242
      %v339 = vunpack.c.l.b16 %v243
      %v340 = vunpack.c.l.b16 %v244
      %v341 = vunpack.c.l.b16 %v245
      %v342 = vunpack.c.l.b16 %v246
      %v343 = vunpack.c.l.b16 %v247
      %v344 = vunpack.c.l.b16 %v248
      %v345 = vunpack.c.l.b16 %v249
      %v346 = vunpack.c.l.b16 %v250
      %v347 = vunpack.c.l.b16 %v251
      %v348 = vunpack.c.l.b16 %v252
      %v349 = vunpack.c.l.b16 %v253
      %v350 = vunpack.c.l.b16 %v254
      %v351 = vpack.c.b16 %v320, %v319
      %v352 = vpack.c.b16 %v322, %v321
      %v353 = vpack.c.b16 %v324, %v323
      %v354 = vpack.c.b16 %v326, %v325
      %v355 = vpack.c.b16 %v328, %v327
      %v356 = vpack.c.b16 %v330, %v329
      %v357 = vpack.c.b16 %v332, %v331
      %v358 = vpack.c.b16 %v334, %v333
      %v359 = vpack.c.b16 %v336, %v335
      %v360 = vpack.c.b16 %v338, %v337
      %v361 = vpack.c.b16 %v340, %v339
      %v362 = vpack.c.b16 %v342, %v341
      %v363 = vpack.c.b16 %v344, %v343
      %v364 = vpack.c.b16 %v346, %v345
      %v365 = vpack.c.b16 %v348, %v347
      %v366 = vpack.c.b16 %v350, %v349
      %v399 = vunpack.c.l.b16 %v255
      %v400 = vunpack.c.l.b16 %v256
      %v401 = vunpack.c.l.b16 %v257
      %v402 = vunpack.c.l.b16 %v258
      %v403 = vunpack.c.l.b16 %v259
      %v404 = vunpack.c.l.b16 %v260
      %v405 = vunpack.c.l.b16 %v261
      %v406 = vunpack.c.l.b16 %v262
      %v407 = vunpack.c.l.b16 %v263
      %v408 = vunpack.c.l.b16 %v264
      %v409 = vunpack.c.l.b16 %v265
      %v410 = vunpack.c.l.b16 %v266
      %v411 = vunpack.c.l.b16 %v267
      %v412 = vunpack.c.l.b16 %v268
      %v413 = vunpack.c.l.b16 %v269
      %v414 = vunpack.c.l.b16 %v270
      %v415 = vpack.c.b16 %v399, %v399
      %v416 = vpack.c.b16 %v400, %v400
      %v417 = vpack.c.b16 %v401, %v401
      %v418 = vpack.c.b16 %v402, %v402
      %v419 = vpack.c.b16 %v403, %v403
      %v420 = vpack.c.b16 %v404, %v404
      %v421 = vpack.c.b16 %v405, %v405
      %v422 = vpack.c.b16 %v406, %v406
      %v423 = vpack.c.b16 %v407, %v407
      %v424 = vpack.c.b16 %v408, %v408
      %v425 = vpack.c.b16 %v409, %v409
      %v426 = vpack.c.b16 %v410, %v410
      %v427 = vpack.c.b16 %v411, %v411
      %v428 = vpack.c.b16 %v412, %v412
      %v429 = vpack.c.b16 %v413, %v413
      %v430 = vpack.c.b16 %v414, %v414
      %vm431 = vsmask.f32 7424
      %v433 = vshrl.u32 %v351, 16
      %v435 = vshll.u32 %v351, 16
      %v437 = vrot.slane %v435, 1
      %v438 = vor.u32 %v433, %v437
      %v440 = vshll.u32 %v415, 16
      %v442 = vrot.slane %v440, 1
      %v443 = vsel %vm431, %v438, %v442
      %v445 = vshrl.u32 %v352, 16
      %v447 = vshll.u32 %v352, 16
      %v449 = vrot.slane %v447, 1
      %v450 = vor.u32 %v445, %v449
      %v452 = vshll.u32 %v416, 16
      %v454 = vrot.slane %v452, 1
      %v455 = vsel %vm431, %v450, %v454
      %v457 = vshrl.u32 %v353, 16
      %v459 = vshll.u32 %v353, 16
      %v461 = vrot.slane %v459, 1
      %v462 = vor.u32 %v457, %v461
      %v464 = vshll.u32 %v417, 16
      %v466 = vrot.slane %v464, 1
      %v467 = vsel %vm431, %v462, %v466
      %v469 = vshrl.u32 %v354, 16
      %v471 = vshll.u32 %v354, 16
      %v473 = vrot.slane %v471, 1
      %v474 = vor.u32 %v469, %v473
      %v476 = vshll.u32 %v418, 16
      %v478 = vrot.slane %v476, 1
      %v479 = vsel %vm431, %v474, %v478
      %v481 = vshrl.u32 %v355, 16
      %v483 = vshll.u32 %v355, 16
      %v485 = vrot.slane %v483, 1
      %v486 = vor.u32 %v481, %v485
      %v488 = vshll.u32 %v419, 16
      %v490 = vrot.slane %v488, 1
      %v491 = vsel %vm431, %v486, %v490
      %v493 = vshrl.u32 %v356, 16
      %v495 = vshll.u32 %v356, 16
      %v497 = vrot.slane %v495, 1
      %v498 = vor.u32 %v493, %v497
      %v500 = vshll.u32 %v420, 16
      %v502 = vrot.slane %v500, 1
      %v503 = vsel %vm431, %v498, %v502
      %v505 = vshrl.u32 %v357, 16
      %v507 = vshll.u32 %v357, 16
      %v509 = vrot.slane %v507, 1
      %v510 = vor.u32 %v505, %v509
      %v512 = vshll.u32 %v421, 16
      %v514 = vrot.slane %v512, 1
      %v515 = vsel %vm431, %v510, %v514
      %v517 = vshrl.u32 %v358, 16
      %v519 = vshll.u32 %v358, 16
      %v521 = vrot.slane %v519, 1
      %v522 = vor.u32 %v517, %v521
      %v524 = vshll.u32 %v422, 16
      %v526 = vrot.slane %v524, 1
      %v527 = vsel %vm431, %v522, %v526
      %v529 = vshrl.u32 %v359, 16
      %v531 = vshll.u32 %v359, 16
      %v533 = vrot.slane %v531, 1
      %v534 = vor.u32 %v529, %v533
      %v536 = vshll.u32 %v423, 16
      %v538 = vrot.slane %v536, 1
      %v539 = vsel %vm431, %v534, %v538
      %v541 = vshrl.u32 %v360, 16
      %v543 = vshll.u32 %v360, 16
      %v545 = vrot.slane %v543, 1
      %v546 = vor.u32 %v541, %v545
      %v548 = vshll.u32 %v424, 16
      %v550 = vrot.slane %v548, 1
      %v551 = vsel %vm431, %v546, %v550
      %v553 = vshrl.u32 %v361, 16
      %v555 = vshll.u32 %v361, 16
      %v557 = vrot.slane %v555, 1
      %v558 = vor.u32 %v553, %v557
      %v560 = vshll.u32 %v425, 16
      %v562 = vrot.slane %v560, 1
      %v563 = vsel %vm431, %v558, %v562
      %v565 = vshrl.u32 %v362, 16
      %v567 = vshll.u32 %v362, 16
      %v569 = vrot.slane %v567, 1
      %v570 = vor.u32 %v565, %v569
      %v572 = vshll.u32 %v426, 16
      %v574 = vrot.slane %v572, 1
      %v575 = vsel %vm431, %v570, %v574
      %v577 = vshrl.u32 %v363, 16
      %v579 = vshll.u32 %v363, 16
      %v581 = vrot.slane %v579, 1
      %v582 = vor.u32 %v577, %v581
      %v584 = vshll.u32 %v427, 16
      %v586 = vrot.slane %v584, 1
      %v587 = vsel %vm431, %v582, %v586
      %v589 = vshrl.u32 %v364, 16
      %v591 = vshll.u32 %v364, 16
      %v593 = vrot.slane %v591, 1
      %v594 = vor.u32 %v589, %v593
      %v596 = vshll.u32 %v428, 16
      %v598 = vrot.slane %v596, 1
      %v599 = vsel %vm431, %v594, %v598
      %v601 = vshrl.u32 %v365, 16
      %v603 = vshll.u32 %v365, 16
      %v605 = vrot.slane %v603, 1
      %v606 = vor.u32 %v601, %v605
      %v608 = vshll.u32 %v429, 16
      %v610 = vrot.slane %v608, 1
      %v611 = vsel %vm431, %v606, %v610
      %v613 = vshrl.u32 %v366, 16
      %v615 = vshll.u32 %v366, 16
      %v617 = vrot.slane %v615, 1
      %v618 = vor.u32 %v613, %v617
      %v620 = vshll.u32 %v430, 16
      %v622 = vrot.slane %v620, 1
      %v623 = vsel %vm431, %v618, %v622
      %v656 = vunpack.c.l.b16 %v271
      %v657 = vunpack.c.l.b16 %v272
      %v658 = vunpack.c.l.b16 %v273
      %v659 = vunpack.c.l.b16 %v274
      %v660 = vunpack.c.l.b16 %v275
      %v661 = vunpack.c.l.b16 %v276
      %v662 = vunpack.c.l.b16 %v277
      %v663 = vunpack.c.l.b16 %v278
      %v664 = vunpack.c.l.b16 %v279
      %v665 = vunpack.c.l.b16 %v280
      %v666 = vunpack.c.l.b16 %v281
      %v667 = vunpack.c.l.b16 %v282
      %v668 = vunpack.c.l.b16 %v283
      %v669 = vunpack.c.l.b16 %v284
      %v670 = vunpack.c.l.b16 %v285
      %v671 = vunpack.c.l.b16 %v286
      %v672 = vpack.c.b16 %v320, %v656
      %v673 = vpack.c.b16 %v322, %v657
      %v674 = vpack.c.b16 %v324, %v658
      %v675 = vpack.c.b16 %v326, %v659
      %v676 = vpack.c.b16 %v328, %v660
      %v677 = vpack.c.b16 %v330, %v661
      %v678 = vpack.c.b16 %v332, %v662
      %v679 = vpack.c.b16 %v334, %v663
      %v680 = vpack.c.b16 %v336, %v664
      %v681 = vpack.c.b16 %v338, %v665
      %v682 = vpack.c.b16 %v340, %v666
      %v683 = vpack.c.b16 %v342, %v667
      %v684 = vpack.c.b16 %v344, %v668
      %v685 = vpack.c.b16 %v346, %v669
      %v686 = vpack.c.b16 %v348, %v670
      %v687 = vpack.c.b16 %v350, %v671
      %vm688 = vcmask 1046528
      %v689 = vrot.slane %v672, 1
      %v690 = vrot.slane %v415, 1
      %v691 = vsel %vm688, %v689, %v690
      %v692 = vrot.slane %v673, 1
      %v693 = vrot.slane %v416, 1
      %v694 = vsel %vm688, %v692, %v693
      %v695 = vrot.slane %v674, 1
      %v696 = vrot.slane %v417, 1
      %v697 = vsel %vm688, %v695, %v696
      %v698 = vrot.slane %v675, 1
      %v699 = vrot.slane %v418, 1
      %v700 = vsel %vm688, %v698, %v699
      %v701 = vrot.slane %v676, 1
      %v702 = vrot.slane %v419, 1
      %v703 = vsel %vm688, %v701, %v702
      %v704 = vrot.slane %v677, 1
      %v705 = vrot.slane %v420, 1
      %v706 = vsel %vm688, %v704, %v705
      %v707 = vrot.slane %v678, 1
      %v708 = vrot.slane %v421, 1
      %v709 = vsel %vm688, %v707, %v708
      %v710 = vrot.slane %v679, 1
      %v711 = vrot.slane %v422, 1
      %v712 = vsel %vm688, %v710, %v711
      %v713 = vrot.slane %v680, 1
      %v714 = vrot.slane %v423, 1
      %v715 = vsel %vm688, %v713, %v714
      %v716 = vrot.slane %v681, 1
      %v717 = vrot.slane %v424, 1
      %v718 = vsel %vm688, %v716, %v717
      %v719 = vrot.slane %v682, 1
      %v720 = vrot.slane %v425, 1
      %v721 = vsel %vm688, %v719, %v720
      %v722 = vrot.slane %v683, 1
      %v723 = vrot.slane %v426, 1
      %v724 = vsel %vm688, %v722, %v723
      %v725 = vrot.slane %v684, 1
      %v726 = vrot.slane %v427, 1
      %v727 = vsel %vm688, %v725, %v726
      %v728 = vrot.slane %v685, 1
      %v729 = vrot.slane %v428, 1
      %v730 = vsel %vm688, %v728, %v729
      %v731 = vrot.slane %v686, 1
      %v732 = vrot.slane %v429, 1
      %v733 = vsel %vm688, %v731, %v732
      %v734 = vrot.slane %v687, 1
      %v735 = vrot.slane %v430, 1
      %v736 = vsel %vm688, %v734, %v735
      %v753 = vld [vmem:[%s210] sm:$0xf]
      %v754 = vld [vmem:[%s210 + $0x4] sm:$0xf]
      %v755 = vld [vmem:[%s210 + $0x8] sm:$0xf]
      %v756 = vld [vmem:[%s210 + $0xc] sm:$0xf]
      %v757 = vld [vmem:[%s210 + $0x10] sm:$0xf]
      %v758 = vld [vmem:[%s210 + $0x14] sm:$0xf]
      %v759 = vld [vmem:[%s210 + $0x18] sm:$0xf]
      %v760 = vld [vmem:[%s210 + $0x1c] sm:$0xf]
      %v761 = vld [vmem:[%s210 + $0x20] sm:$0xf]
      %v762 = vld [vmem:[%s210 + $0x24] sm:$0xf]
      %v763 = vld [vmem:[%s210 + $0x28] sm:$0xf]
      %v764 = vld [vmem:[%s210 + $0x2c] sm:$0xf]
      %v765 = vld [vmem:[%s210 + $0x30] sm:$0xf]
      %v766 = vld [vmem:[%s210 + $0x34] sm:$0xf]
      %v767 = vld [vmem:[%s210 + $0x38] sm:$0xf]
      %v768 = vld [vmem:[%s210 + $0x3c] sm:$0xf]
      %v769 = vld [vmem:[%s210 + $0x40] sm:$0xf]
      %v770 = vld [vmem:[%s210 + $0x44] sm:$0xf]
      %v771 = vld [vmem:[%s210 + $0x48] sm:$0xf]
      %v772 = vld [vmem:[%s210 + $0x4c] sm:$0xf]
      %v773 = vld [vmem:[%s210 + $0x50] sm:$0xf]
      %v774 = vld [vmem:[%s210 + $0x54] sm:$0xf]
      %v775 = vld [vmem:[%s210 + $0x58] sm:$0xf]
      %v776 = vld [vmem:[%s210 + $0x5c] sm:$0xf]
      %v777 = vld [vmem:[%s210 + $0x60] sm:$0xf]
      %v778 = vld [vmem:[%s210 + $0x64] sm:$0xf]
      %v779 = vld [vmem:[%s210 + $0x68] sm:$0xf]
      %v780 = vld [vmem:[%s210 + $0x6c] sm:$0xf]
      %v781 = vld [vmem:[%s210 + $0x70] sm:$0xf]
      %v782 = vld [vmem:[%s210 + $0x74] sm:$0xf]
      %v783 = vld [vmem:[%s210 + $0x78] sm:$0xf]
      %v784 = vld [vmem:[%s210 + $0x7c] sm:$0xf]
      %v785 = vld [vmem:[%s210 + $0x80] sm:$0xf]
      %v786 = vld [vmem:[%s210 + $0x84] sm:$0xf]
      %v787 = vld [vmem:[%s210 + $0x88] sm:$0xf]
      %v788 = vld [vmem:[%s210 + $0x8c] sm:$0xf]
      %v789 = vld [vmem:[%s210 + $0x90] sm:$0xf]
      %v790 = vld [vmem:[%s210 + $0x94] sm:$0xf]
      %v791 = vld [vmem:[%s210 + $0x98] sm:$0xf]
      %v792 = vld [vmem:[%s210 + $0x9c] sm:$0xf]
      %v793 = vld [vmem:[%s210 + $0xa0] sm:$0xf]
      %v794 = vld [vmem:[%s210 + $0xa4] sm:$0xf]
      %v795 = vld [vmem:[%s210 + $0xa8] sm:$0xf]
      %v796 = vld [vmem:[%s210 + $0xac] sm:$0xf]
      %v797 = vld [vmem:[%s210 + $0xb0] sm:$0xf]
      %v798 = vld [vmem:[%s210 + $0xb4] sm:$0xf]
      %v799 = vld [vmem:[%s210 + $0xb8] sm:$0xf]
      %v800 = vld [vmem:[%s210 + $0xbc] sm:$0xf]
      %s801 = scalar_lea.vmem %s206, 12
      %v802 = vld [vmem:[%s801] sm:$0xf]
      %v803 = vld [vmem:[%s801 + $0x4] sm:$0xf]
      %v804 = vld [vmem:[%s801 + $0xc] sm:$0xf]
      %v805 = vld [vmem:[%s801 + $0x10] sm:$0xf]
      %v806 = vld [vmem:[%s801 + $0x18] sm:$0xf]
      %v807 = vld [vmem:[%s801 + $0x1c] sm:$0xf]
      %v808 = vld [vmem:[%s801 + $0x24] sm:$0xf]
      %v809 = vld [vmem:[%s801 + $0x28] sm:$0xf]
      %v810 = vld [vmem:[%s801 + $0x30] sm:$0xf]
      %v811 = vld [vmem:[%s801 + $0x34] sm:$0xf]
      %v812 = vld [vmem:[%s801 + $0x3c] sm:$0xf]
      %v813 = vld [vmem:[%s801 + $0x40] sm:$0xf]
      %v814 = vld [vmem:[%s801 + $0x48] sm:$0xf]
      %v815 = vld [vmem:[%s801 + $0x4c] sm:$0xf]
      %v816 = vld [vmem:[%s801 + $0x54] sm:$0xf]
      %v817 = vld [vmem:[%s801 + $0x58] sm:$0xf]
      %v818 = vld [vmem:[%s801 + $0x60] sm:$0xf]
      %v819 = vld [vmem:[%s801 + $0x64] sm:$0xf]
      %v820 = vld [vmem:[%s801 + $0x6c] sm:$0xf]
      %v821 = vld [vmem:[%s801 + $0x70] sm:$0xf]
      %v822 = vld [vmem:[%s801 + $0x78] sm:$0xf]
      %v823 = vld [vmem:[%s801 + $0x7c] sm:$0xf]
      %v824 = vld [vmem:[%s801 + $0x84] sm:$0xf]
      %v825 = vld [vmem:[%s801 + $0x88] sm:$0xf]
      %v826 = vld [vmem:[%s801 + $0x90] sm:$0xf]
      %v827 = vld [vmem:[%s801 + $0x94] sm:$0xf]
      %v828 = vld [vmem:[%s801 + $0x9c] sm:$0xf]
      %v829 = vld [vmem:[%s801 + $0xa0] sm:$0xf]
      %v830 = vld [vmem:[%s801 + $0xa8] sm:$0xf]
      %v831 = vld [vmem:[%s801 + $0xac] sm:$0xf]
      %v832 = vld [vmem:[%s801 + $0xb4] sm:$0xf]
      %v833 = vld [vmem:[%s801 + $0xb8] sm:$0xf]
      %v834 = vld [vmem:[%s801 + $0x8] sm:$0x1]
      %v835 = vld [vmem:[%s801 + $0x14] sm:$0x1]
      %v836 = vld [vmem:[%s801 + $0x20] sm:$0x1]
      %v837 = vld [vmem:[%s801 + $0x2c] sm:$0x1]
      %v838 = vld [vmem:[%s801 + $0x38] sm:$0x1]
      %v839 = vld [vmem:[%s801 + $0x44] sm:$0x1]
      %v840 = vld [vmem:[%s801 + $0x50] sm:$0x1]
      %v841 = vld [vmem:[%s801 + $0x5c] sm:$0x1]
      %v842 = vld [vmem:[%s801 + $0x68] sm:$0x1]
      %v843 = vld [vmem:[%s801 + $0x74] sm:$0x1]
      %v844 = vld [vmem:[%s801 + $0x80] sm:$0x1]
      %v845 = vld [vmem:[%s801 + $0x8c] sm:$0x1]
      %v846 = vld [vmem:[%s801 + $0x98] sm:$0x1]
      %v847 = vld [vmem:[%s801 + $0xa4] sm:$0x1]
      %v848 = vld [vmem:[%s801 + $0xb0] sm:$0x1]
      %v849 = vld [vmem:[%s801 + $0xbc] sm:$0x1]
      %v850 = vld [vmem:[%s801] sm:$0xe]
      %v851 = vld [vmem:[%s801 + $0xc] sm:$0xe]
      %v852 = vld [vmem:[%s801 + $0x18] sm:$0xe]
      %v853 = vld [vmem:[%s801 + $0x24] sm:$0xe]
      %v854 = vld [vmem:[%s801 + $0x30] sm:$0xe]
      %v855 = vld [vmem:[%s801 + $0x3c] sm:$0xe]
      %v856 = vld [vmem:[%s801 + $0x48] sm:$0xe]
      %v857 = vld [vmem:[%s801 + $0x54] sm:$0xe]
      %v858 = vld [vmem:[%s801 + $0x60] sm:$0xe]
      %v859 = vld [vmem:[%s801 + $0x6c] sm:$0xe]
      %v860 = vld [vmem:[%s801 + $0x78] sm:$0xe]
      %v861 = vld [vmem:[%s801 + $0x84] sm:$0xe]
      %v862 = vld [vmem:[%s801 + $0x90] sm:$0xe]
      %v863 = vld [vmem:[%s801 + $0x9c] sm:$0xe]
      %v864 = vld [vmem:[%s801 + $0xa8] sm:$0xe]
      %v865 = vld [vmem:[%s801 + $0xb4] sm:$0xe]
      %v898 = vunpack.c.l.b16 %v802
      %v899 = vunpack.c.l.b16 %v803
      %v900 = vunpack.c.l.b16 %v804
      %v901 = vunpack.c.l.b16 %v805
      %v902 = vunpack.c.l.b16 %v806
      %v903 = vunpack.c.l.b16 %v807
      %v904 = vunpack.c.l.b16 %v808
      %v905 = vunpack.c.l.b16 %v809
      %v906 = vunpack.c.l.b16 %v810
      %v907 = vunpack.c.l.b16 %v811
      %v908 = vunpack.c.l.b16 %v812
      %v909 = vunpack.c.l.b16 %v813
      %v910 = vunpack.c.l.b16 %v814
      %v911 = vunpack.c.l.b16 %v815
      %v912 = vunpack.c.l.b16 %v816
      %v913 = vunpack.c.l.b16 %v817
      %v914 = vunpack.c.l.b16 %v818
      %v915 = vunpack.c.l.b16 %v819
      %v916 = vunpack.c.l.b16 %v820
      %v917 = vunpack.c.l.b16 %v821
      %v918 = vunpack.c.l.b16 %v822
      %v919 = vunpack.c.l.b16 %v823
      %v920 = vunpack.c.l.b16 %v824
      %v921 = vunpack.c.l.b16 %v825
      %v922 = vunpack.c.l.b16 %v826
      %v923 = vunpack.c.l.b16 %v827
      %v924 = vunpack.c.l.b16 %v828
      %v925 = vunpack.c.l.b16 %v829
      %v926 = vunpack.c.l.b16 %v830
      %v927 = vunpack.c.l.b16 %v831
      %v928 = vunpack.c.l.b16 %v832
      %v929 = vunpack.c.l.b16 %v833
      %v930 = vpack.c.b16 %v899, %v898
      %v931 = vpack.c.b16 %v901, %v900
      %v932 = vpack.c.b16 %v903, %v902
      %v933 = vpack.c.b16 %v905, %v904
      %v934 = vpack.c.b16 %v907, %v906
      %v935 = vpack.c.b16 %v909, %v908
      %v936 = vpack.c.b16 %v911, %v910
      %v937 = vpack.c.b16 %v913, %v912
      %v938 = vpack.c.b16 %v915, %v914
      %v939 = vpack.c.b16 %v917, %v916
      %v940 = vpack.c.b16 %v919, %v918
      %v941 = vpack.c.b16 %v921, %v920
      %v942 = vpack.c.b16 %v923, %v922
      %v943 = vpack.c.b16 %v925, %v924
      %v944 = vpack.c.b16 %v927, %v926
      %v945 = vpack.c.b16 %v929, %v928
      %v978 = vunpack.c.l.b16 %v834
      %v979 = vunpack.c.l.b16 %v835
      %v980 = vunpack.c.l.b16 %v836
      %v981 = vunpack.c.l.b16 %v837
      %v982 = vunpack.c.l.b16 %v838
      %v983 = vunpack.c.l.b16 %v839
      %v984 = vunpack.c.l.b16 %v840
      %v985 = vunpack.c.l.b16 %v841
      %v986 = vunpack.c.l.b16 %v842
      %v987 = vunpack.c.l.b16 %v843
      %v988 = vunpack.c.l.b16 %v844
      %v989 = vunpack.c.l.b16 %v845
      %v990 = vunpack.c.l.b16 %v846
      %v991 = vunpack.c.l.b16 %v847
      %v992 = vunpack.c.l.b16 %v848
      %v993 = vunpack.c.l.b16 %v849
      %v994 = vpack.c.b16 %v978, %v978
      %v995 = vpack.c.b16 %v979, %v979
      %v996 = vpack.c.b16 %v980, %v980
      %v997 = vpack.c.b16 %v981, %v981
      %v998 = vpack.c.b16 %v982, %v982
      %v999 = vpack.c.b16 %v983, %v983
      %v1000 = vpack.c.b16 %v984, %v984
      %v1001 = vpack.c.b16 %v985, %v985
      %v1002 = vpack.c.b16 %v986, %v986
      %v1003 = vpack.c.b16 %v987, %v987
      %v1004 = vpack.c.b16 %v988, %v988
      %v1005 = vpack.c.b16 %v989, %v989
      %v1006 = vpack.c.b16 %v990, %v990
      %v1007 = vpack.c.b16 %v991, %v991
      %v1008 = vpack.c.b16 %v992, %v992
      %v1009 = vpack.c.b16 %v993, %v993
      %v1011 = vshrl.u32 %v930, 16
      %v1013 = vshll.u32 %v930, 16
      %v1015 = vrot.slane %v1013, 1
      %v1016 = vor.u32 %v1011, %v1015
      %v1018 = vshll.u32 %v994, 16
      %v1020 = vrot.slane %v1018, 1
      %v1021 = vsel %vm431, %v1016, %v1020
      %v1023 = vshrl.u32 %v931, 16
      %v1025 = vshll.u32 %v931, 16
      %v1027 = vrot.slane %v1025, 1
      %v1028 = vor.u32 %v1023, %v1027
      %v1030 = vshll.u32 %v995, 16
      %v1032 = vrot.slane %v1030, 1
      %v1033 = vsel %vm431, %v1028, %v1032
      %v1035 = vshrl.u32 %v932, 16
      %v1037 = vshll.u32 %v932, 16
      %v1039 = vrot.slane %v1037, 1
      %v1040 = vor.u32 %v1035, %v1039
      %v1042 = vshll.u32 %v996, 16
      %v1044 = vrot.slane %v1042, 1
      %v1045 = vsel %vm431, %v1040, %v1044
      %v1047 = vshrl.u32 %v933, 16
      %v1049 = vshll.u32 %v933, 16
      %v1051 = vrot.slane %v1049, 1
      %v1052 = vor.u32 %v1047, %v1051
      %v1054 = vshll.u32 %v997, 16
      %v1056 = vrot.slane %v1054, 1
      %v1057 = vsel %vm431, %v1052, %v1056
      %v1059 = vshrl.u32 %v934, 16
      %v1061 = vshll.u32 %v934, 16
      %v1063 = vrot.slane %v1061, 1
      %v1064 = vor.u32 %v1059, %v1063
      %v1066 = vshll.u32 %v998, 16
      %v1068 = vrot.slane %v1066, 1
      %v1069 = vsel %vm431, %v1064, %v1068
      %v1071 = vshrl.u32 %v935, 16
      %v1073 = vshll.u32 %v935, 16
      %v1075 = vrot.slane %v1073, 1
      %v1076 = vor.u32 %v1071, %v1075
      %v1078 = vshll.u32 %v999, 16
      %v1080 = vrot.slane %v1078, 1
      %v1081 = vsel %vm431, %v1076, %v1080
      %v1083 = vshrl.u32 %v936, 16
      %v1085 = vshll.u32 %v936, 16
      %v1087 = vrot.slane %v1085, 1
      %v1088 = vor.u32 %v1083, %v1087
      %v1090 = vshll.u32 %v1000, 16
      %v1092 = vrot.slane %v1090, 1
      %v1093 = vsel %vm431, %v1088, %v1092
      %v1095 = vshrl.u32 %v937, 16
      %v1097 = vshll.u32 %v937, 16
      %v1099 = vrot.slane %v1097, 1
      %v1100 = vor.u32 %v1095, %v1099
      %v1102 = vshll.u32 %v1001, 16
      %v1104 = vrot.slane %v1102, 1
      %v1105 = vsel %vm431, %v1100, %v1104
      %v1107 = vshrl.u32 %v938, 16
      %v1109 = vshll.u32 %v938, 16
      %v1111 = vrot.slane %v1109, 1
      %v1112 = vor.u32 %v1107, %v1111
      %v1114 = vshll.u32 %v1002, 16
      %v1116 = vrot.slane %v1114, 1
      %v1117 = vsel %vm431, %v1112, %v1116
      %v1119 = vshrl.u32 %v939, 16
      %v1121 = vshll.u32 %v939, 16
      %v1123 = vrot.slane %v1121, 1
      %v1124 = vor.u32 %v1119, %v1123
      %v1126 = vshll.u32 %v1003, 16
      %v1128 = vrot.slane %v1126, 1
      %v1129 = vsel %vm431, %v1124, %v1128
      %v1131 = vshrl.u32 %v940, 16
      %v1133 = vshll.u32 %v940, 16
      %v1135 = vrot.slane %v1133, 1
      %v1136 = vor.u32 %v1131, %v1135
      %v1138 = vshll.u32 %v1004, 16
      %v1140 = vrot.slane %v1138, 1
      %v1141 = vsel %vm431, %v1136, %v1140
      %v1143 = vshrl.u32 %v941, 16
      %v1145 = vshll.u32 %v941, 16
      %v1147 = vrot.slane %v1145, 1
      %v1148 = vor.u32 %v1143, %v1147
      %v1150 = vshll.u32 %v1005, 16
      %v1152 = vrot.slane %v1150, 1
      %v1153 = vsel %vm431, %v1148, %v1152
      %v1155 = vshrl.u32 %v942, 16
      %v1157 = vshll.u32 %v942, 16
      %v1159 = vrot.slane %v1157, 1
      %v1160 = vor.u32 %v1155, %v1159
      %v1162 = vshll.u32 %v1006, 16
      %v1164 = vrot.slane %v1162, 1
      %v1165 = vsel %vm431, %v1160, %v1164
      %v1167 = vshrl.u32 %v943, 16
      %v1169 = vshll.u32 %v943, 16
      %v1171 = vrot.slane %v1169, 1
      %v1172 = vor.u32 %v1167, %v1171
      %v1174 = vshll.u32 %v1007, 16
      %v1176 = vrot.slane %v1174, 1
      %v1177 = vsel %vm431, %v1172, %v1176
      %v1179 = vshrl.u32 %v944, 16
      %v1181 = vshll.u32 %v944, 16
      %v1183 = vrot.slane %v1181, 1
      %v1184 = vor.u32 %v1179, %v1183
      %v1186 = vshll.u32 %v1008, 16
      %v1188 = vrot.slane %v1186, 1
      %v1189 = vsel %vm431, %v1184, %v1188
      %v1191 = vshrl.u32 %v945, 16
      %v1193 = vshll.u32 %v945, 16
      %v1195 = vrot.slane %v1193, 1
      %v1196 = vor.u32 %v1191, %v1195
      %v1198 = vshll.u32 %v1009, 16
      %v1200 = vrot.slane %v1198, 1
      %v1201 = vsel %vm431, %v1196, %v1200
      %v1234 = vunpack.c.l.b16 %v850
      %v1235 = vunpack.c.l.b16 %v851
      %v1236 = vunpack.c.l.b16 %v852
      %v1237 = vunpack.c.l.b16 %v853
      %v1238 = vunpack.c.l.b16 %v854
      %v1239 = vunpack.c.l.b16 %v855
      %v1240 = vunpack.c.l.b16 %v856
      %v1241 = vunpack.c.l.b16 %v857
      %v1242 = vunpack.c.l.b16 %v858
      %v1243 = vunpack.c.l.b16 %v859
      %v1244 = vunpack.c.l.b16 %v860
      %v1245 = vunpack.c.l.b16 %v861
      %v1246 = vunpack.c.l.b16 %v862
      %v1247 = vunpack.c.l.b16 %v863
      %v1248 = vunpack.c.l.b16 %v864
      %v1249 = vunpack.c.l.b16 %v865
      %v1250 = vpack.c.b16 %v899, %v1234
      %v1251 = vpack.c.b16 %v901, %v1235
      %v1252 = vpack.c.b16 %v903, %v1236
      %v1253 = vpack.c.b16 %v905, %v1237
      %v1254 = vpack.c.b16 %v907, %v1238
      %v1255 = vpack.c.b16 %v909, %v1239
      %v1256 = vpack.c.b16 %v911, %v1240
      %v1257 = vpack.c.b16 %v913, %v1241
      %v1258 = vpack.c.b16 %v915, %v1242
      %v1259 = vpack.c.b16 %v917, %v1243
      %v1260 = vpack.c.b16 %v919, %v1244
      %v1261 = vpack.c.b16 %v921, %v1245
      %v1262 = vpack.c.b16 %v923, %v1246
      %v1263 = vpack.c.b16 %v925, %v1247
      %v1264 = vpack.c.b16 %v927, %v1248
      %v1265 = vpack.c.b16 %v929, %v1249
      %v1266 = vrot.slane %v1250, 1
      %v1267 = vrot.slane %v994, 1
      %v1268 = vsel %vm688, %v1266, %v1267
      %v1269 = vrot.slane %v1251, 1
      %v1270 = vrot.slane %v995, 1
      %v1271 = vsel %vm688, %v1269, %v1270
      %v1272 = vrot.slane %v1252, 1
      %v1273 = vrot.slane %v996, 1
      %v1274 = vsel %vm688, %v1272, %v1273
      %v1275 = vrot.slane %v1253, 1
      %v1276 = vrot.slane %v997, 1
      %v1277 = vsel %vm688, %v1275, %v1276
      %v1278 = vrot.slane %v1254, 1
      %v1279 = vrot.slane %v998, 1
      %v1280 = vsel %vm688, %v1278, %v1279
      %v1281 = vrot.slane %v1255, 1
      %v1282 = vrot.slane %v999, 1
      %v1283 = vsel %vm688, %v1281, %v1282
      %v1284 = vrot.slane %v1256, 1
      %v1285 = vrot.slane %v1000, 1
      %v1286 = vsel %vm688, %v1284, %v1285
      %v1287 = vrot.slane %v1257, 1
      %v1288 = vrot.slane %v1001, 1
      %v1289 = vsel %vm688, %v1287, %v1288
      %v1290 = vrot.slane %v1258, 1
      %v1291 = vrot.slane %v1002, 1
      %v1292 = vsel %vm688, %v1290, %v1291
      %v1293 = vrot.slane %v1259, 1
      %v1294 = vrot.slane %v1003, 1
      %v1295 = vsel %vm688, %v1293, %v1294
      %v1296 = vrot.slane %v1260, 1
      %v1297 = vrot.slane %v1004, 1
      %v1298 = vsel %vm688, %v1296, %v1297
      %v1299 = vrot.slane %v1261, 1
      %v1300 = vrot.slane %v1005, 1
      %v1301 = vsel %vm688, %v1299, %v1300
      %v1302 = vrot.slane %v1262, 1
      %v1303 = vrot.slane %v1006, 1
      %v1304 = vsel %vm688, %v1302, %v1303
      %v1305 = vrot.slane %v1263, 1
      %v1306 = vrot.slane %v1007, 1
      %v1307 = vsel %vm688, %v1305, %v1306
      %v1308 = vrot.slane %v1264, 1
      %v1309 = vrot.slane %v1008, 1
      %v1310 = vsel %vm688, %v1308, %v1309
      %v1311 = vrot.slane %v1265, 1
      %v1312 = vrot.slane %v1009, 1
      %v1313 = vsel %vm688, %v1311, %v1312
      %s1330 = scalar_lea.vmem %s210, 192
      %v1331 = vld [vmem:[%s1330] sm:$0xf]
      %v1332 = vld [vmem:[%s1330 + $0x4] sm:$0xf]
      %v1333 = vld [vmem:[%s1330 + $0x8] sm:$0xf]
      %v1334 = vld [vmem:[%s1330 + $0xc] sm:$0xf]
      %v1335 = vld [vmem:[%s1330 + $0x10] sm:$0xf]
      %v1336 = vld [vmem:[%s1330 + $0x14] sm:$0xf]
      %v1337 = vld [vmem:[%s1330 + $0x18] sm:$0xf]
      %v1338 = vld [vmem:[%s1330 + $0x1c] sm:$0xf]
      %v1339 = vld [vmem:[%s1330 + $0x20] sm:$0xf]
      %v1340 = vld [vmem:[%s1330 + $0x24] sm:$0xf]
      %v1341 = vld [vmem:[%s1330 + $0x28] sm:$0xf]
      %v1342 = vld [vmem:[%s1330 + $0x2c] sm:$0xf]
      %v1343 = vld [vmem:[%s1330 + $0x30] sm:$0xf]
      %v1344 = vld [vmem:[%s1330 + $0x34] sm:$0xf]
      %v1345 = vld [vmem:[%s1330 + $0x38] sm:$0xf]
      %v1346 = vld [vmem:[%s1330 + $0x3c] sm:$0xf]
      %v1347 = vld [vmem:[%s1330 + $0x40] sm:$0xf]
      %v1348 = vld [vmem:[%s1330 + $0x44] sm:$0xf]
      %v1349 = vld [vmem:[%s1330 + $0x48] sm:$0xf]
      %v1350 = vld [vmem:[%s1330 + $0x4c] sm:$0xf]
      %v1351 = vld [vmem:[%s1330 + $0x50] sm:$0xf]
      %v1352 = vld [vmem:[%s1330 + $0x54] sm:$0xf]
      %v1353 = vld [vmem:[%s1330 + $0x58] sm:$0xf]
      %v1354 = vld [vmem:[%s1330 + $0x5c] sm:$0xf]
      %v1355 = vld [vmem:[%s1330 + $0x60] sm:$0xf]
      %v1356 = vld [vmem:[%s1330 + $0x64] sm:$0xf]
      %v1357 = vld [vmem:[%s1330 + $0x68] sm:$0xf]
      %v1358 = vld [vmem:[%s1330 + $0x6c] sm:$0xf]
      %v1359 = vld [vmem:[%s1330 + $0x70] sm:$0xf]
      %v1360 = vld [vmem:[%s1330 + $0x74] sm:$0xf]
      %v1361 = vld [vmem:[%s1330 + $0x78] sm:$0xf]
      %v1362 = vld [vmem:[%s1330 + $0x7c] sm:$0xf]
      %v1363 = vld [vmem:[%s1330 + $0x80] sm:$0xf]
      %v1364 = vld [vmem:[%s1330 + $0x84] sm:$0xf]
      %v1365 = vld [vmem:[%s1330 + $0x88] sm:$0xf]
      %v1366 = vld [vmem:[%s1330 + $0x8c] sm:$0xf]
      %v1367 = vld [vmem:[%s1330 + $0x90] sm:$0xf]
      %v1368 = vld [vmem:[%s1330 + $0x94] sm:$0xf]
      %v1369 = vld [vmem:[%s1330 + $0x98] sm:$0xf]
      %v1370 = vld [vmem:[%s1330 + $0x9c] sm:$0xf]
      %v1371 = vld [vmem:[%s1330 + $0xa0] sm:$0xf]
      %v1372 = vld [vmem:[%s1330 + $0xa4] sm:$0xf]
      %v1373 = vld [vmem:[%s1330 + $0xa8] sm:$0xf]
      %v1374 = vld [vmem:[%s1330 + $0xac] sm:$0xf]
      %v1375 = vld [vmem:[%s1330 + $0xb0] sm:$0xf]
      %v1376 = vld [vmem:[%s1330 + $0xb4] sm:$0xf]
      %v1377 = vld [vmem:[%s1330 + $0xb8] sm:$0xf]
      %v1378 = vld [vmem:[%s1330 + $0xbc] sm:$0xf]
      %v1427 = vunpack.c.l.b16 %v1331
      %v1428 = vunpack.c.l.b16 %v1332
      %v1429 = vunpack.c.l.b16 %v1333
      %v1430 = vunpack.c.l.b16 %v1334
      %v1431 = vunpack.c.l.b16 %v1335
      %v1432 = vunpack.c.l.b16 %v1336
      %v1433 = vunpack.c.l.b16 %v1337
      %v1434 = vunpack.c.l.b16 %v1338
      %v1435 = vunpack.c.l.b16 %v1339
      %v1436 = vunpack.c.l.b16 %v1340
      %v1437 = vunpack.c.l.b16 %v1341
      %v1438 = vunpack.c.l.b16 %v1342
      %v1439 = vunpack.c.l.b16 %v1343
      %v1440 = vunpack.c.l.b16 %v1344
      %v1441 = vunpack.c.l.b16 %v1345
      %v1442 = vunpack.c.l.b16 %v1346
      %v1443 = vunpack.c.l.b16 %v1347
      %v1444 = vunpack.c.l.b16 %v1348
      %v1445 = vunpack.c.l.b16 %v1349
      %v1446 = vunpack.c.l.b16 %v1350
      %v1447 = vunpack.c.l.b16 %v1351
      %v1448 = vunpack.c.l.b16 %v1352
      %v1449 = vunpack.c.l.b16 %v1353
      %v1450 = vunpack.c.l.b16 %v1354
      %v1451 = vunpack.c.l.b16 %v1355
      %v1452 = vunpack.c.l.b16 %v1356
      %v1453 = vunpack.c.l.b16 %v1357
      %v1454 = vunpack.c.l.b16 %v1358
      %v1455 = vunpack.c.l.b16 %v1359
      %v1456 = vunpack.c.l.b16 %v1360
      %v1457 = vunpack.c.l.b16 %v1361
      %v1458 = vunpack.c.l.b16 %v1362
      %v1459 = vunpack.c.l.b16 %v1363
      %v1460 = vunpack.c.l.b16 %v1364
      %v1461 = vunpack.c.l.b16 %v1365
      %v1462 = vunpack.c.l.b16 %v1366
      %v1463 = vunpack.c.l.b16 %v1367
      %v1464 = vunpack.c.l.b16 %v1368
      %v1465 = vunpack.c.l.b16 %v1369
      %v1466 = vunpack.c.l.b16 %v1370
      %v1467 = vunpack.c.l.b16 %v1371
      %v1468 = vunpack.c.l.b16 %v1372
      %v1469 = vunpack.c.l.b16 %v1373
      %v1470 = vunpack.c.l.b16 %v1374
      %v1471 = vunpack.c.l.b16 %v1375
      %v1472 = vunpack.c.l.b16 %v1376
      %v1473 = vunpack.c.l.b16 %v1377
      %v1474 = vunpack.c.l.b16 %v1378
      %v1475 = vpack.c.b16 %v1428, %v1427
      %v1476 = vpack.c.b16 %v1430, %v1429
      %v1477 = vpack.c.b16 %v1432, %v1431
      %v1478 = vpack.c.b16 %v1434, %v1433
      %v1479 = vpack.c.b16 %v1436, %v1435
      %v1480 = vpack.c.b16 %v1438, %v1437
      %v1481 = vpack.c.b16 %v1440, %v1439
      %v1482 = vpack.c.b16 %v1442, %v1441
      %v1483 = vpack.c.b16 %v1444, %v1443
      %v1484 = vpack.c.b16 %v1446, %v1445
      %v1485 = vpack.c.b16 %v1448, %v1447
      %v1486 = vpack.c.b16 %v1450, %v1449
      %v1487 = vpack.c.b16 %v1452, %v1451
      %v1488 = vpack.c.b16 %v1454, %v1453
      %v1489 = vpack.c.b16 %v1456, %v1455
      %v1490 = vpack.c.b16 %v1458, %v1457
      %v1491 = vpack.c.b16 %v1460, %v1459
      %v1492 = vpack.c.b16 %v1462, %v1461
      %v1493 = vpack.c.b16 %v1464, %v1463
      %v1494 = vpack.c.b16 %v1466, %v1465
      %v1495 = vpack.c.b16 %v1468, %v1467
      %v1496 = vpack.c.b16 %v1470, %v1469
      %v1497 = vpack.c.b16 %v1472, %v1471
      %v1498 = vpack.c.b16 %v1474, %v1473
      %1523 = vmatprep.subr.bf16.mxu0 0
      %1524 = vmatpush1.bf16.msra.mxu0 %v1482
      %1525 = vmatprep.subr.bf16.mxu0 0
      %1526 = vmatpush1.bf16.msra.mxu0 %v1481
      %1527 = vmatprep.subr.bf16.mxu0 0
      %1528 = vmatpush1.bf16.msra.mxu0 %v1480
      %1529 = vmatprep.subr.bf16.mxu0 0
      %1530 = vmatpush1.bf16.msra.mxu0 %v1479
      %1531 = vmatprep.subr.bf16.mxu0 0
      %1532 = vmatpush1.bf16.msra.mxu0 %v1478
      %1533 = vmatprep.subr.bf16.mxu0 0
      %1534 = vmatpush1.bf16.msra.mxu0 %v1477
      %1535 = vmatprep.subr.bf16.mxu0 0
      %1536 = vmatpush1.bf16.msra.mxu0 %v1476
      %1537 = vmatprep.subr.bf16.mxu0 0
      %1538 = vmatpush1.bf16.msra.mxu0 %v1475
      %1539 = vmatprep.subr.bf16.mxu0 0
      %1540 = vmatpush2.bf16.msra.mxu0 %v1490
      %1541 = vmatprep.subr.bf16.mxu0 0
      %1542 = vmatpush2.bf16.msra.mxu0 %v1489
      %1543 = vmatprep.subr.bf16.mxu0 0
      %1544 = vmatpush2.bf16.msra.mxu0 %v1488
      %1545 = vmatprep.subr.bf16.mxu0 0
      %1546 = vmatpush2.bf16.msra.mxu0 %v1487
      %1547 = vmatprep.subr.bf16.mxu0 0
      %1548 = vmatpush2.bf16.msra.mxu0 %v1486
      %1549 = vmatprep.subr.bf16.mxu0 0
      %1550 = vmatpush2.bf16.msra.mxu0 %v1485
      %1551 = vmatprep.subr.bf16.mxu0 0
      %1552 = vmatpush2.bf16.msra.mxu0 %v1484
      %1553 = vmatprep.subr.bf16.mxu0 0
      %1554 = vmatpush2.bf16.msra.mxu0 %v1483
      %1555 = vmatprep.mubr.bf16.mxu0 %v1021
      %1556 = vmatmul.mubr.bf16.gmra.mxu0 %v930
      %v1557 = vpop.f32.mrf.mxu0
      %v1558 = vadd.f32 0.0, %v1557
      %v1559 = vpop.f32.mrf.mxu0
      %v1560 = vpop.f32.mrf.mxu0
      %v1561 = vadd.f32 0.0, %v1560
      %v1562 = vpop.f32.mrf.mxu0
      %1563 = vmatprep.mubr.bf16.mxu0 %v1033
      %1564 = vmatmul.mubr.bf16.gmra.mxu0 %v931
      %v1565 = vpop.f32.mrf.mxu0
      %v1566 = vadd.f32 0.0, %v1565
      %v1567 = vpop.f32.mrf.mxu0
      %v1568 = vpop.f32.mrf.mxu0
      %v1569 = vadd.f32 0.0, %v1568
      %v1570 = vpop.f32.mrf.mxu0
      %1571 = vmatprep.mubr.bf16.mxu0 %v1045
      %1572 = vmatmul.mubr.bf16.gmra.mxu0 %v932
      %v1573 = vpop.f32.mrf.mxu0
      %v1574 = vadd.f32 0.0, %v1573
      %v1575 = vpop.f32.mrf.mxu0
      %v1576 = vpop.f32.mrf.mxu0
      %v1577 = vadd.f32 0.0, %v1576
      %v1578 = vpop.f32.mrf.mxu0
      %1579 = vmatprep.mubr.bf16.mxu0 %v1057
      %1580 = vmatmul.mubr.bf16.gmra.mxu0 %v933
      %v1581 = vpop.f32.mrf.mxu0
      %v1582 = vadd.f32 0.0, %v1581
      %v1583 = vpop.f32.mrf.mxu0
      %v1584 = vpop.f32.mrf.mxu0
      %v1585 = vadd.f32 0.0, %v1584
      %v1586 = vpop.f32.mrf.mxu0
      %1587 = vmatprep.mubr.bf16.mxu0 %v1069
      %1588 = vmatmul.mubr.bf16.gmra.mxu0 %v934
      %v1589 = vpop.f32.mrf.mxu0
      %v1590 = vadd.f32 0.0, %v1589
      %v1591 = vpop.f32.mrf.mxu0
      %v1592 = vpop.f32.mrf.mxu0
      %v1593 = vadd.f32 0.0, %v1592
      %v1594 = vpop.f32.mrf.mxu0
      %1595 = vmatprep.mubr.bf16.mxu0 %v1081
      %1596 = vmatmul.mubr.bf16.gmra.mxu0 %v935
      %v1597 = vpop.f32.mrf.mxu0
      %v1598 = vadd.f32 0.0, %v1597
      %v1599 = vpop.f32.mrf.mxu0
      %v1600 = vpop.f32.mrf.mxu0
      %v1601 = vadd.f32 0.0, %v1600
      %v1602 = vpop.f32.mrf.mxu0
      %1603 = vmatprep.mubr.bf16.mxu0 %v1093
      %1604 = vmatmul.mubr.bf16.gmra.mxu0 %v936
      %v1605 = vpop.f32.mrf.mxu0
      %v1606 = vadd.f32 0.0, %v1605
      %v1607 = vpop.f32.mrf.mxu0
      %v1608 = vpop.f32.mrf.mxu0
      %v1609 = vadd.f32 0.0, %v1608
      %v1610 = vpop.f32.mrf.mxu0
      %1611 = vmatprep.mubr.bf16.mxu0 %v1105
      %1612 = vmatmul.mubr.bf16.gmra.mxu0 %v937
      %v1613 = vpop.f32.mrf.mxu0
      %v1614 = vadd.f32 0.0, %v1613
      %v1615 = vpop.f32.mrf.mxu0
      %v1616 = vpop.f32.mrf.mxu0
      %v1617 = vadd.f32 0.0, %v1616
      %v1618 = vpop.f32.mrf.mxu0
      %1619 = vmatprep.mubr.bf16.mxu0 %v1117
      %1620 = vmatmul.mubr.bf16.gmra.mxu0 %v938
      %v1621 = vpop.f32.mrf.mxu0
      %v1622 = vadd.f32 0.0, %v1621
      %v1623 = vpop.f32.mrf.mxu0
      %v1624 = vpop.f32.mrf.mxu0
      %v1625 = vadd.f32 0.0, %v1624
      %v1626 = vpop.f32.mrf.mxu0
      %1627 = vmatprep.mubr.bf16.mxu0 %v1129
      %1628 = vmatmul.mubr.bf16.gmra.mxu0 %v939
      %v1629 = vpop.f32.mrf.mxu0
      %v1630 = vadd.f32 0.0, %v1629
      %v1631 = vpop.f32.mrf.mxu0
      %v1632 = vpop.f32.mrf.mxu0
      %v1633 = vadd.f32 0.0, %v1632
      %v1634 = vpop.f32.mrf.mxu0
      %1635 = vmatprep.mubr.bf16.mxu0 %v1141
      %1636 = vmatmul.mubr.bf16.gmra.mxu0 %v940
      %v1637 = vpop.f32.mrf.mxu0
      %v1638 = vadd.f32 0.0, %v1637
      %v1639 = vpop.f32.mrf.mxu0
      %v1640 = vpop.f32.mrf.mxu0
      %v1641 = vadd.f32 0.0, %v1640
      %v1642 = vpop.f32.mrf.mxu0
      %1643 = vmatprep.mubr.bf16.mxu0 %v1153
      %1644 = vmatmul.mubr.bf16.gmra.mxu0 %v941
      %v1645 = vpop.f32.mrf.mxu0
      %v1646 = vadd.f32 0.0, %v1645
      %v1647 = vpop.f32.mrf.mxu0
      %v1648 = vpop.f32.mrf.mxu0
      %v1649 = vadd.f32 0.0, %v1648
      %v1650 = vpop.f32.mrf.mxu0
      %1651 = vmatprep.mubr.bf16.mxu0 %v1165
      %1652 = vmatmul.mubr.bf16.gmra.mxu0 %v942
      %v1653 = vpop.f32.mrf.mxu0
      %v1654 = vadd.f32 0.0, %v1653
      %v1655 = vpop.f32.mrf.mxu0
      %v1656 = vpop.f32.mrf.mxu0
      %v1657 = vadd.f32 0.0, %v1656
      %v1658 = vpop.f32.mrf.mxu0
      %1659 = vmatprep.mubr.bf16.mxu0 %v1177
      %1660 = vmatmul.mubr.bf16.gmra.mxu0 %v943
      %v1661 = vpop.f32.mrf.mxu0
      %v1662 = vadd.f32 0.0, %v1661
      %v1663 = vpop.f32.mrf.mxu0
      %v1664 = vpop.f32.mrf.mxu0
      %v1665 = vadd.f32 0.0, %v1664
      %v1666 = vpop.f32.mrf.mxu0
      %1667 = vmatprep.mubr.bf16.mxu0 %v1189
      %1668 = vmatmul.mubr.bf16.gmra.mxu0 %v944
      %v1669 = vpop.f32.mrf.mxu0
      %v1670 = vadd.f32 0.0, %v1669
      %v1671 = vpop.f32.mrf.mxu0
      %v1672 = vpop.f32.mrf.mxu0
      %v1673 = vadd.f32 0.0, %v1672
      %v1674 = vpop.f32.mrf.mxu0
      %1675 = vmatprep.mubr.bf16.mxu0 %v1201
      %1676 = vmatmul.mubr.bf16.gmra.mxu0 %v945
      %v1677 = vpop.f32.mrf.mxu0
      %v1678 = vadd.f32 0.0, %v1677
      %v1679 = vpop.f32.mrf.mxu0
      %v1680 = vpop.f32.mrf.mxu0
      %v1681 = vadd.f32 0.0, %v1680
      %v1682 = vpop.f32.mrf.mxu0
      %1683 = vdwg.mxu0
      %1684 = vmatprep.subr.bf16.mxu0 0
      %1685 = vmatpush1.bf16.msra.mxu0 %v1498
      %1686 = vmatprep.subr.bf16.mxu0 0
      %1687 = vmatpush1.bf16.msra.mxu0 %v1497
      %1688 = vmatprep.subr.bf16.mxu0 0
      %1689 = vmatpush1.bf16.msra.mxu0 %v1496
      %1690 = vmatprep.subr.bf16.mxu0 0
      %1691 = vmatpush1.bf16.msra.mxu0 %v1495
      %1692 = vmatprep.subr.bf16.mxu0 0
      %1693 = vmatpush1.bf16.msra.mxu0 %v1494
      %1694 = vmatprep.subr.bf16.mxu0 0
      %1695 = vmatpush1.bf16.msra.mxu0 %v1493
      %1696 = vmatprep.subr.bf16.mxu0 0
      %1697 = vmatpush1.bf16.msra.mxu0 %v1492
      %1698 = vmatprep.subr.bf16.mxu0 0
      %1699 = vmatpush1.bf16.msra.mxu0 %v1491
      %1700 = vmatprep.subr.bf16.mxu0 0
      %1701 = vmatpush2.bf16.msra.mxu0 0
      %1702 = vmatprep.subr.bf16.mxu0 0
      %1703 = vmatpush2.bf16.msra.mxu0 0
      %1704 = vmatprep.subr.bf16.mxu0 0
      %1705 = vmatpush2.bf16.msra.mxu0 0
      %1706 = vmatprep.subr.bf16.mxu0 0
      %1707 = vmatpush2.bf16.msra.mxu0 0
      %1708 = vmatprep.subr.bf16.mxu0 0
      %1709 = vmatpush2.bf16.msra.mxu0 0
      %1710 = vmatprep.subr.bf16.mxu0 0
      %1711 = vmatpush2.bf16.msra.mxu0 0
      %1712 = vmatprep.subr.bf16.mxu0 0
      %1713 = vmatpush2.bf16.msra.mxu0 0
      %1714 = vmatprep.subr.bf16.mxu0 0
      %1715 = vmatpush2.bf16.msra.mxu0 0
      %1716 = vmatprep.mubr.bf16.mxu0 0
      %1717 = vmatmul.mubr.bf16.gmra.mxu0 %v1268
      %v1718 = vpop.f32.mrf.mxu0
      %v1719 = vadd.f32 %v1558, %v1718
      %v1720 = vpop.f32.mrf.mxu0
      %v1721 = vpop.f32.mrf.mxu0
      %v1722 = vadd.f32 %v1561, %v1721
      %v1723 = vpop.f32.mrf.mxu0
      %1724 = vmatprep.mubr.bf16.mxu0 0
      %1725 = vmatmul.mubr.bf16.gmra.mxu0 %v1271
      %v1726 = vpop.f32.mrf.mxu0
      %v1727 = vadd.f32 %v1566, %v1726
      %v1728 = vpop.f32.mrf.mxu0
      %v1729 = vpop.f32.mrf.mxu0
      %v1730 = vadd.f32 %v1569, %v1729
      %v1731 = vpop.f32.mrf.mxu0
      %1732 = vmatprep.mubr.bf16.mxu0 0
      %1733 = vmatmul.mubr.bf16.gmra.mxu0 %v1274
      %v1734 = vpop.f32.mrf.mxu0
      %v1735 = vadd.f32 %v1574, %v1734
      %v1736 = vpop.f32.mrf.mxu0
      %v1737 = vpop.f32.mrf.mxu0
      %v1738 = vadd.f32 %v1577, %v1737
      %v1739 = vpop.f32.mrf.mxu0
      %1740 = vmatprep.mubr.bf16.mxu0 0
      %1741 = vmatmul.mubr.bf16.gmra.mxu0 %v1277
      %v1742 = vpop.f32.mrf.mxu0
      %v1743 = vadd.f32 %v1582, %v1742
      %v1744 = vpop.f32.mrf.mxu0
      %v1745 = vpop.f32.mrf.mxu0
      %v1746 = vadd.f32 %v1585, %v1745
      %v1747 = vpop.f32.mrf.mxu0
      %1748 = vmatprep.mubr.bf16.mxu0 0
      %1749 = vmatmul.mubr.bf16.gmra.mxu0 %v1280
      %v1750 = vpop.f32.mrf.mxu0
      %v1751 = vadd.f32 %v1590, %v1750
      %v1752 = vpop.f32.mrf.mxu0
      %v1753 = vpop.f32.mrf.mxu0
      %v1754 = vadd.f32 %v1593, %v1753
      %v1755 = vpop.f32.mrf.mxu0
      %1756 = vmatprep.mubr.bf16.mxu0 0
      %1757 = vmatmul.mubr.bf16.gmra.mxu0 %v1283
      %v1758 = vpop.f32.mrf.mxu0
      %v1759 = vadd.f32 %v1598, %v1758
      %v1760 = vpop.f32.mrf.mxu0
      %v1761 = vpop.f32.mrf.mxu0
      %v1762 = vadd.f32 %v1601, %v1761
      %v1763 = vpop.f32.mrf.mxu0
      %1764 = vmatprep.mubr.bf16.mxu0 0
      %1765 = vmatmul.mubr.bf16.gmra.mxu0 %v1286
      %v1766 = vpop.f32.mrf.mxu0
      %v1767 = vadd.f32 %v1606, %v1766
      %v1768 = vpop.f32.mrf.mxu0
      %v1769 = vpop.f32.mrf.mxu0
      %v1770 = vadd.f32 %v1609, %v1769
      %v1771 = vpop.f32.mrf.mxu0
      %1772 = vmatprep.mubr.bf16.mxu0 0
      %1773 = vmatmul.mubr.bf16.gmra.mxu0 %v1289
      %v1774 = vpop.f32.mrf.mxu0
      %v1775 = vadd.f32 %v1614, %v1774
      %v1776 = vpop.f32.mrf.mxu0
      %v1777 = vpop.f32.mrf.mxu0
      %v1778 = vadd.f32 %v1617, %v1777
      %v1779 = vpop.f32.mrf.mxu0
      %1780 = vmatprep.mubr.bf16.mxu0 0
      %1781 = vmatmul.mubr.bf16.gmra.mxu0 %v1292
      %v1782 = vpop.f32.mrf.mxu0
      %v1783 = vadd.f32 %v1622, %v1782
      %v1784 = vpop.f32.mrf.mxu0
      %v1785 = vpop.f32.mrf.mxu0
      %v1786 = vadd.f32 %v1625, %v1785
      %v1787 = vpop.f32.mrf.mxu0
      %1788 = vmatprep.mubr.bf16.mxu0 0
      %1789 = vmatmul.mubr.bf16.gmra.mxu0 %v1295
      %v1790 = vpop.f32.mrf.mxu0
      %v1791 = vadd.f32 %v1630, %v1790
      %v1792 = vpop.f32.mrf.mxu0
      %v1793 = vpop.f32.mrf.mxu0
      %v1794 = vadd.f32 %v1633, %v1793
      %v1795 = vpop.f32.mrf.mxu0
      %1796 = vmatprep.mubr.bf16.mxu0 0
      %1797 = vmatmul.mubr.bf16.gmra.mxu0 %v1298
      %v1798 = vpop.f32.mrf.mxu0
      %v1799 = vadd.f32 %v1638, %v1798
      %v1800 = vpop.f32.mrf.mxu0
      %v1801 = vpop.f32.mrf.mxu0
      %v1802 = vadd.f32 %v1641, %v1801
      %v1803 = vpop.f32.mrf.mxu0
      %1804 = vmatprep.mubr.bf16.mxu0 0
      %1805 = vmatmul.mubr.bf16.gmra.mxu0 %v1301
      %v1806 = vpop.f32.mrf.mxu0
      %v1807 = vadd.f32 %v1646, %v1806
      %v1808 = vpop.f32.mrf.mxu0
      %v1809 = vpop.f32.mrf.mxu0
      %v1810 = vadd.f32 %v1649, %v1809
      %v1811 = vpop.f32.mrf.mxu0
      %1812 = vmatprep.mubr.bf16.mxu0 0
      %1813 = vmatmul.mubr.bf16.gmra.mxu0 %v1304
      %v1814 = vpop.f32.mrf.mxu0
      %v1815 = vadd.f32 %v1654, %v1814
      %v1816 = vpop.f32.mrf.mxu0
      %v1817 = vpop.f32.mrf.mxu0
      %v1818 = vadd.f32 %v1657, %v1817
      %v1819 = vpop.f32.mrf.mxu0
      %1820 = vmatprep.mubr.bf16.mxu0 0
      %1821 = vmatmul.mubr.bf16.gmra.mxu0 %v1307
      %v1822 = vpop.f32.mrf.mxu0
      %v1823 = vadd.f32 %v1662, %v1822
      %v1824 = vpop.f32.mrf.mxu0
      %v1825 = vpop.f32.mrf.mxu0
      %v1826 = vadd.f32 %v1665, %v1825
      %v1827 = vpop.f32.mrf.mxu0
      %1828 = vmatprep.mubr.bf16.mxu0 0
      %1829 = vmatmul.mubr.bf16.gmra.mxu0 %v1310
      %v1830 = vpop.f32.mrf.mxu0
      %v1831 = vadd.f32 %v1670, %v1830
      %v1832 = vpop.f32.mrf.mxu0
      %v1833 = vpop.f32.mrf.mxu0
      %v1834 = vadd.f32 %v1673, %v1833
      %v1835 = vpop.f32.mrf.mxu0
      %1836 = vmatprep.mubr.bf16.mxu0 0
      %1837 = vmatmul.mubr.bf16.gmra.mxu0 %v1313
      %v1838 = vpop.f32.mrf.mxu0
      %v1839 = vadd.f32 %v1678, %v1838
      %v1840 = vpop.f32.mrf.mxu0
      %v1841 = vpop.f32.mrf.mxu0
      %v1842 = vadd.f32 %v1681, %v1841
      %v1843 = vpop.f32.mrf.mxu0
      %1844 = vdwg.mxu0
      %v1893 = vunpack.c.l.b16 %v753
      %v1894 = vunpack.c.l.b16 %v754
      %v1895 = vunpack.c.l.b16 %v755
      %v1896 = vunpack.c.l.b16 %v756
      %v1897 = vunpack.c.l.b16 %v757
      %v1898 = vunpack.c.l.b16 %v758
      %v1899 = vunpack.c.l.b16 %v759
      %v1900 = vunpack.c.l.b16 %v760
      %v1901 = vunpack.c.l.b16 %v761
      %v1902 = vunpack.c.l.b16 %v762
      %v1903 = vunpack.c.l.b16 %v763
      %v1904 = vunpack.c.l.b16 %v764
      %v1905 = vunpack.c.l.b16 %v765
      %v1906 = vunpack.c.l.b16 %v766
      %v1907 = vunpack.c.l.b16 %v767
      %v1908 = vunpack.c.l.b16 %v768
      %v1909 = vunpack.c.l.b16 %v769
      %v1910 = vunpack.c.l.b16 %v770
      %v1911 = vunpack.c.l.b16 %v771
      %v1912 = vunpack.c.l.b16 %v772
      %v1913 = vunpack.c.l.b16 %v773
      %v1914 = vunpack.c.l.b16 %v774
      %v1915 = vunpack.c.l.b16 %v775
      %v1916 = vunpack.c.l.b16 %v776
      %v1917 = vunpack.c.l.b16 %v777
      %v1918 = vunpack.c.l.b16 %v778
      %v1919 = vunpack.c.l.b16 %v779
      %v1920 = vunpack.c.l.b16 %v780
      %v1921 = vunpack.c.l.b16 %v781
      %v1922 = vunpack.c.l.b16 %v782
      %v1923 = vunpack.c.l.b16 %v783
      %v1924 = vunpack.c.l.b16 %v784
      %v1925 = vunpack.c.l.b16 %v785
      %v1926 = vunpack.c.l.b16 %v786
      %v1927 = vunpack.c.l.b16 %v787
      %v1928 = vunpack.c.l.b16 %v788
      %v1929 = vunpack.c.l.b16 %v789
      %v1930 = vunpack.c.l.b16 %v790
      %v1931 = vunpack.c.l.b16 %v791
      %v1932 = vunpack.c.l.b16 %v792
      %v1933 = vunpack.c.l.b16 %v793
      %v1934 = vunpack.c.l.b16 %v794
      %v1935 = vunpack.c.l.b16 %v795
      %v1936 = vunpack.c.l.b16 %v796
      %v1937 = vunpack.c.l.b16 %v797
      %v1938 = vunpack.c.l.b16 %v798
      %v1939 = vunpack.c.l.b16 %v799
      %v1940 = vunpack.c.l.b16 %v800
      %v1941 = vpack.c.b16 %v1894, %v1893
      %v1942 = vpack.c.b16 %v1896, %v1895
      %v1943 = vpack.c.b16 %v1898, %v1897
      %v1944 = vpack.c.b16 %v1900, %v1899
      %v1945 = vpack.c.b16 %v1902, %v1901
      %v1946 = vpack.c.b16 %v1904, %v1903
      %v1947 = vpack.c.b16 %v1906, %v1905
      %v1948 = vpack.c.b16 %v1908, %v1907
      %v1949 = vpack.c.b16 %v1910, %v1909
      %v1950 = vpack.c.b16 %v1912, %v1911
      %v1951 = vpack.c.b16 %v1914, %v1913
      %v1952 = vpack.c.b16 %v1916, %v1915
      %v1953 = vpack.c.b16 %v1918, %v1917
      %v1954 = vpack.c.b16 %v1920, %v1919
      %v1955 = vpack.c.b16 %v1922, %v1921
      %v1956 = vpack.c.b16 %v1924, %v1923
      %v1957 = vpack.c.b16 %v1926, %v1925
      %v1958 = vpack.c.b16 %v1928, %v1927
      %v1959 = vpack.c.b16 %v1930, %v1929
      %v1960 = vpack.c.b16 %v1932, %v1931
      %v1961 = vpack.c.b16 %v1934, %v1933
      %v1962 = vpack.c.b16 %v1936, %v1935
      %v1963 = vpack.c.b16 %v1938, %v1937
      %v1964 = vpack.c.b16 %v1940, %v1939
      %1989 = vmatprep.subr.bf16.mxu0 0
      %1990 = vmatpush1.bf16.msra.mxu0 %v1948
      %1991 = vmatprep.subr.bf16.mxu0 0
      %1992 = vmatpush1.bf16.msra.mxu0 %v1947
      %1993 = vmatprep.subr.bf16.mxu0 0
      %1994 = vmatpush1.bf16.msra.mxu0 %v1946
      %1995 = vmatprep.subr.bf16.mxu0 0
      %1996 = vmatpush1.bf16.msra.mxu0 %v1945
      %1997 = vmatprep.subr.bf16.mxu0 0
      %1998 = vmatpush1.bf16.msra.mxu0 %v1944
      %1999 = vmatprep.subr.bf16.mxu0 0
      %2000 = vmatpush1.bf16.msra.mxu0 %v1943
      %2001 = vmatprep.subr.bf16.mxu0 0
      %2002 = vmatpush1.bf16.msra.mxu0 %v1942
      %2003 = vmatprep.subr.bf16.mxu0 0
      %2004 = vmatpush1.bf16.msra.mxu0 %v1941
      %2005 = vmatprep.subr.bf16.mxu0 0
      %2006 = vmatpush2.bf16.msra.mxu0 %v1956
      %2007 = vmatprep.subr.bf16.mxu0 0
      %2008 = vmatpush2.bf16.msra.mxu0 %v1955
      %2009 = vmatprep.subr.bf16.mxu0 0
      %2010 = vmatpush2.bf16.msra.mxu0 %v1954
      %2011 = vmatprep.subr.bf16.mxu0 0
      %2012 = vmatpush2.bf16.msra.mxu0 %v1953
      %2013 = vmatprep.subr.bf16.mxu0 0
      %2014 = vmatpush2.bf16.msra.mxu0 %v1952
      %2015 = vmatprep.subr.bf16.mxu0 0
      %2016 = vmatpush2.bf16.msra.mxu0 %v1951
      %2017 = vmatprep.subr.bf16.mxu0 0
      %2018 = vmatpush2.bf16.msra.mxu0 %v1950
      %2019 = vmatprep.subr.bf16.mxu0 0
      %2020 = vmatpush2.bf16.msra.mxu0 %v1949
      %2021 = vmatprep.mubr.bf16.mxu0 %v443
      %2022 = vmatmul.mubr.bf16.gmra.mxu0 %v351
      %v2023 = vpop.f32.mrf.mxu0
      %v2024 = vadd.f32 %v1719, %v2023
      %v2025 = vpop.f32.mrf.mxu0
      %v2026 = vpop.f32.mrf.mxu0
      %v2027 = vadd.f32 %v1722, %v2026
      %v2028 = vpop.f32.mrf.mxu0
      %2029 = vmatprep.mubr.bf16.mxu0 %v455
      %2030 = vmatmul.mubr.bf16.gmra.mxu0 %v352
      %v2031 = vpop.f32.mrf.mxu0
      %v2032 = vadd.f32 %v1727, %v2031
      %v2033 = vpop.f32.mrf.mxu0
      %v2034 = vpop.f32.mrf.mxu0
      %v2035 = vadd.f32 %v1730, %v2034
      %v2036 = vpop.f32.mrf.mxu0
      %2037 = vmatprep.mubr.bf16.mxu0 %v467
      %2038 = vmatmul.mubr.bf16.gmra.mxu0 %v353
      %v2039 = vpop.f32.mrf.mxu0
      %v2040 = vadd.f32 %v1735, %v2039
      %v2041 = vpop.f32.mrf.mxu0
      %v2042 = vpop.f32.mrf.mxu0
      %v2043 = vadd.f32 %v1738, %v2042
      %v2044 = vpop.f32.mrf.mxu0
      %2045 = vmatprep.mubr.bf16.mxu0 %v479
      %2046 = vmatmul.mubr.bf16.gmra.mxu0 %v354
      %v2047 = vpop.f32.mrf.mxu0
      %v2048 = vadd.f32 %v1743, %v2047
      %v2049 = vpop.f32.mrf.mxu0
      %v2050 = vpop.f32.mrf.mxu0
      %v2051 = vadd.f32 %v1746, %v2050
      %v2052 = vpop.f32.mrf.mxu0
      %2053 = vmatprep.mubr.bf16.mxu0 %v491
      %2054 = vmatmul.mubr.bf16.gmra.mxu0 %v355
      %v2055 = vpop.f32.mrf.mxu0
      %v2056 = vadd.f32 %v1751, %v2055
      %v2057 = vpop.f32.mrf.mxu0
      %v2058 = vpop.f32.mrf.mxu0
      %v2059 = vadd.f32 %v1754, %v2058
      %v2060 = vpop.f32.mrf.mxu0
      %2061 = vmatprep.mubr.bf16.mxu0 %v503
      %2062 = vmatmul.mubr.bf16.gmra.mxu0 %v356
      %v2063 = vpop.f32.mrf.mxu0
      %v2064 = vadd.f32 %v1759, %v2063
      %v2065 = vpop.f32.mrf.mxu0
      %v2066 = vpop.f32.mrf.mxu0
      %v2067 = vadd.f32 %v1762, %v2066
      %v2068 = vpop.f32.mrf.mxu0
      %2069 = vmatprep.mubr.bf16.mxu0 %v515
      %2070 = vmatmul.mubr.bf16.gmra.mxu0 %v357
      %v2071 = vpop.f32.mrf.mxu0
      %v2072 = vadd.f32 %v1767, %v2071
      %v2073 = vpop.f32.mrf.mxu0
      %v2074 = vpop.f32.mrf.mxu0
      %v2075 = vadd.f32 %v1770, %v2074
      %v2076 = vpop.f32.mrf.mxu0
      %2077 = vmatprep.mubr.bf16.mxu0 %v527
      %2078 = vmatmul.mubr.bf16.gmra.mxu0 %v358
      %v2079 = vpop.f32.mrf.mxu0
      %v2080 = vadd.f32 %v1775, %v2079
      %v2081 = vpop.f32.mrf.mxu0
      %v2082 = vpop.f32.mrf.mxu0
      %v2083 = vadd.f32 %v1778, %v2082
      %v2084 = vpop.f32.mrf.mxu0
      %2085 = vmatprep.mubr.bf16.mxu0 %v539
      %2086 = vmatmul.mubr.bf16.gmra.mxu0 %v359
      %v2087 = vpop.f32.mrf.mxu0
      %v2088 = vadd.f32 %v1783, %v2087
      %v2089 = vpop.f32.mrf.mxu0
      %v2090 = vpop.f32.mrf.mxu0
      %v2091 = vadd.f32 %v1786, %v2090
      %v2092 = vpop.f32.mrf.mxu0
      %2093 = vmatprep.mubr.bf16.mxu0 %v551
      %2094 = vmatmul.mubr.bf16.gmra.mxu0 %v360
      %v2095 = vpop.f32.mrf.mxu0
      %v2096 = vadd.f32 %v1791, %v2095
      %v2097 = vpop.f32.mrf.mxu0
      %v2098 = vpop.f32.mrf.mxu0
      %v2099 = vadd.f32 %v1794, %v2098
      %v2100 = vpop.f32.mrf.mxu0
      %2101 = vmatprep.mubr.bf16.mxu0 %v563
      %2102 = vmatmul.mubr.bf16.gmra.mxu0 %v361
      %v2103 = vpop.f32.mrf.mxu0
      %v2104 = vadd.f32 %v1799, %v2103
      %v2105 = vpop.f32.mrf.mxu0
      %v2106 = vpop.f32.mrf.mxu0
      %v2107 = vadd.f32 %v1802, %v2106
      %v2108 = vpop.f32.mrf.mxu0
      %2109 = vmatprep.mubr.bf16.mxu0 %v575
      %2110 = vmatmul.mubr.bf16.gmra.mxu0 %v362
      %v2111 = vpop.f32.mrf.mxu0
      %v2112 = vadd.f32 %v1807, %v2111
      %v2113 = vpop.f32.mrf.mxu0
      %v2114 = vpop.f32.mrf.mxu0
      %v2115 = vadd.f32 %v1810, %v2114
      %v2116 = vpop.f32.mrf.mxu0
      %2117 = vmatprep.mubr.bf16.mxu0 %v587
      %2118 = vmatmul.mubr.bf16.gmra.mxu0 %v363
      %v2119 = vpop.f32.mrf.mxu0
      %v2120 = vadd.f32 %v1815, %v2119
      %v2121 = vpop.f32.mrf.mxu0
      %v2122 = vpop.f32.mrf.mxu0
      %v2123 = vadd.f32 %v1818, %v2122
      %v2124 = vpop.f32.mrf.mxu0
      %2125 = vmatprep.mubr.bf16.mxu0 %v599
      %2126 = vmatmul.mubr.bf16.gmra.mxu0 %v364
      %v2127 = vpop.f32.mrf.mxu0
      %v2128 = vadd.f32 %v1823, %v2127
      %v2129 = vpop.f32.mrf.mxu0
      %v2130 = vpop.f32.mrf.mxu0
      %v2131 = vadd.f32 %v1826, %v2130
      %v2132 = vpop.f32.mrf.mxu0
      %2133 = vmatprep.mubr.bf16.mxu0 %v611
      %2134 = vmatmul.mubr.bf16.gmra.mxu0 %v365
      %v2135 = vpop.f32.mrf.mxu0
      %v2136 = vadd.f32 %v1831, %v2135
      %v2137 = vpop.f32.mrf.mxu0
      %v2138 = vpop.f32.mrf.mxu0
      %v2139 = vadd.f32 %v1834, %v2138
      %v2140 = vpop.f32.mrf.mxu0
      %2141 = vmatprep.mubr.bf16.mxu0 %v623
      %2142 = vmatmul.mubr.bf16.gmra.mxu0 %v366
      %v2143 = vpop.f32.mrf.mxu0
      %v2144 = vadd.f32 %v1839, %v2143
      %v2145 = vpop.f32.mrf.mxu0
      %v2146 = vpop.f32.mrf.mxu0
      %v2147 = vadd.f32 %v1842, %v2146
      %v2148 = vpop.f32.mrf.mxu0
      %2149 = vdwg.mxu0
      %2150 = vmatprep.subr.bf16.mxu0 0
      %2151 = vmatpush1.bf16.msra.mxu0 %v1964
      %2152 = vmatprep.subr.bf16.mxu0 0
      %2153 = vmatpush1.bf16.msra.mxu0 %v1963
      %2154 = vmatprep.subr.bf16.mxu0 0
      %2155 = vmatpush1.bf16.msra.mxu0 %v1962
      %2156 = vmatprep.subr.bf16.mxu0 0
      %2157 = vmatpush1.bf16.msra.mxu0 %v1961
      %2158 = vmatprep.subr.bf16.mxu0 0
      %2159 = vmatpush1.bf16.msra.mxu0 %v1960
      %2160 = vmatprep.subr.bf16.mxu0 0
      %2161 = vmatpush1.bf16.msra.mxu0 %v1959
      %2162 = vmatprep.subr.bf16.mxu0 0
      %2163 = vmatpush1.bf16.msra.mxu0 %v1958
      %2164 = vmatprep.subr.bf16.mxu0 0
      %2165 = vmatpush1.bf16.msra.mxu0 %v1957
      %2166 = vmatprep.subr.bf16.mxu0 0
      %2167 = vmatpush2.bf16.msra.mxu0 0
      %2168 = vmatprep.subr.bf16.mxu0 0
      %2169 = vmatpush2.bf16.msra.mxu0 0
      %2170 = vmatprep.subr.bf16.mxu0 0
      %2171 = vmatpush2.bf16.msra.mxu0 0
      %2172 = vmatprep.subr.bf16.mxu0 0
      %2173 = vmatpush2.bf16.msra.mxu0 0
      %2174 = vmatprep.subr.bf16.mxu0 0
      %2175 = vmatpush2.bf16.msra.mxu0 0
      %2176 = vmatprep.subr.bf16.mxu0 0
      %2177 = vmatpush2.bf16.msra.mxu0 0
      %2178 = vmatprep.subr.bf16.mxu0 0
      %2179 = vmatpush2.bf16.msra.mxu0 0
      %2180 = vmatprep.subr.bf16.mxu0 0
      %2181 = vmatpush2.bf16.msra.mxu0 0
      %2182 = vmatprep.mubr.bf16.mxu0 0
      %2183 = vmatmul.mubr.bf16.gmra.mxu0 %v691
      %v2184 = vpop.f32.mrf.mxu0
      %v2185 = vadd.f32 %v2024, %v2184
      %v2186 = vpop.f32.mrf.mxu0
      %v2187 = vpop.f32.mrf.mxu0
      %v2188 = vadd.f32 %v2027, %v2187
      %v2189 = vpop.f32.mrf.mxu0
      %2190 = vmatprep.mubr.bf16.mxu0 0
      %2191 = vmatmul.mubr.bf16.gmra.mxu0 %v694
      %v2192 = vpop.f32.mrf.mxu0
      %v2193 = vadd.f32 %v2032, %v2192
      %v2194 = vpop.f32.mrf.mxu0
      %v2195 = vpop.f32.mrf.mxu0
      %v2196 = vadd.f32 %v2035, %v2195
      %v2197 = vpop.f32.mrf.mxu0
      %2198 = vmatprep.mubr.bf16.mxu0 0
      %2199 = vmatmul.mubr.bf16.gmra.mxu0 %v697
      %v2200 = vpop.f32.mrf.mxu0
      %v2201 = vadd.f32 %v2040, %v2200
      %v2202 = vpop.f32.mrf.mxu0
      %v2203 = vpop.f32.mrf.mxu0
      %v2204 = vadd.f32 %v2043, %v2203
      %v2205 = vpop.f32.mrf.mxu0
      %2206 = vmatprep.mubr.bf16.mxu0 0
      %2207 = vmatmul.mubr.bf16.gmra.mxu0 %v700
      %v2208 = vpop.f32.mrf.mxu0
      %v2209 = vadd.f32 %v2048, %v2208
      %v2210 = vpop.f32.mrf.mxu0
      %v2211 = vpop.f32.mrf.mxu0
      %v2212 = vadd.f32 %v2051, %v2211
      %v2213 = vpop.f32.mrf.mxu0
      %2214 = vmatprep.mubr.bf16.mxu0 0
      %2215 = vmatmul.mubr.bf16.gmra.mxu0 %v703
      %v2216 = vpop.f32.mrf.mxu0
      %v2217 = vadd.f32 %v2056, %v2216
      %v2218 = vpop.f32.mrf.mxu0
      %v2219 = vpop.f32.mrf.mxu0
      %v2220 = vadd.f32 %v2059, %v2219
      %v2221 = vpop.f32.mrf.mxu0
      %2222 = vmatprep.mubr.bf16.mxu0 0
      %2223 = vmatmul.mubr.bf16.gmra.mxu0 %v706
      %v2224 = vpop.f32.mrf.mxu0
      %v2225 = vadd.f32 %v2064, %v2224
      %v2226 = vpop.f32.mrf.mxu0
      %v2227 = vpop.f32.mrf.mxu0
      %v2228 = vadd.f32 %v2067, %v2227
      %v2229 = vpop.f32.mrf.mxu0
      %2230 = vmatprep.mubr.bf16.mxu0 0
      %2231 = vmatmul.mubr.bf16.gmra.mxu0 %v709
      %v2232 = vpop.f32.mrf.mxu0
      %v2233 = vadd.f32 %v2072, %v2232
      %v2234 = vpop.f32.mrf.mxu0
      %v2235 = vpop.f32.mrf.mxu0
      %v2236 = vadd.f32 %v2075, %v2235
      %v2237 = vpop.f32.mrf.mxu0
      %2238 = vmatprep.mubr.bf16.mxu0 0
      %2239 = vmatmul.mubr.bf16.gmra.mxu0 %v712
      %v2240 = vpop.f32.mrf.mxu0
      %v2241 = vadd.f32 %v2080, %v2240
      %v2242 = vpop.f32.mrf.mxu0
      %v2243 = vpop.f32.mrf.mxu0
      %v2244 = vadd.f32 %v2083, %v2243
      %v2245 = vpop.f32.mrf.mxu0
      %2246 = vmatprep.mubr.bf16.mxu0 0
      %2247 = vmatmul.mubr.bf16.gmra.mxu0 %v715
      %v2248 = vpop.f32.mrf.mxu0
      %v2249 = vadd.f32 %v2088, %v2248
      %v2250 = vpop.f32.mrf.mxu0
      %v2251 = vpop.f32.mrf.mxu0
      %v2252 = vadd.f32 %v2091, %v2251
      %v2253 = vpop.f32.mrf.mxu0
      %2254 = vmatprep.mubr.bf16.mxu0 0
      %2255 = vmatmul.mubr.bf16.gmra.mxu0 %v718
      %v2256 = vpop.f32.mrf.mxu0
      %v2257 = vadd.f32 %v2096, %v2256
      %v2258 = vpop.f32.mrf.mxu0
      %v2259 = vpop.f32.mrf.mxu0
      %v2260 = vadd.f32 %v2099, %v2259
      %v2261 = vpop.f32.mrf.mxu0
      %2262 = vmatprep.mubr.bf16.mxu0 0
      %2263 = vmatmul.mubr.bf16.gmra.mxu0 %v721
      %v2264 = vpop.f32.mrf.mxu0
      %v2265 = vadd.f32 %v2104, %v2264
      %v2266 = vpop.f32.mrf.mxu0
      %v2267 = vpop.f32.mrf.mxu0
      %v2268 = vadd.f32 %v2107, %v2267
      %v2269 = vpop.f32.mrf.mxu0
      %2270 = vmatprep.mubr.bf16.mxu0 0
      %2271 = vmatmul.mubr.bf16.gmra.mxu0 %v724
      %v2272 = vpop.f32.mrf.mxu0
      %v2273 = vadd.f32 %v2112, %v2272
      %v2274 = vpop.f32.mrf.mxu0
      %v2275 = vpop.f32.mrf.mxu0
      %v2276 = vadd.f32 %v2115, %v2275
      %v2277 = vpop.f32.mrf.mxu0
      %2278 = vmatprep.mubr.bf16.mxu0 0
      %2279 = vmatmul.mubr.bf16.gmra.mxu0 %v727
      %v2280 = vpop.f32.mrf.mxu0
      %v2281 = vadd.f32 %v2120, %v2280
      %v2282 = vpop.f32.mrf.mxu0
      %v2283 = vpop.f32.mrf.mxu0
      %v2284 = vadd.f32 %v2123, %v2283
      %v2285 = vpop.f32.mrf.mxu0
      %2286 = vmatprep.mubr.bf16.mxu0 0
      %2287 = vmatmul.mubr.bf16.gmra.mxu0 %v730
      %v2288 = vpop.f32.mrf.mxu0
      %v2289 = vadd.f32 %v2128, %v2288
      %v2290 = vpop.f32.mrf.mxu0
      %v2291 = vpop.f32.mrf.mxu0
      %v2292 = vadd.f32 %v2131, %v2291
      %v2293 = vpop.f32.mrf.mxu0
      %2294 = vmatprep.mubr.bf16.mxu0 0
      %2295 = vmatmul.mubr.bf16.gmra.mxu0 %v733
      %v2296 = vpop.f32.mrf.mxu0
      %v2297 = vadd.f32 %v2136, %v2296
      %v2298 = vpop.f32.mrf.mxu0
      %v2299 = vpop.f32.mrf.mxu0
      %v2300 = vadd.f32 %v2139, %v2299
      %v2301 = vpop.f32.mrf.mxu0
      %2302 = vmatprep.mubr.bf16.mxu0 0
      %2303 = vmatmul.mubr.bf16.gmra.mxu0 %v736
      %v2304 = vpop.f32.mrf.mxu0
      %v2305 = vadd.f32 %v2144, %v2304
      %v2306 = vpop.f32.mrf.mxu0
      %v2307 = vpop.f32.mrf.mxu0
      %v2308 = vadd.f32 %v2147, %v2307
      %v2309 = vpop.f32.mrf.mxu0
      %2310 = vdwg.mxu0
      %s2311 = scalar_lea.vmem %s206, 24
      %v2312 = vld [vmem:[%s2311] sm:$0xf]
      %v2313 = vld [vmem:[%s2311 + $0x4] sm:$0xf]
      %v2314 = vld [vmem:[%s2311 + $0xc] sm:$0xf]
      %v2315 = vld [vmem:[%s2311 + $0x10] sm:$0xf]
      %v2316 = vld [vmem:[%s2311 + $0x18] sm:$0xf]
      %v2317 = vld [vmem:[%s2311 + $0x1c] sm:$0xf]
      %v2318 = vld [vmem:[%s2311 + $0x24] sm:$0xf]
      %v2319 = vld [vmem:[%s2311 + $0x28] sm:$0xf]
      %v2320 = vld [vmem:[%s2311 + $0x30] sm:$0xf]
      %v2321 = vld [vmem:[%s2311 + $0x34] sm:$0xf]
      %v2322 = vld [vmem:[%s2311 + $0x3c] sm:$0xf]
      %v2323 = vld [vmem:[%s2311 + $0x40] sm:$0xf]
      %v2324 = vld [vmem:[%s2311 + $0x48] sm:$0xf]
      %v2325 = vld [vmem:[%s2311 + $0x4c] sm:$0xf]
      %v2326 = vld [vmem:[%s2311 + $0x54] sm:$0xf]
      %v2327 = vld [vmem:[%s2311 + $0x58] sm:$0xf]
      %v2328 = vld [vmem:[%s2311 + $0x60] sm:$0xf]
      %v2329 = vld [vmem:[%s2311 + $0x64] sm:$0xf]
      %v2330 = vld [vmem:[%s2311 + $0x6c] sm:$0xf]
      %v2331 = vld [vmem:[%s2311 + $0x70] sm:$0xf]
      %v2332 = vld [vmem:[%s2311 + $0x78] sm:$0xf]
      %v2333 = vld [vmem:[%s2311 + $0x7c] sm:$0xf]
      %v2334 = vld [vmem:[%s2311 + $0x84] sm:$0xf]
      %v2335 = vld [vmem:[%s2311 + $0x88] sm:$0xf]
      %v2336 = vld [vmem:[%s2311 + $0x90] sm:$0xf]
      %v2337 = vld [vmem:[%s2311 + $0x94] sm:$0xf]
      %v2338 = vld [vmem:[%s2311 + $0x9c] sm:$0xf]
      %v2339 = vld [vmem:[%s2311 + $0xa0] sm:$0xf]
      %v2340 = vld [vmem:[%s2311 + $0xa8] sm:$0xf]
      %v2341 = vld [vmem:[%s2311 + $0xac] sm:$0xf]
      %v2342 = vld [vmem:[%s2311 + $0xb4] sm:$0xf]
      %v2343 = vld [vmem:[%s2311 + $0xb8] sm:$0xf]
      %v2344 = vld [vmem:[%s2311 + $0x8] sm:$0x1]
      %v2345 = vld [vmem:[%s2311 + $0x14] sm:$0x1]
      %v2346 = vld [vmem:[%s2311 + $0x20] sm:$0x1]
      %v2347 = vld [vmem:[%s2311 + $0x2c] sm:$0x1]
      %v2348 = vld [vmem:[%s2311 + $0x38] sm:$0x1]
      %v2349 = vld [vmem:[%s2311 + $0x44] sm:$0x1]
      %v2350 = vld [vmem:[%s2311 + $0x50] sm:$0x1]
      %v2351 = vld [vmem:[%s2311 + $0x5c] sm:$0x1]
      %v2352 = vld [vmem:[%s2311 + $0x68] sm:$0x1]
      %v2353 = vld [vmem:[%s2311 + $0x74] sm:$0x1]
      %v2354 = vld [vmem:[%s2311 + $0x80] sm:$0x1]
      %v2355 = vld [vmem:[%s2311 + $0x8c] sm:$0x1]
      %v2356 = vld [vmem:[%s2311 + $0x98] sm:$0x1]
      %v2357 = vld [vmem:[%s2311 + $0xa4] sm:$0x1]
      %v2358 = vld [vmem:[%s2311 + $0xb0] sm:$0x1]
      %v2359 = vld [vmem:[%s2311 + $0xbc] sm:$0x1]
      %v2360 = vld [vmem:[%s2311] sm:$0xe]
      %v2361 = vld [vmem:[%s2311 + $0xc] sm:$0xe]
      %v2362 = vld [vmem:[%s2311 + $0x18] sm:$0xe]
      %v2363 = vld [vmem:[%s2311 + $0x24] sm:$0xe]
      %v2364 = vld [vmem:[%s2311 + $0x30] sm:$0xe]
      %v2365 = vld [vmem:[%s2311 + $0x3c] sm:$0xe]
      %v2366 = vld [vmem:[%s2311 + $0x48] sm:$0xe]
      %v2367 = vld [vmem:[%s2311 + $0x54] sm:$0xe]
      %v2368 = vld [vmem:[%s2311 + $0x60] sm:$0xe]
      %v2369 = vld [vmem:[%s2311 + $0x6c] sm:$0xe]
      %v2370 = vld [vmem:[%s2311 + $0x78] sm:$0xe]
      %v2371 = vld [vmem:[%s2311 + $0x84] sm:$0xe]
      %v2372 = vld [vmem:[%s2311 + $0x90] sm:$0xe]
      %v2373 = vld [vmem:[%s2311 + $0x9c] sm:$0xe]
      %v2374 = vld [vmem:[%s2311 + $0xa8] sm:$0xe]
      %v2375 = vld [vmem:[%s2311 + $0xb4] sm:$0xe]
      %v2408 = vunpack.c.l.b16 %v2312
      %v2409 = vunpack.c.l.b16 %v2313
      %v2410 = vunpack.c.l.b16 %v2314
      %v2411 = vunpack.c.l.b16 %v2315
      %v2412 = vunpack.c.l.b16 %v2316
      %v2413 = vunpack.c.l.b16 %v2317
      %v2414 = vunpack.c.l.b16 %v2318
      %v2415 = vunpack.c.l.b16 %v2319
      %v2416 = vunpack.c.l.b16 %v2320
      %v2417 = vunpack.c.l.b16 %v2321
      %v2418 = vunpack.c.l.b16 %v2322
      %v2419 = vunpack.c.l.b16 %v2323
      %v2420 = vunpack.c.l.b16 %v2324
      %v2421 = vunpack.c.l.b16 %v2325
      %v2422 = vunpack.c.l.b16 %v2326
      %v2423 = vunpack.c.l.b16 %v2327
      %v2424 = vunpack.c.l.b16 %v2328
      %v2425 = vunpack.c.l.b16 %v2329
      %v2426 = vunpack.c.l.b16 %v2330
      %v2427 = vunpack.c.l.b16 %v2331
      %v2428 = vunpack.c.l.b16 %v2332
      %v2429 = vunpack.c.l.b16 %v2333
      %v2430 = vunpack.c.l.b16 %v2334
      %v2431 = vunpack.c.l.b16 %v2335
      %v2432 = vunpack.c.l.b16 %v2336
      %v2433 = vunpack.c.l.b16 %v2337
      %v2434 = vunpack.c.l.b16 %v2338
      %v2435 = vunpack.c.l.b16 %v2339
      %v2436 = vunpack.c.l.b16 %v2340
      %v2437 = vunpack.c.l.b16 %v2341
      %v2438 = vunpack.c.l.b16 %v2342
      %v2439 = vunpack.c.l.b16 %v2343
      %v2440 = vpack.c.b16 %v2409, %v2408
      %v2441 = vpack.c.b16 %v2411, %v2410
      %v2442 = vpack.c.b16 %v2413, %v2412
      %v2443 = vpack.c.b16 %v2415, %v2414
      %v2444 = vpack.c.b16 %v2417, %v2416
      %v2445 = vpack.c.b16 %v2419, %v2418
      %v2446 = vpack.c.b16 %v2421, %v2420
      %v2447 = vpack.c.b16 %v2423, %v2422
      %v2448 = vpack.c.b16 %v2425, %v2424
      %v2449 = vpack.c.b16 %v2427, %v2426
      %v2450 = vpack.c.b16 %v2429, %v2428
      %v2451 = vpack.c.b16 %v2431, %v2430
      %v2452 = vpack.c.b16 %v2433, %v2432
      %v2453 = vpack.c.b16 %v2435, %v2434
      %v2454 = vpack.c.b16 %v2437, %v2436
      %v2455 = vpack.c.b16 %v2439, %v2438
      %v2488 = vunpack.c.l.b16 %v2344
      %v2489 = vunpack.c.l.b16 %v2345
      %v2490 = vunpack.c.l.b16 %v2346
      %v2491 = vunpack.c.l.b16 %v2347
      %v2492 = vunpack.c.l.b16 %v2348
      %v2493 = vunpack.c.l.b16 %v2349
      %v2494 = vunpack.c.l.b16 %v2350
      %v2495 = vunpack.c.l.b16 %v2351
      %v2496 = vunpack.c.l.b16 %v2352
      %v2497 = vunpack.c.l.b16 %v2353
      %v2498 = vunpack.c.l.b16 %v2354
      %v2499 = vunpack.c.l.b16 %v2355
      %v2500 = vunpack.c.l.b16 %v2356
      %v2501 = vunpack.c.l.b16 %v2357
      %v2502 = vunpack.c.l.b16 %v2358
      %v2503 = vunpack.c.l.b16 %v2359
      %v2504 = vpack.c.b16 %v2488, %v2488
      %v2505 = vpack.c.b16 %v2489, %v2489
      %v2506 = vpack.c.b16 %v2490, %v2490
      %v2507 = vpack.c.b16 %v2491, %v2491
      %v2508 = vpack.c.b16 %v2492, %v2492
      %v2509 = vpack.c.b16 %v2493, %v2493
      %v2510 = vpack.c.b16 %v2494, %v2494
      %v2511 = vpack.c.b16 %v2495, %v2495
      %v2512 = vpack.c.b16 %v2496, %v2496
      %v2513 = vpack.c.b16 %v2497, %v2497
      %v2514 = vpack.c.b16 %v2498, %v2498
      %v2515 = vpack.c.b16 %v2499, %v2499
      %v2516 = vpack.c.b16 %v2500, %v2500
      %v2517 = vpack.c.b16 %v2501, %v2501
      %v2518 = vpack.c.b16 %v2502, %v2502
      %v2519 = vpack.c.b16 %v2503, %v2503
      %v2521 = vshrl.u32 %v2440, 16
      %v2523 = vshll.u32 %v2440, 16
      %v2525 = vrot.slane %v2523, 1
      %v2526 = vor.u32 %v2521, %v2525
      %v2528 = vshll.u32 %v2504, 16
      %v2530 = vrot.slane %v2528, 1
      %v2531 = vsel %vm431, %v2526, %v2530
      %v2533 = vshrl.u32 %v2441, 16
      %v2535 = vshll.u32 %v2441, 16
      %v2537 = vrot.slane %v2535, 1
      %v2538 = vor.u32 %v2533, %v2537
      %v2540 = vshll.u32 %v2505, 16
      %v2542 = vrot.slane %v2540, 1
      %v2543 = vsel %vm431, %v2538, %v2542
      %v2545 = vshrl.u32 %v2442, 16
      %v2547 = vshll.u32 %v2442, 16
      %v2549 = vrot.slane %v2547, 1
      %v2550 = vor.u32 %v2545, %v2549
      %v2552 = vshll.u32 %v2506, 16
      %v2554 = vrot.slane %v2552, 1
      %v2555 = vsel %vm431, %v2550, %v2554
      %v2557 = vshrl.u32 %v2443, 16
      %v2559 = vshll.u32 %v2443, 16
      %v2561 = vrot.slane %v2559, 1
      %v2562 = vor.u32 %v2557, %v2561
      %v2564 = vshll.u32 %v2507, 16
      %v2566 = vrot.slane %v2564, 1
      %v2567 = vsel %vm431, %v2562, %v2566
      %v2569 = vshrl.u32 %v2444, 16
      %v2571 = vshll.u32 %v2444, 16
      %v2573 = vrot.slane %v2571, 1
      %v2574 = vor.u32 %v2569, %v2573
      %v2576 = vshll.u32 %v2508, 16
      %v2578 = vrot.slane %v2576, 1
      %v2579 = vsel %vm431, %v2574, %v2578
      %v2581 = vshrl.u32 %v2445, 16
      %v2583 = vshll.u32 %v2445, 16
      %v2585 = vrot.slane %v2583, 1
      %v2586 = vor.u32 %v2581, %v2585
      %v2588 = vshll.u32 %v2509, 16
      %v2590 = vrot.slane %v2588, 1
      %v2591 = vsel %vm431, %v2586, %v2590
      %v2593 = vshrl.u32 %v2446, 16
      %v2595 = vshll.u32 %v2446, 16
      %v2597 = vrot.slane %v2595, 1
      %v2598 = vor.u32 %v2593, %v2597
      %v2600 = vshll.u32 %v2510, 16
      %v2602 = vrot.slane %v2600, 1
      %v2603 = vsel %vm431, %v2598, %v2602
      %v2605 = vshrl.u32 %v2447, 16
      %v2607 = vshll.u32 %v2447, 16
      %v2609 = vrot.slane %v2607, 1
      %v2610 = vor.u32 %v2605, %v2609
      %v2612 = vshll.u32 %v2511, 16
      %v2614 = vrot.slane %v2612, 1
      %v2615 = vsel %vm431, %v2610, %v2614
      %v2617 = vshrl.u32 %v2448, 16
      %v2619 = vshll.u32 %v2448, 16
      %v2621 = vrot.slane %v2619, 1
      %v2622 = vor.u32 %v2617, %v2621
      %v2624 = vshll.u32 %v2512, 16
      %v2626 = vrot.slane %v2624, 1
      %v2627 = vsel %vm431, %v2622, %v2626
      %v2629 = vshrl.u32 %v2449, 16
      %v2631 = vshll.u32 %v2449, 16
      %v2633 = vrot.slane %v2631, 1
      %v2634 = vor.u32 %v2629, %v2633
      %v2636 = vshll.u32 %v2513, 16
      %v2638 = vrot.slane %v2636, 1
      %v2639 = vsel %vm431, %v2634, %v2638
      %v2641 = vshrl.u32 %v2450, 16
      %v2643 = vshll.u32 %v2450, 16
      %v2645 = vrot.slane %v2643, 1
      %v2646 = vor.u32 %v2641, %v2645
      %v2648 = vshll.u32 %v2514, 16
      %v2650 = vrot.slane %v2648, 1
      %v2651 = vsel %vm431, %v2646, %v2650
      %v2653 = vshrl.u32 %v2451, 16
      %v2655 = vshll.u32 %v2451, 16
      %v2657 = vrot.slane %v2655, 1
      %v2658 = vor.u32 %v2653, %v2657
      %v2660 = vshll.u32 %v2515, 16
      %v2662 = vrot.slane %v2660, 1
      %v2663 = vsel %vm431, %v2658, %v2662
      %v2665 = vshrl.u32 %v2452, 16
      %v2667 = vshll.u32 %v2452, 16
      %v2669 = vrot.slane %v2667, 1
      %v2670 = vor.u32 %v2665, %v2669
      %v2672 = vshll.u32 %v2516, 16
      %v2674 = vrot.slane %v2672, 1
      %v2675 = vsel %vm431, %v2670, %v2674
      %v2677 = vshrl.u32 %v2453, 16
      %v2679 = vshll.u32 %v2453, 16
      %v2681 = vrot.slane %v2679, 1
      %v2682 = vor.u32 %v2677, %v2681
      %v2684 = vshll.u32 %v2517, 16
      %v2686 = vrot.slane %v2684, 1
      %v2687 = vsel %vm431, %v2682, %v2686
      %v2689 = vshrl.u32 %v2454, 16
      %v2691 = vshll.u32 %v2454, 16
      %v2693 = vrot.slane %v2691, 1
      %v2694 = vor.u32 %v2689, %v2693
      %v2696 = vshll.u32 %v2518, 16
      %v2698 = vrot.slane %v2696, 1
      %v2699 = vsel %vm431, %v2694, %v2698
      %v2701 = vshrl.u32 %v2455, 16
      %v2703 = vshll.u32 %v2455, 16
      %v2705 = vrot.slane %v2703, 1
      %v2706 = vor.u32 %v2701, %v2705
      %v2708 = vshll.u32 %v2519, 16
      %v2710 = vrot.slane %v2708, 1
      %v2711 = vsel %vm431, %v2706, %v2710
      %v2744 = vunpack.c.l.b16 %v2360
      %v2745 = vunpack.c.l.b16 %v2361
      %v2746 = vunpack.c.l.b16 %v2362
      %v2747 = vunpack.c.l.b16 %v2363
      %v2748 = vunpack.c.l.b16 %v2364
      %v2749 = vunpack.c.l.b16 %v2365
      %v2750 = vunpack.c.l.b16 %v2366
      %v2751 = vunpack.c.l.b16 %v2367
      %v2752 = vunpack.c.l.b16 %v2368
      %v2753 = vunpack.c.l.b16 %v2369
      %v2754 = vunpack.c.l.b16 %v2370
      %v2755 = vunpack.c.l.b16 %v2371
      %v2756 = vunpack.c.l.b16 %v2372
      %v2757 = vunpack.c.l.b16 %v2373
      %v2758 = vunpack.c.l.b16 %v2374
      %v2759 = vunpack.c.l.b16 %v2375
      %v2760 = vpack.c.b16 %v2409, %v2744
      %v2761 = vpack.c.b16 %v2411, %v2745
      %v2762 = vpack.c.b16 %v2413, %v2746
      %v2763 = vpack.c.b16 %v2415, %v2747
      %v2764 = vpack.c.b16 %v2417, %v2748
      %v2765 = vpack.c.b16 %v2419, %v2749
      %v2766 = vpack.c.b16 %v2421, %v2750
      %v2767 = vpack.c.b16 %v2423, %v2751
      %v2768 = vpack.c.b16 %v2425, %v2752
      %v2769 = vpack.c.b16 %v2427, %v2753
      %v2770 = vpack.c.b16 %v2429, %v2754
      %v2771 = vpack.c.b16 %v2431, %v2755
      %v2772 = vpack.c.b16 %v2433, %v2756
      %v2773 = vpack.c.b16 %v2435, %v2757
      %v2774 = vpack.c.b16 %v2437, %v2758
      %v2775 = vpack.c.b16 %v2439, %v2759
      %v2776 = vrot.slane %v2760, 1
      %v2777 = vrot.slane %v2504, 1
      %v2778 = vsel %vm688, %v2776, %v2777
      %v2779 = vrot.slane %v2761, 1
      %v2780 = vrot.slane %v2505, 1
      %v2781 = vsel %vm688, %v2779, %v2780
      %v2782 = vrot.slane %v2762, 1
      %v2783 = vrot.slane %v2506, 1
      %v2784 = vsel %vm688, %v2782, %v2783
      %v2785 = vrot.slane %v2763, 1
      %v2786 = vrot.slane %v2507, 1
      %v2787 = vsel %vm688, %v2785, %v2786
      %v2788 = vrot.slane %v2764, 1
      %v2789 = vrot.slane %v2508, 1
      %v2790 = vsel %vm688, %v2788, %v2789
      %v2791 = vrot.slane %v2765, 1
      %v2792 = vrot.slane %v2509, 1
      %v2793 = vsel %vm688, %v2791, %v2792
      %v2794 = vrot.slane %v2766, 1
      %v2795 = vrot.slane %v2510, 1
      %v2796 = vsel %vm688, %v2794, %v2795
      %v2797 = vrot.slane %v2767, 1
      %v2798 = vrot.slane %v2511, 1
      %v2799 = vsel %vm688, %v2797, %v2798
      %v2800 = vrot.slane %v2768, 1
      %v2801 = vrot.slane %v2512, 1
      %v2802 = vsel %vm688, %v2800, %v2801
      %v2803 = vrot.slane %v2769, 1
      %v2804 = vrot.slane %v2513, 1
      %v2805 = vsel %vm688, %v2803, %v2804
      %v2806 = vrot.slane %v2770, 1
      %v2807 = vrot.slane %v2514, 1
      %v2808 = vsel %vm688, %v2806, %v2807
      %v2809 = vrot.slane %v2771, 1
      %v2810 = vrot.slane %v2515, 1
      %v2811 = vsel %vm688, %v2809, %v2810
      %v2812 = vrot.slane %v2772, 1
      %v2813 = vrot.slane %v2516, 1
      %v2814 = vsel %vm688, %v2812, %v2813
      %v2815 = vrot.slane %v2773, 1
      %v2816 = vrot.slane %v2517, 1
      %v2817 = vsel %vm688, %v2815, %v2816
      %v2818 = vrot.slane %v2774, 1
      %v2819 = vrot.slane %v2518, 1
      %v2820 = vsel %vm688, %v2818, %v2819
      %v2821 = vrot.slane %v2775, 1
      %v2822 = vrot.slane %v2519, 1
      %v2823 = vsel %vm688, %v2821, %v2822
      %s2840 = scalar_lea.vmem %s210, 384
      %v2841 = vld [vmem:[%s2840] sm:$0xf]
      %v2842 = vld [vmem:[%s2840 + $0x4] sm:$0xf]
      %v2843 = vld [vmem:[%s2840 + $0x8] sm:$0xf]
      %v2844 = vld [vmem:[%s2840 + $0xc] sm:$0xf]
      %v2845 = vld [vmem:[%s2840 + $0x10] sm:$0xf]
      %v2846 = vld [vmem:[%s2840 + $0x14] sm:$0xf]
      %v2847 = vld [vmem:[%s2840 + $0x18] sm:$0xf]
      %v2848 = vld [vmem:[%s2840 + $0x1c] sm:$0xf]
      %v2849 = vld [vmem:[%s2840 + $0x20] sm:$0xf]
      %v2850 = vld [vmem:[%s2840 + $0x24] sm:$0xf]
      %v2851 = vld [vmem:[%s2840 + $0x28] sm:$0xf]
      %v2852 = vld [vmem:[%s2840 + $0x2c] sm:$0xf]
      %v2853 = vld [vmem:[%s2840 + $0x30] sm:$0xf]
      %v2854 = vld [vmem:[%s2840 + $0x34] sm:$0xf]
      %v2855 = vld [vmem:[%s2840 + $0x38] sm:$0xf]
      %v2856 = vld [vmem:[%s2840 + $0x3c] sm:$0xf]
      %v2857 = vld [vmem:[%s2840 + $0x40] sm:$0xf]
      %v2858 = vld [vmem:[%s2840 + $0x44] sm:$0xf]
      %v2859 = vld [vmem:[%s2840 + $0x48] sm:$0xf]
      %v2860 = vld [vmem:[%s2840 + $0x4c] sm:$0xf]
      %v2861 = vld [vmem:[%s2840 + $0x50] sm:$0xf]
      %v2862 = vld [vmem:[%s2840 + $0x54] sm:$0xf]
      %v2863 = vld [vmem:[%s2840 + $0x58] sm:$0xf]
      %v2864 = vld [vmem:[%s2840 + $0x5c] sm:$0xf]
      %v2865 = vld [vmem:[%s2840 + $0x60] sm:$0xf]
      %v2866 = vld [vmem:[%s2840 + $0x64] sm:$0xf]
      %v2867 = vld [vmem:[%s2840 + $0x68] sm:$0xf]
      %v2868 = vld [vmem:[%s2840 + $0x6c] sm:$0xf]
      %v2869 = vld [vmem:[%s2840 + $0x70] sm:$0xf]
      %v2870 = vld [vmem:[%s2840 + $0x74] sm:$0xf]
      %v2871 = vld [vmem:[%s2840 + $0x78] sm:$0xf]
      %v2872 = vld [vmem:[%s2840 + $0x7c] sm:$0xf]
      %v2873 = vld [vmem:[%s2840 + $0x80] sm:$0xf]
      %v2874 = vld [vmem:[%s2840 + $0x84] sm:$0xf]
      %v2875 = vld [vmem:[%s2840 + $0x88] sm:$0xf]
      %v2876 = vld [vmem:[%s2840 + $0x8c] sm:$0xf]
      %v2877 = vld [vmem:[%s2840 + $0x90] sm:$0xf]
      %v2878 = vld [vmem:[%s2840 + $0x94] sm:$0xf]
      %v2879 = vld [vmem:[%s2840 + $0x98] sm:$0xf]
      %v2880 = vld [vmem:[%s2840 + $0x9c] sm:$0xf]
      %v2881 = vld [vmem:[%s2840 + $0xa0] sm:$0xf]
      %v2882 = vld [vmem:[%s2840 + $0xa4] sm:$0xf]
      %v2883 = vld [vmem:[%s2840 + $0xa8] sm:$0xf]
      %v2884 = vld [vmem:[%s2840 + $0xac] sm:$0xf]
      %v2885 = vld [vmem:[%s2840 + $0xb0] sm:$0xf]
      %v2886 = vld [vmem:[%s2840 + $0xb4] sm:$0xf]
      %v2887 = vld [vmem:[%s2840 + $0xb8] sm:$0xf]
      %v2888 = vld [vmem:[%s2840 + $0xbc] sm:$0xf]
      %v2937 = vunpack.c.l.b16 %v2841
      %v2938 = vunpack.c.l.b16 %v2842
      %v2939 = vunpack.c.l.b16 %v2843
      %v2940 = vunpack.c.l.b16 %v2844
      %v2941 = vunpack.c.l.b16 %v2845
      %v2942 = vunpack.c.l.b16 %v2846
      %v2943 = vunpack.c.l.b16 %v2847
      %v2944 = vunpack.c.l.b16 %v2848
      %v2945 = vunpack.c.l.b16 %v2849
      %v2946 = vunpack.c.l.b16 %v2850
      %v2947 = vunpack.c.l.b16 %v2851
      %v2948 = vunpack.c.l.b16 %v2852
      %v2949 = vunpack.c.l.b16 %v2853
      %v2950 = vunpack.c.l.b16 %v2854
      %v2951 = vunpack.c.l.b16 %v2855
      %v2952 = vunpack.c.l.b16 %v2856
      %v2953 = vunpack.c.l.b16 %v2857
      %v2954 = vunpack.c.l.b16 %v2858
      %v2955 = vunpack.c.l.b16 %v2859
      %v2956 = vunpack.c.l.b16 %v2860
      %v2957 = vunpack.c.l.b16 %v2861
      %v2958 = vunpack.c.l.b16 %v2862
      %v2959 = vunpack.c.l.b16 %v2863
      %v2960 = vunpack.c.l.b16 %v2864
      %v2961 = vunpack.c.l.b16 %v2865
      %v2962 = vunpack.c.l.b16 %v2866
      %v2963 = vunpack.c.l.b16 %v2867
      %v2964 = vunpack.c.l.b16 %v2868
      %v2965 = vunpack.c.l.b16 %v2869
      %v2966 = vunpack.c.l.b16 %v2870
      %v2967 = vunpack.c.l.b16 %v2871
      %v2968 = vunpack.c.l.b16 %v2872
      %v2969 = vunpack.c.l.b16 %v2873
      %v2970 = vunpack.c.l.b16 %v2874
      %v2971 = vunpack.c.l.b16 %v2875
      %v2972 = vunpack.c.l.b16 %v2876
      %v2973 = vunpack.c.l.b16 %v2877
      %v2974 = vunpack.c.l.b16 %v2878
      %v2975 = vunpack.c.l.b16 %v2879
      %v2976 = vunpack.c.l.b16 %v2880
      %v2977 = vunpack.c.l.b16 %v2881
      %v2978 = vunpack.c.l.b16 %v2882
      %v2979 = vunpack.c.l.b16 %v2883
      %v2980 = vunpack.c.l.b16 %v2884
      %v2981 = vunpack.c.l.b16 %v2885
      %v2982 = vunpack.c.l.b16 %v2886
      %v2983 = vunpack.c.l.b16 %v2887
      %v2984 = vunpack.c.l.b16 %v2888
      %v2985 = vpack.c.b16 %v2938, %v2937
      %v2986 = vpack.c.b16 %v2940, %v2939
      %v2987 = vpack.c.b16 %v2942, %v2941
      %v2988 = vpack.c.b16 %v2944, %v2943
      %v2989 = vpack.c.b16 %v2946, %v2945
      %v2990 = vpack.c.b16 %v2948, %v2947
      %v2991 = vpack.c.b16 %v2950, %v2949
      %v2992 = vpack.c.b16 %v2952, %v2951
      %v2993 = vpack.c.b16 %v2954, %v2953
      %v2994 = vpack.c.b16 %v2956, %v2955
      %v2995 = vpack.c.b16 %v2958, %v2957
      %v2996 = vpack.c.b16 %v2960, %v2959
      %v2997 = vpack.c.b16 %v2962, %v2961
      %v2998 = vpack.c.b16 %v2964, %v2963
      %v2999 = vpack.c.b16 %v2966, %v2965
      %v3000 = vpack.c.b16 %v2968, %v2967
      %v3001 = vpack.c.b16 %v2970, %v2969
      %v3002 = vpack.c.b16 %v2972, %v2971
      %v3003 = vpack.c.b16 %v2974, %v2973
      %v3004 = vpack.c.b16 %v2976, %v2975
      %v3005 = vpack.c.b16 %v2978, %v2977
      %v3006 = vpack.c.b16 %v2980, %v2979
      %v3007 = vpack.c.b16 %v2982, %v2981
      %v3008 = vpack.c.b16 %v2984, %v2983
      %3033 = vmatprep.subr.bf16.mxu0 0
      %3034 = vmatpush1.bf16.msra.mxu0 %v2992
      %3035 = vmatprep.subr.bf16.mxu0 0
      %3036 = vmatpush1.bf16.msra.mxu0 %v2991
      %3037 = vmatprep.subr.bf16.mxu0 0
      %3038 = vmatpush1.bf16.msra.mxu0 %v2990
      %3039 = vmatprep.subr.bf16.mxu0 0
      %3040 = vmatpush1.bf16.msra.mxu0 %v2989
      %3041 = vmatprep.subr.bf16.mxu0 0
      %3042 = vmatpush1.bf16.msra.mxu0 %v2988
      %3043 = vmatprep.subr.bf16.mxu0 0
      %3044 = vmatpush1.bf16.msra.mxu0 %v2987
      %3045 = vmatprep.subr.bf16.mxu0 0
      %3046 = vmatpush1.bf16.msra.mxu0 %v2986
      %3047 = vmatprep.subr.bf16.mxu0 0
      %3048 = vmatpush1.bf16.msra.mxu0 %v2985
      %3049 = vmatprep.subr.bf16.mxu0 0
      %3050 = vmatpush2.bf16.msra.mxu0 %v3000
      %3051 = vmatprep.subr.bf16.mxu0 0
      %3052 = vmatpush2.bf16.msra.mxu0 %v2999
      %3053 = vmatprep.subr.bf16.mxu0 0
      %3054 = vmatpush2.bf16.msra.mxu0 %v2998
      %3055 = vmatprep.subr.bf16.mxu0 0
      %3056 = vmatpush2.bf16.msra.mxu0 %v2997
      %3057 = vmatprep.subr.bf16.mxu0 0
      %3058 = vmatpush2.bf16.msra.mxu0 %v2996
      %3059 = vmatprep.subr.bf16.mxu0 0
      %3060 = vmatpush2.bf16.msra.mxu0 %v2995
      %3061 = vmatprep.subr.bf16.mxu0 0
      %3062 = vmatpush2.bf16.msra.mxu0 %v2994
      %3063 = vmatprep.subr.bf16.mxu0 0
      %3064 = vmatpush2.bf16.msra.mxu0 %v2993
      %3065 = vmatprep.mubr.bf16.mxu0 %v2531
      %3066 = vmatmul.mubr.bf16.gmra.mxu0 %v2440
      %v3067 = vpop.f32.mrf.mxu0
      %v3068 = vadd.f32 0.0, %v3067
      %v3069 = vpop.f32.mrf.mxu0
      %v3070 = vpop.f32.mrf.mxu0
      %v3071 = vadd.f32 0.0, %v3070
      %v3072 = vpop.f32.mrf.mxu0
      %3073 = vmatprep.mubr.bf16.mxu0 %v2543
      %3074 = vmatmul.mubr.bf16.gmra.mxu0 %v2441
      %v3075 = vpop.f32.mrf.mxu0
      %v3076 = vadd.f32 0.0, %v3075
      %v3077 = vpop.f32.mrf.mxu0
      %v3078 = vpop.f32.mrf.mxu0
      %v3079 = vadd.f32 0.0, %v3078
      %v3080 = vpop.f32.mrf.mxu0
      %3081 = vmatprep.mubr.bf16.mxu0 %v2555
      %3082 = vmatmul.mubr.bf16.gmra.mxu0 %v2442
      %v3083 = vpop.f32.mrf.mxu0
      %v3084 = vadd.f32 0.0, %v3083
      %v3085 = vpop.f32.mrf.mxu0
      %v3086 = vpop.f32.mrf.mxu0
      %v3087 = vadd.f32 0.0, %v3086
      %v3088 = vpop.f32.mrf.mxu0
      %3089 = vmatprep.mubr.bf16.mxu0 %v2567
      %3090 = vmatmul.mubr.bf16.gmra.mxu0 %v2443
      %v3091 = vpop.f32.mrf.mxu0
      %v3092 = vadd.f32 0.0, %v3091
      %v3093 = vpop.f32.mrf.mxu0
      %v3094 = vpop.f32.mrf.mxu0
      %v3095 = vadd.f32 0.0, %v3094
      %v3096 = vpop.f32.mrf.mxu0
      %3097 = vmatprep.mubr.bf16.mxu0 %v2579
      %3098 = vmatmul.mubr.bf16.gmra.mxu0 %v2444
      %v3099 = vpop.f32.mrf.mxu0
      %v3100 = vadd.f32 0.0, %v3099
      %v3101 = vpop.f32.mrf.mxu0
      %v3102 = vpop.f32.mrf.mxu0
      %v3103 = vadd.f32 0.0, %v3102
      %v3104 = vpop.f32.mrf.mxu0
      %3105 = vmatprep.mubr.bf16.mxu0 %v2591
      %3106 = vmatmul.mubr.bf16.gmra.mxu0 %v2445
      %v3107 = vpop.f32.mrf.mxu0
      %v3108 = vadd.f32 0.0, %v3107
      %v3109 = vpop.f32.mrf.mxu0
      %v3110 = vpop.f32.mrf.mxu0
      %v3111 = vadd.f32 0.0, %v3110
      %v3112 = vpop.f32.mrf.mxu0
      %3113 = vmatprep.mubr.bf16.mxu0 %v2603
      %3114 = vmatmul.mubr.bf16.gmra.mxu0 %v2446
      %v3115 = vpop.f32.mrf.mxu0
      %v3116 = vadd.f32 0.0, %v3115
      %v3117 = vpop.f32.mrf.mxu0
      %v3118 = vpop.f32.mrf.mxu0
      %v3119 = vadd.f32 0.0, %v3118
      %v3120 = vpop.f32.mrf.mxu0
      %3121 = vmatprep.mubr.bf16.mxu0 %v2615
      %3122 = vmatmul.mubr.bf16.gmra.mxu0 %v2447
      %v3123 = vpop.f32.mrf.mxu0
      %v3124 = vadd.f32 0.0, %v3123
      %v3125 = vpop.f32.mrf.mxu0
      %v3126 = vpop.f32.mrf.mxu0
      %v3127 = vadd.f32 0.0, %v3126
      %v3128 = vpop.f32.mrf.mxu0
      %3129 = vmatprep.mubr.bf16.mxu0 %v2627
      %3130 = vmatmul.mubr.bf16.gmra.mxu0 %v2448
      %v3131 = vpop.f32.mrf.mxu0
      %v3132 = vadd.f32 0.0, %v3131
      %v3133 = vpop.f32.mrf.mxu0
      %v3134 = vpop.f32.mrf.mxu0
      %v3135 = vadd.f32 0.0, %v3134
      %v3136 = vpop.f32.mrf.mxu0
      %3137 = vmatprep.mubr.bf16.mxu0 %v2639
      %3138 = vmatmul.mubr.bf16.gmra.mxu0 %v2449
      %v3139 = vpop.f32.mrf.mxu0
      %v3140 = vadd.f32 0.0, %v3139
      %v3141 = vpop.f32.mrf.mxu0
      %v3142 = vpop.f32.mrf.mxu0
      %v3143 = vadd.f32 0.0, %v3142
      %v3144 = vpop.f32.mrf.mxu0
      %3145 = vmatprep.mubr.bf16.mxu0 %v2651
      %3146 = vmatmul.mubr.bf16.gmra.mxu0 %v2450
      %v3147 = vpop.f32.mrf.mxu0
      %v3148 = vadd.f32 0.0, %v3147
      %v3149 = vpop.f32.mrf.mxu0
      %v3150 = vpop.f32.mrf.mxu0
      %v3151 = vadd.f32 0.0, %v3150
      %v3152 = vpop.f32.mrf.mxu0
      %3153 = vmatprep.mubr.bf16.mxu0 %v2663
      %3154 = vmatmul.mubr.bf16.gmra.mxu0 %v2451
      %v3155 = vpop.f32.mrf.mxu0
      %v3156 = vadd.f32 0.0, %v3155
      %v3157 = vpop.f32.mrf.mxu0
      %v3158 = vpop.f32.mrf.mxu0
      %v3159 = vadd.f32 0.0, %v3158
      %v3160 = vpop.f32.mrf.mxu0
      %3161 = vmatprep.mubr.bf16.mxu0 %v2675
      %3162 = vmatmul.mubr.bf16.gmra.mxu0 %v2452
      %v3163 = vpop.f32.mrf.mxu0
      %v3164 = vadd.f32 0.0, %v3163
      %v3165 = vpop.f32.mrf.mxu0
      %v3166 = vpop.f32.mrf.mxu0
      %v3167 = vadd.f32 0.0, %v3166
      %v3168 = vpop.f32.mrf.mxu0
      %3169 = vmatprep.mubr.bf16.mxu0 %v2687
      %3170 = vmatmul.mubr.bf16.gmra.mxu0 %v2453
      %v3171 = vpop.f32.mrf.mxu0
      %v3172 = vadd.f32 0.0, %v3171
      %v3173 = vpop.f32.mrf.mxu0
      %v3174 = vpop.f32.mrf.mxu0
      %v3175 = vadd.f32 0.0, %v3174
      %v3176 = vpop.f32.mrf.mxu0
      %3177 = vmatprep.mubr.bf16.mxu0 %v2699
      %3178 = vmatmul.mubr.bf16.gmra.mxu0 %v2454
      %v3179 = vpop.f32.mrf.mxu0
      %v3180 = vadd.f32 0.0, %v3179
      %v3181 = vpop.f32.mrf.mxu0
      %v3182 = vpop.f32.mrf.mxu0
      %v3183 = vadd.f32 0.0, %v3182
      %v3184 = vpop.f32.mrf.mxu0
      %3185 = vmatprep.mubr.bf16.mxu0 %v2711
      %3186 = vmatmul.mubr.bf16.gmra.mxu0 %v2455
      %v3187 = vpop.f32.mrf.mxu0
      %v3188 = vadd.f32 0.0, %v3187
      %v3189 = vpop.f32.mrf.mxu0
      %v3190 = vpop.f32.mrf.mxu0
      %v3191 = vadd.f32 0.0, %v3190
      %v3192 = vpop.f32.mrf.mxu0
      %3193 = vdwg.mxu0
      %3194 = vmatprep.subr.bf16.mxu0 0
      %3195 = vmatpush1.bf16.msra.mxu0 %v3008
      %3196 = vmatprep.subr.bf16.mxu0 0
      %3197 = vmatpush1.bf16.msra.mxu0 %v3007
      %3198 = vmatprep.subr.bf16.mxu0 0
      %3199 = vmatpush1.bf16.msra.mxu0 %v3006
      %3200 = vmatprep.subr.bf16.mxu0 0
      %3201 = vmatpush1.bf16.msra.mxu0 %v3005
      %3202 = vmatprep.subr.bf16.mxu0 0
      %3203 = vmatpush1.bf16.msra.mxu0 %v3004
      %3204 = vmatprep.subr.bf16.mxu0 0
      %3205 = vmatpush1.bf16.msra.mxu0 %v3003
      %3206 = vmatprep.subr.bf16.mxu0 0
      %3207 = vmatpush1.bf16.msra.mxu0 %v3002
      %3208 = vmatprep.subr.bf16.mxu0 0
      %3209 = vmatpush1.bf16.msra.mxu0 %v3001
      %3210 = vmatprep.subr.bf16.mxu0 0
      %3211 = vmatpush2.bf16.msra.mxu0 0
      %3212 = vmatprep.subr.bf16.mxu0 0
      %3213 = vmatpush2.bf16.msra.mxu0 0
      %3214 = vmatprep.subr.bf16.mxu0 0
      %3215 = vmatpush2.bf16.msra.mxu0 0
      %3216 = vmatprep.subr.bf16.mxu0 0
      %3217 = vmatpush2.bf16.msra.mxu0 0
      %3218 = vmatprep.subr.bf16.mxu0 0
      %3219 = vmatpush2.bf16.msra.mxu0 0
      %3220 = vmatprep.subr.bf16.mxu0 0
      %3221 = vmatpush2.bf16.msra.mxu0 0
      %3222 = vmatprep.subr.bf16.mxu0 0
      %3223 = vmatpush2.bf16.msra.mxu0 0
      %3224 = vmatprep.subr.bf16.mxu0 0
      %3225 = vmatpush2.bf16.msra.mxu0 0
      %3226 = vmatprep.mubr.bf16.mxu0 0
      %3227 = vmatmul.mubr.bf16.gmra.mxu0 %v2778
      %v3228 = vpop.f32.mrf.mxu0
      %v3229 = vadd.f32 %v3068, %v3228
      %v3230 = vpop.f32.mrf.mxu0
      %v3231 = vpop.f32.mrf.mxu0
      %v3232 = vadd.f32 %v3071, %v3231
      %v3233 = vpop.f32.mrf.mxu0
      %3234 = vmatprep.mubr.bf16.mxu0 0
      %3235 = vmatmul.mubr.bf16.gmra.mxu0 %v2781
      %v3236 = vpop.f32.mrf.mxu0
      %v3237 = vadd.f32 %v3076, %v3236
      %v3238 = vpop.f32.mrf.mxu0
      %v3239 = vpop.f32.mrf.mxu0
      %v3240 = vadd.f32 %v3079, %v3239
      %v3241 = vpop.f32.mrf.mxu0
      %3242 = vmatprep.mubr.bf16.mxu0 0
      %3243 = vmatmul.mubr.bf16.gmra.mxu0 %v2784
      %v3244 = vpop.f32.mrf.mxu0
      %v3245 = vadd.f32 %v3084, %v3244
      %v3246 = vpop.f32.mrf.mxu0
      %v3247 = vpop.f32.mrf.mxu0
      %v3248 = vadd.f32 %v3087, %v3247
      %v3249 = vpop.f32.mrf.mxu0
      %3250 = vmatprep.mubr.bf16.mxu0 0
      %3251 = vmatmul.mubr.bf16.gmra.mxu0 %v2787
      %v3252 = vpop.f32.mrf.mxu0
      %v3253 = vadd.f32 %v3092, %v3252
      %v3254 = vpop.f32.mrf.mxu0
      %v3255 = vpop.f32.mrf.mxu0
      %v3256 = vadd.f32 %v3095, %v3255
      %v3257 = vpop.f32.mrf.mxu0
      %3258 = vmatprep.mubr.bf16.mxu0 0
      %3259 = vmatmul.mubr.bf16.gmra.mxu0 %v2790
      %v3260 = vpop.f32.mrf.mxu0
      %v3261 = vadd.f32 %v3100, %v3260
      %v3262 = vpop.f32.mrf.mxu0
      %v3263 = vpop.f32.mrf.mxu0
      %v3264 = vadd.f32 %v3103, %v3263
      %v3265 = vpop.f32.mrf.mxu0
      %3266 = vmatprep.mubr.bf16.mxu0 0
      %3267 = vmatmul.mubr.bf16.gmra.mxu0 %v2793
      %v3268 = vpop.f32.mrf.mxu0
      %v3269 = vadd.f32 %v3108, %v3268
      %v3270 = vpop.f32.mrf.mxu0
      %v3271 = vpop.f32.mrf.mxu0
      %v3272 = vadd.f32 %v3111, %v3271
      %v3273 = vpop.f32.mrf.mxu0
      %3274 = vmatprep.mubr.bf16.mxu0 0
      %3275 = vmatmul.mubr.bf16.gmra.mxu0 %v2796
      %v3276 = vpop.f32.mrf.mxu0
      %v3277 = vadd.f32 %v3116, %v3276
      %v3278 = vpop.f32.mrf.mxu0
      %v3279 = vpop.f32.mrf.mxu0
      %v3280 = vadd.f32 %v3119, %v3279
      %v3281 = vpop.f32.mrf.mxu0
      %3282 = vmatprep.mubr.bf16.mxu0 0
      %3283 = vmatmul.mubr.bf16.gmra.mxu0 %v2799
      %v3284 = vpop.f32.mrf.mxu0
      %v3285 = vadd.f32 %v3124, %v3284
      %v3286 = vpop.f32.mrf.mxu0
      %v3287 = vpop.f32.mrf.mxu0
      %v3288 = vadd.f32 %v3127, %v3287
      %v3289 = vpop.f32.mrf.mxu0
      %3290 = vmatprep.mubr.bf16.mxu0 0
      %3291 = vmatmul.mubr.bf16.gmra.mxu0 %v2802
      %v3292 = vpop.f32.mrf.mxu0
      %v3293 = vadd.f32 %v3132, %v3292
      %v3294 = vpop.f32.mrf.mxu0
      %v3295 = vpop.f32.mrf.mxu0
      %v3296 = vadd.f32 %v3135, %v3295
      %v3297 = vpop.f32.mrf.mxu0
      %3298 = vmatprep.mubr.bf16.mxu0 0
      %3299 = vmatmul.mubr.bf16.gmra.mxu0 %v2805
      %v3300 = vpop.f32.mrf.mxu0
      %v3301 = vadd.f32 %v3140, %v3300
      %v3302 = vpop.f32.mrf.mxu0
      %v3303 = vpop.f32.mrf.mxu0
      %v3304 = vadd.f32 %v3143, %v3303
      %v3305 = vpop.f32.mrf.mxu0
      %3306 = vmatprep.mubr.bf16.mxu0 0
      %3307 = vmatmul.mubr.bf16.gmra.mxu0 %v2808
      %v3308 = vpop.f32.mrf.mxu0
      %v3309 = vadd.f32 %v3148, %v3308
      %v3310 = vpop.f32.mrf.mxu0
      %v3311 = vpop.f32.mrf.mxu0
      %v3312 = vadd.f32 %v3151, %v3311
      %v3313 = vpop.f32.mrf.mxu0
      %3314 = vmatprep.mubr.bf16.mxu0 0
      %3315 = vmatmul.mubr.bf16.gmra.mxu0 %v2811
      %v3316 = vpop.f32.mrf.mxu0
      %v3317 = vadd.f32 %v3156, %v3316
      %v3318 = vpop.f32.mrf.mxu0
      %v3319 = vpop.f32.mrf.mxu0
      %v3320 = vadd.f32 %v3159, %v3319
      %v3321 = vpop.f32.mrf.mxu0
      %3322 = vmatprep.mubr.bf16.mxu0 0
      %3323 = vmatmul.mubr.bf16.gmra.mxu0 %v2814
      %v3324 = vpop.f32.mrf.mxu0
      %v3325 = vadd.f32 %v3164, %v3324
      %v3326 = vpop.f32.mrf.mxu0
      %v3327 = vpop.f32.mrf.mxu0
      %v3328 = vadd.f32 %v3167, %v3327
      %v3329 = vpop.f32.mrf.mxu0
      %3330 = vmatprep.mubr.bf16.mxu0 0
      %3331 = vmatmul.mubr.bf16.gmra.mxu0 %v2817
      %v3332 = vpop.f32.mrf.mxu0
      %v3333 = vadd.f32 %v3172, %v3332
      %v3334 = vpop.f32.mrf.mxu0
      %v3335 = vpop.f32.mrf.mxu0
      %v3336 = vadd.f32 %v3175, %v3335
      %v3337 = vpop.f32.mrf.mxu0
      %3338 = vmatprep.mubr.bf16.mxu0 0
      %3339 = vmatmul.mubr.bf16.gmra.mxu0 %v2820
      %v3340 = vpop.f32.mrf.mxu0
      %v3341 = vadd.f32 %v3180, %v3340
      %v3342 = vpop.f32.mrf.mxu0
      %v3343 = vpop.f32.mrf.mxu0
      %v3344 = vadd.f32 %v3183, %v3343
      %v3345 = vpop.f32.mrf.mxu0
      %3346 = vmatprep.mubr.bf16.mxu0 0
      %3347 = vmatmul.mubr.bf16.gmra.mxu0 %v2823
      %v3348 = vpop.f32.mrf.mxu0
      %v3349 = vadd.f32 %v3188, %v3348
      %v3350 = vpop.f32.mrf.mxu0
      %v3351 = vpop.f32.mrf.mxu0
      %v3352 = vadd.f32 %v3191, %v3351
      %v3353 = vpop.f32.mrf.mxu0
      %3354 = vdwg.mxu0
      %v3355 = vadd.f32 %v2185, %v3229
      %v3356 = vadd.f32 %v2188, %v3232
      %v3357 = vadd.f32 %v2193, %v3237
      %v3358 = vadd.f32 %v2196, %v3240
      %v3359 = vadd.f32 %v2201, %v3245
      %v3360 = vadd.f32 %v2204, %v3248
      %v3361 = vadd.f32 %v2209, %v3253
      %v3362 = vadd.f32 %v2212, %v3256
      %v3363 = vadd.f32 %v2217, %v3261
      %v3364 = vadd.f32 %v2220, %v3264
      %v3365 = vadd.f32 %v2225, %v3269
      %v3366 = vadd.f32 %v2228, %v3272
      %v3367 = vadd.f32 %v2233, %v3277
      %v3368 = vadd.f32 %v2236, %v3280
      %v3369 = vadd.f32 %v2241, %v3285
      %v3370 = vadd.f32 %v2244, %v3288
      %v3371 = vadd.f32 %v2249, %v3293
      %v3372 = vadd.f32 %v2252, %v3296
      %v3373 = vadd.f32 %v2257, %v3301
      %v3374 = vadd.f32 %v2260, %v3304
      %v3375 = vadd.f32 %v2265, %v3309
      %v3376 = vadd.f32 %v2268, %v3312
      %v3377 = vadd.f32 %v2273, %v3317
      %v3378 = vadd.f32 %v2276, %v3320
      %v3379 = vadd.f32 %v2281, %v3325
      %v3380 = vadd.f32 %v2284, %v3328
      %v3381 = vadd.f32 %v2289, %v3333
      %v3382 = vadd.f32 %v2292, %v3336
      %v3383 = vadd.f32 %v2297, %v3341
      %v3384 = vadd.f32 %v2300, %v3344
      %v3385 = vadd.f32 %v2305, %v3349
      %v3386 = vadd.f32 %v2308, %v3352
      %v3387 = vld [vmem:[%s213] sm:$0x1]
      %v3389 = vlaneseq
      %v3390 = vshrl.u32 %v3389, 7
      %v3391 = vsub.s32 0, %v3390
      %v3392 = vrot.slane %v3387, %v3391
      %v3394 = vadd.f32 %v3355, %v3392
      %v3395 = vadd.f32 %v3356, %v3392
      %v3396 = vadd.f32 %v3357, %v3392
      %v3397 = vadd.f32 %v3358, %v3392
      %v3398 = vadd.f32 %v3359, %v3392
      %v3399 = vadd.f32 %v3360, %v3392
      %v3400 = vadd.f32 %v3361, %v3392
      %v3401 = vadd.f32 %v3362, %v3392
      %v3402 = vadd.f32 %v3363, %v3392
      %v3403 = vadd.f32 %v3364, %v3392
      %v3404 = vadd.f32 %v3365, %v3392
      %v3405 = vadd.f32 %v3366, %v3392
      %v3406 = vadd.f32 %v3367, %v3392
      %v3407 = vadd.f32 %v3368, %v3392
      %v3408 = vadd.f32 %v3369, %v3392
      %v3409 = vadd.f32 %v3370, %v3392
      %v3410 = vadd.f32 %v3371, %v3392
      %v3411 = vadd.f32 %v3372, %v3392
      %v3412 = vadd.f32 %v3373, %v3392
      %v3413 = vadd.f32 %v3374, %v3392
      %v3414 = vadd.f32 %v3375, %v3392
      %v3415 = vadd.f32 %v3376, %v3392
      %v3416 = vadd.f32 %v3377, %v3392
      %v3417 = vadd.f32 %v3378, %v3392
      %v3418 = vadd.f32 %v3379, %v3392
      %v3419 = vadd.f32 %v3380, %v3392
      %v3420 = vadd.f32 %v3381, %v3392
      %v3421 = vadd.f32 %v3382, %v3392
      %v3422 = vadd.f32 %v3383, %v3392
      %v3423 = vadd.f32 %v3384, %v3392
      %v3424 = vadd.f32 %v3385, %v3392
      %v3425 = vadd.f32 %v3386, %v3392
      %v3426 = vmax.f32 %v3394, 0.0
      %v3427 = vmax.f32 %v3395, 0.0
      %v3428 = vmax.f32 %v3396, 0.0
      %v3429 = vmax.f32 %v3397, 0.0
      %v3430 = vmax.f32 %v3398, 0.0
      %v3431 = vmax.f32 %v3399, 0.0
      %v3432 = vmax.f32 %v3400, 0.0
      %v3433 = vmax.f32 %v3401, 0.0
      %v3434 = vmax.f32 %v3402, 0.0
      %v3435 = vmax.f32 %v3403, 0.0
      %v3436 = vmax.f32 %v3404, 0.0
      %v3437 = vmax.f32 %v3405, 0.0
      %v3438 = vmax.f32 %v3406, 0.0
      %v3439 = vmax.f32 %v3407, 0.0
      %v3440 = vmax.f32 %v3408, 0.0
      %v3441 = vmax.f32 %v3409, 0.0
      %v3442 = vmax.f32 %v3410, 0.0
      %v3443 = vmax.f32 %v3411, 0.0
      %v3444 = vmax.f32 %v3412, 0.0
      %v3445 = vmax.f32 %v3413, 0.0
      %v3446 = vmax.f32 %v3414, 0.0
      %v3447 = vmax.f32 %v3415, 0.0
      %v3448 = vmax.f32 %v3416, 0.0
      %v3449 = vmax.f32 %v3417, 0.0
      %v3450 = vmax.f32 %v3418, 0.0
      %v3451 = vmax.f32 %v3419, 0.0
      %v3452 = vmax.f32 %v3420, 0.0
      %v3453 = vmax.f32 %v3421, 0.0
      %v3454 = vmax.f32 %v3422, 0.0
      %v3455 = vmax.f32 %v3423, 0.0
      %v3456 = vmax.f32 %v3424, 0.0
      %v3457 = vmax.f32 %v3425, 0.0
      %v3458 = vpack.c.bf16 %v3427, %v3426
      %v3459 = vpack.c.bf16 %v3429, %v3428
      %v3460 = vpack.c.bf16 %v3431, %v3430
      %v3461 = vpack.c.bf16 %v3433, %v3432
      %v3462 = vpack.c.bf16 %v3435, %v3434
      %v3463 = vpack.c.bf16 %v3437, %v3436
      %v3464 = vpack.c.bf16 %v3439, %v3438
      %v3465 = vpack.c.bf16 %v3441, %v3440
      %v3466 = vpack.c.bf16 %v3443, %v3442
      %v3467 = vpack.c.bf16 %v3445, %v3444
      %v3468 = vpack.c.bf16 %v3447, %v3446
      %v3469 = vpack.c.bf16 %v3449, %v3448
      %v3470 = vpack.c.bf16 %v3451, %v3450
      %v3471 = vpack.c.bf16 %v3453, %v3452
      %v3472 = vpack.c.bf16 %v3455, %v3454
      %v3473 = vpack.c.bf16 %v3457, %v3456
      %v3490 = vunpack.c.l.b16 %v3458
      %v3491 = vunpack.c.h.b16 %v3458
      %v3492 = vunpack.c.l.b16 %v3459
      %v3493 = vunpack.c.h.b16 %v3459
      %v3494 = vunpack.c.l.b16 %v3460
      %v3495 = vunpack.c.h.b16 %v3460
      %v3496 = vunpack.c.l.b16 %v3461
      %v3497 = vunpack.c.h.b16 %v3461
      %v3498 = vunpack.c.l.b16 %v3462
      %v3499 = vunpack.c.h.b16 %v3462
      %v3500 = vunpack.c.l.b16 %v3463
      %v3501 = vunpack.c.h.b16 %v3463
      %v3502 = vunpack.c.l.b16 %v3464
      %v3503 = vunpack.c.h.b16 %v3464
      %v3504 = vunpack.c.l.b16 %v3465
      %v3505 = vunpack.c.h.b16 %v3465
      %v3506 = vunpack.c.l.b16 %v3466
      %v3507 = vunpack.c.h.b16 %v3466
      %v3508 = vunpack.c.l.b16 %v3467
      %v3509 = vunpack.c.h.b16 %v3467
      %v3510 = vunpack.c.l.b16 %v3468
      %v3511 = vunpack.c.h.b16 %v3468
      %v3512 = vunpack.c.l.b16 %v3469
      %v3513 = vunpack.c.h.b16 %v3469
      %v3514 = vunpack.c.l.b16 %v3470
      %v3515 = vunpack.c.h.b16 %v3470
      %v3516 = vunpack.c.l.b16 %v3471
      %v3517 = vunpack.c.h.b16 %v3471
      %v3518 = vunpack.c.l.b16 %v3472
      %v3519 = vunpack.c.h.b16 %v3472
      %v3520 = vunpack.c.l.b16 %v3473
      %v3521 = vunpack.c.h.b16 %v3473
      %v3522 = vpack.c.b16 %v3490, %v3490
      %v3523 = vpack.c.b16 %v3491, %v3491
      %v3524 = vpack.c.b16 %v3492, %v3492
      %v3525 = vpack.c.b16 %v3493, %v3493
      %v3526 = vpack.c.b16 %v3494, %v3494
      %v3527 = vpack.c.b16 %v3495, %v3495
      %v3528 = vpack.c.b16 %v3496, %v3496
      %v3529 = vpack.c.b16 %v3497, %v3497
      %v3530 = vpack.c.b16 %v3498, %v3498
      %v3531 = vpack.c.b16 %v3499, %v3499
      %v3532 = vpack.c.b16 %v3500, %v3500
      %v3533 = vpack.c.b16 %v3501, %v3501
      %v3534 = vpack.c.b16 %v3502, %v3502
      %v3535 = vpack.c.b16 %v3503, %v3503
      %v3536 = vpack.c.b16 %v3504, %v3504
      %v3537 = vpack.c.b16 %v3505, %v3505
      %v3538 = vpack.c.b16 %v3506, %v3506
      %v3539 = vpack.c.b16 %v3507, %v3507
      %v3540 = vpack.c.b16 %v3508, %v3508
      %v3541 = vpack.c.b16 %v3509, %v3509
      %v3542 = vpack.c.b16 %v3510, %v3510
      %v3543 = vpack.c.b16 %v3511, %v3511
      %v3544 = vpack.c.b16 %v3512, %v3512
      %v3545 = vpack.c.b16 %v3513, %v3513
      %v3546 = vpack.c.b16 %v3514, %v3514
      %v3547 = vpack.c.b16 %v3515, %v3515
      %v3548 = vpack.c.b16 %v3516, %v3516
      %v3549 = vpack.c.b16 %v3517, %v3517
      %v3550 = vpack.c.b16 %v3518, %v3518
      %v3551 = vpack.c.b16 %v3519, %v3519
      %v3552 = vpack.c.b16 %v3520, %v3520
      %v3553 = vpack.c.b16 %v3521, %v3521
      %s3586 = scalar_lea.vmem %s221, 20
      %3587 = vst [vmem:[%s3586 + $0x8] sm:$0xf] %v3522
      %3588 = vst [vmem:[%s3586 + $0xc] sm:$0xf] %v3523
      %3589 = vst [vmem:[%s3586 + $0x1c] sm:$0xf] %v3524
      %3590 = vst [vmem:[%s3586 + $0x20] sm:$0xf] %v3525
      %3591 = vst [vmem:[%s3586 + $0x30] sm:$0xf] %v3526
      %3592 = vst [vmem:[%s3586 + $0x34] sm:$0xf] %v3527
      %3593 = vst [vmem:[%s3586 + $0x44] sm:$0xf] %v3528
      %3594 = vst [vmem:[%s3586 + $0x48] sm:$0xf] %v3529
      %3595 = vst [vmem:[%s3586 + $0x58] sm:$0xf] %v3530
      %3596 = vst [vmem:[%s3586 + $0x5c] sm:$0xf] %v3531
      %3597 = vst [vmem:[%s3586 + $0x6c] sm:$0xf] %v3532
      %3598 = vst [vmem:[%s3586 + $0x70] sm:$0xf] %v3533
      %3599 = vst [vmem:[%s3586 + $0x80] sm:$0xf] %v3534
      %3600 = vst [vmem:[%s3586 + $0x84] sm:$0xf] %v3535
      %3601 = vst [vmem:[%s3586 + $0x94] sm:$0xf] %v3536
      %3602 = vst [vmem:[%s3586 + $0x98] sm:$0xf] %v3537
      %3603 = vst [vmem:[%s3586 + $0xa8] sm:$0xf] %v3538
      %3604 = vst [vmem:[%s3586 + $0xac] sm:$0xf] %v3539
      %3605 = vst [vmem:[%s3586 + $0xbc] sm:$0xf] %v3540
      %3606 = vst [vmem:[%s3586 + $0xc0] sm:$0xf] %v3541
      %3607 = vst [vmem:[%s3586 + $0xd0] sm:$0xf] %v3542
      %3608 = vst [vmem:[%s3586 + $0xd4] sm:$0xf] %v3543
      %3609 = vst [vmem:[%s3586 + $0xe4] sm:$0xf] %v3544
      %3610 = vst [vmem:[%s3586 + $0xe8] sm:$0xf] %v3545
      %3611 = vst [vmem:[%s3586 + $0xf8] sm:$0xf] %v3546
      %3612 = vst [vmem:[%s3586 + $0xfc] sm:$0xf] %v3547
      %3613 = vst [vmem:[%s3586 + $0x10c] sm:$0xf] %v3548
      %3614 = vst [vmem:[%s3586 + $0x110] sm:$0xf] %v3549
      %3615 = vst [vmem:[%s3586 + $0x120] sm:$0xf] %v3550
      %3616 = vst [vmem:[%s3586 + $0x124] sm:$0xf] %v3551
      %3617 = vst [vmem:[%s3586 + $0x134] sm:$0xf] %v3552
      %3618 = vst [vmem:[%s3586 + $0x138] sm:$0xf] %v3553
      %vm3619 = vcmask 1043459
      %vm3620 = vsmask.f32 7950
      %vm3621 = vmand %vm3619, %vm3620
      %v3622 = vld [vmem:[%s221 + $0x4] sm:$0x8]
      %v3623 = vsel %vm3621, 0, %v3622
      %3624 = vst [vmem:[%s221 + $0x4] sm:$0x8] %v3623
      %v3625 = vld [vmem:[%s221 + $0x18] sm:$0x8]
      %v3626 = vsel %vm3621, 0, %v3625
      %3627 = vst [vmem:[%s221 + $0x18] sm:$0x8] %v3626
      %v3628 = vld [vmem:[%s221 + $0x2c] sm:$0x8]
      %v3629 = vsel %vm3621, 0, %v3628
      %3630 = vst [vmem:[%s221 + $0x2c] sm:$0x8] %v3629
      %v3631 = vld [vmem:[%s221 + $0x40] sm:$0x8]
      %v3632 = vsel %vm3621, 0, %v3631
      %3633 = vst [vmem:[%s221 + $0x40] sm:$0x8] %v3632
      %v3634 = vld [vmem:[%s221 + $0x54] sm:$0x8]
      %v3635 = vsel %vm3621, 0, %v3634
      %3636 = vst [vmem:[%s221 + $0x54] sm:$0x8] %v3635
      %v3637 = vld [vmem:[%s221 + $0x68] sm:$0x8]
      %v3638 = vsel %vm3621, 0, %v3637
      %3639 = vst [vmem:[%s221 + $0x68] sm:$0x8] %v3638
      %v3640 = vld [vmem:[%s221 + $0x7c] sm:$0x8]
      %v3641 = vsel %vm3621, 0, %v3640
      %3642 = vst [vmem:[%s221 + $0x7c] sm:$0x8] %v3641
      %v3643 = vld [vmem:[%s221 + $0x90] sm:$0x8]
      %v3644 = vsel %vm3621, 0, %v3643
      %3645 = vst [vmem:[%s221 + $0x90] sm:$0x8] %v3644
      %v3646 = vld [vmem:[%s221 + $0xa4] sm:$0x8]
      %v3647 = vsel %vm3621, 0, %v3646
      %3648 = vst [vmem:[%s221 + $0xa4] sm:$0x8] %v3647
      %v3649 = vld [vmem:[%s221 + $0xb8] sm:$0x8]
      %v3650 = vsel %vm3621, 0, %v3649
      %3651 = vst [vmem:[%s221 + $0xb8] sm:$0x8] %v3650
      %v3652 = vld [vmem:[%s221 + $0xcc] sm:$0x8]
      %v3653 = vsel %vm3621, 0, %v3652
      %3654 = vst [vmem:[%s221 + $0xcc] sm:$0x8] %v3653
      %v3655 = vld [vmem:[%s221 + $0xe0] sm:$0x8]
      %v3656 = vsel %vm3621, 0, %v3655
      %3657 = vst [vmem:[%s221 + $0xe0] sm:$0x8] %v3656
      %v3658 = vld [vmem:[%s221 + $0xf4] sm:$0x8]
      %v3659 = vsel %vm3621, 0, %v3658
      %3660 = vst [vmem:[%s221 + $0xf4] sm:$0x8] %v3659
      %v3661 = vld [vmem:[%s221 + $0x108] sm:$0x8]
      %v3662 = vsel %vm3621, 0, %v3661
      %3663 = vst [vmem:[%s221 + $0x108] sm:$0x8] %v3662
      %v3664 = vld [vmem:[%s221 + $0x11c] sm:$0x8]
      %v3665 = vsel %vm3621, 0, %v3664
      %3666 = vst [vmem:[%s221 + $0x11c] sm:$0x8] %v3665
      %v3667 = vld [vmem:[%s221 + $0x130] sm:$0x8]
      %v3668 = vsel %vm3621, 0, %v3667
      %3669 = vst [vmem:[%s221 + $0x130] sm:$0x8] %v3668
      %v3670 = vld [vmem:[%s221 + $0x144] sm:$0x8]
      %v3671 = vsel %vm3621, 0, %v3670
      %3672 = vst [vmem:[%s221 + $0x144] sm:$0x8] %v3671
      %v3673 = vld [vmem:[%s221 + $0x158] sm:$0x8]
      %v3674 = vsel %vm3621, 0, %v3673
      %3675 = vst [vmem:[%s221 + $0x158] sm:$0x8] %v3674
      %vm3676 = vcmask 1040384
      %vm3677 = vsmask.f32 256
      %vm3678 = vmand %vm3676, %vm3677
      %v3679 = vld [vmem:[%s221 + $0x10] sm:$0x1]
      %v3680 = vsel %vm3678, 0, %v3679
      %3681 = vst [vmem:[%s221 + $0x10] sm:$0x1] %v3680
      %v3682 = vld [vmem:[%s221 + $0x24] sm:$0x1]
      %v3683 = vsel %vm3678, 0, %v3682
      %3684 = vst [vmem:[%s221 + $0x24] sm:$0x1] %v3683
      %v3685 = vld [vmem:[%s221 + $0x38] sm:$0x1]
      %v3686 = vsel %vm3678, 0, %v3685
      %3687 = vst [vmem:[%s221 + $0x38] sm:$0x1] %v3686
      %v3688 = vld [vmem:[%s221 + $0x4c] sm:$0x1]
      %v3689 = vsel %vm3678, 0, %v3688
      %3690 = vst [vmem:[%s221 + $0x4c] sm:$0x1] %v3689
      %v3691 = vld [vmem:[%s221 + $0x60] sm:$0x1]
      %v3692 = vsel %vm3678, 0, %v3691
      %3693 = vst [vmem:[%s221 + $0x60] sm:$0x1] %v3692
      %v3694 = vld [vmem:[%s221 + $0x74] sm:$0x1]
      %v3695 = vsel %vm3678, 0, %v3694
      %3696 = vst [vmem:[%s221 + $0x74] sm:$0x1] %v3695
      %v3697 = vld [vmem:[%s221 + $0x88] sm:$0x1]
      %v3698 = vsel %vm3678, 0, %v3697
      %3699 = vst [vmem:[%s221 + $0x88] sm:$0x1] %v3698
      %v3700 = vld [vmem:[%s221 + $0x9c] sm:$0x1]
      %v3701 = vsel %vm3678, 0, %v3700
      %3702 = vst [vmem:[%s221 + $0x9c] sm:$0x1] %v3701
      %v3703 = vld [vmem:[%s221 + $0xb0] sm:$0x1]
      %v3704 = vsel %vm3678, 0, %v3703
      %3705 = vst [vmem:[%s221 + $0xb0] sm:$0x1] %v3704
      %v3706 = vld [vmem:[%s221 + $0xc4] sm:$0x1]
      %v3707 = vsel %vm3678, 0, %v3706
      %3708 = vst [vmem:[%s221 + $0xc4] sm:$0x1] %v3707
      %v3709 = vld [vmem:[%s221 + $0xd8] sm:$0x1]
      %v3710 = vsel %vm3678, 0, %v3709
      %3711 = vst [vmem:[%s221 + $0xd8] sm:$0x1] %v3710
      %v3712 = vld [vmem:[%s221 + $0xec] sm:$0x1]
      %v3713 = vsel %vm3678, 0, %v3712
      %3714 = vst [vmem:[%s221 + $0xec] sm:$0x1] %v3713
      %v3715 = vld [vmem:[%s221 + $0x100] sm:$0x1]
      %v3716 = vsel %vm3678, 0, %v3715
      %3717 = vst [vmem:[%s221 + $0x100] sm:$0x1] %v3716
      %v3718 = vld [vmem:[%s221 + $0x114] sm:$0x1]
      %v3719 = vsel %vm3678, 0, %v3718
      %3720 = vst [vmem:[%s221 + $0x114] sm:$0x1] %v3719
      %v3721 = vld [vmem:[%s221 + $0x128] sm:$0x1]
      %v3722 = vsel %vm3678, 0, %v3721
      %3723 = vst [vmem:[%s221 + $0x128] sm:$0x1] %v3722
      %v3724 = vld [vmem:[%s221 + $0x13c] sm:$0x1]
      %v3725 = vsel %vm3678, 0, %v3724
      %3726 = vst [vmem:[%s221 + $0x13c] sm:$0x1] %v3725
      %v3727 = vld [vmem:[%s221 + $0x150] sm:$0x1]
      %v3728 = vsel %vm3678, 0, %v3727
      %3729 = vst [vmem:[%s221 + $0x150] sm:$0x1] %v3728
      %v3730 = vld [vmem:[%s221 + $0x164] sm:$0x1]
      %v3731 = vsel %vm3678, 0, %v3730
      %3732 = vst [vmem:[%s221 + $0x164] sm:$0x1] %v3731
      %v3733 = vld [vmem:[%s221 + $0x4] sm:$0x8]
      %v3734 = vsel %vm3621, 0, %v3733
      %3735 = vst [vmem:[%s221 + $0x4] sm:$0x8] %v3734
      %3736 = vst [vmem:[%s221 + $0x8] sm:$0xf] 0
      %3737 = vst [vmem:[%s221 + $0xc] sm:$0xf] 0
      %v3738 = vld [vmem:[%s221 + $0x10] sm:$0x1]
      %v3739 = vsel %vm3678, 0, %v3738
      %3740 = vst [vmem:[%s221 + $0x10] sm:$0x1] %v3739
      %s3741 = scalar_lea.vmem %s221, 340
      %v3742 = vld [vmem:[%s3741 + $0x4] sm:$0x8]
      %v3743 = vsel %vm3621, 0, %v3742
      %3744 = vst [vmem:[%s3741 + $0x4] sm:$0x8] %v3743
      %3745 = vst [vmem:[%s3741 + $0x8] sm:$0xf] 0
      %3746 = vst [vmem:[%s3741 + $0xc] sm:$0xf] 0
      %v3747 = vld [vmem:[%s3741 + $0x10] sm:$0x1]
      %v3748 = vsel %vm3678, 0, %v3747
      %3749 = vst [vmem:[%s3741 + $0x10] sm:$0x1] %v3748
      %p3750 = scmp.lt.s32.totalorder %s19, 1
      %s3751 = scalar_select %p3750, %s19, 1
      %p3752 = scmp.lt.s32.totalorder %s18, 0
      %s3753 = scalar_select %p3752, %s18, 0
      %s3754 = smul.addr %s3751, 90
      %s3755 = sadd.s32 %s3753, %s3754
      %s3756 = smul.addr %s3755, 4
      %s3757 = scalar_lea.vmem %s3, %s3756
      // Predicated region
      $region33: #{basic_block_forward.3} parent=31 // pred_check
        %p3758 = pneg %p124
      $region34: #{basic_block_forward.3} parent=31 // pred_check_branch
        %3760 = sbr.rel (%p3758) target = $region36
      $region35: #{basic_block_forward.3} parent=31 // pred_region
        _
      $region36: #{basic_block_forward.3} parent=31 // pred_fallthru
        _
    $region32: #{basic_block_forward.3} parent=5 // pred_fallthru
      _
    %p3761 = scmp.le.s32.totalorder 2, %s9
    // Predicated region
    $region37: #{basic_block_forward.3} parent=5 // pred_check
      %p3762 = pneg %p3761
    $region38: #{basic_block_forward.3} parent=5 // pred_check_branch
      %3764 = sbr.rel (%p3762) target = $region40
    $region39: #{basic_block_forward.3} parent=5 // pred_region
      %s3765 = ssub.s32 %s9, 2
      // Predicated region
      $region41: #{basic_block_forward.3} parent=39 // pred_check
        %p3766 = pneg %p130
      $region42: #{basic_block_forward.3} parent=39 // pred_check_branch
        %3768 = sbr.rel (%p3766) target = $region44
      $region43: #{basic_block_forward.3} parent=39 // pred_region
        %p3769 = scmp.lt.s32.totalorder %s21, 1
        %s3770 = scalar_select %p3769, %s21, 1
        %p3771 = scmp.lt.s32.totalorder %s20, 0
        %s3772 = scalar_select %p3771, %s20, 0
        %s3773 = smul.addr %s3770, 90
        %s3774 = sadd.s32 %s3772, %s3773
        %s3775 = smul.addr %s3774, 4
        %s3776 = scalar_lea.vmem %s3, %s3775
      $region44: #{basic_block_forward.3} parent=39 // pred_fallthru
        _
    $region40: #{basic_block_forward.3} parent=5 // pred_fallthru
      _
  $region6: #{basic_block_forward.3} parent=0 // loop_footer
    %s13 = sadd.s32 1, %s9
  $region7: #{basic_block_forward.3} parent=0 // loop_footer_branch
    %8 = sbr.rel target = $region3
  $region8: #{basic_block_forward.3} parent=0 // loop_exit
    _

// kernel: basic_block_forward.5
$region0: #{basic_block_forward.5}
  #allocation0 [shape = 'u32[]', space=smem, size = 0x4, offset = 0x4, fixed_abs, tag = 'smem constant byte address 0x4 - core index']
  #allocation1 [shape = 'u32[144,128]{1,0:T(1,128)}', space=vmem, size = 0x12000, scoped, tag = 'internal scratch']
  %s0 = inlined_call_operand.vmem [shape: bf16[2,18,33,128], index: 0, kind: input, shape index: {}]
  %s1 = inlined_call_operand.vmem [shape: bf16[3,384,128], index: 1, kind: input, shape index: {}]
  %s2 = inlined_call_operand.vmem [shape: f32[1,128], index: 2, kind: input, shape index: {}]
  %s3 = inlined_call_operand.vmem [shape: bf16[2,256,128], index: 3, kind: input, shape index: {}]
  %s4 = inlined_call_operand.vmem [shape: f32[2,256,128], index: 4, kind: output, shape index: {}]
  %s5 = sld [smem:[#allocation0]]
  $region49: #{basic_block_forward.5} parent=0
    _
  %s7 = ssub.s32 1, %s5
  %s8 = scalar_select 0, %s7, %s5
  loop: start=0, step=1, limit=4
  $region2: #{basic_block_forward.5} parent=0 // loop_pre_header
    _
  $region3: #{basic_block_forward.5} parent=0 // loop_header
    %s10 = sphi 0, %s14
    %p11 = scmp.ge.s32.totalorder %s10, 4
    %s17 = sphi 0, %s29
    %s18 = sphi 0, %s25
    %s19 = sphi 0, %s17
    %s20 = sphi 0, %s18
    %s21 = sphi 0, %s19
    %s22 = sphi 0, %s20
    %s32 = sphi 0, %s34
    %s35 = sphi 0, %s32
    %s36 = sphi 0, %s35
    %s52 = sphi 0, %s36
    %s58 = sphi 0, %s60
    %s61 = sphi 0, %s58
    %s62 = sphi 0, %s61
    %s78 = sphi 0, %s62
    %s84 = sphi 0, %s86
    %s87 = sphi 0, %s84
    %s88 = sphi 0, %s87
    %s104 = sphi 0, %s88
    %s112 = sphi 0, %s114
    %s115 = sphi 0, %s112
    %s116 = sphi 0, %s115
    %s132 = sphi 0, %s116
    %s140 = sphi 0, %s142
    %s143 = sphi 0, %s140
    %s144 = sphi 0, %s143
    %s160 = sphi 0, %s144
  $region4: #{basic_block_forward.5} parent=0 // loop_header_branch
    %13 = sbr.rel (%p11) target = $region8
  $region5: #{basic_block_forward.5} parent=0 // loop_body
    %s15 = ssub.s32 %s10, 1
    %s16 = ssub.s32 %s10, 2
    %s23 = sadd.s32 1, %s18
    %p24 = scmp.ge.s32.totalorder %s23, 2
    %s25 = scalar_select %p24, 0, %s23
    %s26 = sadd.s32 1, %s17
    %s27 = scalar_select %p24, %s26, %s17
    %p28 = scmp.ge.s32.totalorder %s27, 1
    %s29 = scalar_select %p28, 0, %s27
    %s30 = ssub.s32 %s18, %s25
    %p31 = scmp.eq.s32.totalorder %s30, 0
    %s33 = sadd.s32 %s32, 1
    %s34 = scalar_select %p31, %s32, %s33
    %p37 = pneg %p31
    %p38 = scmp.eq.s32.totalorder %s10, 1
    %p39 = por %p37, %p38
    %p40 = scmp.ne.s32.totalorder %s32, %s35
    %p41 = scmp.eq.s32.totalorder %s10, 0
    %p42 = por %p40, %p41
    %p43 = scmp.ne.s32.totalorder %s32, %s35
    %p44 = scmp.eq.s32.totalorder %s15, 1
    %p45 = por %p43, %p44
    %p46 = scmp.ne.s32.totalorder %s35, %s36
    %p47 = scmp.eq.s32.totalorder %s15, 0
    %p48 = por %p46, %p47
    %p49 = scmp.ne.s32.totalorder %s35, %s36
    %p50 = scmp.eq.s32.totalorder %s16, 1
    %p51 = por %p49, %p50
    %p53 = scmp.ne.s32.totalorder %s36, %s52
    %p54 = scmp.eq.s32.totalorder %s16, 0
    %p55 = por %p53, %p54
    %s56 = ssub.s32 %s17, %s29
    %p57 = scmp.eq.s32.totalorder %s56, 0
    %s59 = sadd.s32 %s58, 1
    %s60 = scalar_select %p57, %s58, %s59
    %p63 = pneg %p57
    %p64 = scmp.eq.s32.totalorder %s10, 1
    %p65 = por %p63, %p64
    %p66 = scmp.ne.s32.totalorder %s58, %s61
    %p67 = scmp.eq.s32.totalorder %s10, 0
    %p68 = por %p66, %p67
    %p69 = scmp.ne.s32.totalorder %s58, %s61
    %p70 = scmp.eq.s32.totalorder %s15, 1
    %p71 = por %p69, %p70
    %p72 = scmp.ne.s32.totalorder %s61, %s62
    %p73 = scmp.eq.s32.totalorder %s15, 0
    %p74 = por %p72, %p73
    %p75 = scmp.ne.s32.totalorder %s61, %s62
    %p76 = scmp.eq.s32.totalorder %s16, 1
    %p77 = por %p75, %p76
    %p79 = scmp.ne.s32.totalorder %s62, %s78
    %p80 = scmp.eq.s32.totalorder %s16, 0
    %p81 = por %p79, %p80
    %s82 = ssub.s32 %s17, %s29
    %p83 = scmp.eq.s32.totalorder %s82, 0
    %s85 = sadd.s32 %s84, 1
    %s86 = scalar_select %p83, %s84, %s85
    %p89 = pneg %p83
    %p90 = scmp.eq.s32.totalorder %s10, 1
    %p91 = por %p89, %p90
    %p92 = scmp.ne.s32.totalorder %s84, %s87
    %p93 = scmp.eq.s32.totalorder %s10, 0
    %p94 = por %p92, %p93
    %p95 = scmp.ne.s32.totalorder %s84, %s87
    %p96 = scmp.eq.s32.totalorder %s15, 1
    %p97 = por %p95, %p96
    %p98 = scmp.ne.s32.totalorder %s87, %s88
    %p99 = scmp.eq.s32.totalorder %s15, 0
    %p100 = por %p98, %p99
    %p101 = scmp.ne.s32.totalorder %s87, %s88
    %p102 = scmp.eq.s32.totalorder %s16, 1
    %p103 = por %p101, %p102
    %p105 = scmp.ne.s32.totalorder %s88, %s104
    %p106 = scmp.eq.s32.totalorder %s16, 0
    %p107 = por %p105, %p106
    %s108 = ssub.s32 %s18, %s25
    %s109 = ssub.s32 %s17, %s29
    %s110 = sor.u32 %s108, %s109
    %p111 = scmp.eq.s32.totalorder %s110, 0
    %s113 = sadd.s32 %s112, 1
    %s114 = scalar_select %p111, %s112, %s113
    %p117 = pneg %p111
    %p118 = scmp.eq.s32.totalorder %s10, 1
    %p119 = por %p117, %p118
    %p120 = scmp.ne.s32.totalorder %s112, %s115
    %p121 = scmp.eq.s32.totalorder %s10, 0
    %p122 = por %p120, %p121
    %p123 = scmp.ne.s32.totalorder %s112, %s115
    %p124 = scmp.eq.s32.totalorder %s15, 1
    %p125 = por %p123, %p124
    %p126 = scmp.ne.s32.totalorder %s115, %s116
    %p127 = scmp.eq.s32.totalorder %s15, 0
    %p128 = por %p126, %p127
    %p129 = scmp.ne.s32.totalorder %s115, %s116
    %p130 = scmp.eq.s32.totalorder %s16, 1
    %p131 = por %p129, %p130
    %p133 = scmp.ne.s32.totalorder %s116, %s132
    %p134 = scmp.eq.s32.totalorder %s16, 0
    %p135 = por %p133, %p134
    %s136 = ssub.s32 %s18, %s25
    %s137 = ssub.s32 %s17, %s29
    %s138 = sor.u32 %s136, %s137
    %p139 = scmp.eq.s32.totalorder %s138, 0
    %s141 = sadd.s32 %s140, 1
    %s142 = scalar_select %p139, %s140, %s141
    %p145 = pneg %p139
    %p146 = scmp.eq.s32.totalorder %s10, 1
    %p147 = por %p145, %p146
    %p148 = scmp.ne.s32.totalorder %s140, %s143
    %p149 = scmp.eq.s32.totalorder %s10, 0
    %p150 = por %p148, %p149
    %p151 = scmp.ne.s32.totalorder %s140, %s143
    %p152 = scmp.eq.s32.totalorder %s15, 1
    %p153 = por %p151, %p152
    %p154 = scmp.ne.s32.totalorder %s143, %s144
    %p155 = scmp.eq.s32.totalorder %s15, 0
    %p156 = por %p154, %p155
    %p157 = scmp.ne.s32.totalorder %s143, %s144
    %p158 = scmp.eq.s32.totalorder %s16, 1
    %p159 = por %p157, %p158
    %p161 = scmp.ne.s32.totalorder %s144, %s160
    %p162 = scmp.eq.s32.totalorder %s16, 0
    %p163 = por %p161, %p162
    %p164 = scmp.le.s32.totalorder 1, %s10
    %p165 = scmp.lt.s32.totalorder %s10, 3
    %p166 = pnand %p164, %p165
    %p167 = pneg %p166
    // Predicated region
    $region9: #{basic_block_forward.5} parent=5 // pred_check
      _
    $region10: #{basic_block_forward.5} parent=5 // pred_check_branch
      %169 = sbr.rel (%p166) target = $region12
    $region11: #{basic_block_forward.5} parent=5 // pred_region
      %s170 = ssub.s32 %s10, 1
      // Predicated region
      $region13: #{basic_block_forward.5} parent=11 // pred_check
        %p171 = pneg %p74
      $region14: #{basic_block_forward.5} parent=11 // pred_check_branch
        %173 = sbr.rel (%p171) target = $region16
      $region15: #{basic_block_forward.5} parent=11 // pred_region
        %p174 = scmp.lt.s32.totalorder %s19, 0
        %s175 = scalar_select %p174, %s19, 0
        %s176 = smul.addr %s175, 4
        %s177 = scalar_lea.vmem %s1, %s176
      $region16: #{basic_block_forward.5} parent=11 // pred_fallthru
        _
      // Predicated region
      $region17: #{basic_block_forward.5} parent=11 // pred_check
        %p178 = pneg %p100
      $region18: #{basic_block_forward.5} parent=11 // pred_check_branch
        %180 = sbr.rel (%p178) target = $region20
      $region19: #{basic_block_forward.5} parent=11 // pred_region
        %p181 = scmp.lt.s32.totalorder %s19, 0
        %s182 = scalar_select %p181, %s19, 0
        %s183 = scalar_lea.vmem %s2, %s182
      $region20: #{basic_block_forward.5} parent=11 // pred_fallthru
        _
    $region12: #{basic_block_forward.5} parent=5 // pred_fallthru
      _
    %p184 = scmp.lt.s32.totalorder %s10, 2
    // Predicated region
    $region21: #{basic_block_forward.5} parent=5 // pred_check
      %p185 = pneg %p184
    $region22: #{basic_block_forward.5} parent=5 // pred_check_branch
      %187 = sbr.rel (%p185) target = $region24
    $region23: #{basic_block_forward.5} parent=5 // pred_region
      // Predicated region
      $region25: #{basic_block_forward.5} parent=23 // pred_check
        %p188 = pneg %p42
      $region26: #{basic_block_forward.5} parent=23 // pred_check_branch
        %190 = sbr.rel (%p188) target = $region28
      $region27: #{basic_block_forward.5} parent=23 // pred_region
        %p191 = scmp.lt.s32.totalorder %s18, 1
        %s192 = scalar_select %p191, %s18, 1
        %s193 = smul.addr %s192, 90
        %s194 = smul.addr %s193, 4
        %s195 = scalar_lea.vmem %s0, %s194
      $region28: #{basic_block_forward.5} parent=23 // pred_fallthru
        _
      // Predicated region
      $region29: #{basic_block_forward.5} parent=23 // pred_check
        %p196 = pneg %p122
      $region30: #{basic_block_forward.5} parent=23 // pred_check_branch
        %198 = sbr.rel (%p196) target = $region32
      $region31: #{basic_block_forward.5} parent=23 // pred_region
        %p199 = scmp.lt.s32.totalorder %s18, 1
        %s200 = scalar_select %p199, %s18, 1
        %p201 = scmp.lt.s32.totalorder %s17, 0
        %s202 = scalar_select %p201, %s17, 0
        %s203 = smul.addr %s200, 32
        %s204 = sadd.s32 %s202, %s203
        %s205 = smul.addr %s204, 4
        %s206 = scalar_lea.vmem %s3, %s205
      $region32: #{basic_block_forward.5} parent=23 // pred_fallthru
        _
    $region24: #{basic_block_forward.5} parent=5 // pred_fallthru
      _
    %p207 = scmp.le.s32.totalorder 1, %s10
    %p208 = scmp.lt.s32.totalorder %s10, 3
    %p209 = pnand %p207, %p208
    %p210 = pneg %p209
    // Predicated region
    $region33: #{basic_block_forward.5} parent=5 // pred_check
      _
    $region34: #{basic_block_forward.5} parent=5 // pred_check_branch
      %212 = sbr.rel (%p209) target = $region36
    $region35: #{basic_block_forward.5} parent=5 // pred_region
      %s213 = ssub.s32 %s10, 1
      %p214 = scmp.lt.s32.totalorder %s20, 1
      %s215 = scalar_select %p214, %s20, 1
      %s216 = smul.addr %s215, 90
      %s217 = smul.addr %s216, 4
      %s218 = scalar_lea.vmem %s0, %s217
      %p219 = pneg %p48
      %p220 = pneg %p45
      %p221 = scmp.lt.s32.totalorder %s19, 0
      %s222 = scalar_select %p221, %s19, 0
      %s223 = smul.addr %s222, 4
      %s224 = scalar_lea.vmem %s1, %s223
      %p225 = pneg %p74
      %p226 = pneg %p71
      %p227 = scmp.lt.s32.totalorder %s19, 0
      %s228 = scalar_select %p227, %s19, 0
      %s229 = scalar_lea.vmem %s2, %s228
      %p230 = pneg %p100
      %p231 = pneg %p97
      %p232 = scmp.lt.s32.totalorder %s20, 1
      %s233 = scalar_select %p232, %s20, 1
      %p234 = scmp.lt.s32.totalorder %s19, 0
      %s235 = scalar_select %p234, %s19, 0
      %s236 = smul.addr %s233, 32
      %s237 = sadd.s32 %s235, %s236
      %s238 = smul.addr %s237, 4
      %s239 = scalar_lea.vmem %s3, %s238
      %p240 = pneg %p128
      %p241 = pneg %p125
      %p242 = pneg %p156
      %p243 = pneg %p153
      %p244 = scmp.lt.s32.totalorder %s20, 1
      %s245 = scalar_select %p244, %s20, 1
      %p246 = scmp.lt.s32.totalorder %s19, 0
      %s247 = scalar_select %p246, %s19, 0
      %s248 = smul.addr %s245, 32
      %s249 = sadd.s32 %s247, %s248
      %s250 = smul.addr %s249, 8
      %s251 = scalar_lea.vmem %s4, %s250
      %p252 = scmp.lt.s32.totalorder %s20, 1
      %s253 = scalar_select %p252, %s20, 1
      %s254 = smul.addr %s253, 90
      %s255 = smul.addr %s254, 4
      %s256 = scalar_lea.vmem %s0, %s255
      %p257 = scmp.lt.s32.totalorder %s19, 0
      %s258 = scalar_select %p257, %s19, 0
      %s259 = smul.addr %s258, 4
      %s260 = scalar_lea.vmem %s1, %s259
      %p261 = scmp.lt.s32.totalorder %s19, 0
      %s262 = scalar_select %p261, %s19, 0
      %s263 = scalar_lea.vmem %s2, %s262
      %p264 = scmp.lt.s32.totalorder %s20, 1
      %s265 = scalar_select %p264, %s20, 1
      %p266 = scmp.lt.s32.totalorder %s19, 0
      %s267 = scalar_select %p266, %s19, 0
      %s268 = smul.addr %s265, 32
      %s269 = sadd.s32 %s267, %s268
      %s270 = smul.addr %s269, 4
      %s271 = scalar_lea.vmem %s3, %s270
      %p272 = scmp.lt.s32.totalorder %s20, 1
      %s273 = scalar_select %p272, %s20, 1
      %p274 = scmp.lt.s32.totalorder %s19, 0
      %s275 = scalar_select %p274, %s19, 0
      %s276 = smul.addr %s273, 32
      %s277 = sadd.s32 %s275, %s276
      %s278 = smul.addr %s277, 8
      %s279 = scalar_lea.vmem %s4, %s278
      %v281 = vld [vmem:[%s256 + $0x4] sm:$0x8]
      %v282 = vld [vmem:[%s256 + $0x8] sm:$0xf]
      %v283 = vld [vmem:[%s256 + $0xc] sm:$0xf]
      %v284 = vld [vmem:[%s256 + $0x18] sm:$0x8]
      %v285 = vld [vmem:[%s256 + $0x1c] sm:$0xf]
      %v286 = vld [vmem:[%s256 + $0x20] sm:$0xf]
      %v287 = vld [vmem:[%s256 + $0x2c] sm:$0x8]
      %v288 = vld [vmem:[%s256 + $0x30] sm:$0xf]
      %v289 = vld [vmem:[%s256 + $0x34] sm:$0xf]
      %v290 = vld [vmem:[%s256 + $0x40] sm:$0x8]
      %v291 = vld [vmem:[%s256 + $0x44] sm:$0xf]
      %v292 = vld [vmem:[%s256 + $0x48] sm:$0xf]
      %v293 = vld [vmem:[%s256 + $0x54] sm:$0x8]
      %v294 = vld [vmem:[%s256 + $0x58] sm:$0xf]
      %v295 = vld [vmem:[%s256 + $0x5c] sm:$0xf]
      %v296 = vld [vmem:[%s256 + $0x68] sm:$0x8]
      %v297 = vld [vmem:[%s256 + $0x6c] sm:$0xf]
      %v298 = vld [vmem:[%s256 + $0x70] sm:$0xf]
      %v299 = vld [vmem:[%s256 + $0x7c] sm:$0x8]
      %v300 = vld [vmem:[%s256 + $0x80] sm:$0xf]
      %v301 = vld [vmem:[%s256 + $0x84] sm:$0xf]
      %v302 = vld [vmem:[%s256 + $0x90] sm:$0x8]
      %v303 = vld [vmem:[%s256 + $0x94] sm:$0xf]
      %v304 = vld [vmem:[%s256 + $0x98] sm:$0xf]
      %v305 = vld [vmem:[%s256 + $0xa4] sm:$0x8]
      %v306 = vld [vmem:[%s256 + $0xa8] sm:$0xf]
      %v307 = vld [vmem:[%s256 + $0xac] sm:$0xf]
      %v308 = vld [vmem:[%s256 + $0xb8] sm:$0x8]
      %v309 = vld [vmem:[%s256 + $0xbc] sm:$0xf]
      %v310 = vld [vmem:[%s256 + $0xc0] sm:$0xf]
      %v311 = vld [vmem:[%s256 + $0xcc] sm:$0x8]
      %v312 = vld [vmem:[%s256 + $0xd0] sm:$0xf]
      %v313 = vld [vmem:[%s256 + $0xd4] sm:$0xf]
      %v314 = vld [vmem:[%s256 + $0xe0] sm:$0x8]
      %v315 = vld [vmem:[%s256 + $0xe4] sm:$0xf]
      %v316 = vld [vmem:[%s256 + $0xe8] sm:$0xf]
      %v317 = vld [vmem:[%s256 + $0xf4] sm:$0x8]
      %v318 = vld [vmem:[%s256 + $0xf8] sm:$0xf]
      %v319 = vld [vmem:[%s256 + $0xfc] sm:$0xf]
      %v320 = vld [vmem:[%s256 + $0x108] sm:$0x8]
      %v321 = vld [vmem:[%s256 + $0x10c] sm:$0xf]
      %v322 = vld [vmem:[%s256 + $0x110] sm:$0xf]
      %v323 = vld [vmem:[%s256 + $0x11c] sm:$0x8]
      %v324 = vld [vmem:[%s256 + $0x120] sm:$0xf]
      %v325 = vld [vmem:[%s256 + $0x124] sm:$0xf]
      %v326 = vld [vmem:[%s256 + $0x130] sm:$0x8]
      %v327 = vld [vmem:[%s256 + $0x134] sm:$0xf]
      %v328 = vld [vmem:[%s256 + $0x138] sm:$0xf]
      %v329 = vld [vmem:[%s256 + $0x10] sm:$0x1]
      %v330 = vld [vmem:[%s256 + $0x24] sm:$0x1]
      %v331 = vld [vmem:[%s256 + $0x38] sm:$0x1]
      %v332 = vld [vmem:[%s256 + $0x4c] sm:$0x1]
      %v333 = vld [vmem:[%s256 + $0x60] sm:$0x1]
      %v334 = vld [vmem:[%s256 + $0x74] sm:$0x1]
      %v335 = vld [vmem:[%s256 + $0x88] sm:$0x1]
      %v336 = vld [vmem:[%s256 + $0x9c] sm:$0x1]
      %v337 = vld [vmem:[%s256 + $0xb0] sm:$0x1]
      %v338 = vld [vmem:[%s256 + $0xc4] sm:$0x1]
      %v339 = vld [vmem:[%s256 + $0xd8] sm:$0x1]
      %v340 = vld [vmem:[%s256 + $0xec] sm:$0x1]
      %v341 = vld [vmem:[%s256 + $0x100] sm:$0x1]
      %v342 = vld [vmem:[%s256 + $0x114] sm:$0x1]
      %v343 = vld [vmem:[%s256 + $0x128] sm:$0x1]
      %v344 = vld [vmem:[%s256 + $0x13c] sm:$0x1]
      %v393 = vunpack.c.l.b16 %v281
      %v394 = vunpack.c.l.b16 %v282
      %v395 = vunpack.c.l.b16 %v283
      %v396 = vunpack.c.l.b16 %v284
      %v397 = vunpack.c.l.b16 %v285
      %v398 = vunpack.c.l.b16 %v286
      %v399 = vunpack.c.l.b16 %v287
      %v400 = vunpack.c.l.b16 %v288
      %v401 = vunpack.c.l.b16 %v289
      %v402 = vunpack.c.l.b16 %v290
      %v403 = vunpack.c.l.b16 %v291
      %v404 = vunpack.c.l.b16 %v292
      %v405 = vunpack.c.l.b16 %v293
      %v406 = vunpack.c.l.b16 %v294
      %v407 = vunpack.c.l.b16 %v295
      %v408 = vunpack.c.l.b16 %v296
      %v409 = vunpack.c.l.b16 %v297
      %v410 = vunpack.c.l.b16 %v298
      %v411 = vunpack.c.l.b16 %v299
      %v412 = vunpack.c.l.b16 %v300
      %v413 = vunpack.c.l.b16 %v301
      %v414 = vunpack.c.l.b16 %v302
      %v415 = vunpack.c.l.b16 %v303
      %v416 = vunpack.c.l.b16 %v304
      %v417 = vunpack.c.l.b16 %v305
      %v418 = vunpack.c.l.b16 %v306
      %v419 = vunpack.c.l.b16 %v307
      %v420 = vunpack.c.l.b16 %v308
      %v421 = vunpack.c.l.b16 %v309
      %v422 = vunpack.c.l.b16 %v310
      %v423 = vunpack.c.l.b16 %v311
      %v424 = vunpack.c.l.b16 %v312
      %v425 = vunpack.c.l.b16 %v313
      %v426 = vunpack.c.l.b16 %v314
      %v427 = vunpack.c.l.b16 %v315
      %v428 = vunpack.c.l.b16 %v316
      %v429 = vunpack.c.l.b16 %v317
      %v430 = vunpack.c.l.b16 %v318
      %v431 = vunpack.c.l.b16 %v319
      %v432 = vunpack.c.l.b16 %v320
      %v433 = vunpack.c.l.b16 %v321
      %v434 = vunpack.c.l.b16 %v322
      %v435 = vunpack.c.l.b16 %v323
      %v436 = vunpack.c.l.b16 %v324
      %v437 = vunpack.c.l.b16 %v325
      %v438 = vunpack.c.l.b16 %v326
      %v439 = vunpack.c.l.b16 %v327
      %v440 = vunpack.c.l.b16 %v328
      %v441 = vpack.c.b16 %v394, %v393
      %v442 = vpack.c.b16 %v395, %v395
      %v443 = vpack.c.b16 %v397, %v396
      %v444 = vpack.c.b16 %v398, %v398
      %v445 = vpack.c.b16 %v400, %v399
      %v446 = vpack.c.b16 %v401, %v401
      %v447 = vpack.c.b16 %v403, %v402
      %v448 = vpack.c.b16 %v404, %v404
      %v449 = vpack.c.b16 %v406, %v405
      %v450 = vpack.c.b16 %v407, %v407
      %v451 = vpack.c.b16 %v409, %v408
      %v452 = vpack.c.b16 %v410, %v410
      %v453 = vpack.c.b16 %v412, %v411
      %v454 = vpack.c.b16 %v413, %v413
      %v455 = vpack.c.b16 %v415, %v414
      %v456 = vpack.c.b16 %v416, %v416
      %v457 = vpack.c.b16 %v418, %v417
      %v458 = vpack.c.b16 %v419, %v419
      %v459 = vpack.c.b16 %v421, %v420
      %v460 = vpack.c.b16 %v422, %v422
      %v461 = vpack.c.b16 %v424, %v423
      %v462 = vpack.c.b16 %v425, %v425
      %v463 = vpack.c.b16 %v427, %v426
      %v464 = vpack.c.b16 %v428, %v428
      %v465 = vpack.c.b16 %v430, %v429
      %v466 = vpack.c.b16 %v431, %v431
      %v467 = vpack.c.b16 %v433, %v432
      %v468 = vpack.c.b16 %v434, %v434
      %v469 = vpack.c.b16 %v436, %v435
      %v470 = vpack.c.b16 %v437, %v437
      %v471 = vpack.c.b16 %v439, %v438
      %v472 = vpack.c.b16 %v440, %v440
      %v473 = vpack.c.b16 %v395, %v394
      %v474 = vpack.c.b16 %v398, %v397
      %v475 = vpack.c.b16 %v401, %v400
      %v476 = vpack.c.b16 %v404, %v403
      %v477 = vpack.c.b16 %v407, %v406
      %v478 = vpack.c.b16 %v410, %v409
      %v479 = vpack.c.b16 %v413, %v412
      %v480 = vpack.c.b16 %v416, %v415
      %v481 = vpack.c.b16 %v419, %v418
      %v482 = vpack.c.b16 %v422, %v421
      %v483 = vpack.c.b16 %v425, %v424
      %v484 = vpack.c.b16 %v428, %v427
      %v485 = vpack.c.b16 %v431, %v430
      %v486 = vpack.c.b16 %v434, %v433
      %v487 = vpack.c.b16 %v437, %v436
      %v488 = vpack.c.b16 %v440, %v439
      %v490 = vshrl.u32 %v473, 16
      %v492 = vrot.slane %v490, 4
      %v493 = vshll.u32 %v473, 16
      %v495 = vrot.slane %v493, 5
      %v496 = vor.u32 %v492, %v495
      %v498 = vshrl.u32 %v474, 16
      %v500 = vrot.slane %v498, 4
      %v501 = vshll.u32 %v474, 16
      %v503 = vrot.slane %v501, 5
      %v504 = vor.u32 %v500, %v503
      %v506 = vshrl.u32 %v475, 16
      %v508 = vrot.slane %v506, 4
      %v509 = vshll.u32 %v475, 16
      %v511 = vrot.slane %v509, 5
      %v512 = vor.u32 %v508, %v511
      %v514 = vshrl.u32 %v476, 16
      %v516 = vrot.slane %v514, 4
      %v517 = vshll.u32 %v476, 16
      %v519 = vrot.slane %v517, 5
      %v520 = vor.u32 %v516, %v519
      %v522 = vshrl.u32 %v477, 16
      %v524 = vrot.slane %v522, 4
      %v525 = vshll.u32 %v477, 16
      %v527 = vrot.slane %v525, 5
      %v528 = vor.u32 %v524, %v527
      %v530 = vshrl.u32 %v478, 16
      %v532 = vrot.slane %v530, 4
      %v533 = vshll.u32 %v478, 16
      %v535 = vrot.slane %v533, 5
      %v536 = vor.u32 %v532, %v535
      %v538 = vshrl.u32 %v479, 16
      %v540 = vrot.slane %v538, 4
      %v541 = vshll.u32 %v479, 16
      %v543 = vrot.slane %v541, 5
      %v544 = vor.u32 %v540, %v543
      %v546 = vshrl.u32 %v480, 16
      %v548 = vrot.slane %v546, 4
      %v549 = vshll.u32 %v480, 16
      %v551 = vrot.slane %v549, 5
      %v552 = vor.u32 %v548, %v551
      %v554 = vshrl.u32 %v481, 16
      %v556 = vrot.slane %v554, 4
      %v557 = vshll.u32 %v481, 16
      %v559 = vrot.slane %v557, 5
      %v560 = vor.u32 %v556, %v559
      %v562 = vshrl.u32 %v482, 16
      %v564 = vrot.slane %v562, 4
      %v565 = vshll.u32 %v482, 16
      %v567 = vrot.slane %v565, 5
      %v568 = vor.u32 %v564, %v567
      %v570 = vshrl.u32 %v483, 16
      %v572 = vrot.slane %v570, 4
      %v573 = vshll.u32 %v483, 16
      %v575 = vrot.slane %v573, 5
      %v576 = vor.u32 %v572, %v575
      %v578 = vshrl.u32 %v484, 16
      %v580 = vrot.slane %v578, 4
      %v581 = vshll.u32 %v484, 16
      %v583 = vrot.slane %v581, 5
      %v584 = vor.u32 %v580, %v583
      %v586 = vshrl.u32 %v485, 16
      %v588 = vrot.slane %v586, 4
      %v589 = vshll.u32 %v485, 16
      %v591 = vrot.slane %v589, 5
      %v592 = vor.u32 %v588, %v591
      %v594 = vshrl.u32 %v486, 16
      %v596 = vrot.slane %v594, 4
      %v597 = vshll.u32 %v486, 16
      %v599 = vrot.slane %v597, 5
      %v600 = vor.u32 %v596, %v599
      %v602 = vshrl.u32 %v487, 16
      %v604 = vrot.slane %v602, 4
      %v605 = vshll.u32 %v487, 16
      %v607 = vrot.slane %v605, 5
      %v608 = vor.u32 %v604, %v607
      %v610 = vshrl.u32 %v488, 16
      %v612 = vrot.slane %v610, 4
      %v613 = vshll.u32 %v488, 16
      %v615 = vrot.slane %v613, 5
      %v616 = vor.u32 %v612, %v615
      %v633 = vunpack.c.l.b16 %v329
      %v634 = vunpack.c.l.b16 %v330
      %v635 = vunpack.c.l.b16 %v331
      %v636 = vunpack.c.l.b16 %v332
      %v637 = vunpack.c.l.b16 %v333
      %v638 = vunpack.c.l.b16 %v334
      %v639 = vunpack.c.l.b16 %v335
      %v640 = vunpack.c.l.b16 %v336
      %v641 = vunpack.c.l.b16 %v337
      %v642 = vunpack.c.l.b16 %v338
      %v643 = vunpack.c.l.b16 %v339
      %v644 = vunpack.c.l.b16 %v340
      %v645 = vunpack.c.l.b16 %v341
      %v646 = vunpack.c.l.b16 %v342
      %v647 = vunpack.c.l.b16 %v343
      %v648 = vunpack.c.l.b16 %v344
      %v649 = vpack.c.b16 %v633, %v633
      %v650 = vpack.c.b16 %v634, %v634
      %v651 = vpack.c.b16 %v635, %v635
      %v652 = vpack.c.b16 %v636, %v636
      %v653 = vpack.c.b16 %v637, %v637
      %v654 = vpack.c.b16 %v638, %v638
      %v655 = vpack.c.b16 %v639, %v639
      %v656 = vpack.c.b16 %v640, %v640
      %v657 = vpack.c.b16 %v641, %v641
      %v658 = vpack.c.b16 %v642, %v642
      %v659 = vpack.c.b16 %v643, %v643
      %v660 = vpack.c.b16 %v644, %v644
      %v661 = vpack.c.b16 %v645, %v645
      %v662 = vpack.c.b16 %v646, %v646
      %v663 = vpack.c.b16 %v647, %v647
      %v664 = vpack.c.b16 %v648, %v648
      %vm665 = vcmask 1042432
      %v666 = vrot.slane %v473, 5
      %v667 = vrot.slane %v649, 5
      %v668 = vsel %vm665, %v666, %v667
      %v669 = vrot.slane %v474, 5
      %v670 = vrot.slane %v650, 5
      %v671 = vsel %vm665, %v669, %v670
      %v672 = vrot.slane %v475, 5
      %v673 = vrot.slane %v651, 5
      %v674 = vsel %vm665, %v672, %v673
      %v675 = vrot.slane %v476, 5
      %v676 = vrot.slane %v652, 5
      %v677 = vsel %vm665, %v675, %v676
      %v678 = vrot.slane %v477, 5
      %v679 = vrot.slane %v653, 5
      %v680 = vsel %vm665, %v678, %v679
      %v681 = vrot.slane %v478, 5
      %v682 = vrot.slane %v654, 5
      %v683 = vsel %vm665, %v681, %v682
      %v684 = vrot.slane %v479, 5
      %v685 = vrot.slane %v655, 5
      %v686 = vsel %vm665, %v684, %v685
      %v687 = vrot.slane %v480, 5
      %v688 = vrot.slane %v656, 5
      %v689 = vsel %vm665, %v687, %v688
      %v690 = vrot.slane %v481, 5
      %v691 = vrot.slane %v657, 5
      %v692 = vsel %vm665, %v690, %v691
      %v693 = vrot.slane %v482, 5
      %v694 = vrot.slane %v658, 5
      %v695 = vsel %vm665, %v693, %v694
      %v696 = vrot.slane %v483, 5
      %v697 = vrot.slane %v659, 5
      %v698 = vsel %vm665, %v696, %v697
      %v699 = vrot.slane %v484, 5
      %v700 = vrot.slane %v660, 5
      %v701 = vsel %vm665, %v699, %v700
      %v702 = vrot.slane %v485, 5
      %v703 = vrot.slane %v661, 5
      %v704 = vsel %vm665, %v702, %v703
      %v705 = vrot.slane %v486, 5
      %v706 = vrot.slane %v662, 5
      %v707 = vsel %vm665, %v705, %v706
      %v708 = vrot.slane %v487, 5
      %v709 = vrot.slane %v663, 5
      %v710 = vsel %vm665, %v708, %v709
      %v711 = vrot.slane %v488, 5
      %v712 = vrot.slane %v664, 5
      %v713 = vsel %vm665, %v711, %v712
      %vm714 = vsmask.f32 4352
      %v716 = vshrl.u32 %v441, 16
      %v718 = vrot.slane %v716, 3
      %v719 = vshll.u32 %v441, 16
      %v721 = vrot.slane %v719, 4
      %v722 = vor.u32 %v718, %v721
      %v724 = vshrl.u32 %v442, 16
      %v726 = vrot.slane %v724, 3
      %v727 = vshll.u32 %v442, 16
      %v729 = vrot.slane %v727, 4
      %v730 = vor.u32 %v726, %v729
      %v731 = vsel %vm714, %v722, %v730
      %v733 = vshrl.u32 %v496, 16
      %v735 = vrot.slane %v733, 3
      %v736 = vshll.u32 %v496, 16
      %v738 = vrot.slane %v736, 4
      %v739 = vor.u32 %v735, %v738
      %v740 = vsel %vm714, %v739, %v739
      %v742 = vshrl.u32 %v666, 16
      %v744 = vrot.slane %v742, 3
      %v745 = vshll.u32 %v666, 16
      %v747 = vrot.slane %v745, 4
      %v748 = vor.u32 %v744, %v747
      %v750 = vshrl.u32 %v668, 16
      %v752 = vrot.slane %v750, 3
      %v753 = vshll.u32 %v668, 16
      %v755 = vrot.slane %v753, 4
      %v756 = vor.u32 %v752, %v755
      %v757 = vsel %vm714, %v748, %v756
      %v759 = vshrl.u32 %v443, 16
      %v761 = vrot.slane %v759, 3
      %v762 = vshll.u32 %v443, 16
      %v764 = vrot.slane %v762, 4
      %v765 = vor.u32 %v761, %v764
      %v767 = vshrl.u32 %v444, 16
      %v769 = vrot.slane %v767, 3
      %v770 = vshll.u32 %v444, 16
      %v772 = vrot.slane %v770, 4
      %v773 = vor.u32 %v769, %v772
      %v774 = vsel %vm714, %v765, %v773
      %v776 = vshrl.u32 %v504, 16
      %v778 = vrot.slane %v776, 3
      %v779 = vshll.u32 %v504, 16
      %v781 = vrot.slane %v779, 4
      %v782 = vor.u32 %v778, %v781
      %v783 = vsel %vm714, %v782, %v782
      %v785 = vshrl.u32 %v669, 16
      %v787 = vrot.slane %v785, 3
      %v788 = vshll.u32 %v669, 16
      %v790 = vrot.slane %v788, 4
      %v791 = vor.u32 %v787, %v790
      %v793 = vshrl.u32 %v671, 16
      %v795 = vrot.slane %v793, 3
      %v796 = vshll.u32 %v671, 16
      %v798 = vrot.slane %v796, 4
      %v799 = vor.u32 %v795, %v798
      %v800 = vsel %vm714, %v791, %v799
      %v802 = vshrl.u32 %v445, 16
      %v804 = vrot.slane %v802, 3
      %v805 = vshll.u32 %v445, 16
      %v807 = vrot.slane %v805, 4
      %v808 = vor.u32 %v804, %v807
      %v810 = vshrl.u32 %v446, 16
      %v812 = vrot.slane %v810, 3
      %v813 = vshll.u32 %v446, 16
      %v815 = vrot.slane %v813, 4
      %v816 = vor.u32 %v812, %v815
      %v817 = vsel %vm714, %v808, %v816
      %v819 = vshrl.u32 %v512, 16
      %v821 = vrot.slane %v819, 3
      %v822 = vshll.u32 %v512, 16
      %v824 = vrot.slane %v822, 4
      %v825 = vor.u32 %v821, %v824
      %v826 = vsel %vm714, %v825, %v825
      %v828 = vshrl.u32 %v672, 16
      %v830 = vrot.slane %v828, 3
      %v831 = vshll.u32 %v672, 16
      %v833 = vrot.slane %v831, 4
      %v834 = vor.u32 %v830, %v833
      %v836 = vshrl.u32 %v674, 16
      %v838 = vrot.slane %v836, 3
      %v839 = vshll.u32 %v674, 16
      %v841 = vrot.slane %v839, 4
      %v842 = vor.u32 %v838, %v841
      %v843 = vsel %vm714, %v834, %v842
      %v845 = vshrl.u32 %v447, 16
      %v847 = vrot.slane %v845, 3
      %v848 = vshll.u32 %v447, 16
      %v850 = vrot.slane %v848, 4
      %v851 = vor.u32 %v847, %v850
      %v853 = vshrl.u32 %v448, 16
      %v855 = vrot.slane %v853, 3
      %v856 = vshll.u32 %v448, 16
      %v858 = vrot.slane %v856, 4
      %v859 = vor.u32 %v855, %v858
      %v860 = vsel %vm714, %v851, %v859
      %v862 = vshrl.u32 %v520, 16
      %v864 = vrot.slane %v862, 3
      %v865 = vshll.u32 %v520, 16
      %v867 = vrot.slane %v865, 4
      %v868 = vor.u32 %v864, %v867
      %v869 = vsel %vm714, %v868, %v868
      %v871 = vshrl.u32 %v675, 16
      %v873 = vrot.slane %v871, 3
      %v874 = vshll.u32 %v675, 16
      %v876 = vrot.slane %v874, 4
      %v877 = vor.u32 %v873, %v876
      %v879 = vshrl.u32 %v677, 16
      %v881 = vrot.slane %v879, 3
      %v882 = vshll.u32 %v677, 16
      %v884 = vrot.slane %v882, 4
      %v885 = vor.u32 %v881, %v884
      %v886 = vsel %vm714, %v877, %v885
      %v888 = vshrl.u32 %v449, 16
      %v890 = vrot.slane %v888, 3
      %v891 = vshll.u32 %v449, 16
      %v893 = vrot.slane %v891, 4
      %v894 = vor.u32 %v890, %v893
      %v896 = vshrl.u32 %v450, 16
      %v898 = vrot.slane %v896, 3
      %v899 = vshll.u32 %v450, 16
      %v901 = vrot.slane %v899, 4
      %v902 = vor.u32 %v898, %v901
      %v903 = vsel %vm714, %v894, %v902
      %v905 = vshrl.u32 %v528, 16
      %v907 = vrot.slane %v905, 3
      %v908 = vshll.u32 %v528, 16
      %v910 = vrot.slane %v908, 4
      %v911 = vor.u32 %v907, %v910
      %v912 = vsel %vm714, %v911, %v911
      %v914 = vshrl.u32 %v678, 16
      %v916 = vrot.slane %v914, 3
      %v917 = vshll.u32 %v678, 16
      %v919 = vrot.slane %v917, 4
      %v920 = vor.u32 %v916, %v919
      %v922 = vshrl.u32 %v680, 16
      %v924 = vrot.slane %v922, 3
      %v925 = vshll.u32 %v680, 16
      %v927 = vrot.slane %v925, 4
      %v928 = vor.u32 %v924, %v927
      %v929 = vsel %vm714, %v920, %v928
      %v931 = vshrl.u32 %v451, 16
      %v933 = vrot.slane %v931, 3
      %v934 = vshll.u32 %v451, 16
      %v936 = vrot.slane %v934, 4
      %v937 = vor.u32 %v933, %v936
      %v939 = vshrl.u32 %v452, 16
      %v941 = vrot.slane %v939, 3
      %v942 = vshll.u32 %v452, 16
      %v944 = vrot.slane %v942, 4
      %v945 = vor.u32 %v941, %v944
      %v946 = vsel %vm714, %v937, %v945
      %v948 = vshrl.u32 %v536, 16
      %v950 = vrot.slane %v948, 3
      %v951 = vshll.u32 %v536, 16
      %v953 = vrot.slane %v951, 4
      %v954 = vor.u32 %v950, %v953
      %v955 = vsel %vm714, %v954, %v954
      %v957 = vshrl.u32 %v681, 16
      %v959 = vrot.slane %v957, 3
      %v960 = vshll.u32 %v681, 16
      %v962 = vrot.slane %v960, 4
      %v963 = vor.u32 %v959, %v962
      %v965 = vshrl.u32 %v683, 16
      %v967 = vrot.slane %v965, 3
      %v968 = vshll.u32 %v683, 16
      %v970 = vrot.slane %v968, 4
      %v971 = vor.u32 %v967, %v970
      %v972 = vsel %vm714, %v963, %v971
      %v974 = vshrl.u32 %v453, 16
      %v976 = vrot.slane %v974, 3
      %v977 = vshll.u32 %v453, 16
      %v979 = vrot.slane %v977, 4
      %v980 = vor.u32 %v976, %v979
      %v982 = vshrl.u32 %v454, 16
      %v984 = vrot.slane %v982, 3
      %v985 = vshll.u32 %v454, 16
      %v987 = vrot.slane %v985, 4
      %v988 = vor.u32 %v984, %v987
      %v989 = vsel %vm714, %v980, %v988
      %v991 = vshrl.u32 %v544, 16
      %v993 = vrot.slane %v991, 3
      %v994 = vshll.u32 %v544, 16
      %v996 = vrot.slane %v994, 4
      %v997 = vor.u32 %v993, %v996
      %v998 = vsel %vm714, %v997, %v997
      %v1000 = vshrl.u32 %v684, 16
      %v1002 = vrot.slane %v1000, 3
      %v1003 = vshll.u32 %v684, 16
      %v1005 = vrot.slane %v1003, 4
      %v1006 = vor.u32 %v1002, %v1005
      %v1008 = vshrl.u32 %v686, 16
      %v1010 = vrot.slane %v1008, 3
      %v1011 = vshll.u32 %v686, 16
      %v1013 = vrot.slane %v1011, 4
      %v1014 = vor.u32 %v1010, %v1013
      %v1015 = vsel %vm714, %v1006, %v1014
      %v1017 = vshrl.u32 %v455, 16
      %v1019 = vrot.slane %v1017, 3
      %v1020 = vshll.u32 %v455, 16
      %v1022 = vrot.slane %v1020, 4
      %v1023 = vor.u32 %v1019, %v1022
      %v1025 = vshrl.u32 %v456, 16
      %v1027 = vrot.slane %v1025, 3
      %v1028 = vshll.u32 %v456, 16
      %v1030 = vrot.slane %v1028, 4
      %v1031 = vor.u32 %v1027, %v1030
      %v1032 = vsel %vm714, %v1023, %v1031
      %v1034 = vshrl.u32 %v552, 16
      %v1036 = vrot.slane %v1034, 3
      %v1037 = vshll.u32 %v552, 16
      %v1039 = vrot.slane %v1037, 4
      %v1040 = vor.u32 %v1036, %v1039
      %v1041 = vsel %vm714, %v1040, %v1040
      %v1043 = vshrl.u32 %v687, 16
      %v1045 = vrot.slane %v1043, 3
      %v1046 = vshll.u32 %v687, 16
      %v1048 = vrot.slane %v1046, 4
      %v1049 = vor.u32 %v1045, %v1048
      %v1051 = vshrl.u32 %v689, 16
      %v1053 = vrot.slane %v1051, 3
      %v1054 = vshll.u32 %v689, 16
      %v1056 = vrot.slane %v1054, 4
      %v1057 = vor.u32 %v1053, %v1056
      %v1058 = vsel %vm714, %v1049, %v1057
      %v1060 = vshrl.u32 %v457, 16
      %v1062 = vrot.slane %v1060, 3
      %v1063 = vshll.u32 %v457, 16
      %v1065 = vrot.slane %v1063, 4
      %v1066 = vor.u32 %v1062, %v1065
      %v1068 = vshrl.u32 %v458, 16
      %v1070 = vrot.slane %v1068, 3
      %v1071 = vshll.u32 %v458, 16
      %v1073 = vrot.slane %v1071, 4
      %v1074 = vor.u32 %v1070, %v1073
      %v1075 = vsel %vm714, %v1066, %v1074
      %v1077 = vshrl.u32 %v560, 16
      %v1079 = vrot.slane %v1077, 3
      %v1080 = vshll.u32 %v560, 16
      %v1082 = vrot.slane %v1080, 4
      %v1083 = vor.u32 %v1079, %v1082
      %v1084 = vsel %vm714, %v1083, %v1083
      %v1086 = vshrl.u32 %v690, 16
      %v1088 = vrot.slane %v1086, 3
      %v1089 = vshll.u32 %v690, 16
      %v1091 = vrot.slane %v1089, 4
      %v1092 = vor.u32 %v1088, %v1091
      %v1094 = vshrl.u32 %v692, 16
      %v1096 = vrot.slane %v1094, 3
      %v1097 = vshll.u32 %v692, 16
      %v1099 = vrot.slane %v1097, 4
      %v1100 = vor.u32 %v1096, %v1099
      %v1101 = vsel %vm714, %v1092, %v1100
      %v1103 = vshrl.u32 %v459, 16
      %v1105 = vrot.slane %v1103, 3
      %v1106 = vshll.u32 %v459, 16
      %v1108 = vrot.slane %v1106, 4
      %v1109 = vor.u32 %v1105, %v1108
      %v1111 = vshrl.u32 %v460, 16
      %v1113 = vrot.slane %v1111, 3
      %v1114 = vshll.u32 %v460, 16
      %v1116 = vrot.slane %v1114, 4
      %v1117 = vor.u32 %v1113, %v1116
      %v1118 = vsel %vm714, %v1109, %v1117
      %v1120 = vshrl.u32 %v568, 16
      %v1122 = vrot.slane %v1120, 3
      %v1123 = vshll.u32 %v568, 16
      %v1125 = vrot.slane %v1123, 4
      %v1126 = vor.u32 %v1122, %v1125
      %v1127 = vsel %vm714, %v1126, %v1126
      %v1129 = vshrl.u32 %v693, 16
      %v1131 = vrot.slane %v1129, 3
      %v1132 = vshll.u32 %v693, 16
      %v1134 = vrot.slane %v1132, 4
      %v1135 = vor.u32 %v1131, %v1134
      %v1137 = vshrl.u32 %v695, 16
      %v1139 = vrot.slane %v1137, 3
      %v1140 = vshll.u32 %v695, 16
      %v1142 = vrot.slane %v1140, 4
      %v1143 = vor.u32 %v1139, %v1142
      %v1144 = vsel %vm714, %v1135, %v1143
      %v1146 = vshrl.u32 %v461, 16
      %v1148 = vrot.slane %v1146, 3
      %v1149 = vshll.u32 %v461, 16
      %v1151 = vrot.slane %v1149, 4
      %v1152 = vor.u32 %v1148, %v1151
      %v1154 = vshrl.u32 %v462, 16
      %v1156 = vrot.slane %v1154, 3
      %v1157 = vshll.u32 %v462, 16
      %v1159 = vrot.slane %v1157, 4
      %v1160 = vor.u32 %v1156, %v1159
      %v1161 = vsel %vm714, %v1152, %v1160
      %v1163 = vshrl.u32 %v576, 16
      %v1165 = vrot.slane %v1163, 3
      %v1166 = vshll.u32 %v576, 16
      %v1168 = vrot.slane %v1166, 4
      %v1169 = vor.u32 %v1165, %v1168
      %v1170 = vsel %vm714, %v1169, %v1169
      %v1172 = vshrl.u32 %v696, 16
      %v1174 = vrot.slane %v1172, 3
      %v1175 = vshll.u32 %v696, 16
      %v1177 = vrot.slane %v1175, 4
      %v1178 = vor.u32 %v1174, %v1177
      %v1180 = vshrl.u32 %v698, 16
      %v1182 = vrot.slane %v1180, 3
      %v1183 = vshll.u32 %v698, 16
      %v1185 = vrot.slane %v1183, 4
      %v1186 = vor.u32 %v1182, %v1185
      %v1187 = vsel %vm714, %v1178, %v1186
      %v1189 = vshrl.u32 %v463, 16
      %v1191 = vrot.slane %v1189, 3
      %v1192 = vshll.u32 %v463, 16
      %v1194 = vrot.slane %v1192, 4
      %v1195 = vor.u32 %v1191, %v1194
      %v1197 = vshrl.u32 %v464, 16
      %v1199 = vrot.slane %v1197, 3
      %v1200 = vshll.u32 %v464, 16
      %v1202 = vrot.slane %v1200, 4
      %v1203 = vor.u32 %v1199, %v1202
      %v1204 = vsel %vm714, %v1195, %v1203
      %v1206 = vshrl.u32 %v584, 16
      %v1208 = vrot.slane %v1206, 3
      %v1209 = vshll.u32 %v584, 16
      %v1211 = vrot.slane %v1209, 4
      %v1212 = vor.u32 %v1208, %v1211
      %v1213 = vsel %vm714, %v1212, %v1212
      %v1215 = vshrl.u32 %v699, 16
      %v1217 = vrot.slane %v1215, 3
      %v1218 = vshll.u32 %v699, 16
      %v1220 = vrot.slane %v1218, 4
      %v1221 = vor.u32 %v1217, %v1220
      %v1223 = vshrl.u32 %v701, 16
      %v1225 = vrot.slane %v1223, 3
      %v1226 = vshll.u32 %v701, 16
      %v1228 = vrot.slane %v1226, 4
      %v1229 = vor.u32 %v1225, %v1228
      %v1230 = vsel %vm714, %v1221, %v1229
      %v1232 = vshrl.u32 %v465, 16
      %v1234 = vrot.slane %v1232, 3
      %v1235 = vshll.u32 %v465, 16
      %v1237 = vrot.slane %v1235, 4
      %v1238 = vor.u32 %v1234, %v1237
      %v1240 = vshrl.u32 %v466, 16
      %v1242 = vrot.slane %v1240, 3
      %v1243 = vshll.u32 %v466, 16
      %v1245 = vrot.slane %v1243, 4
      %v1246 = vor.u32 %v1242, %v1245
      %v1247 = vsel %vm714, %v1238, %v1246
      %v1249 = vshrl.u32 %v592, 16
      %v1251 = vrot.slane %v1249, 3
      %v1252 = vshll.u32 %v592, 16
      %v1254 = vrot.slane %v1252, 4
      %v1255 = vor.u32 %v1251, %v1254
      %v1256 = vsel %vm714, %v1255, %v1255
      %v1258 = vshrl.u32 %v702, 16
      %v1260 = vrot.slane %v1258, 3
      %v1261 = vshll.u32 %v702, 16
      %v1263 = vrot.slane %v1261, 4
      %v1264 = vor.u32 %v1260, %v1263
      %v1266 = vshrl.u32 %v704, 16
      %v1268 = vrot.slane %v1266, 3
      %v1269 = vshll.u32 %v704, 16
      %v1271 = vrot.slane %v1269, 4
      %v1272 = vor.u32 %v1268, %v1271
      %v1273 = vsel %vm714, %v1264, %v1272
      %v1275 = vshrl.u32 %v467, 16
      %v1277 = vrot.slane %v1275, 3
      %v1278 = vshll.u32 %v467, 16
      %v1280 = vrot.slane %v1278, 4
      %v1281 = vor.u32 %v1277, %v1280
      %v1283 = vshrl.u32 %v468, 16
      %v1285 = vrot.slane %v1283, 3
      %v1286 = vshll.u32 %v468, 16
      %v1288 = vrot.slane %v1286, 4
      %v1289 = vor.u32 %v1285, %v1288
      %v1290 = vsel %vm714, %v1281, %v1289
      %v1292 = vshrl.u32 %v600, 16
      %v1294 = vrot.slane %v1292, 3
      %v1295 = vshll.u32 %v600, 16
      %v1297 = vrot.slane %v1295, 4
      %v1298 = vor.u32 %v1294, %v1297
      %v1299 = vsel %vm714, %v1298, %v1298
      %v1301 = vshrl.u32 %v705, 16
      %v1303 = vrot.slane %v1301, 3
      %v1304 = vshll.u32 %v705, 16
      %v1306 = vrot.slane %v1304, 4
      %v1307 = vor.u32 %v1303, %v1306
      %v1309 = vshrl.u32 %v707, 16
      %v1311 = vrot.slane %v1309, 3
      %v1312 = vshll.u32 %v707, 16
      %v1314 = vrot.slane %v1312, 4
      %v1315 = vor.u32 %v1311, %v1314
      %v1316 = vsel %vm714, %v1307, %v1315
      %v1318 = vshrl.u32 %v469, 16
      %v1320 = vrot.slane %v1318, 3
      %v1321 = vshll.u32 %v469, 16
      %v1323 = vrot.slane %v1321, 4
      %v1324 = vor.u32 %v1320, %v1323
      %v1326 = vshrl.u32 %v470, 16
      %v1328 = vrot.slane %v1326, 3
      %v1329 = vshll.u32 %v470, 16
      %v1331 = vrot.slane %v1329, 4
      %v1332 = vor.u32 %v1328, %v1331
      %v1333 = vsel %vm714, %v1324, %v1332
      %v1335 = vshrl.u32 %v608, 16
      %v1337 = vrot.slane %v1335, 3
      %v1338 = vshll.u32 %v608, 16
      %v1340 = vrot.slane %v1338, 4
      %v1341 = vor.u32 %v1337, %v1340
      %v1342 = vsel %vm714, %v1341, %v1341
      %v1344 = vshrl.u32 %v708, 16
      %v1346 = vrot.slane %v1344, 3
      %v1347 = vshll.u32 %v708, 16
      %v1349 = vrot.slane %v1347, 4
      %v1350 = vor.u32 %v1346, %v1349
      %v1352 = vshrl.u32 %v710, 16
      %v1354 = vrot.slane %v1352, 3
      %v1355 = vshll.u32 %v710, 16
      %v1357 = vrot.slane %v1355, 4
      %v1358 = vor.u32 %v1354, %v1357
      %v1359 = vsel %vm714, %v1350, %v1358
      %v1361 = vshrl.u32 %v471, 16
      %v1363 = vrot.slane %v1361, 3
      %v1364 = vshll.u32 %v471, 16
      %v1366 = vrot.slane %v1364, 4
      %v1367 = vor.u32 %v1363, %v1366
      %v1369 = vshrl.u32 %v472, 16
      %v1371 = vrot.slane %v1369, 3
      %v1372 = vshll.u32 %v472, 16
      %v1374 = vrot.slane %v1372, 4
      %v1375 = vor.u32 %v1371, %v1374
      %v1376 = vsel %vm714, %v1367, %v1375
      %v1378 = vshrl.u32 %v616, 16
      %v1380 = vrot.slane %v1378, 3
      %v1381 = vshll.u32 %v616, 16
      %v1383 = vrot.slane %v1381, 4
      %v1384 = vor.u32 %v1380, %v1383
      %v1385 = vsel %vm714, %v1384, %v1384
      %v1387 = vshrl.u32 %v711, 16
      %v1389 = vrot.slane %v1387, 3
      %v1390 = vshll.u32 %v711, 16
      %v1392 = vrot.slane %v1390, 4
      %v1393 = vor.u32 %v1389, %v1392
      %v1395 = vshrl.u32 %v713, 16
      %v1397 = vrot.slane %v1395, 3
      %v1398 = vshll.u32 %v713, 16
      %v1400 = vrot.slane %v1398, 4
      %v1401 = vor.u32 %v1397, %v1400
      %v1402 = vsel %vm714, %v1393, %v1401
      %v1451 = vld [vmem:[%s260] sm:$0xf]
      %v1452 = vld [vmem:[%s260 + $0x4] sm:$0xf]
      %v1453 = vld [vmem:[%s260 + $0x8] sm:$0xf]
      %v1454 = vld [vmem:[%s260 + $0xc] sm:$0xf]
      %v1455 = vld [vmem:[%s260 + $0x10] sm:$0xf]
      %v1456 = vld [vmem:[%s260 + $0x14] sm:$0xf]
      %v1457 = vld [vmem:[%s260 + $0x18] sm:$0xf]
      %v1458 = vld [vmem:[%s260 + $0x1c] sm:$0xf]
      %v1459 = vld [vmem:[%s260 + $0x20] sm:$0xf]
      %v1460 = vld [vmem:[%s260 + $0x24] sm:$0xf]
      %v1461 = vld [vmem:[%s260 + $0x28] sm:$0xf]
      %v1462 = vld [vmem:[%s260 + $0x2c] sm:$0xf]
      %v1463 = vld [vmem:[%s260 + $0x30] sm:$0xf]
      %v1464 = vld [vmem:[%s260 + $0x34] sm:$0xf]
      %v1465 = vld [vmem:[%s260 + $0x38] sm:$0xf]
      %v1466 = vld [vmem:[%s260 + $0x3c] sm:$0xf]
      %v1467 = vld [vmem:[%s260 + $0x40] sm:$0xf]
      %v1468 = vld [vmem:[%s260 + $0x44] sm:$0xf]
      %v1469 = vld [vmem:[%s260 + $0x48] sm:$0xf]
      %v1470 = vld [vmem:[%s260 + $0x4c] sm:$0xf]
      %v1471 = vld [vmem:[%s260 + $0x50] sm:$0xf]
      %v1472 = vld [vmem:[%s260 + $0x54] sm:$0xf]
      %v1473 = vld [vmem:[%s260 + $0x58] sm:$0xf]
      %v1474 = vld [vmem:[%s260 + $0x5c] sm:$0xf]
      %v1475 = vld [vmem:[%s260 + $0x60] sm:$0xf]
      %v1476 = vld [vmem:[%s260 + $0x64] sm:$0xf]
      %v1477 = vld [vmem:[%s260 + $0x68] sm:$0xf]
      %v1478 = vld [vmem:[%s260 + $0x6c] sm:$0xf]
      %v1479 = vld [vmem:[%s260 + $0x70] sm:$0xf]
      %v1480 = vld [vmem:[%s260 + $0x74] sm:$0xf]
      %v1481 = vld [vmem:[%s260 + $0x78] sm:$0xf]
      %v1482 = vld [vmem:[%s260 + $0x7c] sm:$0xf]
      %v1483 = vld [vmem:[%s260 + $0x80] sm:$0xf]
      %v1484 = vld [vmem:[%s260 + $0x84] sm:$0xf]
      %v1485 = vld [vmem:[%s260 + $0x88] sm:$0xf]
      %v1486 = vld [vmem:[%s260 + $0x8c] sm:$0xf]
      %v1487 = vld [vmem:[%s260 + $0x90] sm:$0xf]
      %v1488 = vld [vmem:[%s260 + $0x94] sm:$0xf]
      %v1489 = vld [vmem:[%s260 + $0x98] sm:$0xf]
      %v1490 = vld [vmem:[%s260 + $0x9c] sm:$0xf]
      %v1491 = vld [vmem:[%s260 + $0xa0] sm:$0xf]
      %v1492 = vld [vmem:[%s260 + $0xa4] sm:$0xf]
      %v1493 = vld [vmem:[%s260 + $0xa8] sm:$0xf]
      %v1494 = vld [vmem:[%s260 + $0xac] sm:$0xf]
      %v1495 = vld [vmem:[%s260 + $0xb0] sm:$0xf]
      %v1496 = vld [vmem:[%s260 + $0xb4] sm:$0xf]
      %v1497 = vld [vmem:[%s260 + $0xb8] sm:$0xf]
      %v1498 = vld [vmem:[%s260 + $0xbc] sm:$0xf]
      %s1499 = scalar_lea.vmem %s256, 20
      %v1500 = vld [vmem:[%s1499 + $0x4] sm:$0x8]
      %v1501 = vld [vmem:[%s1499 + $0x8] sm:$0xf]
      %v1502 = vld [vmem:[%s1499 + $0xc] sm:$0xf]
      %v1503 = vld [vmem:[%s1499 + $0x18] sm:$0x8]
      %v1504 = vld [vmem:[%s1499 + $0x1c] sm:$0xf]
      %v1505 = vld [vmem:[%s1499 + $0x20] sm:$0xf]
      %v1506 = vld [vmem:[%s1499 + $0x2c] sm:$0x8]
      %v1507 = vld [vmem:[%s1499 + $0x30] sm:$0xf]
      %v1508 = vld [vmem:[%s1499 + $0x34] sm:$0xf]
      %v1509 = vld [vmem:[%s1499 + $0x40] sm:$0x8]
      %v1510 = vld [vmem:[%s1499 + $0x44] sm:$0xf]
      %v1511 = vld [vmem:[%s1499 + $0x48] sm:$0xf]
      %v1512 = vld [vmem:[%s1499 + $0x54] sm:$0x8]
      %v1513 = vld [vmem:[%s1499 + $0x58] sm:$0xf]
      %v1514 = vld [vmem:[%s1499 + $0x5c] sm:$0xf]
      %v1515 = vld [vmem:[%s1499 + $0x68] sm:$0x8]
      %v1516 = vld [vmem:[%s1499 + $0x6c] sm:$0xf]
      %v1517 = vld [vmem:[%s1499 + $0x70] sm:$0xf]
      %v1518 = vld [vmem:[%s1499 + $0x7c] sm:$0x8]
      %v1519 = vld [vmem:[%s1499 + $0x80] sm:$0xf]
      %v1520 = vld [vmem:[%s1499 + $0x84] sm:$0xf]
      %v1521 = vld [vmem:[%s1499 + $0x90] sm:$0x8]
      %v1522 = vld [vmem:[%s1499 + $0x94] sm:$0xf]
      %v1523 = vld [vmem:[%s1499 + $0x98] sm:$0xf]
      %v1524 = vld [vmem:[%s1499 + $0xa4] sm:$0x8]
      %v1525 = vld [vmem:[%s1499 + $0xa8] sm:$0xf]
      %v1526 = vld [vmem:[%s1499 + $0xac] sm:$0xf]
      %v1527 = vld [vmem:[%s1499 + $0xb8] sm:$0x8]
      %v1528 = vld [vmem:[%s1499 + $0xbc] sm:$0xf]
      %v1529 = vld [vmem:[%s1499 + $0xc0] sm:$0xf]
      %v1530 = vld [vmem:[%s1499 + $0xcc] sm:$0x8]
      %v1531 = vld [vmem:[%s1499 + $0xd0] sm:$0xf]
      %v1532 = vld [vmem:[%s1499 + $0xd4] sm:$0xf]
      %v1533 = vld [vmem:[%s1499 + $0xe0] sm:$0x8]
      %v1534 = vld [vmem:[%s1499 + $0xe4] sm:$0xf]
      %v1535 = vld [vmem:[%s1499 + $0xe8] sm:$0xf]
      %v1536 = vld [vmem:[%s1499 + $0xf4] sm:$0x8]
      %v1537 = vld [vmem:[%s1499 + $0xf8] sm:$0xf]
      %v1538 = vld [vmem:[%s1499 + $0xfc] sm:$0xf]
      %v1539 = vld [vmem:[%s1499 + $0x108] sm:$0x8]
      %v1540 = vld [vmem:[%s1499 + $0x10c] sm:$0xf]
      %v1541 = vld [vmem:[%s1499 + $0x110] sm:$0xf]
      %v1542 = vld [vmem:[%s1499 + $0x11c] sm:$0x8]
      %v1543 = vld [vmem:[%s1499 + $0x120] sm:$0xf]
      %v1544 = vld [vmem:[%s1499 + $0x124] sm:$0xf]
      %v1545 = vld [vmem:[%s1499 + $0x130] sm:$0x8]
      %v1546 = vld [vmem:[%s1499 + $0x134] sm:$0xf]
      %v1547 = vld [vmem:[%s1499 + $0x138] sm:$0xf]
      %v1548 = vld [vmem:[%s1499 + $0x10] sm:$0x1]
      %v1549 = vld [vmem:[%s1499 + $0x24] sm:$0x1]
      %v1550 = vld [vmem:[%s1499 + $0x38] sm:$0x1]
      %v1551 = vld [vmem:[%s1499 + $0x4c] sm:$0x1]
      %v1552 = vld [vmem:[%s1499 + $0x60] sm:$0x1]
      %v1553 = vld [vmem:[%s1499 + $0x74] sm:$0x1]
      %v1554 = vld [vmem:[%s1499 + $0x88] sm:$0x1]
      %v1555 = vld [vmem:[%s1499 + $0x9c] sm:$0x1]
      %v1556 = vld [vmem:[%s1499 + $0xb0] sm:$0x1]
      %v1557 = vld [vmem:[%s1499 + $0xc4] sm:$0x1]
      %v1558 = vld [vmem:[%s1499 + $0xd8] sm:$0x1]
      %v1559 = vld [vmem:[%s1499 + $0xec] sm:$0x1]
      %v1560 = vld [vmem:[%s1499 + $0x100] sm:$0x1]
      %v1561 = vld [vmem:[%s1499 + $0x114] sm:$0x1]
      %v1562 = vld [vmem:[%s1499 + $0x128] sm:$0x1]
      %v1563 = vld [vmem:[%s1499 + $0x13c] sm:$0x1]
      %v1612 = vunpack.c.l.b16 %v1500
      %v1613 = vunpack.c.l.b16 %v1501
      %v1614 = vunpack.c.l.b16 %v1502
      %v1615 = vunpack.c.l.b16 %v1503
      %v1616 = vunpack.c.l.b16 %v1504
      %v1617 = vunpack.c.l.b16 %v1505
      %v1618 = vunpack.c.l.b16 %v1506
      %v1619 = vunpack.c.l.b16 %v1507
      %v1620 = vunpack.c.l.b16 %v1508
      %v1621 = vunpack.c.l.b16 %v1509
      %v1622 = vunpack.c.l.b16 %v1510
      %v1623 = vunpack.c.l.b16 %v1511
      %v1624 = vunpack.c.l.b16 %v1512
      %v1625 = vunpack.c.l.b16 %v1513
      %v1626 = vunpack.c.l.b16 %v1514
      %v1627 = vunpack.c.l.b16 %v1515
      %v1628 = vunpack.c.l.b16 %v1516
      %v1629 = vunpack.c.l.b16 %v1517
      %v1630 = vunpack.c.l.b16 %v1518
      %v1631 = vunpack.c.l.b16 %v1519
      %v1632 = vunpack.c.l.b16 %v1520
      %v1633 = vunpack.c.l.b16 %v1521
      %v1634 = vunpack.c.l.b16 %v1522
      %v1635 = vunpack.c.l.b16 %v1523
      %v1636 = vunpack.c.l.b16 %v1524
      %v1637 = vunpack.c.l.b16 %v1525
      %v1638 = vunpack.c.l.b16 %v1526
      %v1639 = vunpack.c.l.b16 %v1527
      %v1640 = vunpack.c.l.b16 %v1528
      %v1641 = vunpack.c.l.b16 %v1529
      %v1642 = vunpack.c.l.b16 %v1530
      %v1643 = vunpack.c.l.b16 %v1531
      %v1644 = vunpack.c.l.b16 %v1532
      %v1645 = vunpack.c.l.b16 %v1533
      %v1646 = vunpack.c.l.b16 %v1534
      %v1647 = vunpack.c.l.b16 %v1535
      %v1648 = vunpack.c.l.b16 %v1536
      %v1649 = vunpack.c.l.b16 %v1537
      %v1650 = vunpack.c.l.b16 %v1538
      %v1651 = vunpack.c.l.b16 %v1539
      %v1652 = vunpack.c.l.b16 %v1540
      %v1653 = vunpack.c.l.b16 %v1541
      %v1654 = vunpack.c.l.b16 %v1542
      %v1655 = vunpack.c.l.b16 %v1543
      %v1656 = vunpack.c.l.b16 %v1544
      %v1657 = vunpack.c.l.b16 %v1545
      %v1658 = vunpack.c.l.b16 %v1546
      %v1659 = vunpack.c.l.b16 %v1547
      %v1660 = vpack.c.b16 %v1613, %v1612
      %v1661 = vpack.c.b16 %v1614, %v1614
      %v1662 = vpack.c.b16 %v1616, %v1615
      %v1663 = vpack.c.b16 %v1617, %v1617
      %v1664 = vpack.c.b16 %v1619, %v1618
      %v1665 = vpack.c.b16 %v1620, %v1620
      %v1666 = vpack.c.b16 %v1622, %v1621
      %v1667 = vpack.c.b16 %v1623, %v1623
      %v1668 = vpack.c.b16 %v1625, %v1624
      %v1669 = vpack.c.b16 %v1626, %v1626
      %v1670 = vpack.c.b16 %v1628, %v1627
      %v1671 = vpack.c.b16 %v1629, %v1629
      %v1672 = vpack.c.b16 %v1631, %v1630
      %v1673 = vpack.c.b16 %v1632, %v1632
      %v1674 = vpack.c.b16 %v1634, %v1633
      %v1675 = vpack.c.b16 %v1635, %v1635
      %v1676 = vpack.c.b16 %v1637, %v1636
      %v1677 = vpack.c.b16 %v1638, %v1638
      %v1678 = vpack.c.b16 %v1640, %v1639
      %v1679 = vpack.c.b16 %v1641, %v1641
      %v1680 = vpack.c.b16 %v1643, %v1642
      %v1681 = vpack.c.b16 %v1644, %v1644
      %v1682 = vpack.c.b16 %v1646, %v1645
      %v1683 = vpack.c.b16 %v1647, %v1647
      %v1684 = vpack.c.b16 %v1649, %v1648
      %v1685 = vpack.c.b16 %v1650, %v1650
      %v1686 = vpack.c.b16 %v1652, %v1651
      %v1687 = vpack.c.b16 %v1653, %v1653
      %v1688 = vpack.c.b16 %v1655, %v1654
      %v1689 = vpack.c.b16 %v1656, %v1656
      %v1690 = vpack.c.b16 %v1658, %v1657
      %v1691 = vpack.c.b16 %v1659, %v1659
      %v1692 = vpack.c.b16 %v1614, %v1613
      %v1693 = vpack.c.b16 %v1617, %v1616
      %v1694 = vpack.c.b16 %v1620, %v1619
      %v1695 = vpack.c.b16 %v1623, %v1622
      %v1696 = vpack.c.b16 %v1626, %v1625
      %v1697 = vpack.c.b16 %v1629, %v1628
      %v1698 = vpack.c.b16 %v1632, %v1631
      %v1699 = vpack.c.b16 %v1635, %v1634
      %v1700 = vpack.c.b16 %v1638, %v1637
      %v1701 = vpack.c.b16 %v1641, %v1640
      %v1702 = vpack.c.b16 %v1644, %v1643
      %v1703 = vpack.c.b16 %v1647, %v1646
      %v1704 = vpack.c.b16 %v1650, %v1649
      %v1705 = vpack.c.b16 %v1653, %v1652
      %v1706 = vpack.c.b16 %v1656, %v1655
      %v1707 = vpack.c.b16 %v1659, %v1658
      %v1709 = vshrl.u32 %v1692, 16
      %v1711 = vrot.slane %v1709, 4
      %v1712 = vshll.u32 %v1692, 16
      %v1714 = vrot.slane %v1712, 5
      %v1715 = vor.u32 %v1711, %v1714
      %v1717 = vshrl.u32 %v1693, 16
      %v1719 = vrot.slane %v1717, 4
      %v1720 = vshll.u32 %v1693, 16
      %v1722 = vrot.slane %v1720, 5
      %v1723 = vor.u32 %v1719, %v1722
      %v1725 = vshrl.u32 %v1694, 16
      %v1727 = vrot.slane %v1725, 4
      %v1728 = vshll.u32 %v1694, 16
      %v1730 = vrot.slane %v1728, 5
      %v1731 = vor.u32 %v1727, %v1730
      %v1733 = vshrl.u32 %v1695, 16
      %v1735 = vrot.slane %v1733, 4
      %v1736 = vshll.u32 %v1695, 16
      %v1738 = vrot.slane %v1736, 5
      %v1739 = vor.u32 %v1735, %v1738
      %v1741 = vshrl.u32 %v1696, 16
      %v1743 = vrot.slane %v1741, 4
      %v1744 = vshll.u32 %v1696, 16
      %v1746 = vrot.slane %v1744, 5
      %v1747 = vor.u32 %v1743, %v1746
      %v1749 = vshrl.u32 %v1697, 16
      %v1751 = vrot.slane %v1749, 4
      %v1752 = vshll.u32 %v1697, 16
      %v1754 = vrot.slane %v1752, 5
      %v1755 = vor.u32 %v1751, %v1754
      %v1757 = vshrl.u32 %v1698, 16
      %v1759 = vrot.slane %v1757, 4
      %v1760 = vshll.u32 %v1698, 16
      %v1762 = vrot.slane %v1760, 5
      %v1763 = vor.u32 %v1759, %v1762
      %v1765 = vshrl.u32 %v1699, 16
      %v1767 = vrot.slane %v1765, 4
      %v1768 = vshll.u32 %v1699, 16
      %v1770 = vrot.slane %v1768, 5
      %v1771 = vor.u32 %v1767, %v1770
      %v1773 = vshrl.u32 %v1700, 16
      %v1775 = vrot.slane %v1773, 4
      %v1776 = vshll.u32 %v1700, 16
      %v1778 = vrot.slane %v1776, 5
      %v1779 = vor.u32 %v1775, %v1778
      %v1781 = vshrl.u32 %v1701, 16
      %v1783 = vrot.slane %v1781, 4
      %v1784 = vshll.u32 %v1701, 16
      %v1786 = vrot.slane %v1784, 5
      %v1787 = vor.u32 %v1783, %v1786
      %v1789 = vshrl.u32 %v1702, 16
      %v1791 = vrot.slane %v1789, 4
      %v1792 = vshll.u32 %v1702, 16
      %v1794 = vrot.slane %v1792, 5
      %v1795 = vor.u32 %v1791, %v1794
      %v1797 = vshrl.u32 %v1703, 16
      %v1799 = vrot.slane %v1797, 4
      %v1800 = vshll.u32 %v1703, 16
      %v1802 = vrot.slane %v1800, 5
      %v1803 = vor.u32 %v1799, %v1802
      %v1805 = vshrl.u32 %v1704, 16
      %v1807 = vrot.slane %v1805, 4
      %v1808 = vshll.u32 %v1704, 16
      %v1810 = vrot.slane %v1808, 5
      %v1811 = vor.u32 %v1807, %v1810
      %v1813 = vshrl.u32 %v1705, 16
      %v1815 = vrot.slane %v1813, 4
      %v1816 = vshll.u32 %v1705, 16
      %v1818 = vrot.slane %v1816, 5
      %v1819 = vor.u32 %v1815, %v1818
      %v1821 = vshrl.u32 %v1706, 16
      %v1823 = vrot.slane %v1821, 4
      %v1824 = vshll.u32 %v1706, 16
      %v1826 = vrot.slane %v1824, 5
      %v1827 = vor.u32 %v1823, %v1826
      %v1829 = vshrl.u32 %v1707, 16
      %v1831 = vrot.slane %v1829, 4
      %v1832 = vshll.u32 %v1707, 16
      %v1834 = vrot.slane %v1832, 5
      %v1835 = vor.u32 %v1831, %v1834
      %v1852 = vunpack.c.l.b16 %v1548
      %v1853 = vunpack.c.l.b16 %v1549
      %v1854 = vunpack.c.l.b16 %v1550
      %v1855 = vunpack.c.l.b16 %v1551
      %v1856 = vunpack.c.l.b16 %v1552
      %v1857 = vunpack.c.l.b16 %v1553
      %v1858 = vunpack.c.l.b16 %v1554
      %v1859 = vunpack.c.l.b16 %v1555
      %v1860 = vunpack.c.l.b16 %v1556
      %v1861 = vunpack.c.l.b16 %v1557
      %v1862 = vunpack.c.l.b16 %v1558
      %v1863 = vunpack.c.l.b16 %v1559
      %v1864 = vunpack.c.l.b16 %v1560
      %v1865 = vunpack.c.l.b16 %v1561
      %v1866 = vunpack.c.l.b16 %v1562
      %v1867 = vunpack.c.l.b16 %v1563
      %v1868 = vpack.c.b16 %v1852, %v1852
      %v1869 = vpack.c.b16 %v1853, %v1853
      %v1870 = vpack.c.b16 %v1854, %v1854
      %v1871 = vpack.c.b16 %v1855, %v1855
      %v1872 = vpack.c.b16 %v1856, %v1856
      %v1873 = vpack.c.b16 %v1857, %v1857
      %v1874 = vpack.c.b16 %v1858, %v1858
      %v1875 = vpack.c.b16 %v1859, %v1859
      %v1876 = vpack.c.b16 %v1860, %v1860
      %v1877 = vpack.c.b16 %v1861, %v1861
      %v1878 = vpack.c.b16 %v1862, %v1862
      %v1879 = vpack.c.b16 %v1863, %v1863
      %v1880 = vpack.c.b16 %v1864, %v1864
      %v1881 = vpack.c.b16 %v1865, %v1865
      %v1882 = vpack.c.b16 %v1866, %v1866
      %v1883 = vpack.c.b16 %v1867, %v1867
      %v1884 = vrot.slane %v1692, 5
      %v1885 = vrot.slane %v1868, 5
      %v1886 = vsel %vm665, %v1884, %v1885
      %v1887 = vrot.slane %v1693, 5
      %v1888 = vrot.slane %v1869, 5
      %v1889 = vsel %vm665, %v1887, %v1888
      %v1890 = vrot.slane %v1694, 5
      %v1891 = vrot.slane %v1870, 5
      %v1892 = vsel %vm665, %v1890, %v1891
      %v1893 = vrot.slane %v1695, 5
      %v1894 = vrot.slane %v1871, 5
      %v1895 = vsel %vm665, %v1893, %v1894
      %v1896 = vrot.slane %v1696, 5
      %v1897 = vrot.slane %v1872, 5
      %v1898 = vsel %vm665, %v1896, %v1897
      %v1899 = vrot.slane %v1697, 5
      %v1900 = vrot.slane %v1873, 5
      %v1901 = vsel %vm665, %v1899, %v1900
      %v1902 = vrot.slane %v1698, 5
      %v1903 = vrot.slane %v1874, 5
      %v1904 = vsel %vm665, %v1902, %v1903
      %v1905 = vrot.slane %v1699, 5
      %v1906 = vrot.slane %v1875, 5
      %v1907 = vsel %vm665, %v1905, %v1906
      %v1908 = vrot.slane %v1700, 5
      %v1909 = vrot.slane %v1876, 5
      %v1910 = vsel %vm665, %v1908, %v1909
      %v1911 = vrot.slane %v1701, 5
      %v1912 = vrot.slane %v1877, 5
      %v1913 = vsel %vm665, %v1911, %v1912
      %v1914 = vrot.slane %v1702, 5
      %v1915 = vrot.slane %v1878, 5
      %v1916 = vsel %vm665, %v1914, %v1915
      %v1917 = vrot.slane %v1703, 5
      %v1918 = vrot.slane %v1879, 5
      %v1919 = vsel %vm665, %v1917, %v1918
      %v1920 = vrot.slane %v1704, 5
      %v1921 = vrot.slane %v1880, 5
      %v1922 = vsel %vm665, %v1920, %v1921
      %v1923 = vrot.slane %v1705, 5
      %v1924 = vrot.slane %v1881, 5
      %v1925 = vsel %vm665, %v1923, %v1924
      %v1926 = vrot.slane %v1706, 5
      %v1927 = vrot.slane %v1882, 5
      %v1928 = vsel %vm665, %v1926, %v1927
      %v1929 = vrot.slane %v1707, 5
      %v1930 = vrot.slane %v1883, 5
      %v1931 = vsel %vm665, %v1929, %v1930
      %v1933 = vshrl.u32 %v1660, 16
      %v1935 = vrot.slane %v1933, 3
      %v1936 = vshll.u32 %v1660, 16
      %v1938 = vrot.slane %v1936, 4
      %v1939 = vor.u32 %v1935, %v1938
      %v1941 = vshrl.u32 %v1661, 16
      %v1943 = vrot.slane %v1941, 3
      %v1944 = vshll.u32 %v1661, 16
      %v1946 = vrot.slane %v1944, 4
      %v1947 = vor.u32 %v1943, %v1946
      %v1948 = vsel %vm714, %v1939, %v1947
      %v1950 = vshrl.u32 %v1715, 16
      %v1952 = vrot.slane %v1950, 3
      %v1953 = vshll.u32 %v1715, 16
      %v1955 = vrot.slane %v1953, 4
      %v1956 = vor.u32 %v1952, %v1955
      %v1957 = vsel %vm714, %v1956, %v1956
      %v1959 = vshrl.u32 %v1884, 16
      %v1961 = vrot.slane %v1959, 3
      %v1962 = vshll.u32 %v1884, 16
      %v1964 = vrot.slane %v1962, 4
      %v1965 = vor.u32 %v1961, %v1964
      %v1967 = vshrl.u32 %v1886, 16
      %v1969 = vrot.slane %v1967, 3
      %v1970 = vshll.u32 %v1886, 16
      %v1972 = vrot.slane %v1970, 4
      %v1973 = vor.u32 %v1969, %v1972
      %v1974 = vsel %vm714, %v1965, %v1973
      %v1976 = vshrl.u32 %v1662, 16
      %v1978 = vrot.slane %v1976, 3
      %v1979 = vshll.u32 %v1662, 16
      %v1981 = vrot.slane %v1979, 4
      %v1982 = vor.u32 %v1978, %v1981
      %v1984 = vshrl.u32 %v1663, 16
      %v1986 = vrot.slane %v1984, 3
      %v1987 = vshll.u32 %v1663, 16
      %v1989 = vrot.slane %v1987, 4
      %v1990 = vor.u32 %v1986, %v1989
      %v1991 = vsel %vm714, %v1982, %v1990
      %v1993 = vshrl.u32 %v1723, 16
      %v1995 = vrot.slane %v1993, 3
      %v1996 = vshll.u32 %v1723, 16
      %v1998 = vrot.slane %v1996, 4
      %v1999 = vor.u32 %v1995, %v1998
      %v2000 = vsel %vm714, %v1999, %v1999
      %v2002 = vshrl.u32 %v1887, 16
      %v2004 = vrot.slane %v2002, 3
      %v2005 = vshll.u32 %v1887, 16
      %v2007 = vrot.slane %v2005, 4
      %v2008 = vor.u32 %v2004, %v2007
      %v2010 = vshrl.u32 %v1889, 16
      %v2012 = vrot.slane %v2010, 3
      %v2013 = vshll.u32 %v1889, 16
      %v2015 = vrot.slane %v2013, 4
      %v2016 = vor.u32 %v2012, %v2015
      %v2017 = vsel %vm714, %v2008, %v2016
      %v2019 = vshrl.u32 %v1664, 16
      %v2021 = vrot.slane %v2019, 3
      %v2022 = vshll.u32 %v1664, 16
      %v2024 = vrot.slane %v2022, 4
      %v2025 = vor.u32 %v2021, %v2024
      %v2027 = vshrl.u32 %v1665, 16
      %v2029 = vrot.slane %v2027, 3
      %v2030 = vshll.u32 %v1665, 16
      %v2032 = vrot.slane %v2030, 4
      %v2033 = vor.u32 %v2029, %v2032
      %v2034 = vsel %vm714, %v2025, %v2033
      %v2036 = vshrl.u32 %v1731, 16
      %v2038 = vrot.slane %v2036, 3
      %v2039 = vshll.u32 %v1731, 16
      %v2041 = vrot.slane %v2039, 4
      %v2042 = vor.u32 %v2038, %v2041
      %v2043 = vsel %vm714, %v2042, %v2042
      %v2045 = vshrl.u32 %v1890, 16
      %v2047 = vrot.slane %v2045, 3
      %v2048 = vshll.u32 %v1890, 16
      %v2050 = vrot.slane %v2048, 4
      %v2051 = vor.u32 %v2047, %v2050
      %v2053 = vshrl.u32 %v1892, 16
      %v2055 = vrot.slane %v2053, 3
      %v2056 = vshll.u32 %v1892, 16
      %v2058 = vrot.slane %v2056, 4
      %v2059 = vor.u32 %v2055, %v2058
      %v2060 = vsel %vm714, %v2051, %v2059
      %v2062 = vshrl.u32 %v1666, 16
      %v2064 = vrot.slane %v2062, 3
      %v2065 = vshll.u32 %v1666, 16
      %v2067 = vrot.slane %v2065, 4
      %v2068 = vor.u32 %v2064, %v2067
      %v2070 = vshrl.u32 %v1667, 16
      %v2072 = vrot.slane %v2070, 3
      %v2073 = vshll.u32 %v1667, 16
      %v2075 = vrot.slane %v2073, 4
      %v2076 = vor.u32 %v2072, %v2075
      %v2077 = vsel %vm714, %v2068, %v2076
      %v2079 = vshrl.u32 %v1739, 16
      %v2081 = vrot.slane %v2079, 3
      %v2082 = vshll.u32 %v1739, 16
      %v2084 = vrot.slane %v2082, 4
      %v2085 = vor.u32 %v2081, %v2084
      %v2086 = vsel %vm714, %v2085, %v2085
      %v2088 = vshrl.u32 %v1893, 16
      %v2090 = vrot.slane %v2088, 3
      %v2091 = vshll.u32 %v1893, 16
      %v2093 = vrot.slane %v2091, 4
      %v2094 = vor.u32 %v2090, %v2093
      %v2096 = vshrl.u32 %v1895, 16
      %v2098 = vrot.slane %v2096, 3
      %v2099 = vshll.u32 %v1895, 16
      %v2101 = vrot.slane %v2099, 4
      %v2102 = vor.u32 %v2098, %v2101
      %v2103 = vsel %vm714, %v2094, %v2102
      %v2105 = vshrl.u32 %v1668, 16
      %v2107 = vrot.slane %v2105, 3
      %v2108 = vshll.u32 %v1668, 16
      %v2110 = vrot.slane %v2108, 4
      %v2111 = vor.u32 %v2107, %v2110
      %v2113 = vshrl.u32 %v1669, 16
      %v2115 = vrot.slane %v2113, 3
      %v2116 = vshll.u32 %v1669, 16
      %v2118 = vrot.slane %v2116, 4
      %v2119 = vor.u32 %v2115, %v2118
      %v2120 = vsel %vm714, %v2111, %v2119
      %v2122 = vshrl.u32 %v1747, 16
      %v2124 = vrot.slane %v2122, 3
      %v2125 = vshll.u32 %v1747, 16
      %v2127 = vrot.slane %v2125, 4
      %v2128 = vor.u32 %v2124, %v2127
      %v2129 = vsel %vm714, %v2128, %v2128
      %v2131 = vshrl.u32 %v1896, 16
      %v2133 = vrot.slane %v2131, 3
      %v2134 = vshll.u32 %v1896, 16
      %v2136 = vrot.slane %v2134, 4
      %v2137 = vor.u32 %v2133, %v2136
      %v2139 = vshrl.u32 %v1898, 16
      %v2141 = vrot.slane %v2139, 3
      %v2142 = vshll.u32 %v1898, 16
      %v2144 = vrot.slane %v2142, 4
      %v2145 = vor.u32 %v2141, %v2144
      %v2146 = vsel %vm714, %v2137, %v2145
      %v2148 = vshrl.u32 %v1670, 16
      %v2150 = vrot.slane %v2148, 3
      %v2151 = vshll.u32 %v1670, 16
      %v2153 = vrot.slane %v2151, 4
      %v2154 = vor.u32 %v2150, %v2153
      %v2156 = vshrl.u32 %v1671, 16
      %v2158 = vrot.slane %v2156, 3
      %v2159 = vshll.u32 %v1671, 16
      %v2161 = vrot.slane %v2159, 4
      %v2162 = vor.u32 %v2158, %v2161
      %v2163 = vsel %vm714, %v2154, %v2162
      %v2165 = vshrl.u32 %v1755, 16
      %v2167 = vrot.slane %v2165, 3
      %v2168 = vshll.u32 %v1755, 16
      %v2170 = vrot.slane %v2168, 4
      %v2171 = vor.u32 %v2167, %v2170
      %v2172 = vsel %vm714, %v2171, %v2171
      %v2174 = vshrl.u32 %v1899, 16
      %v2176 = vrot.slane %v2174, 3
      %v2177 = vshll.u32 %v1899, 16
      %v2179 = vrot.slane %v2177, 4
      %v2180 = vor.u32 %v2176, %v2179
      %v2182 = vshrl.u32 %v1901, 16
      %v2184 = vrot.slane %v2182, 3
      %v2185 = vshll.u32 %v1901, 16
      %v2187 = vrot.slane %v2185, 4
      %v2188 = vor.u32 %v2184, %v2187
      %v2189 = vsel %vm714, %v2180, %v2188
      %v2191 = vshrl.u32 %v1672, 16
      %v2193 = vrot.slane %v2191, 3
      %v2194 = vshll.u32 %v1672, 16
      %v2196 = vrot.slane %v2194, 4
      %v2197 = vor.u32 %v2193, %v2196
      %v2199 = vshrl.u32 %v1673, 16
      %v2201 = vrot.slane %v2199, 3
      %v2202 = vshll.u32 %v1673, 16
      %v2204 = vrot.slane %v2202, 4
      %v2205 = vor.u32 %v2201, %v2204
      %v2206 = vsel %vm714, %v2197, %v2205
      %v2208 = vshrl.u32 %v1763, 16
      %v2210 = vrot.slane %v2208, 3
      %v2211 = vshll.u32 %v1763, 16
      %v2213 = vrot.slane %v2211, 4
      %v2214 = vor.u32 %v2210, %v2213
      %v2215 = vsel %vm714, %v2214, %v2214
      %v2217 = vshrl.u32 %v1902, 16
      %v2219 = vrot.slane %v2217, 3
      %v2220 = vshll.u32 %v1902, 16
      %v2222 = vrot.slane %v2220, 4
      %v2223 = vor.u32 %v2219, %v2222
      %v2225 = vshrl.u32 %v1904, 16
      %v2227 = vrot.slane %v2225, 3
      %v2228 = vshll.u32 %v1904, 16
      %v2230 = vrot.slane %v2228, 4
      %v2231 = vor.u32 %v2227, %v2230
      %v2232 = vsel %vm714, %v2223, %v2231
      %v2234 = vshrl.u32 %v1674, 16
      %v2236 = vrot.slane %v2234, 3
      %v2237 = vshll.u32 %v1674, 16
      %v2239 = vrot.slane %v2237, 4
      %v2240 = vor.u32 %v2236, %v2239
      %v2242 = vshrl.u32 %v1675, 16
      %v2244 = vrot.slane %v2242, 3
      %v2245 = vshll.u32 %v1675, 16
      %v2247 = vrot.slane %v2245, 4
      %v2248 = vor.u32 %v2244, %v2247
      %v2249 = vsel %vm714, %v2240, %v2248
      %v2251 = vshrl.u32 %v1771, 16
      %v2253 = vrot.slane %v2251, 3
      %v2254 = vshll.u32 %v1771, 16
      %v2256 = vrot.slane %v2254, 4
      %v2257 = vor.u32 %v2253, %v2256
      %v2258 = vsel %vm714, %v2257, %v2257
      %v2260 = vshrl.u32 %v1905, 16
      %v2262 = vrot.slane %v2260, 3
      %v2263 = vshll.u32 %v1905, 16
      %v2265 = vrot.slane %v2263, 4
      %v2266 = vor.u32 %v2262, %v2265
      %v2268 = vshrl.u32 %v1907, 16
      %v2270 = vrot.slane %v2268, 3
      %v2271 = vshll.u32 %v1907, 16
      %v2273 = vrot.slane %v2271, 4
      %v2274 = vor.u32 %v2270, %v2273
      %v2275 = vsel %vm714, %v2266, %v2274
      %v2277 = vshrl.u32 %v1676, 16
      %v2279 = vrot.slane %v2277, 3
      %v2280 = vshll.u32 %v1676, 16
      %v2282 = vrot.slane %v2280, 4
      %v2283 = vor.u32 %v2279, %v2282
      %v2285 = vshrl.u32 %v1677, 16
      %v2287 = vrot.slane %v2285, 3
      %v2288 = vshll.u32 %v1677, 16
      %v2290 = vrot.slane %v2288, 4
      %v2291 = vor.u32 %v2287, %v2290
      %v2292 = vsel %vm714, %v2283, %v2291
      %v2294 = vshrl.u32 %v1779, 16
      %v2296 = vrot.slane %v2294, 3
      %v2297 = vshll.u32 %v1779, 16
      %v2299 = vrot.slane %v2297, 4
      %v2300 = vor.u32 %v2296, %v2299
      %v2301 = vsel %vm714, %v2300, %v2300
      %v2303 = vshrl.u32 %v1908, 16
      %v2305 = vrot.slane %v2303, 3
      %v2306 = vshll.u32 %v1908, 16
      %v2308 = vrot.slane %v2306, 4
      %v2309 = vor.u32 %v2305, %v2308
      %v2311 = vshrl.u32 %v1910, 16
      %v2313 = vrot.slane %v2311, 3
      %v2314 = vshll.u32 %v1910, 16
      %v2316 = vrot.slane %v2314, 4
      %v2317 = vor.u32 %v2313, %v2316
      %v2318 = vsel %vm714, %v2309, %v2317
      %v2320 = vshrl.u32 %v1678, 16
      %v2322 = vrot.slane %v2320, 3
      %v2323 = vshll.u32 %v1678, 16
      %v2325 = vrot.slane %v2323, 4
      %v2326 = vor.u32 %v2322, %v2325
      %v2328 = vshrl.u32 %v1679, 16
      %v2330 = vrot.slane %v2328, 3
      %v2331 = vshll.u32 %v1679, 16
      %v2333 = vrot.slane %v2331, 4
      %v2334 = vor.u32 %v2330, %v2333
      %v2335 = vsel %vm714, %v2326, %v2334
      %v2337 = vshrl.u32 %v1787, 16
      %v2339 = vrot.slane %v2337, 3
      %v2340 = vshll.u32 %v1787, 16
      %v2342 = vrot.slane %v2340, 4
      %v2343 = vor.u32 %v2339, %v2342
      %v2344 = vsel %vm714, %v2343, %v2343
      %v2346 = vshrl.u32 %v1911, 16
      %v2348 = vrot.slane %v2346, 3
      %v2349 = vshll.u32 %v1911, 16
      %v2351 = vrot.slane %v2349, 4
      %v2352 = vor.u32 %v2348, %v2351
      %v2354 = vshrl.u32 %v1913, 16
      %v2356 = vrot.slane %v2354, 3
      %v2357 = vshll.u32 %v1913, 16
      %v2359 = vrot.slane %v2357, 4
      %v2360 = vor.u32 %v2356, %v2359
      %v2361 = vsel %vm714, %v2352, %v2360
      %v2363 = vshrl.u32 %v1680, 16
      %v2365 = vrot.slane %v2363, 3
      %v2366 = vshll.u32 %v1680, 16
      %v2368 = vrot.slane %v2366, 4
      %v2369 = vor.u32 %v2365, %v2368
      %v2371 = vshrl.u32 %v1681, 16
      %v2373 = vrot.slane %v2371, 3
      %v2374 = vshll.u32 %v1681, 16
      %v2376 = vrot.slane %v2374, 4
      %v2377 = vor.u32 %v2373, %v2376
      %v2378 = vsel %vm714, %v2369, %v2377
      %v2380 = vshrl.u32 %v1795, 16
      %v2382 = vrot.slane %v2380, 3
      %v2383 = vshll.u32 %v1795, 16
      %v2385 = vrot.slane %v2383, 4
      %v2386 = vor.u32 %v2382, %v2385
      %v2387 = vsel %vm714, %v2386, %v2386
      %v2389 = vshrl.u32 %v1914, 16
      %v2391 = vrot.slane %v2389, 3
      %v2392 = vshll.u32 %v1914, 16
      %v2394 = vrot.slane %v2392, 4
      %v2395 = vor.u32 %v2391, %v2394
      %v2397 = vshrl.u32 %v1916, 16
      %v2399 = vrot.slane %v2397, 3
      %v2400 = vshll.u32 %v1916, 16
      %v2402 = vrot.slane %v2400, 4
      %v2403 = vor.u32 %v2399, %v2402
      %v2404 = vsel %vm714, %v2395, %v2403
      %v2406 = vshrl.u32 %v1682, 16
      %v2408 = vrot.slane %v2406, 3
      %v2409 = vshll.u32 %v1682, 16
      %v2411 = vrot.slane %v2409, 4
      %v2412 = vor.u32 %v2408, %v2411
      %v2414 = vshrl.u32 %v1683, 16
      %v2416 = vrot.slane %v2414, 3
      %v2417 = vshll.u32 %v1683, 16
      %v2419 = vrot.slane %v2417, 4
      %v2420 = vor.u32 %v2416, %v2419
      %v2421 = vsel %vm714, %v2412, %v2420
      %v2423 = vshrl.u32 %v1803, 16
      %v2425 = vrot.slane %v2423, 3
      %v2426 = vshll.u32 %v1803, 16
      %v2428 = vrot.slane %v2426, 4
      %v2429 = vor.u32 %v2425, %v2428
      %v2430 = vsel %vm714, %v2429, %v2429
      %v2432 = vshrl.u32 %v1917, 16
      %v2434 = vrot.slane %v2432, 3
      %v2435 = vshll.u32 %v1917, 16
      %v2437 = vrot.slane %v2435, 4
      %v2438 = vor.u32 %v2434, %v2437
      %v2440 = vshrl.u32 %v1919, 16
      %v2442 = vrot.slane %v2440, 3
      %v2443 = vshll.u32 %v1919, 16
      %v2445 = vrot.slane %v2443, 4
      %v2446 = vor.u32 %v2442, %v2445
      %v2447 = vsel %vm714, %v2438, %v2446
      %v2449 = vshrl.u32 %v1684, 16
      %v2451 = vrot.slane %v2449, 3
      %v2452 = vshll.u32 %v1684, 16
      %v2454 = vrot.slane %v2452, 4
      %v2455 = vor.u32 %v2451, %v2454
      %v2457 = vshrl.u32 %v1685, 16
      %v2459 = vrot.slane %v2457, 3
      %v2460 = vshll.u32 %v1685, 16
      %v2462 = vrot.slane %v2460, 4
      %v2463 = vor.u32 %v2459, %v2462
      %v2464 = vsel %vm714, %v2455, %v2463
      %v2466 = vshrl.u32 %v1811, 16
      %v2468 = vrot.slane %v2466, 3
      %v2469 = vshll.u32 %v1811, 16
      %v2471 = vrot.slane %v2469, 4
      %v2472 = vor.u32 %v2468, %v2471
      %v2473 = vsel %vm714, %v2472, %v2472
      %v2475 = vshrl.u32 %v1920, 16
      %v2477 = vrot.slane %v2475, 3
      %v2478 = vshll.u32 %v1920, 16
      %v2480 = vrot.slane %v2478, 4
      %v2481 = vor.u32 %v2477, %v2480
      %v2483 = vshrl.u32 %v1922, 16
      %v2485 = vrot.slane %v2483, 3
      %v2486 = vshll.u32 %v1922, 16
      %v2488 = vrot.slane %v2486, 4
      %v2489 = vor.u32 %v2485, %v2488
      %v2490 = vsel %vm714, %v2481, %v2489
      %v2492 = vshrl.u32 %v1686, 16
      %v2494 = vrot.slane %v2492, 3
      %v2495 = vshll.u32 %v1686, 16
      %v2497 = vrot.slane %v2495, 4
      %v2498 = vor.u32 %v2494, %v2497
      %v2500 = vshrl.u32 %v1687, 16
      %v2502 = vrot.slane %v2500, 3
      %v2503 = vshll.u32 %v1687, 16
      %v2505 = vrot.slane %v2503, 4
      %v2506 = vor.u32 %v2502, %v2505
      %v2507 = vsel %vm714, %v2498, %v2506
      %v2509 = vshrl.u32 %v1819, 16
      %v2511 = vrot.slane %v2509, 3
      %v2512 = vshll.u32 %v1819, 16
      %v2514 = vrot.slane %v2512, 4
      %v2515 = vor.u32 %v2511, %v2514
      %v2516 = vsel %vm714, %v2515, %v2515
      %v2518 = vshrl.u32 %v1923, 16
      %v2520 = vrot.slane %v2518, 3
      %v2521 = vshll.u32 %v1923, 16
      %v2523 = vrot.slane %v2521, 4
      %v2524 = vor.u32 %v2520, %v2523
      %v2526 = vshrl.u32 %v1925, 16
      %v2528 = vrot.slane %v2526, 3
      %v2529 = vshll.u32 %v1925, 16
      %v2531 = vrot.slane %v2529, 4
      %v2532 = vor.u32 %v2528, %v2531
      %v2533 = vsel %vm714, %v2524, %v2532
      %v2535 = vshrl.u32 %v1688, 16
      %v2537 = vrot.slane %v2535, 3
      %v2538 = vshll.u32 %v1688, 16
      %v2540 = vrot.slane %v2538, 4
      %v2541 = vor.u32 %v2537, %v2540
      %v2543 = vshrl.u32 %v1689, 16
      %v2545 = vrot.slane %v2543, 3
      %v2546 = vshll.u32 %v1689, 16
      %v2548 = vrot.slane %v2546, 4
      %v2549 = vor.u32 %v2545, %v2548
      %v2550 = vsel %vm714, %v2541, %v2549
      %v2552 = vshrl.u32 %v1827, 16
      %v2554 = vrot.slane %v2552, 3
      %v2555 = vshll.u32 %v1827, 16
      %v2557 = vrot.slane %v2555, 4
      %v2558 = vor.u32 %v2554, %v2557
      %v2559 = vsel %vm714, %v2558, %v2558
      %v2561 = vshrl.u32 %v1926, 16
      %v2563 = vrot.slane %v2561, 3
      %v2564 = vshll.u32 %v1926, 16
      %v2566 = vrot.slane %v2564, 4
      %v2567 = vor.u32 %v2563, %v2566
      %v2569 = vshrl.u32 %v1928, 16
      %v2571 = vrot.slane %v2569, 3
      %v2572 = vshll.u32 %v1928, 16
      %v2574 = vrot.slane %v2572, 4
      %v2575 = vor.u32 %v2571, %v2574
      %v2576 = vsel %vm714, %v2567, %v2575
      %v2578 = vshrl.u32 %v1690, 16
      %v2580 = vrot.slane %v2578, 3
      %v2581 = vshll.u32 %v1690, 16
      %v2583 = vrot.slane %v2581, 4
      %v2584 = vor.u32 %v2580, %v2583
      %v2586 = vshrl.u32 %v1691, 16
      %v2588 = vrot.slane %v2586, 3
      %v2589 = vshll.u32 %v1691, 16
      %v2591 = vrot.slane %v2589, 4
      %v2592 = vor.u32 %v2588, %v2591
      %v2593 = vsel %vm714, %v2584, %v2592
      %v2595 = vshrl.u32 %v1835, 16
      %v2597 = vrot.slane %v2595, 3
      %v2598 = vshll.u32 %v1835, 16
      %v2600 = vrot.slane %v2598, 4
      %v2601 = vor.u32 %v2597, %v2600
      %v2602 = vsel %vm714, %v2601, %v2601
      %v2604 = vshrl.u32 %v1929, 16
      %v2606 = vrot.slane %v2604, 3
      %v2607 = vshll.u32 %v1929, 16
      %v2609 = vrot.slane %v2607, 4
      %v2610 = vor.u32 %v2606, %v2609
      %v2612 = vshrl.u32 %v1931, 16
      %v2614 = vrot.slane %v2612, 3
      %v2615 = vshll.u32 %v1931, 16
      %v2617 = vrot.slane %v2615, 4
      %v2618 = vor.u32 %v2614, %v2617
      %v2619 = vsel %vm714, %v2610, %v2618
      %s2668 = scalar_lea.vmem %s260, 192
      %v2669 = vld [vmem:[%s2668] sm:$0xf]
      %v2670 = vld [vmem:[%s2668 + $0x4] sm:$0xf]
      %v2671 = vld [vmem:[%s2668 + $0x8] sm:$0xf]
      %v2672 = vld [vmem:[%s2668 + $0xc] sm:$0xf]
      %v2673 = vld [vmem:[%s2668 + $0x10] sm:$0xf]
      %v2674 = vld [vmem:[%s2668 + $0x14] sm:$0xf]
      %v2675 = vld [vmem:[%s2668 + $0x18] sm:$0xf]
      %v2676 = vld [vmem:[%s2668 + $0x1c] sm:$0xf]
      %v2677 = vld [vmem:[%s2668 + $0x20] sm:$0xf]
      %v2678 = vld [vmem:[%s2668 + $0x24] sm:$0xf]
      %v2679 = vld [vmem:[%s2668 + $0x28] sm:$0xf]
      %v2680 = vld [vmem:[%s2668 + $0x2c] sm:$0xf]
      %v2681 = vld [vmem:[%s2668 + $0x30] sm:$0xf]
      %v2682 = vld [vmem:[%s2668 + $0x34] sm:$0xf]
      %v2683 = vld [vmem:[%s2668 + $0x38] sm:$0xf]
      %v2684 = vld [vmem:[%s2668 + $0x3c] sm:$0xf]
      %v2685 = vld [vmem:[%s2668 + $0x40] sm:$0xf]
      %v2686 = vld [vmem:[%s2668 + $0x44] sm:$0xf]
      %v2687 = vld [vmem:[%s2668 + $0x48] sm:$0xf]
      %v2688 = vld [vmem:[%s2668 + $0x4c] sm:$0xf]
      %v2689 = vld [vmem:[%s2668 + $0x50] sm:$0xf]
      %v2690 = vld [vmem:[%s2668 + $0x54] sm:$0xf]
      %v2691 = vld [vmem:[%s2668 + $0x58] sm:$0xf]
      %v2692 = vld [vmem:[%s2668 + $0x5c] sm:$0xf]
      %v2693 = vld [vmem:[%s2668 + $0x60] sm:$0xf]
      %v2694 = vld [vmem:[%s2668 + $0x64] sm:$0xf]
      %v2695 = vld [vmem:[%s2668 + $0x68] sm:$0xf]
      %v2696 = vld [vmem:[%s2668 + $0x6c] sm:$0xf]
      %v2697 = vld [vmem:[%s2668 + $0x70] sm:$0xf]
      %v2698 = vld [vmem:[%s2668 + $0x74] sm:$0xf]
      %v2699 = vld [vmem:[%s2668 + $0x78] sm:$0xf]
      %v2700 = vld [vmem:[%s2668 + $0x7c] sm:$0xf]
      %v2701 = vld [vmem:[%s2668 + $0x80] sm:$0xf]
      %v2702 = vld [vmem:[%s2668 + $0x84] sm:$0xf]
      %v2703 = vld [vmem:[%s2668 + $0x88] sm:$0xf]
      %v2704 = vld [vmem:[%s2668 + $0x8c] sm:$0xf]
      %v2705 = vld [vmem:[%s2668 + $0x90] sm:$0xf]
      %v2706 = vld [vmem:[%s2668 + $0x94] sm:$0xf]
      %v2707 = vld [vmem:[%s2668 + $0x98] sm:$0xf]
      %v2708 = vld [vmem:[%s2668 + $0x9c] sm:$0xf]
      %v2709 = vld [vmem:[%s2668 + $0xa0] sm:$0xf]
      %v2710 = vld [vmem:[%s2668 + $0xa4] sm:$0xf]
      %v2711 = vld [vmem:[%s2668 + $0xa8] sm:$0xf]
      %v2712 = vld [vmem:[%s2668 + $0xac] sm:$0xf]
      %v2713 = vld [vmem:[%s2668 + $0xb0] sm:$0xf]
      %v2714 = vld [vmem:[%s2668 + $0xb4] sm:$0xf]
      %v2715 = vld [vmem:[%s2668 + $0xb8] sm:$0xf]
      %v2716 = vld [vmem:[%s2668 + $0xbc] sm:$0xf]
      %v2765 = vunpack.c.l.b16 %v2669
      %v2766 = vunpack.c.l.b16 %v2670
      %v2767 = vunpack.c.l.b16 %v2671
      %v2768 = vunpack.c.l.b16 %v2672
      %v2769 = vunpack.c.l.b16 %v2673
      %v2770 = vunpack.c.l.b16 %v2674
      %v2771 = vunpack.c.l.b16 %v2675
      %v2772 = vunpack.c.l.b16 %v2676
      %v2773 = vunpack.c.l.b16 %v2677
      %v2774 = vunpack.c.l.b16 %v2678
      %v2775 = vunpack.c.l.b16 %v2679
      %v2776 = vunpack.c.l.b16 %v2680
      %v2777 = vunpack.c.l.b16 %v2681
      %v2778 = vunpack.c.l.b16 %v2682
      %v2779 = vunpack.c.l.b16 %v2683
      %v2780 = vunpack.c.l.b16 %v2684
      %v2781 = vunpack.c.l.b16 %v2685
      %v2782 = vunpack.c.l.b16 %v2686
      %v2783 = vunpack.c.l.b16 %v2687
      %v2784 = vunpack.c.l.b16 %v2688
      %v2785 = vunpack.c.l.b16 %v2689
      %v2786 = vunpack.c.l.b16 %v2690
      %v2787 = vunpack.c.l.b16 %v2691
      %v2788 = vunpack.c.l.b16 %v2692
      %v2789 = vunpack.c.l.b16 %v2693
      %v2790 = vunpack.c.l.b16 %v2694
      %v2791 = vunpack.c.l.b16 %v2695
      %v2792 = vunpack.c.l.b16 %v2696
      %v2793 = vunpack.c.l.b16 %v2697
      %v2794 = vunpack.c.l.b16 %v2698
      %v2795 = vunpack.c.l.b16 %v2699
      %v2796 = vunpack.c.l.b16 %v2700
      %v2797 = vunpack.c.l.b16 %v2701
      %v2798 = vunpack.c.l.b16 %v2702
      %v2799 = vunpack.c.l.b16 %v2703
      %v2800 = vunpack.c.l.b16 %v2704
      %v2801 = vunpack.c.l.b16 %v2705
      %v2802 = vunpack.c.l.b16 %v2706
      %v2803 = vunpack.c.l.b16 %v2707
      %v2804 = vunpack.c.l.b16 %v2708
      %v2805 = vunpack.c.l.b16 %v2709
      %v2806 = vunpack.c.l.b16 %v2710
      %v2807 = vunpack.c.l.b16 %v2711
      %v2808 = vunpack.c.l.b16 %v2712
      %v2809 = vunpack.c.l.b16 %v2713
      %v2810 = vunpack.c.l.b16 %v2714
      %v2811 = vunpack.c.l.b16 %v2715
      %v2812 = vunpack.c.l.b16 %v2716
      %v2813 = vpack.c.b16 %v2766, %v2765
      %v2814 = vpack.c.b16 %v2768, %v2767
      %v2815 = vpack.c.b16 %v2770, %v2769
      %v2816 = vpack.c.b16 %v2772, %v2771
      %v2817 = vpack.c.b16 %v2774, %v2773
      %v2818 = vpack.c.b16 %v2776, %v2775
      %v2819 = vpack.c.b16 %v2778, %v2777
      %v2820 = vpack.c.b16 %v2780, %v2779
      %v2821 = vpack.c.b16 %v2782, %v2781
      %v2822 = vpack.c.b16 %v2784, %v2783
      %v2823 = vpack.c.b16 %v2786, %v2785
      %v2824 = vpack.c.b16 %v2788, %v2787
      %v2825 = vpack.c.b16 %v2790, %v2789
      %v2826 = vpack.c.b16 %v2792, %v2791
      %v2827 = vpack.c.b16 %v2794, %v2793
      %v2828 = vpack.c.b16 %v2796, %v2795
      %v2829 = vpack.c.b16 %v2798, %v2797
      %v2830 = vpack.c.b16 %v2800, %v2799
      %v2831 = vpack.c.b16 %v2802, %v2801
      %v2832 = vpack.c.b16 %v2804, %v2803
      %v2833 = vpack.c.b16 %v2806, %v2805
      %v2834 = vpack.c.b16 %v2808, %v2807
      %v2835 = vpack.c.b16 %v2810, %v2809
      %v2836 = vpack.c.b16 %v2812, %v2811
      %2861 = vmatprep.subr.bf16.mxu0 0
      %2862 = vmatpush1.bf16.msra.mxu0 %v2820
      %2863 = vmatprep.subr.bf16.mxu0 0
      %2864 = vmatpush1.bf16.msra.mxu0 %v2819
      %2865 = vmatprep.subr.bf16.mxu0 0
      %2866 = vmatpush1.bf16.msra.mxu0 %v2818
      %2867 = vmatprep.subr.bf16.mxu0 0
      %2868 = vmatpush1.bf16.msra.mxu0 %v2817
      %2869 = vmatprep.subr.bf16.mxu0 0
      %2870 = vmatpush1.bf16.msra.mxu0 %v2816
      %2871 = vmatprep.subr.bf16.mxu0 0
      %2872 = vmatpush1.bf16.msra.mxu0 %v2815
      %2873 = vmatprep.subr.bf16.mxu0 0
      %2874 = vmatpush1.bf16.msra.mxu0 %v2814
      %2875 = vmatprep.subr.bf16.mxu0 0
      %2876 = vmatpush1.bf16.msra.mxu0 %v2813
      %2877 = vmatprep.subr.bf16.mxu0 0
      %2878 = vmatpush2.bf16.msra.mxu0 %v2828
      %2879 = vmatprep.subr.bf16.mxu0 0
      %2880 = vmatpush2.bf16.msra.mxu0 %v2827
      %2881 = vmatprep.subr.bf16.mxu0 0
      %2882 = vmatpush2.bf16.msra.mxu0 %v2826
      %2883 = vmatprep.subr.bf16.mxu0 0
      %2884 = vmatpush2.bf16.msra.mxu0 %v2825
      %2885 = vmatprep.subr.bf16.mxu0 0
      %2886 = vmatpush2.bf16.msra.mxu0 %v2824
      %2887 = vmatprep.subr.bf16.mxu0 0
      %2888 = vmatpush2.bf16.msra.mxu0 %v2823
      %2889 = vmatprep.subr.bf16.mxu0 0
      %2890 = vmatpush2.bf16.msra.mxu0 %v2822
      %2891 = vmatprep.subr.bf16.mxu0 0
      %2892 = vmatpush2.bf16.msra.mxu0 %v2821
      %2893 = vmatprep.mubr.bf16.mxu0 %v1957
      %2894 = vmatmul.mubr.bf16.gmra.mxu0 %v1948
      %v2895 = vpop.f32.mrf.mxu0
      %v2896 = vadd.f32 0.0, %v2895
      %v2897 = vpop.f32.mrf.mxu0
      %v2898 = vpop.f32.mrf.mxu0
      %v2899 = vadd.f32 0.0, %v2898
      %v2900 = vpop.f32.mrf.mxu0
      %2901 = vmatprep.mubr.bf16.mxu0 %v2000
      %2902 = vmatmul.mubr.bf16.gmra.mxu0 %v1991
      %v2903 = vpop.f32.mrf.mxu0
      %v2904 = vadd.f32 0.0, %v2903
      %v2905 = vpop.f32.mrf.mxu0
      %v2906 = vpop.f32.mrf.mxu0
      %v2907 = vadd.f32 0.0, %v2906
      %v2908 = vpop.f32.mrf.mxu0
      %2909 = vmatprep.mubr.bf16.mxu0 %v2043
      %2910 = vmatmul.mubr.bf16.gmra.mxu0 %v2034
      %v2911 = vpop.f32.mrf.mxu0
      %v2912 = vadd.f32 0.0, %v2911
      %v2913 = vpop.f32.mrf.mxu0
      %v2914 = vpop.f32.mrf.mxu0
      %v2915 = vadd.f32 0.0, %v2914
      %v2916 = vpop.f32.mrf.mxu0
      %2917 = vmatprep.mubr.bf16.mxu0 %v2086
      %2918 = vmatmul.mubr.bf16.gmra.mxu0 %v2077
      %v2919 = vpop.f32.mrf.mxu0
      %v2920 = vadd.f32 0.0, %v2919
      %v2921 = vpop.f32.mrf.mxu0
      %v2922 = vpop.f32.mrf.mxu0
      %v2923 = vadd.f32 0.0, %v2922
      %v2924 = vpop.f32.mrf.mxu0
      %2925 = vmatprep.mubr.bf16.mxu0 %v2129
      %2926 = vmatmul.mubr.bf16.gmra.mxu0 %v2120
      %v2927 = vpop.f32.mrf.mxu0
      %v2928 = vadd.f32 0.0, %v2927
      %v2929 = vpop.f32.mrf.mxu0
      %v2930 = vpop.f32.mrf.mxu0
      %v2931 = vadd.f32 0.0, %v2930
      %v2932 = vpop.f32.mrf.mxu0
      %2933 = vmatprep.mubr.bf16.mxu0 %v2172
      %2934 = vmatmul.mubr.bf16.gmra.mxu0 %v2163
      %v2935 = vpop.f32.mrf.mxu0
      %v2936 = vadd.f32 0.0, %v2935
      %v2937 = vpop.f32.mrf.mxu0
      %v2938 = vpop.f32.mrf.mxu0
      %v2939 = vadd.f32 0.0, %v2938
      %v2940 = vpop.f32.mrf.mxu0
      %2941 = vmatprep.mubr.bf16.mxu0 %v2215
      %2942 = vmatmul.mubr.bf16.gmra.mxu0 %v2206
      %v2943 = vpop.f32.mrf.mxu0
      %v2944 = vadd.f32 0.0, %v2943
      %v2945 = vpop.f32.mrf.mxu0
      %v2946 = vpop.f32.mrf.mxu0
      %v2947 = vadd.f32 0.0, %v2946
      %v2948 = vpop.f32.mrf.mxu0
      %2949 = vmatprep.mubr.bf16.mxu0 %v2258
      %2950 = vmatmul.mubr.bf16.gmra.mxu0 %v2249
      %v2951 = vpop.f32.mrf.mxu0
      %v2952 = vadd.f32 0.0, %v2951
      %v2953 = vpop.f32.mrf.mxu0
      %v2954 = vpop.f32.mrf.mxu0
      %v2955 = vadd.f32 0.0, %v2954
      %v2956 = vpop.f32.mrf.mxu0
      %2957 = vmatprep.mubr.bf16.mxu0 %v2301
      %2958 = vmatmul.mubr.bf16.gmra.mxu0 %v2292
      %v2959 = vpop.f32.mrf.mxu0
      %v2960 = vadd.f32 0.0, %v2959
      %v2961 = vpop.f32.mrf.mxu0
      %v2962 = vpop.f32.mrf.mxu0
      %v2963 = vadd.f32 0.0, %v2962
      %v2964 = vpop.f32.mrf.mxu0
      %2965 = vmatprep.mubr.bf16.mxu0 %v2344
      %2966 = vmatmul.mubr.bf16.gmra.mxu0 %v2335
      %v2967 = vpop.f32.mrf.mxu0
      %v2968 = vadd.f32 0.0, %v2967
      %v2969 = vpop.f32.mrf.mxu0
      %v2970 = vpop.f32.mrf.mxu0
      %v2971 = vadd.f32 0.0, %v2970
      %v2972 = vpop.f32.mrf.mxu0
      %2973 = vmatprep.mubr.bf16.mxu0 %v2387
      %2974 = vmatmul.mubr.bf16.gmra.mxu0 %v2378
      %v2975 = vpop.f32.mrf.mxu0
      %v2976 = vadd.f32 0.0, %v2975
      %v2977 = vpop.f32.mrf.mxu0
      %v2978 = vpop.f32.mrf.mxu0
      %v2979 = vadd.f32 0.0, %v2978
      %v2980 = vpop.f32.mrf.mxu0
      %2981 = vmatprep.mubr.bf16.mxu0 %v2430
      %2982 = vmatmul.mubr.bf16.gmra.mxu0 %v2421
      %v2983 = vpop.f32.mrf.mxu0
      %v2984 = vadd.f32 0.0, %v2983
      %v2985 = vpop.f32.mrf.mxu0
      %v2986 = vpop.f32.mrf.mxu0
      %v2987 = vadd.f32 0.0, %v2986
      %v2988 = vpop.f32.mrf.mxu0
      %2989 = vmatprep.mubr.bf16.mxu0 %v2473
      %2990 = vmatmul.mubr.bf16.gmra.mxu0 %v2464
      %v2991 = vpop.f32.mrf.mxu0
      %v2992 = vadd.f32 0.0, %v2991
      %v2993 = vpop.f32.mrf.mxu0
      %v2994 = vpop.f32.mrf.mxu0
      %v2995 = vadd.f32 0.0, %v2994
      %v2996 = vpop.f32.mrf.mxu0
      %2997 = vmatprep.mubr.bf16.mxu0 %v2516
      %2998 = vmatmul.mubr.bf16.gmra.mxu0 %v2507
      %v2999 = vpop.f32.mrf.mxu0
      %v3000 = vadd.f32 0.0, %v2999
      %v3001 = vpop.f32.mrf.mxu0
      %v3002 = vpop.f32.mrf.mxu0
      %v3003 = vadd.f32 0.0, %v3002
      %v3004 = vpop.f32.mrf.mxu0
      %3005 = vmatprep.mubr.bf16.mxu0 %v2559
      %3006 = vmatmul.mubr.bf16.gmra.mxu0 %v2550
      %v3007 = vpop.f32.mrf.mxu0
      %v3008 = vadd.f32 0.0, %v3007
      %v3009 = vpop.f32.mrf.mxu0
      %v3010 = vpop.f32.mrf.mxu0
      %v3011 = vadd.f32 0.0, %v3010
      %v3012 = vpop.f32.mrf.mxu0
      %3013 = vmatprep.mubr.bf16.mxu0 %v2602
      %3014 = vmatmul.mubr.bf16.gmra.mxu0 %v2593
      %v3015 = vpop.f32.mrf.mxu0
      %v3016 = vadd.f32 0.0, %v3015
      %v3017 = vpop.f32.mrf.mxu0
      %v3018 = vpop.f32.mrf.mxu0
      %v3019 = vadd.f32 0.0, %v3018
      %v3020 = vpop.f32.mrf.mxu0
      %3021 = vdwg.mxu0
      %3022 = vmatprep.subr.bf16.mxu0 0
      %3023 = vmatpush1.bf16.msra.mxu0 %v2836
      %3024 = vmatprep.subr.bf16.mxu0 0
      %3025 = vmatpush1.bf16.msra.mxu0 %v2835
      %3026 = vmatprep.subr.bf16.mxu0 0
      %3027 = vmatpush1.bf16.msra.mxu0 %v2834
      %3028 = vmatprep.subr.bf16.mxu0 0
      %3029 = vmatpush1.bf16.msra.mxu0 %v2833
      %3030 = vmatprep.subr.bf16.mxu0 0
      %3031 = vmatpush1.bf16.msra.mxu0 %v2832
      %3032 = vmatprep.subr.bf16.mxu0 0
      %3033 = vmatpush1.bf16.msra.mxu0 %v2831
      %3034 = vmatprep.subr.bf16.mxu0 0
      %3035 = vmatpush1.bf16.msra.mxu0 %v2830
      %3036 = vmatprep.subr.bf16.mxu0 0
      %3037 = vmatpush1.bf16.msra.mxu0 %v2829
      %3038 = vmatprep.subr.bf16.mxu0 0
      %3039 = vmatpush2.bf16.msra.mxu0 0
      %3040 = vmatprep.subr.bf16.mxu0 0
      %3041 = vmatpush2.bf16.msra.mxu0 0
      %3042 = vmatprep.subr.bf16.mxu0 0
      %3043 = vmatpush2.bf16.msra.mxu0 0
      %3044 = vmatprep.subr.bf16.mxu0 0
      %3045 = vmatpush2.bf16.msra.mxu0 0
      %3046 = vmatprep.subr.bf16.mxu0 0
      %3047 = vmatpush2.bf16.msra.mxu0 0
      %3048 = vmatprep.subr.bf16.mxu0 0
      %3049 = vmatpush2.bf16.msra.mxu0 0
      %3050 = vmatprep.subr.bf16.mxu0 0
      %3051 = vmatpush2.bf16.msra.mxu0 0
      %3052 = vmatprep.subr.bf16.mxu0 0
      %3053 = vmatpush2.bf16.msra.mxu0 0
      %3054 = vmatprep.mubr.bf16.mxu0 0
      %3055 = vmatmul.mubr.bf16.gmra.mxu0 %v1974
      %v3056 = vpop.f32.mrf.mxu0
      %v3057 = vadd.f32 %v2896, %v3056
      %v3058 = vpop.f32.mrf.mxu0
      %v3059 = vpop.f32.mrf.mxu0
      %v3060 = vadd.f32 %v2899, %v3059
      %v3061 = vpop.f32.mrf.mxu0
      %3062 = vmatprep.mubr.bf16.mxu0 0
      %3063 = vmatmul.mubr.bf16.gmra.mxu0 %v2017
      %v3064 = vpop.f32.mrf.mxu0
      %v3065 = vadd.f32 %v2904, %v3064
      %v3066 = vpop.f32.mrf.mxu0
      %v3067 = vpop.f32.mrf.mxu0
      %v3068 = vadd.f32 %v2907, %v3067
      %v3069 = vpop.f32.mrf.mxu0
      %3070 = vmatprep.mubr.bf16.mxu0 0
      %3071 = vmatmul.mubr.bf16.gmra.mxu0 %v2060
      %v3072 = vpop.f32.mrf.mxu0
      %v3073 = vadd.f32 %v2912, %v3072
      %v3074 = vpop.f32.mrf.mxu0
      %v3075 = vpop.f32.mrf.mxu0
      %v3076 = vadd.f32 %v2915, %v3075
      %v3077 = vpop.f32.mrf.mxu0
      %3078 = vmatprep.mubr.bf16.mxu0 0
      %3079 = vmatmul.mubr.bf16.gmra.mxu0 %v2103
      %v3080 = vpop.f32.mrf.mxu0
      %v3081 = vadd.f32 %v2920, %v3080
      %v3082 = vpop.f32.mrf.mxu0
      %v3083 = vpop.f32.mrf.mxu0
      %v3084 = vadd.f32 %v2923, %v3083
      %v3085 = vpop.f32.mrf.mxu0
      %3086 = vmatprep.mubr.bf16.mxu0 0
      %3087 = vmatmul.mubr.bf16.gmra.mxu0 %v2146
      %v3088 = vpop.f32.mrf.mxu0
      %v3089 = vadd.f32 %v2928, %v3088
      %v3090 = vpop.f32.mrf.mxu0
      %v3091 = vpop.f32.mrf.mxu0
      %v3092 = vadd.f32 %v2931, %v3091
      %v3093 = vpop.f32.mrf.mxu0
      %3094 = vmatprep.mubr.bf16.mxu0 0
      %3095 = vmatmul.mubr.bf16.gmra.mxu0 %v2189
      %v3096 = vpop.f32.mrf.mxu0
      %v3097 = vadd.f32 %v2936, %v3096
      %v3098 = vpop.f32.mrf.mxu0
      %v3099 = vpop.f32.mrf.mxu0
      %v3100 = vadd.f32 %v2939, %v3099
      %v3101 = vpop.f32.mrf.mxu0
      %3102 = vmatprep.mubr.bf16.mxu0 0
      %3103 = vmatmul.mubr.bf16.gmra.mxu0 %v2232
      %v3104 = vpop.f32.mrf.mxu0
      %v3105 = vadd.f32 %v2944, %v3104
      %v3106 = vpop.f32.mrf.mxu0
      %v3107 = vpop.f32.mrf.mxu0
      %v3108 = vadd.f32 %v2947, %v3107
      %v3109 = vpop.f32.mrf.mxu0
      %3110 = vmatprep.mubr.bf16.mxu0 0
      %3111 = vmatmul.mubr.bf16.gmra.mxu0 %v2275
      %v3112 = vpop.f32.mrf.mxu0
      %v3113 = vadd.f32 %v2952, %v3112
      %v3114 = vpop.f32.mrf.mxu0
      %v3115 = vpop.f32.mrf.mxu0
      %v3116 = vadd.f32 %v2955, %v3115
      %v3117 = vpop.f32.mrf.mxu0
      %3118 = vmatprep.mubr.bf16.mxu0 0
      %3119 = vmatmul.mubr.bf16.gmra.mxu0 %v2318
      %v3120 = vpop.f32.mrf.mxu0
      %v3121 = vadd.f32 %v2960, %v3120
      %v3122 = vpop.f32.mrf.mxu0
      %v3123 = vpop.f32.mrf.mxu0
      %v3124 = vadd.f32 %v2963, %v3123
      %v3125 = vpop.f32.mrf.mxu0
      %3126 = vmatprep.mubr.bf16.mxu0 0
      %3127 = vmatmul.mubr.bf16.gmra.mxu0 %v2361
      %v3128 = vpop.f32.mrf.mxu0
      %v3129 = vadd.f32 %v2968, %v3128
      %v3130 = vpop.f32.mrf.mxu0
      %v3131 = vpop.f32.mrf.mxu0
      %v3132 = vadd.f32 %v2971, %v3131
      %v3133 = vpop.f32.mrf.mxu0
      %3134 = vmatprep.mubr.bf16.mxu0 0
      %3135 = vmatmul.mubr.bf16.gmra.mxu0 %v2404
      %v3136 = vpop.f32.mrf.mxu0
      %v3137 = vadd.f32 %v2976, %v3136
      %v3138 = vpop.f32.mrf.mxu0
      %v3139 = vpop.f32.mrf.mxu0
      %v3140 = vadd.f32 %v2979, %v3139
      %v3141 = vpop.f32.mrf.mxu0
      %3142 = vmatprep.mubr.bf16.mxu0 0
      %3143 = vmatmul.mubr.bf16.gmra.mxu0 %v2447
      %v3144 = vpop.f32.mrf.mxu0
      %v3145 = vadd.f32 %v2984, %v3144
      %v3146 = vpop.f32.mrf.mxu0
      %v3147 = vpop.f32.mrf.mxu0
      %v3148 = vadd.f32 %v2987, %v3147
      %v3149 = vpop.f32.mrf.mxu0
      %3150 = vmatprep.mubr.bf16.mxu0 0
      %3151 = vmatmul.mubr.bf16.gmra.mxu0 %v2490
      %v3152 = vpop.f32.mrf.mxu0
      %v3153 = vadd.f32 %v2992, %v3152
      %v3154 = vpop.f32.mrf.mxu0
      %v3155 = vpop.f32.mrf.mxu0
      %v3156 = vadd.f32 %v2995, %v3155
      %v3157 = vpop.f32.mrf.mxu0
      %3158 = vmatprep.mubr.bf16.mxu0 0
      %3159 = vmatmul.mubr.bf16.gmra.mxu0 %v2533
      %v3160 = vpop.f32.mrf.mxu0
      %v3161 = vadd.f32 %v3000, %v3160
      %v3162 = vpop.f32.mrf.mxu0
      %v3163 = vpop.f32.mrf.mxu0
      %v3164 = vadd.f32 %v3003, %v3163
      %v3165 = vpop.f32.mrf.mxu0
      %3166 = vmatprep.mubr.bf16.mxu0 0
      %3167 = vmatmul.mubr.bf16.gmra.mxu0 %v2576
      %v3168 = vpop.f32.mrf.mxu0
      %v3169 = vadd.f32 %v3008, %v3168
      %v3170 = vpop.f32.mrf.mxu0
      %v3171 = vpop.f32.mrf.mxu0
      %v3172 = vadd.f32 %v3011, %v3171
      %v3173 = vpop.f32.mrf.mxu0
      %3174 = vmatprep.mubr.bf16.mxu0 0
      %3175 = vmatmul.mubr.bf16.gmra.mxu0 %v2619
      %v3176 = vpop.f32.mrf.mxu0
      %v3177 = vadd.f32 %v3016, %v3176
      %v3178 = vpop.f32.mrf.mxu0
      %v3179 = vpop.f32.mrf.mxu0
      %v3180 = vadd.f32 %v3019, %v3179
      %v3181 = vpop.f32.mrf.mxu0
      %3182 = vdwg.mxu0
      %v3231 = vunpack.c.l.b16 %v1451
      %v3232 = vunpack.c.l.b16 %v1452
      %v3233 = vunpack.c.l.b16 %v1453
      %v3234 = vunpack.c.l.b16 %v1454
      %v3235 = vunpack.c.l.b16 %v1455
      %v3236 = vunpack.c.l.b16 %v1456
      %v3237 = vunpack.c.l.b16 %v1457
      %v3238 = vunpack.c.l.b16 %v1458
      %v3239 = vunpack.c.l.b16 %v1459
      %v3240 = vunpack.c.l.b16 %v1460
      %v3241 = vunpack.c.l.b16 %v1461
      %v3242 = vunpack.c.l.b16 %v1462
      %v3243 = vunpack.c.l.b16 %v1463
      %v3244 = vunpack.c.l.b16 %v1464
      %v3245 = vunpack.c.l.b16 %v1465
      %v3246 = vunpack.c.l.b16 %v1466
      %v3247 = vunpack.c.l.b16 %v1467
      %v3248 = vunpack.c.l.b16 %v1468
      %v3249 = vunpack.c.l.b16 %v1469
      %v3250 = vunpack.c.l.b16 %v1470
      %v3251 = vunpack.c.l.b16 %v1471
      %v3252 = vunpack.c.l.b16 %v1472
      %v3253 = vunpack.c.l.b16 %v1473
      %v3254 = vunpack.c.l.b16 %v1474
      %v3255 = vunpack.c.l.b16 %v1475
      %v3256 = vunpack.c.l.b16 %v1476
      %v3257 = vunpack.c.l.b16 %v1477
      %v3258 = vunpack.c.l.b16 %v1478
      %v3259 = vunpack.c.l.b16 %v1479
      %v3260 = vunpack.c.l.b16 %v1480
      %v3261 = vunpack.c.l.b16 %v1481
      %v3262 = vunpack.c.l.b16 %v1482
      %v3263 = vunpack.c.l.b16 %v1483
      %v3264 = vunpack.c.l.b16 %v1484
      %v3265 = vunpack.c.l.b16 %v1485
      %v3266 = vunpack.c.l.b16 %v1486
      %v3267 = vunpack.c.l.b16 %v1487
      %v3268 = vunpack.c.l.b16 %v1488
      %v3269 = vunpack.c.l.b16 %v1489
      %v3270 = vunpack.c.l.b16 %v1490
      %v3271 = vunpack.c.l.b16 %v1491
      %v3272 = vunpack.c.l.b16 %v1492
      %v3273 = vunpack.c.l.b16 %v1493
      %v3274 = vunpack.c.l.b16 %v1494
      %v3275 = vunpack.c.l.b16 %v1495
      %v3276 = vunpack.c.l.b16 %v1496
      %v3277 = vunpack.c.l.b16 %v1497
      %v3278 = vunpack.c.l.b16 %v1498
      %v3279 = vpack.c.b16 %v3232, %v3231
      %v3280 = vpack.c.b16 %v3234, %v3233
      %v3281 = vpack.c.b16 %v3236, %v3235
      %v3282 = vpack.c.b16 %v3238, %v3237
      %v3283 = vpack.c.b16 %v3240, %v3239
      %v3284 = vpack.c.b16 %v3242, %v3241
      %v3285 = vpack.c.b16 %v3244, %v3243
      %v3286 = vpack.c.b16 %v3246, %v3245
      %v3287 = vpack.c.b16 %v3248, %v3247
      %v3288 = vpack.c.b16 %v3250, %v3249
      %v3289 = vpack.c.b16 %v3252, %v3251
      %v3290 = vpack.c.b16 %v3254, %v3253
      %v3291 = vpack.c.b16 %v3256, %v3255
      %v3292 = vpack.c.b16 %v3258, %v3257
      %v3293 = vpack.c.b16 %v3260, %v3259
      %v3294 = vpack.c.b16 %v3262, %v3261
      %v3295 = vpack.c.b16 %v3264, %v3263
      %v3296 = vpack.c.b16 %v3266, %v3265
      %v3297 = vpack.c.b16 %v3268, %v3267
      %v3298 = vpack.c.b16 %v3270, %v3269
      %v3299 = vpack.c.b16 %v3272, %v3271
      %v3300 = vpack.c.b16 %v3274, %v3273
      %v3301 = vpack.c.b16 %v3276, %v3275
      %v3302 = vpack.c.b16 %v3278, %v3277
      %3327 = vmatprep.subr.bf16.mxu0 0
      %3328 = vmatpush1.bf16.msra.mxu0 %v3286
      %3329 = vmatprep.subr.bf16.mxu0 0
      %3330 = vmatpush1.bf16.msra.mxu0 %v3285
      %3331 = vmatprep.subr.bf16.mxu0 0
      %3332 = vmatpush1.bf16.msra.mxu0 %v3284
      %3333 = vmatprep.subr.bf16.mxu0 0
      %3334 = vmatpush1.bf16.msra.mxu0 %v3283
      %3335 = vmatprep.subr.bf16.mxu0 0
      %3336 = vmatpush1.bf16.msra.mxu0 %v3282
      %3337 = vmatprep.subr.bf16.mxu0 0
      %3338 = vmatpush1.bf16.msra.mxu0 %v3281
      %3339 = vmatprep.subr.bf16.mxu0 0
      %3340 = vmatpush1.bf16.msra.mxu0 %v3280
      %3341 = vmatprep.subr.bf16.mxu0 0
      %3342 = vmatpush1.bf16.msra.mxu0 %v3279
      %3343 = vmatprep.subr.bf16.mxu0 0
      %3344 = vmatpush2.bf16.msra.mxu0 %v3294
      %3345 = vmatprep.subr.bf16.mxu0 0
      %3346 = vmatpush2.bf16.msra.mxu0 %v3293
      %3347 = vmatprep.subr.bf16.mxu0 0
      %3348 = vmatpush2.bf16.msra.mxu0 %v3292
      %3349 = vmatprep.subr.bf16.mxu0 0
      %3350 = vmatpush2.bf16.msra.mxu0 %v3291
      %3351 = vmatprep.subr.bf16.mxu0 0
      %3352 = vmatpush2.bf16.msra.mxu0 %v3290
      %3353 = vmatprep.subr.bf16.mxu0 0
      %3354 = vmatpush2.bf16.msra.mxu0 %v3289
      %3355 = vmatprep.subr.bf16.mxu0 0
      %3356 = vmatpush2.bf16.msra.mxu0 %v3288
      %3357 = vmatprep.subr.bf16.mxu0 0
      %3358 = vmatpush2.bf16.msra.mxu0 %v3287
      %3359 = vmatprep.mubr.bf16.mxu0 %v740
      %3360 = vmatmul.mubr.bf16.gmra.mxu0 %v731
      %v3361 = vpop.f32.mrf.mxu0
      %v3362 = vadd.f32 %v3057, %v3361
      %v3363 = vpop.f32.mrf.mxu0
      %v3364 = vpop.f32.mrf.mxu0
      %v3365 = vadd.f32 %v3060, %v3364
      %v3366 = vpop.f32.mrf.mxu0
      %3367 = vmatprep.mubr.bf16.mxu0 %v783
      %3368 = vmatmul.mubr.bf16.gmra.mxu0 %v774
      %v3369 = vpop.f32.mrf.mxu0
      %v3370 = vadd.f32 %v3065, %v3369
      %v3371 = vpop.f32.mrf.mxu0
      %v3372 = vpop.f32.mrf.mxu0
      %v3373 = vadd.f32 %v3068, %v3372
      %v3374 = vpop.f32.mrf.mxu0
      %3375 = vmatprep.mubr.bf16.mxu0 %v826
      %3376 = vmatmul.mubr.bf16.gmra.mxu0 %v817
      %v3377 = vpop.f32.mrf.mxu0
      %v3378 = vadd.f32 %v3073, %v3377
      %v3379 = vpop.f32.mrf.mxu0
      %v3380 = vpop.f32.mrf.mxu0
      %v3381 = vadd.f32 %v3076, %v3380
      %v3382 = vpop.f32.mrf.mxu0
      %3383 = vmatprep.mubr.bf16.mxu0 %v869
      %3384 = vmatmul.mubr.bf16.gmra.mxu0 %v860
      %v3385 = vpop.f32.mrf.mxu0
      %v3386 = vadd.f32 %v3081, %v3385
      %v3387 = vpop.f32.mrf.mxu0
      %v3388 = vpop.f32.mrf.mxu0
      %v3389 = vadd.f32 %v3084, %v3388
      %v3390 = vpop.f32.mrf.mxu0
      %3391 = vmatprep.mubr.bf16.mxu0 %v912
      %3392 = vmatmul.mubr.bf16.gmra.mxu0 %v903
      %v3393 = vpop.f32.mrf.mxu0
      %v3394 = vadd.f32 %v3089, %v3393
      %v3395 = vpop.f32.mrf.mxu0
      %v3396 = vpop.f32.mrf.mxu0
      %v3397 = vadd.f32 %v3092, %v3396
      %v3398 = vpop.f32.mrf.mxu0
      %3399 = vmatprep.mubr.bf16.mxu0 %v955
      %3400 = vmatmul.mubr.bf16.gmra.mxu0 %v946
      %v3401 = vpop.f32.mrf.mxu0
      %v3402 = vadd.f32 %v3097, %v3401
      %v3403 = vpop.f32.mrf.mxu0
      %v3404 = vpop.f32.mrf.mxu0
      %v3405 = vadd.f32 %v3100, %v3404
      %v3406 = vpop.f32.mrf.mxu0
      %3407 = vmatprep.mubr.bf16.mxu0 %v998
      %3408 = vmatmul.mubr.bf16.gmra.mxu0 %v989
      %v3409 = vpop.f32.mrf.mxu0
      %v3410 = vadd.f32 %v3105, %v3409
      %v3411 = vpop.f32.mrf.mxu0
      %v3412 = vpop.f32.mrf.mxu0
      %v3413 = vadd.f32 %v3108, %v3412
      %v3414 = vpop.f32.mrf.mxu0
      %3415 = vmatprep.mubr.bf16.mxu0 %v1041
      %3416 = vmatmul.mubr.bf16.gmra.mxu0 %v1032
      %v3417 = vpop.f32.mrf.mxu0
      %v3418 = vadd.f32 %v3113, %v3417
      %v3419 = vpop.f32.mrf.mxu0
      %v3420 = vpop.f32.mrf.mxu0
      %v3421 = vadd.f32 %v3116, %v3420
      %v3422 = vpop.f32.mrf.mxu0
      %3423 = vmatprep.mubr.bf16.mxu0 %v1084
      %3424 = vmatmul.mubr.bf16.gmra.mxu0 %v1075
      %v3425 = vpop.f32.mrf.mxu0
      %v3426 = vadd.f32 %v3121, %v3425
      %v3427 = vpop.f32.mrf.mxu0
      %v3428 = vpop.f32.mrf.mxu0
      %v3429 = vadd.f32 %v3124, %v3428
      %v3430 = vpop.f32.mrf.mxu0
      %3431 = vmatprep.mubr.bf16.mxu0 %v1127
      %3432 = vmatmul.mubr.bf16.gmra.mxu0 %v1118
      %v3433 = vpop.f32.mrf.mxu0
      %v3434 = vadd.f32 %v3129, %v3433
      %v3435 = vpop.f32.mrf.mxu0
      %v3436 = vpop.f32.mrf.mxu0
      %v3437 = vadd.f32 %v3132, %v3436
      %v3438 = vpop.f32.mrf.mxu0
      %3439 = vmatprep.mubr.bf16.mxu0 %v1170
      %3440 = vmatmul.mubr.bf16.gmra.mxu0 %v1161
      %v3441 = vpop.f32.mrf.mxu0
      %v3442 = vadd.f32 %v3137, %v3441
      %v3443 = vpop.f32.mrf.mxu0
      %v3444 = vpop.f32.mrf.mxu0
      %v3445 = vadd.f32 %v3140, %v3444
      %v3446 = vpop.f32.mrf.mxu0
      %3447 = vmatprep.mubr.bf16.mxu0 %v1213
      %3448 = vmatmul.mubr.bf16.gmra.mxu0 %v1204
      %v3449 = vpop.f32.mrf.mxu0
      %v3450 = vadd.f32 %v3145, %v3449
      %v3451 = vpop.f32.mrf.mxu0
      %v3452 = vpop.f32.mrf.mxu0
      %v3453 = vadd.f32 %v3148, %v3452
      %v3454 = vpop.f32.mrf.mxu0
      %3455 = vmatprep.mubr.bf16.mxu0 %v1256
      %3456 = vmatmul.mubr.bf16.gmra.mxu0 %v1247
      %v3457 = vpop.f32.mrf.mxu0
      %v3458 = vadd.f32 %v3153, %v3457
      %v3459 = vpop.f32.mrf.mxu0
      %v3460 = vpop.f32.mrf.mxu0
      %v3461 = vadd.f32 %v3156, %v3460
      %v3462 = vpop.f32.mrf.mxu0
      %3463 = vmatprep.mubr.bf16.mxu0 %v1299
      %3464 = vmatmul.mubr.bf16.gmra.mxu0 %v1290
      %v3465 = vpop.f32.mrf.mxu0
      %v3466 = vadd.f32 %v3161, %v3465
      %v3467 = vpop.f32.mrf.mxu0
      %v3468 = vpop.f32.mrf.mxu0
      %v3469 = vadd.f32 %v3164, %v3468
      %v3470 = vpop.f32.mrf.mxu0
      %3471 = vmatprep.mubr.bf16.mxu0 %v1342
      %3472 = vmatmul.mubr.bf16.gmra.mxu0 %v1333
      %v3473 = vpop.f32.mrf.mxu0
      %v3474 = vadd.f32 %v3169, %v3473
      %v3475 = vpop.f32.mrf.mxu0
      %v3476 = vpop.f32.mrf.mxu0
      %v3477 = vadd.f32 %v3172, %v3476
      %v3478 = vpop.f32.mrf.mxu0
      %3479 = vmatprep.mubr.bf16.mxu0 %v1385
      %3480 = vmatmul.mubr.bf16.gmra.mxu0 %v1376
      %v3481 = vpop.f32.mrf.mxu0
      %v3482 = vadd.f32 %v3177, %v3481
      %v3483 = vpop.f32.mrf.mxu0
      %v3484 = vpop.f32.mrf.mxu0
      %v3485 = vadd.f32 %v3180, %v3484
      %v3486 = vpop.f32.mrf.mxu0
      %3487 = vdwg.mxu0
      %3488 = vmatprep.subr.bf16.mxu0 0
      %3489 = vmatpush1.bf16.msra.mxu0 %v3302
      %3490 = vmatprep.subr.bf16.mxu0 0
      %3491 = vmatpush1.bf16.msra.mxu0 %v3301
      %3492 = vmatprep.subr.bf16.mxu0 0
      %3493 = vmatpush1.bf16.msra.mxu0 %v3300
      %3494 = vmatprep.subr.bf16.mxu0 0
      %3495 = vmatpush1.bf16.msra.mxu0 %v3299
      %3496 = vmatprep.subr.bf16.mxu0 0
      %3497 = vmatpush1.bf16.msra.mxu0 %v3298
      %3498 = vmatprep.subr.bf16.mxu0 0
      %3499 = vmatpush1.bf16.msra.mxu0 %v3297
      %3500 = vmatprep.subr.bf16.mxu0 0
      %3501 = vmatpush1.bf16.msra.mxu0 %v3296
      %3502 = vmatprep.subr.bf16.mxu0 0
      %3503 = vmatpush1.bf16.msra.mxu0 %v3295
      %3504 = vmatprep.subr.bf16.mxu0 0
      %3505 = vmatpush2.bf16.msra.mxu0 0
      %3506 = vmatprep.subr.bf16.mxu0 0
      %3507 = vmatpush2.bf16.msra.mxu0 0
      %3508 = vmatprep.subr.bf16.mxu0 0
      %3509 = vmatpush2.bf16.msra.mxu0 0
      %3510 = vmatprep.subr.bf16.mxu0 0
      %3511 = vmatpush2.bf16.msra.mxu0 0
      %3512 = vmatprep.subr.bf16.mxu0 0
      %3513 = vmatpush2.bf16.msra.mxu0 0
      %3514 = vmatprep.subr.bf16.mxu0 0
      %3515 = vmatpush2.bf16.msra.mxu0 0
      %3516 = vmatprep.subr.bf16.mxu0 0
      %3517 = vmatpush2.bf16.msra.mxu0 0
      %3518 = vmatprep.subr.bf16.mxu0 0
      %3519 = vmatpush2.bf16.msra.mxu0 0
      %3520 = vmatprep.mubr.bf16.mxu0 0
      %3521 = vmatmul.mubr.bf16.gmra.mxu0 %v757
      %v3522 = vpop.f32.mrf.mxu0
      %v3523 = vadd.f32 %v3362, %v3522
      %v3524 = vpop.f32.mrf.mxu0
      %v3525 = vpop.f32.mrf.mxu0
      %v3526 = vadd.f32 %v3365, %v3525
      %v3527 = vpop.f32.mrf.mxu0
      %3528 = vmatprep.mubr.bf16.mxu0 0
      %3529 = vmatmul.mubr.bf16.gmra.mxu0 %v800
      %v3530 = vpop.f32.mrf.mxu0
      %v3531 = vadd.f32 %v3370, %v3530
      %v3532 = vpop.f32.mrf.mxu0
      %v3533 = vpop.f32.mrf.mxu0
      %v3534 = vadd.f32 %v3373, %v3533
      %v3535 = vpop.f32.mrf.mxu0
      %3536 = vmatprep.mubr.bf16.mxu0 0
      %3537 = vmatmul.mubr.bf16.gmra.mxu0 %v843
      %v3538 = vpop.f32.mrf.mxu0
      %v3539 = vadd.f32 %v3378, %v3538
      %v3540 = vpop.f32.mrf.mxu0
      %v3541 = vpop.f32.mrf.mxu0
      %v3542 = vadd.f32 %v3381, %v3541
      %v3543 = vpop.f32.mrf.mxu0
      %3544 = vmatprep.mubr.bf16.mxu0 0
      %3545 = vmatmul.mubr.bf16.gmra.mxu0 %v886
      %v3546 = vpop.f32.mrf.mxu0
      %v3547 = vadd.f32 %v3386, %v3546
      %v3548 = vpop.f32.mrf.mxu0
      %v3549 = vpop.f32.mrf.mxu0
      %v3550 = vadd.f32 %v3389, %v3549
      %v3551 = vpop.f32.mrf.mxu0
      %3552 = vmatprep.mubr.bf16.mxu0 0
      %3553 = vmatmul.mubr.bf16.gmra.mxu0 %v929
      %v3554 = vpop.f32.mrf.mxu0
      %v3555 = vadd.f32 %v3394, %v3554
      %v3556 = vpop.f32.mrf.mxu0
      %v3557 = vpop.f32.mrf.mxu0
      %v3558 = vadd.f32 %v3397, %v3557
      %v3559 = vpop.f32.mrf.mxu0
      %3560 = vmatprep.mubr.bf16.mxu0 0
      %3561 = vmatmul.mubr.bf16.gmra.mxu0 %v972
      %v3562 = vpop.f32.mrf.mxu0
      %v3563 = vadd.f32 %v3402, %v3562
      %v3564 = vpop.f32.mrf.mxu0
      %v3565 = vpop.f32.mrf.mxu0
      %v3566 = vadd.f32 %v3405, %v3565
      %v3567 = vpop.f32.mrf.mxu0
      %3568 = vmatprep.mubr.bf16.mxu0 0
      %3569 = vmatmul.mubr.bf16.gmra.mxu0 %v1015
      %v3570 = vpop.f32.mrf.mxu0
      %v3571 = vadd.f32 %v3410, %v3570
      %v3572 = vpop.f32.mrf.mxu0
      %v3573 = vpop.f32.mrf.mxu0
      %v3574 = vadd.f32 %v3413, %v3573
      %v3575 = vpop.f32.mrf.mxu0
      %3576 = vmatprep.mubr.bf16.mxu0 0
      %3577 = vmatmul.mubr.bf16.gmra.mxu0 %v1058
      %v3578 = vpop.f32.mrf.mxu0
      %v3579 = vadd.f32 %v3418, %v3578
      %v3580 = vpop.f32.mrf.mxu0
      %v3581 = vpop.f32.mrf.mxu0
      %v3582 = vadd.f32 %v3421, %v3581
      %v3583 = vpop.f32.mrf.mxu0
      %3584 = vmatprep.mubr.bf16.mxu0 0
      %3585 = vmatmul.mubr.bf16.gmra.mxu0 %v1101
      %v3586 = vpop.f32.mrf.mxu0
      %v3587 = vadd.f32 %v3426, %v3586
      %v3588 = vpop.f32.mrf.mxu0
      %v3589 = vpop.f32.mrf.mxu0
      %v3590 = vadd.f32 %v3429, %v3589
      %v3591 = vpop.f32.mrf.mxu0
      %3592 = vmatprep.mubr.bf16.mxu0 0
      %3593 = vmatmul.mubr.bf16.gmra.mxu0 %v1144
      %v3594 = vpop.f32.mrf.mxu0
      %v3595 = vadd.f32 %v3434, %v3594
      %v3596 = vpop.f32.mrf.mxu0
      %v3597 = vpop.f32.mrf.mxu0
      %v3598 = vadd.f32 %v3437, %v3597
      %v3599 = vpop.f32.mrf.mxu0
      %3600 = vmatprep.mubr.bf16.mxu0 0
      %3601 = vmatmul.mubr.bf16.gmra.mxu0 %v1187
      %v3602 = vpop.f32.mrf.mxu0
      %v3603 = vadd.f32 %v3442, %v3602
      %v3604 = vpop.f32.mrf.mxu0
      %v3605 = vpop.f32.mrf.mxu0
      %v3606 = vadd.f32 %v3445, %v3605
      %v3607 = vpop.f32.mrf.mxu0
      %3608 = vmatprep.mubr.bf16.mxu0 0
      %3609 = vmatmul.mubr.bf16.gmra.mxu0 %v1230
      %v3610 = vpop.f32.mrf.mxu0
      %v3611 = vadd.f32 %v3450, %v3610
      %v3612 = vpop.f32.mrf.mxu0
      %v3613 = vpop.f32.mrf.mxu0
      %v3614 = vadd.f32 %v3453, %v3613
      %v3615 = vpop.f32.mrf.mxu0
      %3616 = vmatprep.mubr.bf16.mxu0 0
      %3617 = vmatmul.mubr.bf16.gmra.mxu0 %v1273
      %v3618 = vpop.f32.mrf.mxu0
      %v3619 = vadd.f32 %v3458, %v3618
      %v3620 = vpop.f32.mrf.mxu0
      %v3621 = vpop.f32.mrf.mxu0
      %v3622 = vadd.f32 %v3461, %v3621
      %v3623 = vpop.f32.mrf.mxu0
      %3624 = vmatprep.mubr.bf16.mxu0 0
      %3625 = vmatmul.mubr.bf16.gmra.mxu0 %v1316
      %v3626 = vpop.f32.mrf.mxu0
      %v3627 = vadd.f32 %v3466, %v3626
      %v3628 = vpop.f32.mrf.mxu0
      %v3629 = vpop.f32.mrf.mxu0
      %v3630 = vadd.f32 %v3469, %v3629
      %v3631 = vpop.f32.mrf.mxu0
      %3632 = vmatprep.mubr.bf16.mxu0 0
      %3633 = vmatmul.mubr.bf16.gmra.mxu0 %v1359
      %v3634 = vpop.f32.mrf.mxu0
      %v3635 = vadd.f32 %v3474, %v3634
      %v3636 = vpop.f32.mrf.mxu0
      %v3637 = vpop.f32.mrf.mxu0
      %v3638 = vadd.f32 %v3477, %v3637
      %v3639 = vpop.f32.mrf.mxu0
      %3640 = vmatprep.mubr.bf16.mxu0 0
      %3641 = vmatmul.mubr.bf16.gmra.mxu0 %v1402
      %v3642 = vpop.f32.mrf.mxu0
      %v3643 = vadd.f32 %v3482, %v3642
      %v3644 = vpop.f32.mrf.mxu0
      %v3645 = vpop.f32.mrf.mxu0
      %v3646 = vadd.f32 %v3485, %v3645
      %v3647 = vpop.f32.mrf.mxu0
      %3648 = vdwg.mxu0
      %s3649 = scalar_lea.vmem %s256, 40
      %v3650 = vld [vmem:[%s3649 + $0x4] sm:$0x8]
      %v3651 = vld [vmem:[%s3649 + $0x8] sm:$0xf]
      %v3652 = vld [vmem:[%s3649 + $0xc] sm:$0xf]
      %v3653 = vld [vmem:[%s3649 + $0x18] sm:$0x8]
      %v3654 = vld [vmem:[%s3649 + $0x1c] sm:$0xf]
      %v3655 = vld [vmem:[%s3649 + $0x20] sm:$0xf]
      %v3656 = vld [vmem:[%s3649 + $0x2c] sm:$0x8]
      %v3657 = vld [vmem:[%s3649 + $0x30] sm:$0xf]
      %v3658 = vld [vmem:[%s3649 + $0x34] sm:$0xf]
      %v3659 = vld [vmem:[%s3649 + $0x40] sm:$0x8]
      %v3660 = vld [vmem:[%s3649 + $0x44] sm:$0xf]
      %v3661 = vld [vmem:[%s3649 + $0x48] sm:$0xf]
      %v3662 = vld [vmem:[%s3649 + $0x54] sm:$0x8]
      %v3663 = vld [vmem:[%s3649 + $0x58] sm:$0xf]
      %v3664 = vld [vmem:[%s3649 + $0x5c] sm:$0xf]
      %v3665 = vld [vmem:[%s3649 + $0x68] sm:$0x8]
      %v3666 = vld [vmem:[%s3649 + $0x6c] sm:$0xf]
      %v3667 = vld [vmem:[%s3649 + $0x70] sm:$0xf]
      %v3668 = vld [vmem:[%s3649 + $0x7c] sm:$0x8]
      %v3669 = vld [vmem:[%s3649 + $0x80] sm:$0xf]
      %v3670 = vld [vmem:[%s3649 + $0x84] sm:$0xf]
      %v3671 = vld [vmem:[%s3649 + $0x90] sm:$0x8]
      %v3672 = vld [vmem:[%s3649 + $0x94] sm:$0xf]
      %v3673 = vld [vmem:[%s3649 + $0x98] sm:$0xf]
      %v3674 = vld [vmem:[%s3649 + $0xa4] sm:$0x8]
      %v3675 = vld [vmem:[%s3649 + $0xa8] sm:$0xf]
      %v3676 = vld [vmem:[%s3649 + $0xac] sm:$0xf]
      %v3677 = vld [vmem:[%s3649 + $0xb8] sm:$0x8]
      %v3678 = vld [vmem:[%s3649 + $0xbc] sm:$0xf]
      %v3679 = vld [vmem:[%s3649 + $0xc0] sm:$0xf]
      %v3680 = vld [vmem:[%s3649 + $0xcc] sm:$0x8]
      %v3681 = vld [vmem:[%s3649 + $0xd0] sm:$0xf]
      %v3682 = vld [vmem:[%s3649 + $0xd4] sm:$0xf]
      %v3683 = vld [vmem:[%s3649 + $0xe0] sm:$0x8]
      %v3684 = vld [vmem:[%s3649 + $0xe4] sm:$0xf]
      %v3685 = vld [vmem:[%s3649 + $0xe8] sm:$0xf]
      %v3686 = vld [vmem:[%s3649 + $0xf4] sm:$0x8]
      %v3687 = vld [vmem:[%s3649 + $0xf8] sm:$0xf]
      %v3688 = vld [vmem:[%s3649 + $0xfc] sm:$0xf]
      %v3689 = vld [vmem:[%s3649 + $0x108] sm:$0x8]
      %v3690 = vld [vmem:[%s3649 + $0x10c] sm:$0xf]
      %v3691 = vld [vmem:[%s3649 + $0x110] sm:$0xf]
      %v3692 = vld [vmem:[%s3649 + $0x11c] sm:$0x8]
      %v3693 = vld [vmem:[%s3649 + $0x120] sm:$0xf]
      %v3694 = vld [vmem:[%s3649 + $0x124] sm:$0xf]
      %v3695 = vld [vmem:[%s3649 + $0x130] sm:$0x8]
      %v3696 = vld [vmem:[%s3649 + $0x134] sm:$0xf]
      %v3697 = vld [vmem:[%s3649 + $0x138] sm:$0xf]
      %v3698 = vld [vmem:[%s3649 + $0x10] sm:$0x1]
      %v3699 = vld [vmem:[%s3649 + $0x24] sm:$0x1]
      %v3700 = vld [vmem:[%s3649 + $0x38] sm:$0x1]
      %v3701 = vld [vmem:[%s3649 + $0x4c] sm:$0x1]
      %v3702 = vld [vmem:[%s3649 + $0x60] sm:$0x1]
      %v3703 = vld [vmem:[%s3649 + $0x74] sm:$0x1]
      %v3704 = vld [vmem:[%s3649 + $0x88] sm:$0x1]
      %v3705 = vld [vmem:[%s3649 + $0x9c] sm:$0x1]
      %v3706 = vld [vmem:[%s3649 + $0xb0] sm:$0x1]
      %v3707 = vld [vmem:[%s3649 + $0xc4] sm:$0x1]
      %v3708 = vld [vmem:[%s3649 + $0xd8] sm:$0x1]
      %v3709 = vld [vmem:[%s3649 + $0xec] sm:$0x1]
      %v3710 = vld [vmem:[%s3649 + $0x100] sm:$0x1]
      %v3711 = vld [vmem:[%s3649 + $0x114] sm:$0x1]
      %v3712 = vld [vmem:[%s3649 + $0x128] sm:$0x1]
      %v3713 = vld [vmem:[%s3649 + $0x13c] sm:$0x1]
      %v3762 = vunpack.c.l.b16 %v3650
      %v3763 = vunpack.c.l.b16 %v3651
      %v3764 = vunpack.c.l.b16 %v3652
      %v3765 = vunpack.c.l.b16 %v3653
      %v3766 = vunpack.c.l.b16 %v3654
      %v3767 = vunpack.c.l.b16 %v3655
      %v3768 = vunpack.c.l.b16 %v3656
      %v3769 = vunpack.c.l.b16 %v3657
      %v3770 = vunpack.c.l.b16 %v3658
      %v3771 = vunpack.c.l.b16 %v3659
      %v3772 = vunpack.c.l.b16 %v3660
      %v3773 = vunpack.c.l.b16 %v3661
      %v3774 = vunpack.c.l.b16 %v3662
      %v3775 = vunpack.c.l.b16 %v3663
      %v3776 = vunpack.c.l.b16 %v3664
      %v3777 = vunpack.c.l.b16 %v3665
      %v3778 = vunpack.c.l.b16 %v3666
      %v3779 = vunpack.c.l.b16 %v3667
      %v3780 = vunpack.c.l.b16 %v3668
      %v3781 = vunpack.c.l.b16 %v3669
      %v3782 = vunpack.c.l.b16 %v3670
      %v3783 = vunpack.c.l.b16 %v3671
      %v3784 = vunpack.c.l.b16 %v3672
      %v3785 = vunpack.c.l.b16 %v3673
      %v3786 = vunpack.c.l.b16 %v3674
      %v3787 = vunpack.c.l.b16 %v3675
      %v3788 = vunpack.c.l.b16 %v3676
      %v3789 = vunpack.c.l.b16 %v3677
      %v3790 = vunpack.c.l.b16 %v3678
      %v3791 = vunpack.c.l.b16 %v3679
      %v3792 = vunpack.c.l.b16 %v3680
      %v3793 = vunpack.c.l.b16 %v3681
      %v3794 = vunpack.c.l.b16 %v3682
      %v3795 = vunpack.c.l.b16 %v3683
      %v3796 = vunpack.c.l.b16 %v3684
      %v3797 = vunpack.c.l.b16 %v3685
      %v3798 = vunpack.c.l.b16 %v3686
      %v3799 = vunpack.c.l.b16 %v3687
      %v3800 = vunpack.c.l.b16 %v3688
      %v3801 = vunpack.c.l.b16 %v3689
      %v3802 = vunpack.c.l.b16 %v3690
      %v3803 = vunpack.c.l.b16 %v3691
      %v3804 = vunpack.c.l.b16 %v3692
      %v3805 = vunpack.c.l.b16 %v3693
      %v3806 = vunpack.c.l.b16 %v3694
      %v3807 = vunpack.c.l.b16 %v3695
      %v3808 = vunpack.c.l.b16 %v3696
      %v3809 = vunpack.c.l.b16 %v3697
      %v3810 = vpack.c.b16 %v3763, %v3762
      %v3811 = vpack.c.b16 %v3764, %v3764
      %v3812 = vpack.c.b16 %v3766, %v3765
      %v3813 = vpack.c.b16 %v3767, %v3767
      %v3814 = vpack.c.b16 %v3769, %v3768
      %v3815 = vpack.c.b16 %v3770, %v3770
      %v3816 = vpack.c.b16 %v3772, %v3771
      %v3817 = vpack.c.b16 %v3773, %v3773
      %v3818 = vpack.c.b16 %v3775, %v3774
      %v3819 = vpack.c.b16 %v3776, %v3776
      %v3820 = vpack.c.b16 %v3778, %v3777
      %v3821 = vpack.c.b16 %v3779, %v3779
      %v3822 = vpack.c.b16 %v3781, %v3780
      %v3823 = vpack.c.b16 %v3782, %v3782
      %v3824 = vpack.c.b16 %v3784, %v3783
      %v3825 = vpack.c.b16 %v3785, %v3785
      %v3826 = vpack.c.b16 %v3787, %v3786
      %v3827 = vpack.c.b16 %v3788, %v3788
      %v3828 = vpack.c.b16 %v3790, %v3789
      %v3829 = vpack.c.b16 %v3791, %v3791
      %v3830 = vpack.c.b16 %v3793, %v3792
      %v3831 = vpack.c.b16 %v3794, %v3794
      %v3832 = vpack.c.b16 %v3796, %v3795
      %v3833 = vpack.c.b16 %v3797, %v3797
      %v3834 = vpack.c.b16 %v3799, %v3798
      %v3835 = vpack.c.b16 %v3800, %v3800
      %v3836 = vpack.c.b16 %v3802, %v3801
      %v3837 = vpack.c.b16 %v3803, %v3803
      %v3838 = vpack.c.b16 %v3805, %v3804
      %v3839 = vpack.c.b16 %v3806, %v3806
      %v3840 = vpack.c.b16 %v3808, %v3807
      %v3841 = vpack.c.b16 %v3809, %v3809
      %v3842 = vpack.c.b16 %v3764, %v3763
      %v3843 = vpack.c.b16 %v3767, %v3766
      %v3844 = vpack.c.b16 %v3770, %v3769
      %v3845 = vpack.c.b16 %v3773, %v3772
      %v3846 = vpack.c.b16 %v3776, %v3775
      %v3847 = vpack.c.b16 %v3779, %v3778
      %v3848 = vpack.c.b16 %v3782, %v3781
      %v3849 = vpack.c.b16 %v3785, %v3784
      %v3850 = vpack.c.b16 %v3788, %v3787
      %v3851 = vpack.c.b16 %v3791, %v3790
      %v3852 = vpack.c.b16 %v3794, %v3793
      %v3853 = vpack.c.b16 %v3797, %v3796
      %v3854 = vpack.c.b16 %v3800, %v3799
      %v3855 = vpack.c.b16 %v3803, %v3802
      %v3856 = vpack.c.b16 %v3806, %v3805
      %v3857 = vpack.c.b16 %v3809, %v3808
      %v3859 = vshrl.u32 %v3842, 16
      %v3861 = vrot.slane %v3859, 4
      %v3862 = vshll.u32 %v3842, 16
      %v3864 = vrot.slane %v3862, 5
      %v3865 = vor.u32 %v3861, %v3864
      %v3867 = vshrl.u32 %v3843, 16
      %v3869 = vrot.slane %v3867, 4
      %v3870 = vshll.u32 %v3843, 16
      %v3872 = vrot.slane %v3870, 5
      %v3873 = vor.u32 %v3869, %v3872
      %v3875 = vshrl.u32 %v3844, 16
      %v3877 = vrot.slane %v3875, 4
      %v3878 = vshll.u32 %v3844, 16
      %v3880 = vrot.slane %v3878, 5
      %v3881 = vor.u32 %v3877, %v3880
      %v3883 = vshrl.u32 %v3845, 16
      %v3885 = vrot.slane %v3883, 4
      %v3886 = vshll.u32 %v3845, 16
      %v3888 = vrot.slane %v3886, 5
      %v3889 = vor.u32 %v3885, %v3888
      %v3891 = vshrl.u32 %v3846, 16
      %v3893 = vrot.slane %v3891, 4
      %v3894 = vshll.u32 %v3846, 16
      %v3896 = vrot.slane %v3894, 5
      %v3897 = vor.u32 %v3893, %v3896
      %v3899 = vshrl.u32 %v3847, 16
      %v3901 = vrot.slane %v3899, 4
      %v3902 = vshll.u32 %v3847, 16
      %v3904 = vrot.slane %v3902, 5
      %v3905 = vor.u32 %v3901, %v3904
      %v3907 = vshrl.u32 %v3848, 16
      %v3909 = vrot.slane %v3907, 4
      %v3910 = vshll.u32 %v3848, 16
      %v3912 = vrot.slane %v3910, 5
      %v3913 = vor.u32 %v3909, %v3912
      %v3915 = vshrl.u32 %v3849, 16
      %v3917 = vrot.slane %v3915, 4
      %v3918 = vshll.u32 %v3849, 16
      %v3920 = vrot.slane %v3918, 5
      %v3921 = vor.u32 %v3917, %v3920
      %v3923 = vshrl.u32 %v3850, 16
      %v3925 = vrot.slane %v3923, 4
      %v3926 = vshll.u32 %v3850, 16
      %v3928 = vrot.slane %v3926, 5
      %v3929 = vor.u32 %v3925, %v3928
      %v3931 = vshrl.u32 %v3851, 16
      %v3933 = vrot.slane %v3931, 4
      %v3934 = vshll.u32 %v3851, 16
      %v3936 = vrot.slane %v3934, 5
      %v3937 = vor.u32 %v3933, %v3936
      %v3939 = vshrl.u32 %v3852, 16
      %v3941 = vrot.slane %v3939, 4
      %v3942 = vshll.u32 %v3852, 16
      %v3944 = vrot.slane %v3942, 5
      %v3945 = vor.u32 %v3941, %v3944
      %v3947 = vshrl.u32 %v3853, 16
      %v3949 = vrot.slane %v3947, 4
      %v3950 = vshll.u32 %v3853, 16
      %v3952 = vrot.slane %v3950, 5
      %v3953 = vor.u32 %v3949, %v3952
      %v3955 = vshrl.u32 %v3854, 16
      %v3957 = vrot.slane %v3955, 4
      %v3958 = vshll.u32 %v3854, 16
      %v3960 = vrot.slane %v3958, 5
      %v3961 = vor.u32 %v3957, %v3960
      %v3963 = vshrl.u32 %v3855, 16
      %v3965 = vrot.slane %v3963, 4
      %v3966 = vshll.u32 %v3855, 16
      %v3968 = vrot.slane %v3966, 5
      %v3969 = vor.u32 %v3965, %v3968
      %v3971 = vshrl.u32 %v3856, 16
      %v3973 = vrot.slane %v3971, 4
      %v3974 = vshll.u32 %v3856, 16
      %v3976 = vrot.slane %v3974, 5
      %v3977 = vor.u32 %v3973, %v3976
      %v3979 = vshrl.u32 %v3857, 16
      %v3981 = vrot.slane %v3979, 4
      %v3982 = vshll.u32 %v3857, 16
      %v3984 = vrot.slane %v3982, 5
      %v3985 = vor.u32 %v3981, %v3984
      %v4002 = vunpack.c.l.b16 %v3698
      %v4003 = vunpack.c.l.b16 %v3699
      %v4004 = vunpack.c.l.b16 %v3700
      %v4005 = vunpack.c.l.b16 %v3701
      %v4006 = vunpack.c.l.b16 %v3702
      %v4007 = vunpack.c.l.b16 %v3703
      %v4008 = vunpack.c.l.b16 %v3704
      %v4009 = vunpack.c.l.b16 %v3705
      %v4010 = vunpack.c.l.b16 %v3706
      %v4011 = vunpack.c.l.b16 %v3707
      %v4012 = vunpack.c.l.b16 %v3708
      %v4013 = vunpack.c.l.b16 %v3709
      %v4014 = vunpack.c.l.b16 %v3710
      %v4015 = vunpack.c.l.b16 %v3711
      %v4016 = vunpack.c.l.b16 %v3712
      %v4017 = vunpack.c.l.b16 %v3713
      %v4018 = vpack.c.b16 %v4002, %v4002
      %v4019 = vpack.c.b16 %v4003, %v4003
      %v4020 = vpack.c.b16 %v4004, %v4004
      %v4021 = vpack.c.b16 %v4005, %v4005
      %v4022 = vpack.c.b16 %v4006, %v4006
      %v4023 = vpack.c.b16 %v4007, %v4007
      %v4024 = vpack.c.b16 %v4008, %v4008
      %v4025 = vpack.c.b16 %v4009, %v4009
      %v4026 = vpack.c.b16 %v4010, %v4010
      %v4027 = vpack.c.b16 %v4011, %v4011
      %v4028 = vpack.c.b16 %v4012, %v4012
      %v4029 = vpack.c.b16 %v4013, %v4013
      %v4030 = vpack.c.b16 %v4014, %v4014
      %v4031 = vpack.c.b16 %v4015, %v4015
      %v4032 = vpack.c.b16 %v4016, %v4016
      %v4033 = vpack.c.b16 %v4017, %v4017
      %v4034 = vrot.slane %v3842, 5
      %v4035 = vrot.slane %v4018, 5
      %v4036 = vsel %vm665, %v4034, %v4035
      %v4037 = vrot.slane %v3843, 5
      %v4038 = vrot.slane %v4019, 5
      %v4039 = vsel %vm665, %v4037, %v4038
      %v4040 = vrot.slane %v3844, 5
      %v4041 = vrot.slane %v4020, 5
      %v4042 = vsel %vm665, %v4040, %v4041
      %v4043 = vrot.slane %v3845, 5
      %v4044 = vrot.slane %v4021, 5
      %v4045 = vsel %vm665, %v4043, %v4044
      %v4046 = vrot.slane %v3846, 5
      %v4047 = vrot.slane %v4022, 5
      %v4048 = vsel %vm665, %v4046, %v4047
      %v4049 = vrot.slane %v3847, 5
      %v4050 = vrot.slane %v4023, 5
      %v4051 = vsel %vm665, %v4049, %v4050
      %v4052 = vrot.slane %v3848, 5
      %v4053 = vrot.slane %v4024, 5
      %v4054 = vsel %vm665, %v4052, %v4053
      %v4055 = vrot.slane %v3849, 5
      %v4056 = vrot.slane %v4025, 5
      %v4057 = vsel %vm665, %v4055, %v4056
      %v4058 = vrot.slane %v3850, 5
      %v4059 = vrot.slane %v4026, 5
      %v4060 = vsel %vm665, %v4058, %v4059
      %v4061 = vrot.slane %v3851, 5
      %v4062 = vrot.slane %v4027, 5
      %v4063 = vsel %vm665, %v4061, %v4062
      %v4064 = vrot.slane %v3852, 5
      %v4065 = vrot.slane %v4028, 5
      %v4066 = vsel %vm665, %v4064, %v4065
      %v4067 = vrot.slane %v3853, 5
      %v4068 = vrot.slane %v4029, 5
      %v4069 = vsel %vm665, %v4067, %v4068
      %v4070 = vrot.slane %v3854, 5
      %v4071 = vrot.slane %v4030, 5
      %v4072 = vsel %vm665, %v4070, %v4071
      %v4073 = vrot.slane %v3855, 5
      %v4074 = vrot.slane %v4031, 5
      %v4075 = vsel %vm665, %v4073, %v4074
      %v4076 = vrot.slane %v3856, 5
      %v4077 = vrot.slane %v4032, 5
      %v4078 = vsel %vm665, %v4076, %v4077
      %v4079 = vrot.slane %v3857, 5
      %v4080 = vrot.slane %v4033, 5
      %v4081 = vsel %vm665, %v4079, %v4080
      %v4083 = vshrl.u32 %v3810, 16
      %v4085 = vrot.slane %v4083, 3
      %v4086 = vshll.u32 %v3810, 16
      %v4088 = vrot.slane %v4086, 4
      %v4089 = vor.u32 %v4085, %v4088
      %v4091 = vshrl.u32 %v3811, 16
      %v4093 = vrot.slane %v4091, 3
      %v4094 = vshll.u32 %v3811, 16
      %v4096 = vrot.slane %v4094, 4
      %v4097 = vor.u32 %v4093, %v4096
      %v4098 = vsel %vm714, %v4089, %v4097
      %v4100 = vshrl.u32 %v3865, 16
      %v4102 = vrot.slane %v4100, 3
      %v4103 = vshll.u32 %v3865, 16
      %v4105 = vrot.slane %v4103, 4
      %v4106 = vor.u32 %v4102, %v4105
      %v4107 = vsel %vm714, %v4106, %v4106
      %v4109 = vshrl.u32 %v4034, 16
      %v4111 = vrot.slane %v4109, 3
      %v4112 = vshll.u32 %v4034, 16
      %v4114 = vrot.slane %v4112, 4
      %v4115 = vor.u32 %v4111, %v4114
      %v4117 = vshrl.u32 %v4036, 16
      %v4119 = vrot.slane %v4117, 3
      %v4120 = vshll.u32 %v4036, 16
      %v4122 = vrot.slane %v4120, 4
      %v4123 = vor.u32 %v4119, %v4122
      %v4124 = vsel %vm714, %v4115, %v4123
      %v4126 = vshrl.u32 %v3812, 16
      %v4128 = vrot.slane %v4126, 3
      %v4129 = vshll.u32 %v3812, 16
      %v4131 = vrot.slane %v4129, 4
      %v4132 = vor.u32 %v4128, %v4131
      %v4134 = vshrl.u32 %v3813, 16
      %v4136 = vrot.slane %v4134, 3
      %v4137 = vshll.u32 %v3813, 16
      %v4139 = vrot.slane %v4137, 4
      %v4140 = vor.u32 %v4136, %v4139
      %v4141 = vsel %vm714, %v4132, %v4140
      %v4143 = vshrl.u32 %v3873, 16
      %v4145 = vrot.slane %v4143, 3
      %v4146 = vshll.u32 %v3873, 16
      %v4148 = vrot.slane %v4146, 4
      %v4149 = vor.u32 %v4145, %v4148
      %v4150 = vsel %vm714, %v4149, %v4149
      %v4152 = vshrl.u32 %v4037, 16
      %v4154 = vrot.slane %v4152, 3
      %v4155 = vshll.u32 %v4037, 16
      %v4157 = vrot.slane %v4155, 4
      %v4158 = vor.u32 %v4154, %v4157
      %v4160 = vshrl.u32 %v4039, 16
      %v4162 = vrot.slane %v4160, 3
      %v4163 = vshll.u32 %v4039, 16
      %v4165 = vrot.slane %v4163, 4
      %v4166 = vor.u32 %v4162, %v4165
      %v4167 = vsel %vm714, %v4158, %v4166
      %v4169 = vshrl.u32 %v3814, 16
      %v4171 = vrot.slane %v4169, 3
      %v4172 = vshll.u32 %v3814, 16
      %v4174 = vrot.slane %v4172, 4
      %v4175 = vor.u32 %v4171, %v4174
      %v4177 = vshrl.u32 %v3815, 16
      %v4179 = vrot.slane %v4177, 3
      %v4180 = vshll.u32 %v3815, 16
      %v4182 = vrot.slane %v4180, 4
      %v4183 = vor.u32 %v4179, %v4182
      %v4184 = vsel %vm714, %v4175, %v4183
      %v4186 = vshrl.u32 %v3881, 16
      %v4188 = vrot.slane %v4186, 3
      %v4189 = vshll.u32 %v3881, 16
      %v4191 = vrot.slane %v4189, 4
      %v4192 = vor.u32 %v4188, %v4191
      %v4193 = vsel %vm714, %v4192, %v4192
      %v4195 = vshrl.u32 %v4040, 16
      %v4197 = vrot.slane %v4195, 3
      %v4198 = vshll.u32 %v4040, 16
      %v4200 = vrot.slane %v4198, 4
      %v4201 = vor.u32 %v4197, %v4200
      %v4203 = vshrl.u32 %v4042, 16
      %v4205 = vrot.slane %v4203, 3
      %v4206 = vshll.u32 %v4042, 16
      %v4208 = vrot.slane %v4206, 4
      %v4209 = vor.u32 %v4205, %v4208
      %v4210 = vsel %vm714, %v4201, %v4209
      %v4212 = vshrl.u32 %v3816, 16
      %v4214 = vrot.slane %v4212, 3
      %v4215 = vshll.u32 %v3816, 16
      %v4217 = vrot.slane %v4215, 4
      %v4218 = vor.u32 %v4214, %v4217
      %v4220 = vshrl.u32 %v3817, 16
      %v4222 = vrot.slane %v4220, 3
      %v4223 = vshll.u32 %v3817, 16
      %v4225 = vrot.slane %v4223, 4
      %v4226 = vor.u32 %v4222, %v4225
      %v4227 = vsel %vm714, %v4218, %v4226
      %v4229 = vshrl.u32 %v3889, 16
      %v4231 = vrot.slane %v4229, 3
      %v4232 = vshll.u32 %v3889, 16
      %v4234 = vrot.slane %v4232, 4
      %v4235 = vor.u32 %v4231, %v4234
      %v4236 = vsel %vm714, %v4235, %v4235
      %v4238 = vshrl.u32 %v4043, 16
      %v4240 = vrot.slane %v4238, 3
      %v4241 = vshll.u32 %v4043, 16
      %v4243 = vrot.slane %v4241, 4
      %v4244 = vor.u32 %v4240, %v4243
      %v4246 = vshrl.u32 %v4045, 16
      %v4248 = vrot.slane %v4246, 3
      %v4249 = vshll.u32 %v4045, 16
      %v4251 = vrot.slane %v4249, 4
      %v4252 = vor.u32 %v4248, %v4251
      %v4253 = vsel %vm714, %v4244, %v4252
      %v4255 = vshrl.u32 %v3818, 16
      %v4257 = vrot.slane %v4255, 3
      %v4258 = vshll.u32 %v3818, 16
      %v4260 = vrot.slane %v4258, 4
      %v4261 = vor.u32 %v4257, %v4260
      %v4263 = vshrl.u32 %v3819, 16
      %v4265 = vrot.slane %v4263, 3
      %v4266 = vshll.u32 %v3819, 16
      %v4268 = vrot.slane %v4266, 4
      %v4269 = vor.u32 %v4265, %v4268
      %v4270 = vsel %vm714, %v4261, %v4269
      %v4272 = vshrl.u32 %v3897, 16
      %v4274 = vrot.slane %v4272, 3
      %v4275 = vshll.u32 %v3897, 16
      %v4277 = vrot.slane %v4275, 4
      %v4278 = vor.u32 %v4274, %v4277
      %v4279 = vsel %vm714, %v4278, %v4278
      %v4281 = vshrl.u32 %v4046, 16
      %v4283 = vrot.slane %v4281, 3
      %v4284 = vshll.u32 %v4046, 16
      %v4286 = vrot.slane %v4284, 4
      %v4287 = vor.u32 %v4283, %v4286
      %v4289 = vshrl.u32 %v4048, 16
      %v4291 = vrot.slane %v4289, 3
      %v4292 = vshll.u32 %v4048, 16
      %v4294 = vrot.slane %v4292, 4
      %v4295 = vor.u32 %v4291, %v4294
      %v4296 = vsel %vm714, %v4287, %v4295
      %v4298 = vshrl.u32 %v3820, 16
      %v4300 = vrot.slane %v4298, 3
      %v4301 = vshll.u32 %v3820, 16
      %v4303 = vrot.slane %v4301, 4
      %v4304 = vor.u32 %v4300, %v4303
      %v4306 = vshrl.u32 %v3821, 16
      %v4308 = vrot.slane %v4306, 3
      %v4309 = vshll.u32 %v3821, 16
      %v4311 = vrot.slane %v4309, 4
      %v4312 = vor.u32 %v4308, %v4311
      %v4313 = vsel %vm714, %v4304, %v4312
      %v4315 = vshrl.u32 %v3905, 16
      %v4317 = vrot.slane %v4315, 3
      %v4318 = vshll.u32 %v3905, 16
      %v4320 = vrot.slane %v4318, 4
      %v4321 = vor.u32 %v4317, %v4320
      %v4322 = vsel %vm714, %v4321, %v4321
      %v4324 = vshrl.u32 %v4049, 16
      %v4326 = vrot.slane %v4324, 3
      %v4327 = vshll.u32 %v4049, 16
      %v4329 = vrot.slane %v4327, 4
      %v4330 = vor.u32 %v4326, %v4329
      %v4332 = vshrl.u32 %v4051, 16
      %v4334 = vrot.slane %v4332, 3
      %v4335 = vshll.u32 %v4051, 16
      %v4337 = vrot.slane %v4335, 4
      %v4338 = vor.u32 %v4334, %v4337
      %v4339 = vsel %vm714, %v4330, %v4338
      %v4341 = vshrl.u32 %v3822, 16
      %v4343 = vrot.slane %v4341, 3
      %v4344 = vshll.u32 %v3822, 16
      %v4346 = vrot.slane %v4344, 4
      %v4347 = vor.u32 %v4343, %v4346
      %v4349 = vshrl.u32 %v3823, 16
      %v4351 = vrot.slane %v4349, 3
      %v4352 = vshll.u32 %v3823, 16
      %v4354 = vrot.slane %v4352, 4
      %v4355 = vor.u32 %v4351, %v4354
      %v4356 = vsel %vm714, %v4347, %v4355
      %v4358 = vshrl.u32 %v3913, 16
      %v4360 = vrot.slane %v4358, 3
      %v4361 = vshll.u32 %v3913, 16
      %v4363 = vrot.slane %v4361, 4
      %v4364 = vor.u32 %v4360, %v4363
      %v4365 = vsel %vm714, %v4364, %v4364
      %v4367 = vshrl.u32 %v4052, 16
      %v4369 = vrot.slane %v4367, 3
      %v4370 = vshll.u32 %v4052, 16
      %v4372 = vrot.slane %v4370, 4
      %v4373 = vor.u32 %v4369, %v4372
      %v4375 = vshrl.u32 %v4054, 16
      %v4377 = vrot.slane %v4375, 3
      %v4378 = vshll.u32 %v4054, 16
      %v4380 = vrot.slane %v4378, 4
      %v4381 = vor.u32 %v4377, %v4380
      %v4382 = vsel %vm714, %v4373, %v4381
      %v4384 = vshrl.u32 %v3824, 16
      %v4386 = vrot.slane %v4384, 3
      %v4387 = vshll.u32 %v3824, 16
      %v4389 = vrot.slane %v4387, 4
      %v4390 = vor.u32 %v4386, %v4389
      %v4392 = vshrl.u32 %v3825, 16
      %v4394 = vrot.slane %v4392, 3
      %v4395 = vshll.u32 %v3825, 16
      %v4397 = vrot.slane %v4395, 4
      %v4398 = vor.u32 %v4394, %v4397
      %v4399 = vsel %vm714, %v4390, %v4398
      %v4401 = vshrl.u32 %v3921, 16
      %v4403 = vrot.slane %v4401, 3
      %v4404 = vshll.u32 %v3921, 16
      %v4406 = vrot.slane %v4404, 4
      %v4407 = vor.u32 %v4403, %v4406
      %v4408 = vsel %vm714, %v4407, %v4407
      %v4410 = vshrl.u32 %v4055, 16
      %v4412 = vrot.slane %v4410, 3
      %v4413 = vshll.u32 %v4055, 16
      %v4415 = vrot.slane %v4413, 4
      %v4416 = vor.u32 %v4412, %v4415
      %v4418 = vshrl.u32 %v4057, 16
      %v4420 = vrot.slane %v4418, 3
      %v4421 = vshll.u32 %v4057, 16
      %v4423 = vrot.slane %v4421, 4
      %v4424 = vor.u32 %v4420, %v4423
      %v4425 = vsel %vm714, %v4416, %v4424
      %v4427 = vshrl.u32 %v3826, 16
      %v4429 = vrot.slane %v4427, 3
      %v4430 = vshll.u32 %v3826, 16
      %v4432 = vrot.slane %v4430, 4
      %v4433 = vor.u32 %v4429, %v4432
      %v4435 = vshrl.u32 %v3827, 16
      %v4437 = vrot.slane %v4435, 3
      %v4438 = vshll.u32 %v3827, 16
      %v4440 = vrot.slane %v4438, 4
      %v4441 = vor.u32 %v4437, %v4440
      %v4442 = vsel %vm714, %v4433, %v4441
      %v4444 = vshrl.u32 %v3929, 16
      %v4446 = vrot.slane %v4444, 3
      %v4447 = vshll.u32 %v3929, 16
      %v4449 = vrot.slane %v4447, 4
      %v4450 = vor.u32 %v4446, %v4449
      %v4451 = vsel %vm714, %v4450, %v4450
      %v4453 = vshrl.u32 %v4058, 16
      %v4455 = vrot.slane %v4453, 3
      %v4456 = vshll.u32 %v4058, 16
      %v4458 = vrot.slane %v4456, 4
      %v4459 = vor.u32 %v4455, %v4458
      %v4461 = vshrl.u32 %v4060, 16
      %v4463 = vrot.slane %v4461, 3
      %v4464 = vshll.u32 %v4060, 16
      %v4466 = vrot.slane %v4464, 4
      %v4467 = vor.u32 %v4463, %v4466
      %v4468 = vsel %vm714, %v4459, %v4467
      %v4470 = vshrl.u32 %v3828, 16
      %v4472 = vrot.slane %v4470, 3
      %v4473 = vshll.u32 %v3828, 16
      %v4475 = vrot.slane %v4473, 4
      %v4476 = vor.u32 %v4472, %v4475
      %v4478 = vshrl.u32 %v3829, 16
      %v4480 = vrot.slane %v4478, 3
      %v4481 = vshll.u32 %v3829, 16
      %v4483 = vrot.slane %v4481, 4
      %v4484 = vor.u32 %v4480, %v4483
      %v4485 = vsel %vm714, %v4476, %v4484
      %v4487 = vshrl.u32 %v3937, 16
      %v4489 = vrot.slane %v4487, 3
      %v4490 = vshll.u32 %v3937, 16
      %v4492 = vrot.slane %v4490, 4
      %v4493 = vor.u32 %v4489, %v4492
      %v4494 = vsel %vm714, %v4493, %v4493
      %v4496 = vshrl.u32 %v4061, 16
      %v4498 = vrot.slane %v4496, 3
      %v4499 = vshll.u32 %v4061, 16
      %v4501 = vrot.slane %v4499, 4
      %v4502 = vor.u32 %v4498, %v4501
      %v4504 = vshrl.u32 %v4063, 16
      %v4506 = vrot.slane %v4504, 3
      %v4507 = vshll.u32 %v4063, 16
      %v4509 = vrot.slane %v4507, 4
      %v4510 = vor.u32 %v4506, %v4509
      %v4511 = vsel %vm714, %v4502, %v4510
      %v4513 = vshrl.u32 %v3830, 16
      %v4515 = vrot.slane %v4513, 3
      %v4516 = vshll.u32 %v3830, 16
      %v4518 = vrot.slane %v4516, 4
      %v4519 = vor.u32 %v4515, %v4518
      %v4521 = vshrl.u32 %v3831, 16
      %v4523 = vrot.slane %v4521, 3
      %v4524 = vshll.u32 %v3831, 16
      %v4526 = vrot.slane %v4524, 4
      %v4527 = vor.u32 %v4523, %v4526
      %v4528 = vsel %vm714, %v4519, %v4527
      %v4530 = vshrl.u32 %v3945, 16
      %v4532 = vrot.slane %v4530, 3
      %v4533 = vshll.u32 %v3945, 16
      %v4535 = vrot.slane %v4533, 4
      %v4536 = vor.u32 %v4532, %v4535
      %v4537 = vsel %vm714, %v4536, %v4536
      %v4539 = vshrl.u32 %v4064, 16
      %v4541 = vrot.slane %v4539, 3
      %v4542 = vshll.u32 %v4064, 16
      %v4544 = vrot.slane %v4542, 4
      %v4545 = vor.u32 %v4541, %v4544
      %v4547 = vshrl.u32 %v4066, 16
      %v4549 = vrot.slane %v4547, 3
      %v4550 = vshll.u32 %v4066, 16
      %v4552 = vrot.slane %v4550, 4
      %v4553 = vor.u32 %v4549, %v4552
      %v4554 = vsel %vm714, %v4545, %v4553
      %v4556 = vshrl.u32 %v3832, 16
      %v4558 = vrot.slane %v4556, 3
      %v4559 = vshll.u32 %v3832, 16
      %v4561 = vrot.slane %v4559, 4
      %v4562 = vor.u32 %v4558, %v4561
      %v4564 = vshrl.u32 %v3833, 16
      %v4566 = vrot.slane %v4564, 3
      %v4567 = vshll.u32 %v3833, 16
      %v4569 = vrot.slane %v4567, 4
      %v4570 = vor.u32 %v4566, %v4569
      %v4571 = vsel %vm714, %v4562, %v4570
      %v4573 = vshrl.u32 %v3953, 16
      %v4575 = vrot.slane %v4573, 3
      %v4576 = vshll.u32 %v3953, 16
      %v4578 = vrot.slane %v4576, 4
      %v4579 = vor.u32 %v4575, %v4578
      %v4580 = vsel %vm714, %v4579, %v4579
      %v4582 = vshrl.u32 %v4067, 16
      %v4584 = vrot.slane %v4582, 3
      %v4585 = vshll.u32 %v4067, 16
      %v4587 = vrot.slane %v4585, 4
      %v4588 = vor.u32 %v4584, %v4587
      %v4590 = vshrl.u32 %v4069, 16
      %v4592 = vrot.slane %v4590, 3
      %v4593 = vshll.u32 %v4069, 16
      %v4595 = vrot.slane %v4593, 4
      %v4596 = vor.u32 %v4592, %v4595
      %v4597 = vsel %vm714, %v4588, %v4596
      %v4599 = vshrl.u32 %v3834, 16
      %v4601 = vrot.slane %v4599, 3
      %v4602 = vshll.u32 %v3834, 16
      %v4604 = vrot.slane %v4602, 4
      %v4605 = vor.u32 %v4601, %v4604
      %v4607 = vshrl.u32 %v3835, 16
      %v4609 = vrot.slane %v4607, 3
      %v4610 = vshll.u32 %v3835, 16
      %v4612 = vrot.slane %v4610, 4
      %v4613 = vor.u32 %v4609, %v4612
      %v4614 = vsel %vm714, %v4605, %v4613
      %v4616 = vshrl.u32 %v3961, 16
      %v4618 = vrot.slane %v4616, 3
      %v4619 = vshll.u32 %v3961, 16
      %v4621 = vrot.slane %v4619, 4
      %v4622 = vor.u32 %v4618, %v4621
      %v4623 = vsel %vm714, %v4622, %v4622
      %v4625 = vshrl.u32 %v4070, 16
      %v4627 = vrot.slane %v4625, 3
      %v4628 = vshll.u32 %v4070, 16
      %v4630 = vrot.slane %v4628, 4
      %v4631 = vor.u32 %v4627, %v4630
      %v4633 = vshrl.u32 %v4072, 16
      %v4635 = vrot.slane %v4633, 3
      %v4636 = vshll.u32 %v4072, 16
      %v4638 = vrot.slane %v4636, 4
      %v4639 = vor.u32 %v4635, %v4638
      %v4640 = vsel %vm714, %v4631, %v4639
      %v4642 = vshrl.u32 %v3836, 16
      %v4644 = vrot.slane %v4642, 3
      %v4645 = vshll.u32 %v3836, 16
      %v4647 = vrot.slane %v4645, 4
      %v4648 = vor.u32 %v4644, %v4647
      %v4650 = vshrl.u32 %v3837, 16
      %v4652 = vrot.slane %v4650, 3
      %v4653 = vshll.u32 %v3837, 16
      %v4655 = vrot.slane %v4653, 4
      %v4656 = vor.u32 %v4652, %v4655
      %v4657 = vsel %vm714, %v4648, %v4656
      %v4659 = vshrl.u32 %v3969, 16
      %v4661 = vrot.slane %v4659, 3
      %v4662 = vshll.u32 %v3969, 16
      %v4664 = vrot.slane %v4662, 4
      %v4665 = vor.u32 %v4661, %v4664
      %v4666 = vsel %vm714, %v4665, %v4665
      %v4668 = vshrl.u32 %v4073, 16
      %v4670 = vrot.slane %v4668, 3
      %v4671 = vshll.u32 %v4073, 16
      %v4673 = vrot.slane %v4671, 4
      %v4674 = vor.u32 %v4670, %v4673
      %v4676 = vshrl.u32 %v4075, 16
      %v4678 = vrot.slane %v4676, 3
      %v4679 = vshll.u32 %v4075, 16
      %v4681 = vrot.slane %v4679, 4
      %v4682 = vor.u32 %v4678, %v4681
      %v4683 = vsel %vm714, %v4674, %v4682
      %v4685 = vshrl.u32 %v3838, 16
      %v4687 = vrot.slane %v4685, 3
      %v4688 = vshll.u32 %v3838, 16
      %v4690 = vrot.slane %v4688, 4
      %v4691 = vor.u32 %v4687, %v4690
      %v4693 = vshrl.u32 %v3839, 16
      %v4695 = vrot.slane %v4693, 3
      %v4696 = vshll.u32 %v3839, 16
      %v4698 = vrot.slane %v4696, 4
      %v4699 = vor.u32 %v4695, %v4698
      %v4700 = vsel %vm714, %v4691, %v4699
      %v4702 = vshrl.u32 %v3977, 16
      %v4704 = vrot.slane %v4702, 3
      %v4705 = vshll.u32 %v3977, 16
      %v4707 = vrot.slane %v4705, 4
      %v4708 = vor.u32 %v4704, %v4707
      %v4709 = vsel %vm714, %v4708, %v4708
      %v4711 = vshrl.u32 %v4076, 16
      %v4713 = vrot.slane %v4711, 3
      %v4714 = vshll.u32 %v4076, 16
      %v4716 = vrot.slane %v4714, 4
      %v4717 = vor.u32 %v4713, %v4716
      %v4719 = vshrl.u32 %v4078, 16
      %v4721 = vrot.slane %v4719, 3
      %v4722 = vshll.u32 %v4078, 16
      %v4724 = vrot.slane %v4722, 4
      %v4725 = vor.u32 %v4721, %v4724
      %v4726 = vsel %vm714, %v4717, %v4725
      %v4728 = vshrl.u32 %v3840, 16
      %v4730 = vrot.slane %v4728, 3
      %v4731 = vshll.u32 %v3840, 16
      %v4733 = vrot.slane %v4731, 4
      %v4734 = vor.u32 %v4730, %v4733
      %v4736 = vshrl.u32 %v3841, 16
      %v4738 = vrot.slane %v4736, 3
      %v4739 = vshll.u32 %v3841, 16
      %v4741 = vrot.slane %v4739, 4
      %v4742 = vor.u32 %v4738, %v4741
      %v4743 = vsel %vm714, %v4734, %v4742
      %v4745 = vshrl.u32 %v3985, 16
      %v4747 = vrot.slane %v4745, 3
      %v4748 = vshll.u32 %v3985, 16
      %v4750 = vrot.slane %v4748, 4
      %v4751 = vor.u32 %v4747, %v4750
      %v4752 = vsel %vm714, %v4751, %v4751
      %v4754 = vshrl.u32 %v4079, 16
      %v4756 = vrot.slane %v4754, 3
      %v4757 = vshll.u32 %v4079, 16
      %v4759 = vrot.slane %v4757, 4
      %v4760 = vor.u32 %v4756, %v4759
      %v4762 = vshrl.u32 %v4081, 16
      %v4764 = vrot.slane %v4762, 3
      %v4765 = vshll.u32 %v4081, 16
      %v4767 = vrot.slane %v4765, 4
      %v4768 = vor.u32 %v4764, %v4767
      %v4769 = vsel %vm714, %v4760, %v4768
      %s4818 = scalar_lea.vmem %s260, 384
      %v4819 = vld [vmem:[%s4818] sm:$0xf]
      %v4820 = vld [vmem:[%s4818 + $0x4] sm:$0xf]
      %v4821 = vld [vmem:[%s4818 + $0x8] sm:$0xf]
      %v4822 = vld [vmem:[%s4818 + $0xc] sm:$0xf]
      %v4823 = vld [vmem:[%s4818 + $0x10] sm:$0xf]
      %v4824 = vld [vmem:[%s4818 + $0x14] sm:$0xf]
      %v4825 = vld [vmem:[%s4818 + $0x18] sm:$0xf]
      %v4826 = vld [vmem:[%s4818 + $0x1c] sm:$0xf]
      %v4827 = vld [vmem:[%s4818 + $0x20] sm:$0xf]
      %v4828 = vld [vmem:[%s4818 + $0x24] sm:$0xf]
      %v4829 = vld [vmem:[%s4818 + $0x28] sm:$0xf]
      %v4830 = vld [vmem:[%s4818 + $0x2c] sm:$0xf]
      %v4831 = vld [vmem:[%s4818 + $0x30] sm:$0xf]
      %v4832 = vld [vmem:[%s4818 + $0x34] sm:$0xf]
      %v4833 = vld [vmem:[%s4818 + $0x38] sm:$0xf]
      %v4834 = vld [vmem:[%s4818 + $0x3c] sm:$0xf]
      %v4835 = vld [vmem:[%s4818 + $0x40] sm:$0xf]
      %v4836 = vld [vmem:[%s4818 + $0x44] sm:$0xf]
      %v4837 = vld [vmem:[%s4818 + $0x48] sm:$0xf]
      %v4838 = vld [vmem:[%s4818 + $0x4c] sm:$0xf]
      %v4839 = vld [vmem:[%s4818 + $0x50] sm:$0xf]
      %v4840 = vld [vmem:[%s4818 + $0x54] sm:$0xf]
      %v4841 = vld [vmem:[%s4818 + $0x58] sm:$0xf]
      %v4842 = vld [vmem:[%s4818 + $0x5c] sm:$0xf]
      %v4843 = vld [vmem:[%s4818 + $0x60] sm:$0xf]
      %v4844 = vld [vmem:[%s4818 + $0x64] sm:$0xf]
      %v4845 = vld [vmem:[%s4818 + $0x68] sm:$0xf]
      %v4846 = vld [vmem:[%s4818 + $0x6c] sm:$0xf]
      %v4847 = vld [vmem:[%s4818 + $0x70] sm:$0xf]
      %v4848 = vld [vmem:[%s4818 + $0x74] sm:$0xf]
      %v4849 = vld [vmem:[%s4818 + $0x78] sm:$0xf]
      %v4850 = vld [vmem:[%s4818 + $0x7c] sm:$0xf]
      %v4851 = vld [vmem:[%s4818 + $0x80] sm:$0xf]
      %v4852 = vld [vmem:[%s4818 + $0x84] sm:$0xf]
      %v4853 = vld [vmem:[%s4818 + $0x88] sm:$0xf]
      %v4854 = vld [vmem:[%s4818 + $0x8c] sm:$0xf]
      %v4855 = vld [vmem:[%s4818 + $0x90] sm:$0xf]
      %v4856 = vld [vmem:[%s4818 + $0x94] sm:$0xf]
      %v4857 = vld [vmem:[%s4818 + $0x98] sm:$0xf]
      %v4858 = vld [vmem:[%s4818 + $0x9c] sm:$0xf]
      %v4859 = vld [vmem:[%s4818 + $0xa0] sm:$0xf]
      %v4860 = vld [vmem:[%s4818 + $0xa4] sm:$0xf]
      %v4861 = vld [vmem:[%s4818 + $0xa8] sm:$0xf]
      %v4862 = vld [vmem:[%s4818 + $0xac] sm:$0xf]
      %v4863 = vld [vmem:[%s4818 + $0xb0] sm:$0xf]
      %v4864 = vld [vmem:[%s4818 + $0xb4] sm:$0xf]
      %v4865 = vld [vmem:[%s4818 + $0xb8] sm:$0xf]
      %v4866 = vld [vmem:[%s4818 + $0xbc] sm:$0xf]
      %v4915 = vunpack.c.l.b16 %v4819
      %v4916 = vunpack.c.l.b16 %v4820
      %v4917 = vunpack.c.l.b16 %v4821
      %v4918 = vunpack.c.l.b16 %v4822
      %v4919 = vunpack.c.l.b16 %v4823
      %v4920 = vunpack.c.l.b16 %v4824
      %v4921 = vunpack.c.l.b16 %v4825
      %v4922 = vunpack.c.l.b16 %v4826
      %v4923 = vunpack.c.l.b16 %v4827
      %v4924 = vunpack.c.l.b16 %v4828
      %v4925 = vunpack.c.l.b16 %v4829
      %v4926 = vunpack.c.l.b16 %v4830
      %v4927 = vunpack.c.l.b16 %v4831
      %v4928 = vunpack.c.l.b16 %v4832
      %v4929 = vunpack.c.l.b16 %v4833
      %v4930 = vunpack.c.l.b16 %v4834
      %v4931 = vunpack.c.l.b16 %v4835
      %v4932 = vunpack.c.l.b16 %v4836
      %v4933 = vunpack.c.l.b16 %v4837
      %v4934 = vunpack.c.l.b16 %v4838
      %v4935 = vunpack.c.l.b16 %v4839
      %v4936 = vunpack.c.l.b16 %v4840
      %v4937 = vunpack.c.l.b16 %v4841
      %v4938 = vunpack.c.l.b16 %v4842
      %v4939 = vunpack.c.l.b16 %v4843
      %v4940 = vunpack.c.l.b16 %v4844
      %v4941 = vunpack.c.l.b16 %v4845
      %v4942 = vunpack.c.l.b16 %v4846
      %v4943 = vunpack.c.l.b16 %v4847
      %v4944 = vunpack.c.l.b16 %v4848
      %v4945 = vunpack.c.l.b16 %v4849
      %v4946 = vunpack.c.l.b16 %v4850
      %v4947 = vunpack.c.l.b16 %v4851
      %v4948 = vunpack.c.l.b16 %v4852
      %v4949 = vunpack.c.l.b16 %v4853
      %v4950 = vunpack.c.l.b16 %v4854
      %v4951 = vunpack.c.l.b16 %v4855
      %v4952 = vunpack.c.l.b16 %v4856
      %v4953 = vunpack.c.l.b16 %v4857
      %v4954 = vunpack.c.l.b16 %v4858
      %v4955 = vunpack.c.l.b16 %v4859
      %v4956 = vunpack.c.l.b16 %v4860
      %v4957 = vunpack.c.l.b16 %v4861
      %v4958 = vunpack.c.l.b16 %v4862
      %v4959 = vunpack.c.l.b16 %v4863
      %v4960 = vunpack.c.l.b16 %v4864
      %v4961 = vunpack.c.l.b16 %v4865
      %v4962 = vunpack.c.l.b16 %v4866
      %v4963 = vpack.c.b16 %v4916, %v4915
      %v4964 = vpack.c.b16 %v4918, %v4917
      %v4965 = vpack.c.b16 %v4920, %v4919
      %v4966 = vpack.c.b16 %v4922, %v4921
      %v4967 = vpack.c.b16 %v4924, %v4923
      %v4968 = vpack.c.b16 %v4926, %v4925
      %v4969 = vpack.c.b16 %v4928, %v4927
      %v4970 = vpack.c.b16 %v4930, %v4929
      %v4971 = vpack.c.b16 %v4932, %v4931
      %v4972 = vpack.c.b16 %v4934, %v4933
      %v4973 = vpack.c.b16 %v4936, %v4935
      %v4974 = vpack.c.b16 %v4938, %v4937
      %v4975 = vpack.c.b16 %v4940, %v4939
      %v4976 = vpack.c.b16 %v4942, %v4941
      %v4977 = vpack.c.b16 %v4944, %v4943
      %v4978 = vpack.c.b16 %v4946, %v4945
      %v4979 = vpack.c.b16 %v4948, %v4947
      %v4980 = vpack.c.b16 %v4950, %v4949
      %v4981 = vpack.c.b16 %v4952, %v4951
      %v4982 = vpack.c.b16 %v4954, %v4953
      %v4983 = vpack.c.b16 %v4956, %v4955
      %v4984 = vpack.c.b16 %v4958, %v4957
      %v4985 = vpack.c.b16 %v4960, %v4959
      %v4986 = vpack.c.b16 %v4962, %v4961
      %5011 = vmatprep.subr.bf16.mxu0 0
      %5012 = vmatpush1.bf16.msra.mxu0 %v4970
      %5013 = vmatprep.subr.bf16.mxu0 0
      %5014 = vmatpush1.bf16.msra.mxu0 %v4969
      %5015 = vmatprep.subr.bf16.mxu0 0
      %5016 = vmatpush1.bf16.msra.mxu0 %v4968
      %5017 = vmatprep.subr.bf16.mxu0 0
      %5018 = vmatpush1.bf16.msra.mxu0 %v4967
      %5019 = vmatprep.subr.bf16.mxu0 0
      %5020 = vmatpush1.bf16.msra.mxu0 %v4966
      %5021 = vmatprep.subr.bf16.mxu0 0
      %5022 = vmatpush1.bf16.msra.mxu0 %v4965
      %5023 = vmatprep.subr.bf16.mxu0 0
      %5024 = vmatpush1.bf16.msra.mxu0 %v4964
      %5025 = vmatprep.subr.bf16.mxu0 0
      %5026 = vmatpush1.bf16.msra.mxu0 %v4963
      %5027 = vmatprep.subr.bf16.mxu0 0
      %5028 = vmatpush2.bf16.msra.mxu0 %v4978
      %5029 = vmatprep.subr.bf16.mxu0 0
      %5030 = vmatpush2.bf16.msra.mxu0 %v4977
      %5031 = vmatprep.subr.bf16.mxu0 0
      %5032 = vmatpush2.bf16.msra.mxu0 %v4976
      %5033 = vmatprep.subr.bf16.mxu0 0
      %5034 = vmatpush2.bf16.msra.mxu0 %v4975
      %5035 = vmatprep.subr.bf16.mxu0 0
      %5036 = vmatpush2.bf16.msra.mxu0 %v4974
      %5037 = vmatprep.subr.bf16.mxu0 0
      %5038 = vmatpush2.bf16.msra.mxu0 %v4973
      %5039 = vmatprep.subr.bf16.mxu0 0
      %5040 = vmatpush2.bf16.msra.mxu0 %v4972
      %5041 = vmatprep.subr.bf16.mxu0 0
      %5042 = vmatpush2.bf16.msra.mxu0 %v4971
      %5043 = vmatprep.mubr.bf16.mxu0 %v4107
      %5044 = vmatmul.mubr.bf16.gmra.mxu0 %v4098
      %v5045 = vpop.f32.mrf.mxu0
      %v5046 = vadd.f32 0.0, %v5045
      %v5047 = vpop.f32.mrf.mxu0
      %v5048 = vpop.f32.mrf.mxu0
      %v5049 = vadd.f32 0.0, %v5048
      %v5050 = vpop.f32.mrf.mxu0
      %5051 = vmatprep.mubr.bf16.mxu0 %v4150
      %5052 = vmatmul.mubr.bf16.gmra.mxu0 %v4141
      %v5053 = vpop.f32.mrf.mxu0
      %v5054 = vadd.f32 0.0, %v5053
      %v5055 = vpop.f32.mrf.mxu0
      %v5056 = vpop.f32.mrf.mxu0
      %v5057 = vadd.f32 0.0, %v5056
      %v5058 = vpop.f32.mrf.mxu0
      %5059 = vmatprep.mubr.bf16.mxu0 %v4193
      %5060 = vmatmul.mubr.bf16.gmra.mxu0 %v4184
      %v5061 = vpop.f32.mrf.mxu0
      %v5062 = vadd.f32 0.0, %v5061
      %v5063 = vpop.f32.mrf.mxu0
      %v5064 = vpop.f32.mrf.mxu0
      %v5065 = vadd.f32 0.0, %v5064
      %v5066 = vpop.f32.mrf.mxu0
      %5067 = vmatprep.mubr.bf16.mxu0 %v4236
      %5068 = vmatmul.mubr.bf16.gmra.mxu0 %v4227
      %v5069 = vpop.f32.mrf.mxu0
      %v5070 = vadd.f32 0.0, %v5069
      %v5071 = vpop.f32.mrf.mxu0
      %v5072 = vpop.f32.mrf.mxu0
      %v5073 = vadd.f32 0.0, %v5072
      %v5074 = vpop.f32.mrf.mxu0
      %5075 = vmatprep.mubr.bf16.mxu0 %v4279
      %5076 = vmatmul.mubr.bf16.gmra.mxu0 %v4270
      %v5077 = vpop.f32.mrf.mxu0
      %v5078 = vadd.f32 0.0, %v5077
      %v5079 = vpop.f32.mrf.mxu0
      %v5080 = vpop.f32.mrf.mxu0
      %v5081 = vadd.f32 0.0, %v5080
      %v5082 = vpop.f32.mrf.mxu0
      %5083 = vmatprep.mubr.bf16.mxu0 %v4322
      %5084 = vmatmul.mubr.bf16.gmra.mxu0 %v4313
      %v5085 = vpop.f32.mrf.mxu0
      %v5086 = vadd.f32 0.0, %v5085
      %v5087 = vpop.f32.mrf.mxu0
      %v5088 = vpop.f32.mrf.mxu0
      %v5089 = vadd.f32 0.0, %v5088
      %v5090 = vpop.f32.mrf.mxu0
      %5091 = vmatprep.mubr.bf16.mxu0 %v4365
      %5092 = vmatmul.mubr.bf16.gmra.mxu0 %v4356
      %v5093 = vpop.f32.mrf.mxu0
      %v5094 = vadd.f32 0.0, %v5093
      %v5095 = vpop.f32.mrf.mxu0
      %v5096 = vpop.f32.mrf.mxu0
      %v5097 = vadd.f32 0.0, %v5096
      %v5098 = vpop.f32.mrf.mxu0
      %5099 = vmatprep.mubr.bf16.mxu0 %v4408
      %5100 = vmatmul.mubr.bf16.gmra.mxu0 %v4399
      %v5101 = vpop.f32.mrf.mxu0
      %v5102 = vadd.f32 0.0, %v5101
      %v5103 = vpop.f32.mrf.mxu0
      %v5104 = vpop.f32.mrf.mxu0
      %v5105 = vadd.f32 0.0, %v5104
      %v5106 = vpop.f32.mrf.mxu0
      %5107 = vmatprep.mubr.bf16.mxu0 %v4451
      %5108 = vmatmul.mubr.bf16.gmra.mxu0 %v4442
      %v5109 = vpop.f32.mrf.mxu0
      %v5110 = vadd.f32 0.0, %v5109
      %v5111 = vpop.f32.mrf.mxu0
      %v5112 = vpop.f32.mrf.mxu0
      %v5113 = vadd.f32 0.0, %v5112
      %v5114 = vpop.f32.mrf.mxu0
      %5115 = vmatprep.mubr.bf16.mxu0 %v4494
      %5116 = vmatmul.mubr.bf16.gmra.mxu0 %v4485
      %v5117 = vpop.f32.mrf.mxu0
      %v5118 = vadd.f32 0.0, %v5117
      %v5119 = vpop.f32.mrf.mxu0
      %v5120 = vpop.f32.mrf.mxu0
      %v5121 = vadd.f32 0.0, %v5120
      %v5122 = vpop.f32.mrf.mxu0
      %5123 = vmatprep.mubr.bf16.mxu0 %v4537
      %5124 = vmatmul.mubr.bf16.gmra.mxu0 %v4528
      %v5125 = vpop.f32.mrf.mxu0
      %v5126 = vadd.f32 0.0, %v5125
      %v5127 = vpop.f32.mrf.mxu0
      %v5128 = vpop.f32.mrf.mxu0
      %v5129 = vadd.f32 0.0, %v5128
      %v5130 = vpop.f32.mrf.mxu0
      %5131 = vmatprep.mubr.bf16.mxu0 %v4580
      %5132 = vmatmul.mubr.bf16.gmra.mxu0 %v4571
      %v5133 = vpop.f32.mrf.mxu0
      %v5134 = vadd.f32 0.0, %v5133
      %v5135 = vpop.f32.mrf.mxu0
      %v5136 = vpop.f32.mrf.mxu0
      %v5137 = vadd.f32 0.0, %v5136
      %v5138 = vpop.f32.mrf.mxu0
      %5139 = vmatprep.mubr.bf16.mxu0 %v4623
      %5140 = vmatmul.mubr.bf16.gmra.mxu0 %v4614
      %v5141 = vpop.f32.mrf.mxu0
      %v5142 = vadd.f32 0.0, %v5141
      %v5143 = vpop.f32.mrf.mxu0
      %v5144 = vpop.f32.mrf.mxu0
      %v5145 = vadd.f32 0.0, %v5144
      %v5146 = vpop.f32.mrf.mxu0
      %5147 = vmatprep.mubr.bf16.mxu0 %v4666
      %5148 = vmatmul.mubr.bf16.gmra.mxu0 %v4657
      %v5149 = vpop.f32.mrf.mxu0
      %v5150 = vadd.f32 0.0, %v5149
      %v5151 = vpop.f32.mrf.mxu0
      %v5152 = vpop.f32.mrf.mxu0
      %v5153 = vadd.f32 0.0, %v5152
      %v5154 = vpop.f32.mrf.mxu0
      %5155 = vmatprep.mubr.bf16.mxu0 %v4709
      %5156 = vmatmul.mubr.bf16.gmra.mxu0 %v4700
      %v5157 = vpop.f32.mrf.mxu0
      %v5158 = vadd.f32 0.0, %v5157
      %v5159 = vpop.f32.mrf.mxu0
      %v5160 = vpop.f32.mrf.mxu0
      %v5161 = vadd.f32 0.0, %v5160
      %v5162 = vpop.f32.mrf.mxu0
      %5163 = vmatprep.mubr.bf16.mxu0 %v4752
      %5164 = vmatmul.mubr.bf16.gmra.mxu0 %v4743
      %v5165 = vpop.f32.mrf.mxu0
      %v5166 = vadd.f32 0.0, %v5165
      %v5167 = vpop.f32.mrf.mxu0
      %v5168 = vpop.f32.mrf.mxu0
      %v5169 = vadd.f32 0.0, %v5168
      %v5170 = vpop.f32.mrf.mxu0
      %5171 = vdwg.mxu0
      %5172 = vmatprep.subr.bf16.mxu0 0
      %5173 = vmatpush1.bf16.msra.mxu0 %v4986
      %5174 = vmatprep.subr.bf16.mxu0 0
      %5175 = vmatpush1.bf16.msra.mxu0 %v4985
      %5176 = vmatprep.subr.bf16.mxu0 0
      %5177 = vmatpush1.bf16.msra.mxu0 %v4984
      %5178 = vmatprep.subr.bf16.mxu0 0
      %5179 = vmatpush1.bf16.msra.mxu0 %v4983
      %5180 = vmatprep.subr.bf16.mxu0 0
      %5181 = vmatpush1.bf16.msra.mxu0 %v4982
      %5182 = vmatprep.subr.bf16.mxu0 0
      %5183 = vmatpush1.bf16.msra.mxu0 %v4981
      %5184 = vmatprep.subr.bf16.mxu0 0
      %5185 = vmatpush1.bf16.msra.mxu0 %v4980
      %5186 = vmatprep.subr.bf16.mxu0 0
      %5187 = vmatpush1.bf16.msra.mxu0 %v4979
      %5188 = vmatprep.subr.bf16.mxu0 0
      %5189 = vmatpush2.bf16.msra.mxu0 0
      %5190 = vmatprep.subr.bf16.mxu0 0
      %5191 = vmatpush2.bf16.msra.mxu0 0
      %5192 = vmatprep.subr.bf16.mxu0 0
      %5193 = vmatpush2.bf16.msra.mxu0 0
      %5194 = vmatprep.subr.bf16.mxu0 0
      %5195 = vmatpush2.bf16.msra.mxu0 0
      %5196 = vmatprep.subr.bf16.mxu0 0
      %5197 = vmatpush2.bf16.msra.mxu0 0
      %5198 = vmatprep.subr.bf16.mxu0 0
      %5199 = vmatpush2.bf16.msra.mxu0 0
      %5200 = vmatprep.subr.bf16.mxu0 0
      %5201 = vmatpush2.bf16.msra.mxu0 0
      %5202 = vmatprep.subr.bf16.mxu0 0
      %5203 = vmatpush2.bf16.msra.mxu0 0
      %5204 = vmatprep.mubr.bf16.mxu0 0
      %5205 = vmatmul.mubr.bf16.gmra.mxu0 %v4124
      %v5206 = vpop.f32.mrf.mxu0
      %v5207 = vadd.f32 %v5046, %v5206
      %v5208 = vpop.f32.mrf.mxu0
      %v5209 = vpop.f32.mrf.mxu0
      %v5210 = vadd.f32 %v5049, %v5209
      %v5211 = vpop.f32.mrf.mxu0
      %5212 = vmatprep.mubr.bf16.mxu0 0
      %5213 = vmatmul.mubr.bf16.gmra.mxu0 %v4167
      %v5214 = vpop.f32.mrf.mxu0
      %v5215 = vadd.f32 %v5054, %v5214
      %v5216 = vpop.f32.mrf.mxu0
      %v5217 = vpop.f32.mrf.mxu0
      %v5218 = vadd.f32 %v5057, %v5217
      %v5219 = vpop.f32.mrf.mxu0
      %5220 = vmatprep.mubr.bf16.mxu0 0
      %5221 = vmatmul.mubr.bf16.gmra.mxu0 %v4210
      %v5222 = vpop.f32.mrf.mxu0
      %v5223 = vadd.f32 %v5062, %v5222
      %v5224 = vpop.f32.mrf.mxu0
      %v5225 = vpop.f32.mrf.mxu0
      %v5226 = vadd.f32 %v5065, %v5225
      %v5227 = vpop.f32.mrf.mxu0
      %5228 = vmatprep.mubr.bf16.mxu0 0
      %5229 = vmatmul.mubr.bf16.gmra.mxu0 %v4253
      %v5230 = vpop.f32.mrf.mxu0
      %v5231 = vadd.f32 %v5070, %v5230
      %v5232 = vpop.f32.mrf.mxu0
      %v5233 = vpop.f32.mrf.mxu0
      %v5234 = vadd.f32 %v5073, %v5233
      %v5235 = vpop.f32.mrf.mxu0
      %5236 = vmatprep.mubr.bf16.mxu0 0
      %5237 = vmatmul.mubr.bf16.gmra.mxu0 %v4296
      %v5238 = vpop.f32.mrf.mxu0
      %v5239 = vadd.f32 %v5078, %v5238
      %v5240 = vpop.f32.mrf.mxu0
      %v5241 = vpop.f32.mrf.mxu0
      %v5242 = vadd.f32 %v5081, %v5241
      %v5243 = vpop.f32.mrf.mxu0
      %5244 = vmatprep.mubr.bf16.mxu0 0
      %5245 = vmatmul.mubr.bf16.gmra.mxu0 %v4339
      %v5246 = vpop.f32.mrf.mxu0
      %v5247 = vadd.f32 %v5086, %v5246
      %v5248 = vpop.f32.mrf.mxu0
      %v5249 = vpop.f32.mrf.mxu0
      %v5250 = vadd.f32 %v5089, %v5249
      %v5251 = vpop.f32.mrf.mxu0
      %5252 = vmatprep.mubr.bf16.mxu0 0
      %5253 = vmatmul.mubr.bf16.gmra.mxu0 %v4382
      %v5254 = vpop.f32.mrf.mxu0
      %v5255 = vadd.f32 %v5094, %v5254
      %v5256 = vpop.f32.mrf.mxu0
      %v5257 = vpop.f32.mrf.mxu0
      %v5258 = vadd.f32 %v5097, %v5257
      %v5259 = vpop.f32.mrf.mxu0
      %5260 = vmatprep.mubr.bf16.mxu0 0
      %5261 = vmatmul.mubr.bf16.gmra.mxu0 %v4425
      %v5262 = vpop.f32.mrf.mxu0
      %v5263 = vadd.f32 %v5102, %v5262
      %v5264 = vpop.f32.mrf.mxu0
      %v5265 = vpop.f32.mrf.mxu0
      %v5266 = vadd.f32 %v5105, %v5265
      %v5267 = vpop.f32.mrf.mxu0
      %5268 = vmatprep.mubr.bf16.mxu0 0
      %5269 = vmatmul.mubr.bf16.gmra.mxu0 %v4468
      %v5270 = vpop.f32.mrf.mxu0
      %v5271 = vadd.f32 %v5110, %v5270
      %v5272 = vpop.f32.mrf.mxu0
      %v5273 = vpop.f32.mrf.mxu0
      %v5274 = vadd.f32 %v5113, %v5273
      %v5275 = vpop.f32.mrf.mxu0
      %5276 = vmatprep.mubr.bf16.mxu0 0
      %5277 = vmatmul.mubr.bf16.gmra.mxu0 %v4511
      %v5278 = vpop.f32.mrf.mxu0
      %v5279 = vadd.f32 %v5118, %v5278
      %v5280 = vpop.f32.mrf.mxu0
      %v5281 = vpop.f32.mrf.mxu0
      %v5282 = vadd.f32 %v5121, %v5281
      %v5283 = vpop.f32.mrf.mxu0
      %5284 = vmatprep.mubr.bf16.mxu0 0
      %5285 = vmatmul.mubr.bf16.gmra.mxu0 %v4554
      %v5286 = vpop.f32.mrf.mxu0
      %v5287 = vadd.f32 %v5126, %v5286
      %v5288 = vpop.f32.mrf.mxu0
      %v5289 = vpop.f32.mrf.mxu0
      %v5290 = vadd.f32 %v5129, %v5289
      %v5291 = vpop.f32.mrf.mxu0
      %5292 = vmatprep.mubr.bf16.mxu0 0
      %5293 = vmatmul.mubr.bf16.gmra.mxu0 %v4597
      %v5294 = vpop.f32.mrf.mxu0
      %v5295 = vadd.f32 %v5134, %v5294
      %v5296 = vpop.f32.mrf.mxu0
      %v5297 = vpop.f32.mrf.mxu0
      %v5298 = vadd.f32 %v5137, %v5297
      %v5299 = vpop.f32.mrf.mxu0
      %5300 = vmatprep.mubr.bf16.mxu0 0
      %5301 = vmatmul.mubr.bf16.gmra.mxu0 %v4640
      %v5302 = vpop.f32.mrf.mxu0
      %v5303 = vadd.f32 %v5142, %v5302
      %v5304 = vpop.f32.mrf.mxu0
      %v5305 = vpop.f32.mrf.mxu0
      %v5306 = vadd.f32 %v5145, %v5305
      %v5307 = vpop.f32.mrf.mxu0
      %5308 = vmatprep.mubr.bf16.mxu0 0
      %5309 = vmatmul.mubr.bf16.gmra.mxu0 %v4683
      %v5310 = vpop.f32.mrf.mxu0
      %v5311 = vadd.f32 %v5150, %v5310
      %v5312 = vpop.f32.mrf.mxu0
      %v5313 = vpop.f32.mrf.mxu0
      %v5314 = vadd.f32 %v5153, %v5313
      %v5315 = vpop.f32.mrf.mxu0
      %5316 = vmatprep.mubr.bf16.mxu0 0
      %5317 = vmatmul.mubr.bf16.gmra.mxu0 %v4726
      %v5318 = vpop.f32.mrf.mxu0
      %v5319 = vadd.f32 %v5158, %v5318
      %v5320 = vpop.f32.mrf.mxu0
      %v5321 = vpop.f32.mrf.mxu0
      %v5322 = vadd.f32 %v5161, %v5321
      %v5323 = vpop.f32.mrf.mxu0
      %5324 = vmatprep.mubr.bf16.mxu0 0
      %5325 = vmatmul.mubr.bf16.gmra.mxu0 %v4769
      %v5326 = vpop.f32.mrf.mxu0
      %v5327 = vadd.f32 %v5166, %v5326
      %v5328 = vpop.f32.mrf.mxu0
      %v5329 = vpop.f32.mrf.mxu0
      %v5330 = vadd.f32 %v5169, %v5329
      %v5331 = vpop.f32.mrf.mxu0
      %5332 = vdwg.mxu0
      %v5333 = vadd.f32 %v3523, %v5207
      %v5334 = vadd.f32 %v3526, %v5210
      %v5335 = vadd.f32 %v3531, %v5215
      %v5336 = vadd.f32 %v3534, %v5218
      %v5337 = vadd.f32 %v3539, %v5223
      %v5338 = vadd.f32 %v3542, %v5226
      %v5339 = vadd.f32 %v3547, %v5231
      %v5340 = vadd.f32 %v3550, %v5234
      %v5341 = vadd.f32 %v3555, %v5239
      %v5342 = vadd.f32 %v3558, %v5242
      %v5343 = vadd.f32 %v3563, %v5247
      %v5344 = vadd.f32 %v3566, %v5250
      %v5345 = vadd.f32 %v3571, %v5255
      %v5346 = vadd.f32 %v3574, %v5258
      %v5347 = vadd.f32 %v3579, %v5263
      %v5348 = vadd.f32 %v3582, %v5266
      %v5349 = vadd.f32 %v3587, %v5271
      %v5350 = vadd.f32 %v3590, %v5274
      %v5351 = vadd.f32 %v3595, %v5279
      %v5352 = vadd.f32 %v3598, %v5282
      %v5353 = vadd.f32 %v3603, %v5287
      %v5354 = vadd.f32 %v3606, %v5290
      %v5355 = vadd.f32 %v3611, %v5295
      %v5356 = vadd.f32 %v3614, %v5298
      %v5357 = vadd.f32 %v3619, %v5303
      %v5358 = vadd.f32 %v3622, %v5306
      %v5359 = vadd.f32 %v3627, %v5311
      %v5360 = vadd.f32 %v3630, %v5314
      %v5361 = vadd.f32 %v3635, %v5319
      %v5362 = vadd.f32 %v3638, %v5322
      %v5363 = vadd.f32 %v3643, %v5327
      %v5364 = vadd.f32 %v3646, %v5330
      %v5365 = vld [vmem:[%s263] sm:$0x1]
      %v5367 = vlaneseq
      %v5368 = vshrl.u32 %v5367, 7
      %v5369 = vsub.s32 0, %v5368
      %v5370 = vrot.slane %v5365, %v5369
      %v5372 = vadd.f32 %v5333, %v5370
      %v5373 = vadd.f32 %v5334, %v5370
      %v5374 = vadd.f32 %v5335, %v5370
      %v5375 = vadd.f32 %v5336, %v5370
      %v5376 = vadd.f32 %v5337, %v5370
      %v5377 = vadd.f32 %v5338, %v5370
      %v5378 = vadd.f32 %v5339, %v5370
      %v5379 = vadd.f32 %v5340, %v5370
      %v5380 = vadd.f32 %v5341, %v5370
      %v5381 = vadd.f32 %v5342, %v5370
      %v5382 = vadd.f32 %v5343, %v5370
      %v5383 = vadd.f32 %v5344, %v5370
      %v5384 = vadd.f32 %v5345, %v5370
      %v5385 = vadd.f32 %v5346, %v5370
      %v5386 = vadd.f32 %v5347, %v5370
      %v5387 = vadd.f32 %v5348, %v5370
      %v5388 = vadd.f32 %v5349, %v5370
      %v5389 = vadd.f32 %v5350, %v5370
      %v5390 = vadd.f32 %v5351, %v5370
      %v5391 = vadd.f32 %v5352, %v5370
      %v5392 = vadd.f32 %v5353, %v5370
      %v5393 = vadd.f32 %v5354, %v5370
      %v5394 = vadd.f32 %v5355, %v5370
      %v5395 = vadd.f32 %v5356, %v5370
      %v5396 = vadd.f32 %v5357, %v5370
      %v5397 = vadd.f32 %v5358, %v5370
      %v5398 = vadd.f32 %v5359, %v5370
      %v5399 = vadd.f32 %v5360, %v5370
      %v5400 = vadd.f32 %v5361, %v5370
      %v5401 = vadd.f32 %v5362, %v5370
      %v5402 = vadd.f32 %v5363, %v5370
      %v5403 = vadd.f32 %v5364, %v5370
      %v5404 = vld [vmem:[%s271] sm:$0xf]
      %v5405 = vld [vmem:[%s271 + $0x4] sm:$0xf]
      %v5406 = vld [vmem:[%s271 + $0x8] sm:$0xf]
      %v5407 = vld [vmem:[%s271 + $0xc] sm:$0xf]
      %v5408 = vld [vmem:[%s271 + $0x10] sm:$0xf]
      %v5409 = vld [vmem:[%s271 + $0x14] sm:$0xf]
      %v5410 = vld [vmem:[%s271 + $0x18] sm:$0xf]
      %v5411 = vld [vmem:[%s271 + $0x1c] sm:$0xf]
      %v5412 = vld [vmem:[%s271 + $0x20] sm:$0xf]
      %v5413 = vld [vmem:[%s271 + $0x24] sm:$0xf]
      %v5414 = vld [vmem:[%s271 + $0x28] sm:$0xf]
      %v5415 = vld [vmem:[%s271 + $0x2c] sm:$0xf]
      %v5416 = vld [vmem:[%s271 + $0x30] sm:$0xf]
      %v5417 = vld [vmem:[%s271 + $0x34] sm:$0xf]
      %v5418 = vld [vmem:[%s271 + $0x38] sm:$0xf]
      %v5419 = vld [vmem:[%s271 + $0x3c] sm:$0xf]
      %v5420 = vld [vmem:[%s271 + $0x40] sm:$0xf]
      %v5421 = vld [vmem:[%s271 + $0x44] sm:$0xf]
      %v5422 = vld [vmem:[%s271 + $0x48] sm:$0xf]
      %v5423 = vld [vmem:[%s271 + $0x4c] sm:$0xf]
      %v5424 = vld [vmem:[%s271 + $0x50] sm:$0xf]
      %v5425 = vld [vmem:[%s271 + $0x54] sm:$0xf]
      %v5426 = vld [vmem:[%s271 + $0x58] sm:$0xf]
      %v5427 = vld [vmem:[%s271 + $0x5c] sm:$0xf]
      %v5428 = vld [vmem:[%s271 + $0x60] sm:$0xf]
      %v5429 = vld [vmem:[%s271 + $0x64] sm:$0xf]
      %v5430 = vld [vmem:[%s271 + $0x68] sm:$0xf]
      %v5431 = vld [vmem:[%s271 + $0x6c] sm:$0xf]
      %v5432 = vld [vmem:[%s271 + $0x70] sm:$0xf]
      %v5433 = vld [vmem:[%s271 + $0x74] sm:$0xf]
      %v5434 = vld [vmem:[%s271 + $0x78] sm:$0xf]
      %v5435 = vld [vmem:[%s271 + $0x7c] sm:$0xf]
      %v5436 = vunpack.c.l.bf16 %v5404
      %v5437 = vunpack.c.l.bf16 %v5405
      %v5438 = vunpack.c.l.bf16 %v5406
      %v5439 = vunpack.c.l.bf16 %v5407
      %v5440 = vunpack.c.l.bf16 %v5408
      %v5441 = vunpack.c.l.bf16 %v5409
      %v5442 = vunpack.c.l.bf16 %v5410
      %v5443 = vunpack.c.l.bf16 %v5411
      %v5444 = vunpack.c.l.bf16 %v5412
      %v5445 = vunpack.c.l.bf16 %v5413
      %v5446 = vunpack.c.l.bf16 %v5414
      %v5447 = vunpack.c.l.bf16 %v5415
      %v5448 = vunpack.c.l.bf16 %v5416
      %v5449 = vunpack.c.l.bf16 %v5417
      %v5450 = vunpack.c.l.bf16 %v5418
      %v5451 = vunpack.c.l.bf16 %v5419
      %v5452 = vunpack.c.l.bf16 %v5420
      %v5453 = vunpack.c.l.bf16 %v5421
      %v5454 = vunpack.c.l.bf16 %v5422
      %v5455 = vunpack.c.l.bf16 %v5423
      %v5456 = vunpack.c.l.bf16 %v5424
      %v5457 = vunpack.c.l.bf16 %v5425
      %v5458 = vunpack.c.l.bf16 %v5426
      %v5459 = vunpack.c.l.bf16 %v5427
      %v5460 = vunpack.c.l.bf16 %v5428
      %v5461 = vunpack.c.l.bf16 %v5429
      %v5462 = vunpack.c.l.bf16 %v5430
      %v5463 = vunpack.c.l.bf16 %v5431
      %v5464 = vunpack.c.l.bf16 %v5432
      %v5465 = vunpack.c.l.bf16 %v5433
      %v5466 = vunpack.c.l.bf16 %v5434
      %v5467 = vunpack.c.l.bf16 %v5435
      %v5468 = vadd.f32 %v5372, %v5436
      %v5469 = vadd.f32 %v5373, %v5437
      %v5470 = vadd.f32 %v5374, %v5438
      %v5471 = vadd.f32 %v5375, %v5439
      %v5472 = vadd.f32 %v5376, %v5440
      %v5473 = vadd.f32 %v5377, %v5441
      %v5474 = vadd.f32 %v5378, %v5442
      %v5475 = vadd.f32 %v5379, %v5443
      %v5476 = vadd.f32 %v5380, %v5444
      %v5477 = vadd.f32 %v5381, %v5445
      %v5478 = vadd.f32 %v5382, %v5446
      %v5479 = vadd.f32 %v5383, %v5447
      %v5480 = vadd.f32 %v5384, %v5448
      %v5481 = vadd.f32 %v5385, %v5449
      %v5482 = vadd.f32 %v5386, %v5450
      %v5483 = vadd.f32 %v5387, %v5451
      %v5484 = vadd.f32 %v5388, %v5452
      %v5485 = vadd.f32 %v5389, %v5453
      %v5486 = vadd.f32 %v5390, %v5454
      %v5487 = vadd.f32 %v5391, %v5455
      %v5488 = vadd.f32 %v5392, %v5456
      %v5489 = vadd.f32 %v5393, %v5457
      %v5490 = vadd.f32 %v5394, %v5458
      %v5491 = vadd.f32 %v5395, %v5459
      %v5492 = vadd.f32 %v5396, %v5460
      %v5493 = vadd.f32 %v5397, %v5461
      %v5494 = vadd.f32 %v5398, %v5462
      %v5495 = vadd.f32 %v5399, %v5463
      %v5496 = vadd.f32 %v5400, %v5464
      %v5497 = vadd.f32 %v5401, %v5465
      %v5498 = vadd.f32 %v5402, %v5466
      %v5499 = vadd.f32 %v5403, %v5467
      %v5500 = vmax.f32 %v5468, 0.0
      %v5501 = vmax.f32 %v5469, 0.0
      %v5502 = vmax.f32 %v5470, 0.0
      %v5503 = vmax.f32 %v5471, 0.0
      %v5504 = vmax.f32 %v5472, 0.0
      %v5505 = vmax.f32 %v5473, 0.0
      %v5506 = vmax.f32 %v5474, 0.0
      %v5507 = vmax.f32 %v5475, 0.0
      %v5508 = vmax.f32 %v5476, 0.0
      %v5509 = vmax.f32 %v5477, 0.0
      %v5510 = vmax.f32 %v5478, 0.0
      %v5511 = vmax.f32 %v5479, 0.0
      %v5512 = vmax.f32 %v5480, 0.0
      %v5513 = vmax.f32 %v5481, 0.0
      %v5514 = vmax.f32 %v5482, 0.0
      %v5515 = vmax.f32 %v5483, 0.0
      %v5516 = vmax.f32 %v5484, 0.0
      %v5517 = vmax.f32 %v5485, 0.0
      %v5518 = vmax.f32 %v5486, 0.0
      %v5519 = vmax.f32 %v5487, 0.0
      %v5520 = vmax.f32 %v5488, 0.0
      %v5521 = vmax.f32 %v5489, 0.0
      %v5522 = vmax.f32 %v5490, 0.0
      %v5523 = vmax.f32 %v5491, 0.0
      %v5524 = vmax.f32 %v5492, 0.0
      %v5525 = vmax.f32 %v5493, 0.0
      %v5526 = vmax.f32 %v5494, 0.0
      %v5527 = vmax.f32 %v5495, 0.0
      %v5528 = vmax.f32 %v5496, 0.0
      %v5529 = vmax.f32 %v5497, 0.0
      %v5530 = vmax.f32 %v5498, 0.0
      %v5531 = vmax.f32 %v5499, 0.0
      %5532 = vst [vmem:[%s279] sm:$0xff] %v5500
      %5533 = vst [vmem:[%s279 + $0x8] sm:$0xff] %v5501
      %5534 = vst [vmem:[%s279 + $0x10] sm:$0xff] %v5502
      %5535 = vst [vmem:[%s279 + $0x18] sm:$0xff] %v5503
      %5536 = vst [vmem:[%s279 + $0x20] sm:$0xff] %v5504
      %5537 = vst [vmem:[%s279 + $0x28] sm:$0xff] %v5505
      %5538 = vst [vmem:[%s279 + $0x30] sm:$0xff] %v5506
      %5539 = vst [vmem:[%s279 + $0x38] sm:$0xff] %v5507
      %5540 = vst [vmem:[%s279 + $0x40] sm:$0xff] %v5508
      %5541 = vst [vmem:[%s279 + $0x48] sm:$0xff] %v5509
      %5542 = vst [vmem:[%s279 + $0x50] sm:$0xff] %v5510
      %5543 = vst [vmem:[%s279 + $0x58] sm:$0xff] %v5511
      %5544 = vst [vmem:[%s279 + $0x60] sm:$0xff] %v5512
      %5545 = vst [vmem:[%s279 + $0x68] sm:$0xff] %v5513
      %5546 = vst [vmem:[%s279 + $0x70] sm:$0xff] %v5514
      %5547 = vst [vmem:[%s279 + $0x78] sm:$0xff] %v5515
      %5548 = vst [vmem:[%s279 + $0x80] sm:$0xff] %v5516
      %5549 = vst [vmem:[%s279 + $0x88] sm:$0xff] %v5517
      %5550 = vst [vmem:[%s279 + $0x90] sm:$0xff] %v5518
      %5551 = vst [vmem:[%s279 + $0x98] sm:$0xff] %v5519
      %5552 = vst [vmem:[%s279 + $0xa0] sm:$0xff] %v5520
      %5553 = vst [vmem:[%s279 + $0xa8] sm:$0xff] %v5521
      %5554 = vst [vmem:[%s279 + $0xb0] sm:$0xff] %v5522
      %5555 = vst [vmem:[%s279 + $0xb8] sm:$0xff] %v5523
      %5556 = vst [vmem:[%s279 + $0xc0] sm:$0xff] %v5524
      %5557 = vst [vmem:[%s279 + $0xc8] sm:$0xff] %v5525
      %5558 = vst [vmem:[%s279 + $0xd0] sm:$0xff] %v5526
      %5559 = vst [vmem:[%s279 + $0xd8] sm:$0xff] %v5527
      %5560 = vst [vmem:[%s279 + $0xe0] sm:$0xff] %v5528
      %5561 = vst [vmem:[%s279 + $0xe8] sm:$0xff] %v5529
      %5562 = vst [vmem:[%s279 + $0xf0] sm:$0xff] %v5530
      %5563 = vst [vmem:[%s279 + $0xf8] sm:$0xff] %v5531
      %p5564 = scmp.lt.s32.totalorder %s20, 1
      %s5565 = scalar_select %p5564, %s20, 1
      %p5566 = scmp.lt.s32.totalorder %s19, 0
      %s5567 = scalar_select %p5566, %s19, 0
      %s5568 = smul.addr %s5565, 32
      %s5569 = sadd.s32 %s5567, %s5568
      %s5570 = smul.addr %s5569, 8
      %s5571 = scalar_lea.vmem %s4, %s5570
      // Predicated region
      $region37: #{basic_block_forward.5} parent=35 // pred_check
        %p5572 = pneg %p153
      $region38: #{basic_block_forward.5} parent=35 // pred_check_branch
        %5574 = sbr.rel (%p5572) target = $region40
      $region39: #{basic_block_forward.5} parent=35 // pred_region
        _
      $region40: #{basic_block_forward.5} parent=35 // pred_fallthru
        _
    $region36: #{basic_block_forward.5} parent=5 // pred_fallthru
      _
    %p5575 = scmp.le.s32.totalorder 2, %s10
    // Predicated region
    $region41: #{basic_block_forward.5} parent=5 // pred_check
      %p5576 = pneg %p5575
    $region42: #{basic_block_forward.5} parent=5 // pred_check_branch
      %5578 = sbr.rel (%p5576) target = $region44
    $region43: #{basic_block_forward.5} parent=5 // pred_region
      %s5579 = ssub.s32 %s10, 2
      // Predicated region
      $region45: #{basic_block_forward.5} parent=43 // pred_check
        %p5580 = pneg %p159
      $region46: #{basic_block_forward.5} parent=43 // pred_check_branch
        %5582 = sbr.rel (%p5580) target = $region48
      $region47: #{basic_block_forward.5} parent=43 // pred_region
        %p5583 = scmp.lt.s32.totalorder %s22, 1
        %s5584 = scalar_select %p5583, %s22, 1
        %p5585 = scmp.lt.s32.totalorder %s21, 0
        %s5586 = scalar_select %p5585, %s21, 0
        %s5587 = smul.addr %s5584, 32
        %s5588 = sadd.s32 %s5586, %s5587
        %s5589 = smul.addr %s5588, 8
        %s5590 = scalar_lea.vmem %s4, %s5589
      $region48: #{basic_block_forward.5} parent=43 // pred_fallthru
        _
    $region44: #{basic_block_forward.5} parent=5 // pred_fallthru
      _
  $region6: #{basic_block_forward.5} parent=0 // loop_footer
    %s14 = sadd.s32 1, %s10
  $region7: #{basic_block_forward.5} parent=0 // loop_footer_branch
    %9 = sbr.rel target = $region3
  $region8: #{basic_block_forward.5} parent=0 // loop_exit
    _

</llo_original>
